<compile_context>
chip_gen: v7x
topology: tpu7x:2x2x1
jax: 0.10.0
libtpu: 0.0.40
codegen_flags: <defaults>
</compile_context>

<pallas_src>
import jax
import jax.numpy as jnp
from jax.experimental import pallas as pl
from jax.experimental.pallas import tpu as pltpu


# dtype for non-recurrent MXU matmuls (hoisted LSTM projection, attention,
# classifier).  The LSTM recurrence always stays float32.
MXU_DTYPE = jnp.bfloat16        # set jnp.float32 for exact f32 parity
# dtype the hoisted (B,S,4H) gate streams are materialized with in HBM
# (bf16 halves the dominant LSTM HBM traffic).
GATES_DTYPE = jnp.bfloat16      # set jnp.float32 for exact f32 parity

# Scoped-VMEM limit for every pallas_call: above the 16/32 MiB defaults,
# below v7x's 64 MiB physical VMEM, safe on v5e/v6e (128 MiB physical).
_VMEM_LIMIT = 48 * 1024 * 1024


def _mm(x, w):
    """MXU matmul with f32 accumulation (operands cast to MXU_DTYPE)."""
    return jnp.dot(x.astype(MXU_DTYPE), w.astype(MXU_DTYPE),
                   preferred_element_type=jnp.float32)


def _batch_tile(n, cap):
    """Batch tile <= cap that divides n and is a multiple of 8 (or == n) so
    2-D (tile, feat) blocks satisfy the (8,128) sublane rule.  Falls back to
    the full batch (always legal) if no such divisor exists."""
    if n <= cap:
        return n
    for d in range(min(cap, n), 0, -1):
        if n % d == 0 and d % 8 == 0:
            return d
    return n


def _time_chunk(s):
    """Timesteps per LSTM grid step: 8/16 divisor of S (amortizes the ~0.35us
    grid-step overhead without a huge static unroll), else full S."""
    for t in (16, 8):
        if s % t == 0:
            return t
    return s


def _cross_batch_tile(B, S, H, F, budget=24 * 1024 * 1024):
    """Cross-attention batch tile sized against a VMEM budget (the kernel
    materializes (Bt,S,S) scores + transpose + softmax temporaries)."""
    per_row = 4 * (4 * S * H * 2 + 2 * S * F * 2 + 6 * S * S + 10 * S * 2 * H)
    cap = max(1, budget // max(per_row, 1))
    return _batch_tile(B, min(cap, 64))


# ----------------------------------------------------------------------------
# Bidirectional LSTM over a length-masked (packed) sequence.
# Input projection (x @ W_ih + b) is hoisted into XLA and stored as bf16; the
# kernel runs only the serial recurrence h' = f(h @ W_hh + gates[t]).
# Grid = (batch tiles [parallel], time chunks [arbitrary]).
# emit_seq=True  -> per-timestep outputs (encoder)
# emit_seq=False -> masked mean-pool fused into the kernel (decoder): only the
#                   (Bt,H) pooled means are written back to HBM.
# ----------------------------------------------------------------------------
def _make_bilstm_kernel(emit_seq):
    def kernel(gf_ref, gb_ref, lens_ref, whh_f_ref, whh_b_ref,
               o0_ref, o1_ref, hf_sc, cf_sc, hb_sc, cb_sc):
        c = pl.program_id(1)            # time-chunk index ("arbitrary" axis)
        nC = pl.num_programs(1)
        T = gf_ref.shape[1]
        H = hf_sc.shape[-1]

        @pl.when(c == 0)
        def _():                        # new batch tile -> reset state
            hf_sc[...] = jnp.zeros_like(hf_sc)
            cf_sc[...] = jnp.zeros_like(cf_sc)
            hb_sc[...] = jnp.zeros_like(hb_sc)
            cb_sc[...] = jnp.zeros_like(cb_sc)
            if not emit_seq:            # pooled outputs accumulate in-place
                o0_ref[...] = jnp.zeros_like(o0_ref)
                o1_ref[...] = jnp.zeros_like(o1_ref)

        lens = lens_ref[...]            # (Bt, 1) int32 valid lengths
        whh_f = whh_f_ref[...]          # (H, 4H) f32 -- loop-invariant, f32
        whh_b = whh_b_ref[...]

        def cell(g_in, keep, h, c_state, whh):
            # PyTorch gate order: input, forget, cell(g), output.
            # Recurrent matmul + gate sums stay f32 (rounding would compound).
            gates = jnp.dot(h, whh, preferred_element_type=jnp.float32) \
                    + g_in.astype(jnp.float32)
            i = jax.nn.sigmoid(gates[:, 0 * H:1 * H])
            f = jax.nn.sigmoid(gates[:, 1 * H:2 * H])
            g = jnp.tanh(gates[:, 2 * H:3 * H])
            o = jax.nn.sigmoid(gates[:, 3 * H:4 * H])
            c_new = f * c_state + i * g
            h_new = o * jnp.tanh(c_new)
            # packed-sequence semantics: no state update + zero output on pad
            y = jnp.where(keep, h_new, 0.0)
            return (jnp.where(keep, h_new, h),
                    jnp.where(keep, c_new, c_state),
                    y)

        h_f, c_f = hf_sc[...], cf_sc[...]
        h_b, c_b = hb_sc[...], cb_sc[...]
        sum_f = jnp.zeros_like(h_f)
        sum_b = jnp.zeros_like(h_b)

        t0_f = c * T                    # global time offset of this fwd chunk
        t0_b = (nC - 1 - c) * T         # ... and of the reversed bwd chunk

        # Statically unrolled over the (small, 8-16 step) chunk; per-step ref
        # indexing keeps live ranges short and stores lane-dense per row.
        # TODO(synk): switch to lax.fori_loop(unroll=4) + dynamic sublane
        # indexing once validated on the target toolchain.
        for t in range(T):
            keep_f = (t0_f + t) < lens                       # (Bt,1) bool
            h_f, c_f, y_f = cell(gf_ref[:, t, :], keep_f, h_f, c_f, whh_f)
            tb = T - 1 - t              # backward walks the chunk reversed
            keep_b = (t0_b + tb) < lens
            h_b, c_b, y_b = cell(gb_ref[:, tb, :], keep_b, h_b, c_b, whh_b)
            if emit_seq:
                o0_ref[:, t, :] = y_f
                o1_ref[:, tb, :] = y_b
            else:
                sum_f = sum_f + y_f
                sum_b = sum_b + y_b

        hf_sc[...], cf_sc[...] = h_f, c_f
        hb_sc[...], cb_sc[...] = h_b, c_b

        if not emit_seq:
            # accumulate masked sums into the resident pooled-output block
            o0_ref[...] = o0_ref[...] + sum_f
            o1_ref[...] = o1_ref[...] + sum_b

            @pl.when(c == nC - 1)
            def _():                    # finalize: masked sum -> masked mean
                inv_len = 1.0 / jnp.maximum(lens.astype(jnp.float32), 1.0)
                o0_ref[...] = o0_ref[...] * inv_len
                o1_ref[...] = o1_ref[...] * inv_len

    return kernel


def _project_gates(x, w, b):
    """Hoisted input projection, materialized as GATES_DTYPE for half the
    HBM->VMEM traffic inside the recurrence kernel."""
    g = jnp.dot(x.astype(MXU_DTYPE), w.astype(MXU_DTYPE),
                preferred_element_type=jnp.float32) + b
    return g.astype(GATES_DTYPE)


def bilstm(x, lens, p, *, emit_seq, t_chunk=None, b_tile=None):
    """nn.LSTM(batch_first=True, bidirectional=True) on a length-masked seq.

    x: (N, S, Din) f32, lens: (N, 1) int32.
    emit_seq=True  -> (out_fwd, out_bwd), each (N, S, H)
    emit_seq=False -> (mean_fwd, mean_bwd), each (N, H)  (mean over valid steps)
    """
    N, S, _ = x.shape
    H = p["whh_f"].shape[0]

    gates_f = _project_gates(x, p["wih_f"], p["b_f"])      # (N, S, 4H)
    gates_b = _project_gates(x, p["wih_b"], p["b_b"])

    T = t_chunk or _time_chunk(S)
    Bt = b_tile or _batch_tile(N, 128)   # v7x-safe cap; v6e can raise to 256
    nB, nC = N // Bt, S // T

    fwd = lambda b, c: (b, c, 0)
    bwd = lambda b, c: (b, nC - 1 - c, 0)
    per_b = lambda b, c: (b, 0)
    cst = lambda b, c: (0, 0)

    in_specs = [
        pl.BlockSpec((Bt, T, 4 * H), fwd),
        pl.BlockSpec((Bt, T, 4 * H), bwd),
        pl.BlockSpec((Bt, 1), per_b),
        pl.BlockSpec((H, 4 * H), cst),
        pl.BlockSpec((H, 4 * H), cst),
    ]
    if emit_seq:
        out_specs = [pl.BlockSpec((Bt, T, H), fwd),
                     pl.BlockSpec((Bt, T, H), bwd)]
        out_shape = [jax.ShapeDtypeStruct((N, S, H), jnp.float32),
                     jax.ShapeDtypeStruct((N, S, H), jnp.float32)]
    else:
        out_specs = [pl.BlockSpec((Bt, H), per_b),
                     pl.BlockSpec((Bt, H), per_b)]
        out_shape = [jax.ShapeDtypeStruct((N, H), jnp.float32),
                     jax.ShapeDtypeStruct((N, H), jnp.float32)]

    return pl.pallas_call(
        _make_bilstm_kernel(emit_seq),
        grid=(nB, nC),
        in_specs=in_specs,
        out_specs=out_specs,
        out_shape=out_shape,
        scratch_shapes=[pltpu.VMEM((Bt, H), jnp.float32) for _ in range(4)],
        compiler_params=pltpu.CompilerParams(
            dimension_semantics=("parallel", "arbitrary"),
            vmem_limit_bytes=_VMEM_LIMIT),
    )(gates_f, gates_b, lens, p["whh_f"], p["whh_b"])


# ----------------------------------------------------------------------------
# CrossAttention: masked bidirectional attention + feature fusion + dense+ReLU.
# Consumes the fwd/bwd encoder halves (a- and b-rows routed via index maps).
# ----------------------------------------------------------------------------
def _cross_attn_kernel(af_ref, ab_ref, bf_ref, bb_ref, la_ref, lb_ref,
                       w_ref, bias_ref, out_ref):
    # Lane-concat the fwd/bwd halves ONCE so every matmul runs with K (or N)
    # = 2H, filling the 256-wide MXU on v6e/v7x; the 2H concat never hits HBM.
    a_cat = jnp.concatenate([af_ref[...], ab_ref[...]], axis=-1)   # (Bt,Sa,2H)
    b_cat = jnp.concatenate([bf_ref[...], bb_ref[...]], axis=-1)   # (Bt,Sb,2H)
    Sa, Sb = a_cat.shape[1], b_cat.shape[1]
    H2 = a_cat.shape[-1]
    la = la_ref[0]                       # (Bt,1) int32 valid length of "a"
    lb = lb_ref[0]                       # (Bt,1)
    neg = jnp.float32(-1e9)

    a_mx = a_cat.astype(MXU_DTYPE)       # hoisted invariant casts
    b_mx = b_cat.astype(MXU_DTYPE)

    cross = jnp.einsum('bqh,bkh->bqk', a_mx, b_mx,
                       preferred_element_type=jnp.float32)         # (Bt,Sa,Sb)
    # Reuse the score matrix via an XLU transpose (MXU has slack here; if a
    # bundle dump shows the XLU slot binding, swap for a second MXU bmm).
    cross_t = jnp.transpose(cross, (0, 2, 1))                      # (Bt,Sb,Sa)

    # key-side masks from lengths + iota (no (B,1,S) mask tensors DMA'd)
    kb = jax.lax.broadcasted_iota(jnp.int32, (1, 1, Sb), 2)
    ka = jax.lax.broadcasted_iota(jnp.int32, (1, 1, Sa), 2)
    row_attn = jax.nn.softmax(
        jnp.where(kb < lb[:, :, None], cross, neg), axis=-1)       # keys = b
    col_attn = jax.nn.softmax(
        jnp.where(ka < la[:, :, None], cross_t, neg), axis=-1)     # keys = a

    attn_a = jnp.einsum('bqk,bkh->bqh', row_attn.astype(MXU_DTYPE), b_mx,
                        preferred_element_type=jnp.float32)        # (Bt,Sa,2H)
    attn_b = jnp.einsum('bqk,bkh->bqh', col_attn.astype(MXU_DTYPE), a_mx,
                        preferred_element_type=jnp.float32)        # (Bt,Sb,2H)

    w = w_ref[...].astype(MXU_DTYPE)     # (8H, F), invariant cast hoisted
    bias = bias_ref[...]                 # (1, F) f32

    def dense_relu(x, attn):
        # Linear(8H -> F) over the implicit concat [x, attn, x-attn, x*attn]
        # as 4 slab matmuls with K=2H (no (.., 8H) feature tensor, bias-init).
        bt, s, _ = x.shape
        rows = bt * s
        acc = bias                       # broadcast on the first add
        for k, part in enumerate((x, attn, x - attn, x * attn)):
            acc = acc + jnp.dot(part.reshape(rows, H2).astype(MXU_DTYPE),
                                w[k * H2:(k + 1) * H2, :],
                                preferred_element_type=jnp.float32)
        return jnp.maximum(acc, 0.0).reshape(bt, s, -1)

    out_ref[0] = dense_relu(a_cat, attn_a)
    out_ref[1] = dense_relu(b_cat, attn_b)


def cross_attention(enc_f, enc_b, lens, p, *, b_tile=None):
    """enc_f/enc_b: (2B, S, H) encoder halves, rows [0:B]=text_a, [B:2B]=text_b.
    lens: (2B, 1) int32.  Returns (2, B, S, F): [0]=a-features, [1]=b-features."""
    N, S, H = enc_f.shape
    B = N // 2
    F = p["w"].shape[1]
    Bt = b_tile or _cross_batch_tile(B, S, H, F)
    nB = B // Bt
    lens3 = lens.reshape(2, B, 1)

    a3 = lambda i: (i, 0, 0)             # text-a rows of the stacked arrays
    b3 = lambda i: (i + nB, 0, 0)        # text-b rows
    a_len = lambda i: (0, i, 0)
    b_len = lambda i: (1, i, 0)
    cst = lambda i: (0, 0)

    return pl.pallas_call(
        _cross_attn_kernel,
        grid=(nB,),
        in_specs=[
            pl.BlockSpec((Bt, S, H), a3),      # enc_f, text-a rows
            pl.BlockSpec((Bt, S, H), a3),      # enc_b, text-a rows
            pl.BlockSpec((Bt, S, H), b3),      # enc_f, text-b rows
            pl.BlockSpec((Bt, S, H), b3),      # enc_b, text-b rows
            pl.BlockSpec((1, Bt, 1), a_len),
            pl.BlockSpec((1, Bt, 1), b_len),
            pl.BlockSpec((8 * H, F), cst),
            pl.BlockSpec((1, F), cst),
        ],
        out_specs=pl.BlockSpec((2, Bt, S, F), lambda i: (0, i, 0, 0)),
        out_shape=jax.ShapeDtypeStruct((2, B, S, F), jnp.float32),
        compiler_params=pltpu.CompilerParams(
            dimension_semantics=("parallel",),
            vmem_limit_bytes=_VMEM_LIMIT),
    )(enc_f, enc_b, enc_f, enc_b, lens3, lens3, p["w"], p["b"])


# ----------------------------------------------------------------------------
# Classifier (dense/tanh/dense) on the pooled (B,H) decoder means only.
# ----------------------------------------------------------------------------
def _classifier_kernel(paf_ref, pab_ref, pbf_ref, pbb_ref,
                       w1_ref, b1_ref, w2_ref, b2_ref, out_ref):
    H = paf_ref.shape[-1]
    w1 = w1_ref[...].astype(MXU_DTYPE)            # invariant cast hoisted
    # Linear(4H -> 2H) over the implicit concat [a_fwd, a_bwd, b_fwd, b_bwd],
    # slab-accumulated, bias-initialized.
    acc = b1_ref[...]
    for k, part in enumerate((paf_ref[0], pab_ref[0], pbf_ref[0], pbb_ref[0])):
        acc = acc + jnp.dot(part.astype(MXU_DTYPE), w1[k * H:(k + 1) * H, :],
                            preferred_element_type=jnp.float32)
    h = jnp.tanh(acc)
    out_ref[...] = _mm(h, w2_ref[...]) + b2_ref[...]


def classifier(pool_f, pool_b, p, num_labels, *, b_tile=None):
    """pool_f/pool_b: (2B, H) pooled decoder means, rows [0:B]=a, [B:2B]=b."""
    N, H = pool_f.shape
    B = N // 2
    pf = pool_f.reshape(2, B, H)                  # free reshape (contiguous)
    pb = pool_b.reshape(2, B, H)
    Bt = b_tile or _batch_tile(B, 256)
    nB = B // Bt

    a_map = lambda i: (0, i, 0)
    b_map = lambda i: (1, i, 0)
    cst = lambda i: (0, 0)

    return pl.pallas_call(
        _classifier_kernel,
        grid=(nB,),
        in_specs=[
            pl.BlockSpec((1, Bt, H), a_map),      # pool_f, a rows
            pl.BlockSpec((1, Bt, H), a_map),      # pool_b, a rows
            pl.BlockSpec((1, Bt, H), b_map),      # pool_f, b rows
            pl.BlockSpec((1, Bt, H), b_map),      # pool_b, b rows
            pl.BlockSpec((4 * H, 2 * H), cst),
            pl.BlockSpec((1, 2 * H), cst),
            pl.BlockSpec((2 * H, num_labels), cst),
            pl.BlockSpec((1, num_labels), cst),
        ],
        out_specs=pl.BlockSpec((Bt, num_labels), lambda i: (i, 0)),
        out_shape=jax.ShapeDtypeStruct((B, num_labels), jnp.float32),
        compiler_params=pltpu.CompilerParams(
            dimension_semantics=("parallel",),
            vmem_limit_bytes=_VMEM_LIMIT),
    )(pf, pb, pf, pb, p["w1"], p["b1"], p["w2"], p["b2"])


# ----------------------------------------------------------------------------
# SemAttn forward (eval mode)
# ----------------------------------------------------------------------------
def sem_attn_forward(params, a_ids, b_ids, a_mask, b_mask, num_labels):
    B, S = a_ids.shape
    # Stack text_a / text_b along batch: the shared encoder, decoder and
    # classifier each run as a single pallas_call over 2B rows.
    ids = jnp.concatenate([a_ids, b_ids], axis=0)                  # (2B, S)
    mask = jnp.concatenate([a_mask, b_mask], axis=0)
    lens = jnp.sum(mask.astype(jnp.int32), axis=-1).reshape(2 * B, 1)

    # frozen w2v embedding lookup (padding_idx=0 row is zero) -- XLA gather
    x = params["embedding"][ids]                                   # (2B, S, E)

    # Encoder: per-timestep outputs, fwd/bwd halves kept separate (no concat)
    enc_f, enc_b = bilstm(x, lens, params["encoder"], emit_seq=True)

    # CrossAttention + Linear + ReLU; a/b features land in one (2,B,S,F) slab
    cross_out = cross_attention(enc_f, enc_b, lens, params["cross"])
    dec_in = cross_out.reshape(2 * B, S, -1)       # contiguous -> free reshape

    # Decoder with the masked mean-pool fused into the LSTM kernel: the
    # per-timestep decoder outputs never hit HBM.
    pool_f, pool_b = bilstm(dec_in, lens, params["decoder"], emit_seq=False)

    # Classifier on the pooled means only
    return classifier(pool_f, pool_b, params["classifier"], num_labels)


# ----------------------------------------------------------------------------
# Deterministic parameter construction (synthetic; no checkpoint loading).
# LSTM weights are stored (in, 4H) i.e. transposed vs. PyTorch, with b_ih+b_hh
# pre-summed -- transpose/sum accordingly when loading a real checkpoint.
# ----------------------------------------------------------------------------
def init_params(key, vocab_size, in_feat, num_labels):
    def u(k, shape, scale=0.1):
        return jax.random.uniform(k, shape, jnp.float32, -scale, scale)

    keys = jax.random.split(key, 8)
    H = in_feat

    emb = u(keys[0], (vocab_size, in_feat), 0.5)
    emb = emb.at[0].set(0.0)   # padding_idx=0

    def lstm_params(k, input_dim):
        kk = jax.random.split(k, 6)
        return {
            "wih_f": u(kk[0], (input_dim, 4 * H)),
            "whh_f": u(kk[1], (H, 4 * H)),
            "b_f":   u(kk[2], (1, 4 * H)),          # b_ih + b_hh combined
            "wih_b": u(kk[3], (input_dim, 4 * H)),
            "whh_b": u(kk[4], (H, 4 * H)),
            "b_b":   u(kk[5], (1, 4 * H)),
        }

    kc = jax.random.split(keys[3], 2)
    kcl = jax.random.split(keys[4], 4)
    return {
        "embedding": emb,
        "encoder": lstm_params(keys[1], in_feat),    # input=in_feat, hidden=in_feat
        "decoder": lstm_params(keys[2], in_feat),    # input=in_feat (cross out)
        "cross": {                                   # Linear(4*(2*in_feat) -> in_feat)
            "w": u(kc[0], (8 * in_feat, in_feat)),
            "b": u(kc[1], (1, in_feat)),
        },
        "classifier": {                              # Linear(4F->2F), Linear(2F->labels)
            "w1": u(kcl[0], (4 * in_feat, 2 * in_feat)),
            "b1": u(kcl[1], (1, 2 * in_feat)),
            "w2": u(kcl[2], (2 * in_feat, num_labels)),
            "b2": u(kcl[3], (1, num_labels)),
        },
    }


if __name__ == "__main__":
    B, S, IN_FEAT, VOCAB, NUM_LABELS = 2, 8, 32, 50, 3

    key = jax.random.PRNGKey(0)
    kp, ka, kb = jax.random.split(key, 3)
    params = init_params(kp, VOCAB, IN_FEAT, NUM_LABELS)

    # variable-length sequences (first one full-length so padded max == S)
    lens_a = jnp.array([8, 5], dtype=jnp.int32)
    lens_b = jnp.array([8, 3], dtype=jnp.int32)
    pos = jnp.arange(S)[None, :]
    mask_a = pos < lens_a[:, None]
    mask_b = pos < lens_b[:, None]

    a_ids = (jax.random.randint(ka, (B, S), 1, VOCAB) * mask_a).astype(jnp.int32)
    b_ids = (jax.random.randint(kb, (B, S), 1, VOCAB) * mask_b).astype(jnp.int32)

    fwd = jax.jit(sem_attn_forward, static_argnums=(5,))
    logits = fwd(params, a_ids, b_ids, mask_a, mask_b, NUM_LABELS)
    logits = jax.block_until_ready(logits)
    assert logits.shape == (B, NUM_LABELS)
    print("KERNEL_OK")
</pallas_src>

<mosaic_0001>
module attributes {stable_mosaic.version = 11 : i64} {
  func.func @_cross_attn_kernel(%arg0: i32, %arg1: memref<2x8x32xf32, #tpu.memory_space<vmem>>, %arg2: memref<2x8x32xf32, #tpu.memory_space<vmem>>, %arg3: memref<2x8x32xf32, #tpu.memory_space<vmem>>, %arg4: memref<2x8x32xf32, #tpu.memory_space<vmem>>, %arg5: memref<1x2x1xi32, #tpu.memory_space<vmem>>, %arg6: memref<1x2x1xi32, #tpu.memory_space<vmem>>, %arg7: memref<256x32xf32, #tpu.memory_space<vmem>>, %arg8: memref<1x32xf32, #tpu.memory_space<vmem>>, %arg9: memref<2x2x8x32xf32, #tpu.memory_space<vmem>>) attributes {dimension_semantics = [#tpu.dimension_semantics<parallel>], iteration_bounds = array<i64: 1>, scalar_prefetch = 0 : i64, scratch_operands = 0 : i64, tpu.core_type = #tpu.core_type<tc>, window_params = [{transform_indices = @transform_0, window_bounds = array<i64: 2, 8, 32>}, {transform_indices = @transform_1, window_bounds = array<i64: 2, 8, 32>}, {transform_indices = @transform_2, window_bounds = array<i64: 2, 8, 32>}, {transform_indices = @transform_3, window_bounds = array<i64: 2, 8, 32>}, {transform_indices = @transform_4, window_bounds = array<i64: 1, 2, 1>}, {transform_indices = @transform_5, window_bounds = array<i64: 1, 2, 1>}, {pipeline_mode = #tpu.pipeline_mode<synchronous>, transform_indices = @transform_6, window_bounds = array<i64: 256, 32>}, {pipeline_mode = #tpu.pipeline_mode<synchronous>, transform_indices = @transform_7, window_bounds = array<i64: 1, 32>}, {transform_indices = @transform_8, window_bounds = array<i64: 2, 2, 8, 32>}]} {
    %c0 = arith.constant 0 : index
    %c0_0 = arith.constant 0 : index
    %c0_1 = arith.constant 0 : index
    %0 = vector.load %arg1[%c0, %c0_0, %c0_1] : memref<2x8x32xf32, #tpu.memory_space<vmem>>, vector<2x8x32xf32>
    %c0_2 = arith.constant 0 : index
    %c0_3 = arith.constant 0 : index
    %c0_4 = arith.constant 0 : index
    %1 = vector.load %arg2[%c0_2, %c0_3, %c0_4] : memref<2x8x32xf32, #tpu.memory_space<vmem>>, vector<2x8x32xf32>
    %2 = tpu.concatenate %0, %1 in 2 : vector<2x8x32xf32>, vector<2x8x32xf32> -> vector<2x8x64xf32>
    %c0_5 = arith.constant 0 : index
    %c0_6 = arith.constant 0 : index
    %c0_7 = arith.constant 0 : index
    %3 = vector.load %arg3[%c0_5, %c0_6, %c0_7] : memref<2x8x32xf32, #tpu.memory_space<vmem>>, vector<2x8x32xf32>
    %c0_8 = arith.constant 0 : index
    %c0_9 = arith.constant 0 : index
    %c0_10 = arith.constant 0 : index
    %4 = vector.load %arg4[%c0_8, %c0_9, %c0_10] : memref<2x8x32xf32, #tpu.memory_space<vmem>>, vector<2x8x32xf32>
    %5 = tpu.concatenate %3, %4 in 2 : vector<2x8x32xf32>, vector<2x8x32xf32> -> vector<2x8x64xf32>
    %c0_11 = arith.constant 0 : index
    %c0_12 = arith.constant 0 : index
    %c0_13 = arith.constant 0 : index
    %6 = vector.load %arg5[%c0_11, %c0_12, %c0_13] : memref<1x2x1xi32, #tpu.memory_space<vmem>>, vector<1x2x1xi32>
    %7 = vector.shape_cast %6 : vector<1x2x1xi32> to vector<2x1xi32>
    %c0_14 = arith.constant 0 : index
    %c0_15 = arith.constant 0 : index
    %c0_16 = arith.constant 0 : index
    %8 = vector.load %arg6[%c0_14, %c0_15, %c0_16] : memref<1x2x1xi32, #tpu.memory_space<vmem>>, vector<1x2x1xi32>
    %9 = vector.shape_cast %8 : vector<1x2x1xi32> to vector<2x1xi32>
    %10 = arith.truncf %2 : vector<2x8x64xf32> to vector<2x8x64xbf16>
    %11 = arith.truncf %5 : vector<2x8x64xf32> to vector<2x8x64xbf16>
    "tpu.trace_start"() <{level = 10 : i32, message = "bqh,bkh->bqk"}> : () -> ()
    %cst = arith.constant dense<0.000000e+00> : vector<2x8x8xf32>
    %12 = tpu.matmul %10, %11, %cst {dimension_numbers = #tpu.dot_dimension_numbers<[2], [2], [1], [1], [0, 0, 0, 1, 1, 1], [0], [0]>} : vector<2x8x64xbf16>, vector<2x8x64xbf16>, vector<2x8x8xf32> -> vector<2x8x8xf32>
    "tpu.trace_stop"() : () -> ()
    %13 = tpu.transpose %12, [0, 2, 1] : vector<2x8x8xf32> -> vector<2x8x8xf32>
    %14 = tpu.iota {dimensions = array<i32: 2>} : vector<1x1x8xi32>
    %15 = tpu.iota {dimensions = array<i32: 2>} : vector<1x1x8xi32>
    %16 = vector.shape_cast %9 : vector<2x1xi32> to vector<2x1x1xi32>
    %17 = vector.broadcast %14 : vector<1x1x8xi32> to vector<2x1x8xi32>
    %18 = vector.broadcast %16 : vector<2x1x1xi32> to vector<2x1x8xi32>
    %19 = arith.cmpi slt, %17, %18 : vector<2x1x8xi32>
    %cst_17 = arith.constant -1.000000e+09 : f32
    %20 = vector.shape_cast %19 : vector<2x1x8xi1> to vector<2x1x8xi1>
    %21 = vector.broadcast %20 : vector<2x1x8xi1> to vector<2x8x8xi1>
    %22 = vector.broadcast %cst_17 : f32 to vector<2x8x8xf32>
    %23 = arith.select %21, %12, %22 : vector<2x8x8xi1>, vector<2x8x8xf32>
    %cst_18 = arith.constant dense<0xFF800000> : vector<2x8xf32>
    %24 = vector.multi_reduction <maximumf>, %23, %cst_18 [2] : vector<2x8x8xf32> to vector<2x8xf32>
    %cst_19 = arith.constant 0xFF800000 : f32
    %25 = vector.broadcast %cst_19 : f32 to vector<2x8xf32>
    %26 = arith.maximumf %25, %24 : vector<2x8xf32>
    %27 = vector.shape_cast %26 : vector<2x8xf32> to vector<2x8x1xf32>
    %28 = vector.broadcast %27 : vector<2x8x1xf32> to vector<2x8x8xf32>
    %29 = arith.subf %23, %28 : vector<2x8x8xf32>
    %30 = math.exp %29 : vector<2x8x8xf32>
    %cst_20 = arith.constant dense<0.000000e+00> : vector<2x8xf32>
    %31 = vector.multi_reduction <add>, %30, %cst_20 [2] : vector<2x8x8xf32> to vector<2x8xf32>
    %32 = vector.shape_cast %31 : vector<2x8xf32> to vector<2x8x1xf32>
    %33 = vector.broadcast %32 : vector<2x8x1xf32> to vector<2x8x8xf32>
    %34 = arith.divf %30, %33 : vector<2x8x8xf32>
    %35 = vector.shape_cast %7 : vector<2x1xi32> to vector<2x1x1xi32>
    %36 = vector.broadcast %15 : vector<1x1x8xi32> to vector<2x1x8xi32>
    %37 = vector.broadcast %35 : vector<2x1x1xi32> to vector<2x1x8xi32>
    %38 = arith.cmpi slt, %36, %37 : vector<2x1x8xi32>
    %cst_21 = arith.constant -1.000000e+09 : f32
    %39 = vector.shape_cast %38 : vector<2x1x8xi1> to vector<2x1x8xi1>
    %40 = vector.broadcast %39 : vector<2x1x8xi1> to vector<2x8x8xi1>
    %41 = vector.broadcast %cst_21 : f32 to vector<2x8x8xf32>
    %42 = arith.select %40, %13, %41 : vector<2x8x8xi1>, vector<2x8x8xf32>
    %cst_22 = arith.constant dense<0xFF800000> : vector<2x8xf32>
    %43 = vector.multi_reduction <maximumf>, %42, %cst_22 [2] : vector<2x8x8xf32> to vector<2x8xf32>
    %cst_23 = arith.constant 0xFF800000 : f32
    %44 = vector.broadcast %cst_23 : f32 to vector<2x8xf32>
    %45 = arith.maximumf %44, %43 : vector<2x8xf32>
    %46 = vector.shape_cast %45 : vector<2x8xf32> to vector<2x8x1xf32>
    %47 = vector.broadcast %46 : vector<2x8x1xf32> to vector<2x8x8xf32>
    %48 = arith.subf %42, %47 : vector<2x8x8xf32>
    %49 = math.exp %48 : vector<2x8x8xf32>
    %cst_24 = arith.constant dense<0.000000e+00> : vector<2x8xf32>
    %50 = vector.multi_reduction <add>, %49, %cst_24 [2] : vector<2x8x8xf32> to vector<2x8xf32>
    %51 = vector.shape_cast %50 : vector<2x8xf32> to vector<2x8x1xf32>
    %52 = vector.broadcast %51 : vector<2x8x1xf32> to vector<2x8x8xf32>
    %53 = arith.divf %49, %52 : vector<2x8x8xf32>
    %54 = arith.truncf %34 : vector<2x8x8xf32> to vector<2x8x8xbf16>
    "tpu.trace_start"() <{level = 10 : i32, message = "bqk,bkh->bqh"}> : () -> ()
    %cst_25 = arith.constant dense<0.000000e+00> : vector<2x8x64xf32>
    %55 = tpu.matmul %54, %11, %cst_25 {dimension_numbers = #tpu.dot_dimension_numbers<[2], [1], [1], [2], [0, 0, 0, 1, 1, 2], [0], [0]>} : vector<2x8x8xbf16>, vector<2x8x64xbf16>, vector<2x8x64xf32> -> vector<2x8x64xf32>
    "tpu.trace_stop"() : () -> ()
    %56 = arith.truncf %53 : vector<2x8x8xf32> to vector<2x8x8xbf16>
    "tpu.trace_start"() <{level = 10 : i32, message = "bqk,bkh->bqh"}> : () -> ()
    %cst_26 = arith.constant dense<0.000000e+00> : vector<2x8x64xf32>
    %57 = tpu.matmul %56, %10, %cst_26 {dimension_numbers = #tpu.dot_dimension_numbers<[2], [1], [1], [2], [0, 0, 0, 1, 1, 2], [0], [0]>} : vector<2x8x8xbf16>, vector<2x8x64xbf16>, vector<2x8x64xf32> -> vector<2x8x64xf32>
    "tpu.trace_stop"() : () -> ()
    %c0_27 = arith.constant 0 : index
    %c0_28 = arith.constant 0 : index
    %58 = vector.load %arg7[%c0_27, %c0_28] : memref<256x32xf32, #tpu.memory_space<vmem>>, vector<256x32xf32>
    %59 = arith.truncf %58 : vector<256x32xf32> to vector<256x32xbf16>
    %c0_29 = arith.constant 0 : index
    %c0_30 = arith.constant 0 : index
    %60 = vector.load %arg8[%c0_29, %c0_30] : memref<1x32xf32, #tpu.memory_space<vmem>>, vector<1x32xf32>
    %61 = arith.subf %2, %55 : vector<2x8x64xf32>
    %62 = arith.mulf %2, %55 : vector<2x8x64xf32>
    %63 = vector.shape_cast %2 : vector<2x8x64xf32> to vector<16x64xf32>
    %64 = arith.truncf %63 : vector<16x64xf32> to vector<16x64xbf16>
    %65 = vector.extract_strided_slice %59 {offsets = [0, 0], sizes = [64, 32], strides = [1, 1]} : vector<256x32xbf16> to vector<64x32xbf16>
    %cst_31 = arith.constant dense<0.000000e+00> : vector<16x32xf32>
    %66 = tpu.matmul %64, %65, %cst_31 {dimension_numbers = #tpu.dot_dimension_numbers<[1], [0], [0], [1], [0, 0, 1, 1], [], []>} : vector<16x64xbf16>, vector<64x32xbf16>, vector<16x32xf32> -> vector<16x32xf32>
    %67 = vector.broadcast %60 : vector<1x32xf32> to vector<16x32xf32>
    %68 = arith.addf %67, %66 : vector<16x32xf32>
    %69 = vector.shape_cast %55 : vector<2x8x64xf32> to vector<16x64xf32>
    %70 = arith.truncf %69 : vector<16x64xf32> to vector<16x64xbf16>
    %71 = vector.extract_strided_slice %59 {offsets = [64, 0], sizes = [64, 32], strides = [1, 1]} : vector<256x32xbf16> to vector<64x32xbf16>
    %cst_32 = arith.constant dense<0.000000e+00> : vector<16x32xf32>
    %72 = tpu.matmul %70, %71, %cst_32 {dimension_numbers = #tpu.dot_dimension_numbers<[1], [0], [0], [1], [0, 0, 1, 1], [], []>} : vector<16x64xbf16>, vector<64x32xbf16>, vector<16x32xf32> -> vector<16x32xf32>
    %73 = arith.addf %68, %72 : vector<16x32xf32>
    %74 = vector.shape_cast %61 : vector<2x8x64xf32> to vector<16x64xf32>
    %75 = arith.truncf %74 : vector<16x64xf32> to vector<16x64xbf16>
    %76 = vector.extract_strided_slice %59 {offsets = [128, 0], sizes = [64, 32], strides = [1, 1]} : vector<256x32xbf16> to vector<64x32xbf16>
    %cst_33 = arith.constant dense<0.000000e+00> : vector<16x32xf32>
    %77 = tpu.matmul %75, %76, %cst_33 {dimension_numbers = #tpu.dot_dimension_numbers<[1], [0], [0], [1], [0, 0, 1, 1], [], []>} : vector<16x64xbf16>, vector<64x32xbf16>, vector<16x32xf32> -> vector<16x32xf32>
    %78 = arith.addf %73, %77 : vector<16x32xf32>
    %79 = vector.shape_cast %62 : vector<2x8x64xf32> to vector<16x64xf32>
    %80 = arith.truncf %79 : vector<16x64xf32> to vector<16x64xbf16>
    %81 = vector.extract_strided_slice %59 {offsets = [192, 0], sizes = [64, 32], strides = [1, 1]} : vector<256x32xbf16> to vector<64x32xbf16>
    %cst_34 = arith.constant dense<0.000000e+00> : vector<16x32xf32>
    %82 = tpu.matmul %80, %81, %cst_34 {dimension_numbers = #tpu.dot_dimension_numbers<[1], [0], [0], [1], [0, 0, 1, 1], [], []>} : vector<16x64xbf16>, vector<64x32xbf16>, vector<16x32xf32> -> vector<16x32xf32>
    %83 = arith.addf %78, %82 : vector<16x32xf32>
    %cst_35 = arith.constant 0.000000e+00 : f32
    %84 = vector.broadcast %cst_35 : f32 to vector<16x32xf32>
    %85 = arith.maximumf %83, %84 : vector<16x32xf32>
    %86 = vector.shape_cast %85 : vector<16x32xf32> to vector<2x8x32xf32>
    %c0_36 = arith.constant 0 : index
    %c0_37 = arith.constant 0 : index
    %c0_38 = arith.constant 0 : index
    %c0_39 = arith.constant 0 : index
    %87 = vector.load %arg9[%c0_36, %c0_37, %c0_38, %c0_39] : memref<2x2x8x32xf32, #tpu.memory_space<vmem>>, vector<1x2x8x32xf32>
    %88 = vector.shape_cast %87 : vector<1x2x8x32xf32> to vector<2x8x32xf32>
    %89 = vector.shape_cast %86 : vector<2x8x32xf32> to vector<1x2x8x32xf32>
    tpu.vector_store %arg9[%c0_36, %c0_37, %c0_38, %c0_39], %89 {strides = array<i32>} : memref<2x2x8x32xf32, #tpu.memory_space<vmem>>, vector<1x2x8x32xf32>,
    %90 = arith.subf %5, %57 : vector<2x8x64xf32>
    %91 = arith.mulf %5, %57 : vector<2x8x64xf32>
    %92 = vector.shape_cast %5 : vector<2x8x64xf32> to vector<16x64xf32>
    %93 = arith.truncf %92 : vector<16x64xf32> to vector<16x64xbf16>
    %94 = vector.extract_strided_slice %59 {offsets = [0, 0], sizes = [64, 32], strides = [1, 1]} : vector<256x32xbf16> to vector<64x32xbf16>
    %cst_40 = arith.constant dense<0.000000e+00> : vector<16x32xf32>
    %95 = tpu.matmul %93, %94, %cst_40 {dimension_numbers = #tpu.dot_dimension_numbers<[1], [0], [0], [1], [0, 0, 1, 1], [], []>} : vector<16x64xbf16>, vector<64x32xbf16>, vector<16x32xf32> -> vector<16x32xf32>
    %96 = vector.broadcast %60 : vector<1x32xf32> to vector<16x32xf32>
    %97 = arith.addf %96, %95 : vector<16x32xf32>
    %98 = vector.shape_cast %57 : vector<2x8x64xf32> to vector<16x64xf32>
    %99 = arith.truncf %98 : vector<16x64xf32> to vector<16x64xbf16>
    %100 = vector.extract_strided_slice %59 {offsets = [64, 0], sizes = [64, 32], strides = [1, 1]} : vector<256x32xbf16> to vector<64x32xbf16>
    %cst_41 = arith.constant dense<0.000000e+00> : vector<16x32xf32>
    %101 = tpu.matmul %99, %100, %cst_41 {dimension_numbers = #tpu.dot_dimension_numbers<[1], [0], [0], [1], [0, 0, 1, 1], [], []>} : vector<16x64xbf16>, vector<64x32xbf16>, vector<16x32xf32> -> vector<16x32xf32>
    %102 = arith.addf %97, %101 : vector<16x32xf32>
    %103 = vector.shape_cast %90 : vector<2x8x64xf32> to vector<16x64xf32>
    %104 = arith.truncf %103 : vector<16x64xf32> to vector<16x64xbf16>
    %105 = vector.extract_strided_slice %59 {offsets = [128, 0], sizes = [64, 32], strides = [1, 1]} : vector<256x32xbf16> to vector<64x32xbf16>
    %cst_42 = arith.constant dense<0.000000e+00> : vector<16x32xf32>
    %106 = tpu.matmul %104, %105, %cst_42 {dimension_numbers = #tpu.dot_dimension_numbers<[1], [0], [0], [1], [0, 0, 1, 1], [], []>} : vector<16x64xbf16>, vector<64x32xbf16>, vector<16x32xf32> -> vector<16x32xf32>
    %107 = arith.addf %102, %106 : vector<16x32xf32>
    %108 = vector.shape_cast %91 : vector<2x8x64xf32> to vector<16x64xf32>
    %109 = arith.truncf %108 : vector<16x64xf32> to vector<16x64xbf16>
    %110 = vector.extract_strided_slice %59 {offsets = [192, 0], sizes = [64, 32], strides = [1, 1]} : vector<256x32xbf16> to vector<64x32xbf16>
    %cst_43 = arith.constant dense<0.000000e+00> : vector<16x32xf32>
    %111 = tpu.matmul %109, %110, %cst_43 {dimension_numbers = #tpu.dot_dimension_numbers<[1], [0], [0], [1], [0, 0, 1, 1], [], []>} : vector<16x64xbf16>, vector<64x32xbf16>, vector<16x32xf32> -> vector<16x32xf32>
    %112 = arith.addf %107, %111 : vector<16x32xf32>
    %cst_44 = arith.constant 0.000000e+00 : f32
    %113 = vector.broadcast %cst_44 : f32 to vector<16x32xf32>
    %114 = arith.maximumf %112, %113 : vector<16x32xf32>
    %115 = vector.shape_cast %114 : vector<16x32xf32> to vector<2x8x32xf32>
    %c1 = arith.constant 1 : index
    %c0_45 = arith.constant 0 : index
    %c0_46 = arith.constant 0 : index
    %c0_47 = arith.constant 0 : index
    %116 = vector.load %arg9[%c1, %c0_45, %c0_46, %c0_47] : memref<2x2x8x32xf32, #tpu.memory_space<vmem>>, vector<1x2x8x32xf32>
    %117 = vector.shape_cast %116 : vector<1x2x8x32xf32> to vector<2x8x32xf32>
    %118 = vector.shape_cast %115 : vector<2x8x32xf32> to vector<1x2x8x32xf32>
    tpu.vector_store %arg9[%c1, %c0_45, %c0_46, %c0_47], %118 {strides = array<i32>} : memref<2x2x8x32xf32, #tpu.memory_space<vmem>>, vector<1x2x8x32xf32>,
    return
  }
  func.func @transform_0(%arg0: i32) -> (i32, i32, i32) {
    %c0_i32 = arith.constant 0 : i32
    %c0_i32_0 = arith.constant 0 : i32
    %c0_i32_1 = arith.constant 0 : i32
    return %arg0, %c0_i32, %c0_i32_0 : i32, i32, i32
  }
  func.func @transform_1(%arg0: i32) -> (i32, i32, i32) {
    %c0_i32 = arith.constant 0 : i32
    %c0_i32_0 = arith.constant 0 : i32
    %c0_i32_1 = arith.constant 0 : i32
    return %arg0, %c0_i32, %c0_i32_0 : i32, i32, i32
  }
  func.func @transform_2(%arg0: i32) -> (i32, i32, i32) {
    %c1_i32 = arith.constant 1 : i32
    %0 = arith.addi %arg0, %c1_i32 : i32
    %c0_i32 = arith.constant 0 : i32
    %c0_i32_0 = arith.constant 0 : i32
    %c0_i32_1 = arith.constant 0 : i32
    return %0, %c0_i32, %c0_i32_0 : i32, i32, i32
  }
  func.func @transform_3(%arg0: i32) -> (i32, i32, i32) {
    %c1_i32 = arith.constant 1 : i32
    %0 = arith.addi %arg0, %c1_i32 : i32
    %c0_i32 = arith.constant 0 : i32
    %c0_i32_0 = arith.constant 0 : i32
    %c0_i32_1 = arith.constant 0 : i32
    return %0, %c0_i32, %c0_i32_0 : i32, i32, i32
  }
  func.func @transform_4(%arg0: i32) -> (i32, i32, i32) {
    %c0_i32 = arith.constant 0 : i32
    %c0_i32_0 = arith.constant 0 : i32
    %c0_i32_1 = arith.constant 0 : i32
    return %c0_i32, %arg0, %c0_i32_0 : i32, i32, i32
  }
  func.func @transform_5(%arg0: i32) -> (i32, i32, i32) {
    %c1_i32 = arith.constant 1 : i32
    %c0_i32 = arith.constant 0 : i32
    %c0_i32_0 = arith.constant 0 : i32
    return %c1_i32, %arg0, %c0_i32 : i32, i32, i32
  }
  func.func @transform_6(%arg0: i32) -> (i32, i32) {
    %c0_i32 = arith.constant 0 : i32
    %c0_i32_0 = arith.constant 0 : i32
    %c0_i32_1 = arith.constant 0 : i32
    return %c0_i32, %c0_i32_0 : i32, i32
  }
  func.func @transform_7(%arg0: i32) -> (i32, i32) {
    %c0_i32 = arith.constant 0 : i32
    %c0_i32_0 = arith.constant 0 : i32
    %c0_i32_1 = arith.constant 0 : i32
    return %c0_i32, %c0_i32_0 : i32, i32
  }
  func.func @transform_8(%arg0: i32) -> (i32, i32, i32, i32) {
    %c0_i32 = arith.constant 0 : i32
    %c0_i32_0 = arith.constant 0 : i32
    %c0_i32_1 = arith.constant 0 : i32
    %c0_i32_2 = arith.constant 0 : i32
    return %c0_i32, %arg0, %c0_i32_0, %c0_i32_1 : i32, i32, i32, i32
  }
}

module attributes {stable_mosaic.version = 11 : i64} {
  func.func @kernel(%arg0: i32, %arg1: i32, %arg2: memref<4x8x128xbf16, #tpu.memory_space<vmem>>, %arg3: memref<4x8x128xbf16, #tpu.memory_space<vmem>>, %arg4: memref<4x1xi32, #tpu.memory_space<vmem>>, %arg5: memref<32x128xf32, #tpu.memory_space<vmem>>, %arg6: memref<32x128xf32, #tpu.memory_space<vmem>>, %arg7: memref<4x8x32xf32, #tpu.memory_space<vmem>>, %arg8: memref<4x8x32xf32, #tpu.memory_space<vmem>>, %arg9: memref<4x32xf32, #tpu.memory_space<vmem>>, %arg10: memref<4x32xf32, #tpu.memory_space<vmem>>, %arg11: memref<4x32xf32, #tpu.memory_space<vmem>>, %arg12: memref<4x32xf32, #tpu.memory_space<vmem>>) attributes {dimension_semantics = [#tpu.dimension_semantics<parallel>, #tpu.dimension_semantics<arbitrary>], iteration_bounds = array<i64: 1, 1>, scalar_prefetch = 0 : i64, scratch_operands = 4 : i64, tpu.core_type = #tpu.core_type<tc>, window_params = [{transform_indices = @transform_0, window_bounds = array<i64: 4, 8, 128>}, {transform_indices = @transform_1, window_bounds = array<i64: 4, 8, 128>}, {transform_indices = @transform_2, window_bounds = array<i64: 4, 1>}, {pipeline_mode = #tpu.pipeline_mode<synchronous>, transform_indices = @transform_3, window_bounds = array<i64: 32, 128>}, {pipeline_mode = #tpu.pipeline_mode<synchronous>, transform_indices = @transform_4, window_bounds = array<i64: 32, 128>}, {transform_indices = @transform_5, window_bounds = array<i64: 4, 8, 32>}, {transform_indices = @transform_6, window_bounds = array<i64: 4, 8, 32>}]} {
    %c0_i32 = arith.constant 0 : i32
    %0 = arith.cmpi eq, %arg1, %c0_i32 : i32
    %1 = arith.extui %0 : i1 to i32
    %c0_i32_0 = arith.constant 0 : i32
    %2 = arith.cmpi ne, %1, %c0_i32_0 : i32
    scf.if %2 {
      %cst_201 = arith.constant 0.000000e+00 : f32
      %753 = vector.broadcast %cst_201 : f32 to vector<4x32xf32>
      %c0_202 = arith.constant 0 : index
      %c0_203 = arith.constant 0 : index
      %754 = vector.load %arg9[%c0_202, %c0_203] : memref<4x32xf32, #tpu.memory_space<vmem>>, vector<4x32xf32>
      tpu.vector_store %arg9[%c0_202, %c0_203], %753 {strides = array<i32>} : memref<4x32xf32, #tpu.memory_space<vmem>>, vector<4x32xf32>,
      %cst_204 = arith.constant 0.000000e+00 : f32
      %755 = vector.broadcast %cst_204 : f32 to vector<4x32xf32>
      %c0_205 = arith.constant 0 : index
      %c0_206 = arith.constant 0 : index
      %756 = vector.load %arg10[%c0_205, %c0_206] : memref<4x32xf32, #tpu.memory_space<vmem>>, vector<4x32xf32>
      tpu.vector_store %arg10[%c0_205, %c0_206], %755 {strides = array<i32>} : memref<4x32xf32, #tpu.memory_space<vmem>>, vector<4x32xf32>,
      %cst_207 = arith.constant 0.000000e+00 : f32
      %757 = vector.broadcast %cst_207 : f32 to vector<4x32xf32>
      %c0_208 = arith.constant 0 : index
      %c0_209 = arith.constant 0 : index
      %758 = vector.load %arg11[%c0_208, %c0_209] : memref<4x32xf32, #tpu.memory_space<vmem>>, vector<4x32xf32>
      tpu.vector_store %arg11[%c0_208, %c0_209], %757 {strides = array<i32>} : memref<4x32xf32, #tpu.memory_space<vmem>>, vector<4x32xf32>,
      %cst_210 = arith.constant 0.000000e+00 : f32
      %759 = vector.broadcast %cst_210 : f32 to vector<4x32xf32>
      %c0_211 = arith.constant 0 : index
      %c0_212 = arith.constant 0 : index
      %760 = vector.load %arg12[%c0_211, %c0_212] : memref<4x32xf32, #tpu.memory_space<vmem>>, vector<4x32xf32>
      tpu.vector_store %arg12[%c0_211, %c0_212], %759 {strides = array<i32>} : memref<4x32xf32, #tpu.memory_space<vmem>>, vector<4x32xf32>,
    } else {
    }
    %c0 = arith.constant 0 : index
    %c0_1 = arith.constant 0 : index
    %3 = vector.load %arg4[%c0, %c0_1] : memref<4x1xi32, #tpu.memory_space<vmem>>, vector<4x1xi32>
    %c0_2 = arith.constant 0 : index
    %c0_3 = arith.constant 0 : index
    %4 = vector.load %arg5[%c0_2, %c0_3] : memref<32x128xf32, #tpu.memory_space<vmem>>, vector<32x128xf32>
    %c0_4 = arith.constant 0 : index
    %c0_5 = arith.constant 0 : index
    %5 = vector.load %arg6[%c0_4, %c0_5] : memref<32x128xf32, #tpu.memory_space<vmem>>, vector<32x128xf32>
    %c0_6 = arith.constant 0 : index
    %c0_7 = arith.constant 0 : index
    %6 = vector.load %arg9[%c0_6, %c0_7] : memref<4x32xf32, #tpu.memory_space<vmem>>, vector<4x32xf32>
    %c0_8 = arith.constant 0 : index
    %c0_9 = arith.constant 0 : index
    %7 = vector.load %arg10[%c0_8, %c0_9] : memref<4x32xf32, #tpu.memory_space<vmem>>, vector<4x32xf32>
    %c0_10 = arith.constant 0 : index
    %c0_11 = arith.constant 0 : index
    %8 = vector.load %arg11[%c0_10, %c0_11] : memref<4x32xf32, #tpu.memory_space<vmem>>, vector<4x32xf32>
    %c0_12 = arith.constant 0 : index
    %c0_13 = arith.constant 0 : index
    %9 = vector.load %arg12[%c0_12, %c0_13] : memref<4x32xf32, #tpu.memory_space<vmem>>, vector<4x32xf32>
    %c8_i32 = arith.constant 8 : i32
    %10 = arith.muli %arg1, %c8_i32 : i32
    %c0_i32_14 = arith.constant 0 : i32
    %11 = arith.subi %c0_i32_14, %arg1 : i32
    %c8_i32_15 = arith.constant 8 : i32
    %12 = arith.muli %11, %c8_i32_15 : i32
    %c0_i32_16 = arith.constant 0 : i32
    %13 = arith.addi %10, %c0_i32_16 : i32
    %14 = vector.broadcast %13 : i32 to vector<4x1xi32>
    %15 = arith.cmpi slt, %14, %3 : vector<4x1xi32>
    %c0_17 = arith.constant 0 : index
    %c0_18 = arith.constant 0 : index
    %c0_19 = arith.constant 0 : index
    %16 = vector.load %arg2[%c0_17, %c0_18, %c0_19] : memref<4x8x128xbf16, #tpu.memory_space<vmem>>, vector<4x1x128xbf16>
    %17 = vector.shape_cast %16 : vector<4x1x128xbf16> to vector<4x128xbf16>
    %cst = arith.constant dense<0.000000e+00> : vector<4x128xf32>
    %18 = tpu.matmul %6, %4, %cst {dimension_numbers = #tpu.dot_dimension_numbers<[1], [0], [0], [1], [0, 0, 1, 1], [], []>} : vector<4x32xf32>, vector<32x128xf32>, vector<4x128xf32> -> vector<4x128xf32>
    %19 = arith.extf %17 : vector<4x128xbf16> to vector<4x128xf32>
    %20 = arith.addf %18, %19 : vector<4x128xf32>
    %21 = vector.extract_strided_slice %20 {offsets = [0, 0], sizes = [4, 32], strides = [1, 1]} : vector<4x128xf32> to vector<4x32xf32>
    %22 = arith.negf %21 : vector<4x32xf32>
    %23 = math.exp %22 : vector<4x32xf32>
    %cst_20 = arith.constant 1.000000e+00 : f32
    %24 = vector.broadcast %cst_20 : f32 to vector<4x32xf32>
    %25 = arith.addf %24, %23 : vector<4x32xf32>
    %26 = arith.divf %24, %25 : vector<4x32xf32>
    %27 = vector.extract_strided_slice %20 {offsets = [0, 32], sizes = [4, 32], strides = [1, 1]} : vector<4x128xf32> to vector<4x32xf32>
    %28 = arith.negf %27 : vector<4x32xf32>
    %29 = math.exp %28 : vector<4x32xf32>
    %cst_21 = arith.constant 1.000000e+00 : f32
    %30 = vector.broadcast %cst_21 : f32 to vector<4x32xf32>
    %31 = arith.addf %30, %29 : vector<4x32xf32>
    %32 = arith.divf %30, %31 : vector<4x32xf32>
    %33 = vector.extract_strided_slice %20 {offsets = [0, 64], sizes = [4, 32], strides = [1, 1]} : vector<4x128xf32> to vector<4x32xf32>
    %34 = math.tanh %33 : vector<4x32xf32>
    %35 = vector.extract_strided_slice %20 {offsets = [0, 96], sizes = [4, 32], strides = [1, 1]} : vector<4x128xf32> to vector<4x32xf32>
    %36 = arith.negf %35 : vector<4x32xf32>
    %37 = math.exp %36 : vector<4x32xf32>
    %cst_22 = arith.constant 1.000000e+00 : f32
    %38 = vector.broadcast %cst_22 : f32 to vector<4x32xf32>
    %39 = arith.addf %38, %37 : vector<4x32xf32>
    %40 = arith.divf %38, %39 : vector<4x32xf32>
    %41 = arith.mulf %32, %7 : vector<4x32xf32>
    %42 = arith.mulf %26, %34 : vector<4x32xf32>
    %43 = arith.addf %41, %42 : vector<4x32xf32>
    %44 = math.tanh %43 : vector<4x32xf32>
    %45 = arith.mulf %40, %44 : vector<4x32xf32>
    %cst_23 = arith.constant 0.000000e+00 : f32
    %46 = vector.shape_cast %15 : vector<4x1xi1> to vector<4x1xi1>
    %47 = vector.broadcast %46 : vector<4x1xi1> to vector<4x32xi1>
    %48 = vector.broadcast %cst_23 : f32 to vector<4x32xf32>
    %49 = arith.select %47, %45, %48 : vector<4x32xi1>, vector<4x32xf32>
    %50 = vector.shape_cast %15 : vector<4x1xi1> to vector<4x1xi1>
    %51 = vector.broadcast %50 : vector<4x1xi1> to vector<4x32xi1>
    %52 = arith.select %51, %45, %6 : vector<4x32xi1>, vector<4x32xf32>
    %53 = vector.shape_cast %15 : vector<4x1xi1> to vector<4x1xi1>
    %54 = vector.broadcast %53 : vector<4x1xi1> to vector<4x32xi1>
    %55 = arith.select %54, %43, %7 : vector<4x32xi1>, vector<4x32xf32>
    %c7_i32 = arith.constant 7 : i32
    %56 = arith.addi %12, %c7_i32 : i32
    %57 = vector.broadcast %56 : i32 to vector<4x1xi32>
    %58 = arith.cmpi slt, %57, %3 : vector<4x1xi32>
    %c0_24 = arith.constant 0 : index
    %c7 = arith.constant 7 : index
    %c0_25 = arith.constant 0 : index
    %59 = vector.load %arg3[%c0_24, %c7, %c0_25] : memref<4x8x128xbf16, #tpu.memory_space<vmem>>, vector<4x1x128xbf16>
    %60 = vector.shape_cast %59 : vector<4x1x128xbf16> to vector<4x128xbf16>
    %cst_26 = arith.constant dense<0.000000e+00> : vector<4x128xf32>
    %61 = tpu.matmul %8, %5, %cst_26 {dimension_numbers = #tpu.dot_dimension_numbers<[1], [0], [0], [1], [0, 0, 1, 1], [], []>} : vector<4x32xf32>, vector<32x128xf32>, vector<4x128xf32> -> vector<4x128xf32>
    %62 = arith.extf %60 : vector<4x128xbf16> to vector<4x128xf32>
    %63 = arith.addf %61, %62 : vector<4x128xf32>
    %64 = vector.extract_strided_slice %63 {offsets = [0, 0], sizes = [4, 32], strides = [1, 1]} : vector<4x128xf32> to vector<4x32xf32>
    %65 = arith.negf %64 : vector<4x32xf32>
    %66 = math.exp %65 : vector<4x32xf32>
    %cst_27 = arith.constant 1.000000e+00 : f32
    %67 = vector.broadcast %cst_27 : f32 to vector<4x32xf32>
    %68 = arith.addf %67, %66 : vector<4x32xf32>
    %69 = arith.divf %67, %68 : vector<4x32xf32>
    %70 = vector.extract_strided_slice %63 {offsets = [0, 32], sizes = [4, 32], strides = [1, 1]} : vector<4x128xf32> to vector<4x32xf32>
    %71 = arith.negf %70 : vector<4x32xf32>
    %72 = math.exp %71 : vector<4x32xf32>
    %cst_28 = arith.constant 1.000000e+00 : f32
    %73 = vector.broadcast %cst_28 : f32 to vector<4x32xf32>
    %74 = arith.addf %73, %72 : vector<4x32xf32>
    %75 = arith.divf %73, %74 : vector<4x32xf32>
    %76 = vector.extract_strided_slice %63 {offsets = [0, 64], sizes = [4, 32], strides = [1, 1]} : vector<4x128xf32> to vector<4x32xf32>
    %77 = math.tanh %76 : vector<4x32xf32>
    %78 = vector.extract_strided_slice %63 {offsets = [0, 96], sizes = [4, 32], strides = [1, 1]} : vector<4x128xf32> to vector<4x32xf32>
    %79 = arith.negf %78 : vector<4x32xf32>
    %80 = math.exp %79 : vector<4x32xf32>
    %cst_29 = arith.constant 1.000000e+00 : f32
    %81 = vector.broadcast %cst_29 : f32 to vector<4x32xf32>
    %82 = arith.addf %81, %80 : vector<4x32xf32>
    %83 = arith.divf %81, %82 : vector<4x32xf32>
    %84 = arith.mulf %75, %9 : vector<4x32xf32>
    %85 = arith.mulf %69, %77 : vector<4x32xf32>
    %86 = arith.addf %84, %85 : vector<4x32xf32>
    %87 = math.tanh %86 : vector<4x32xf32>
    %88 = arith.mulf %83, %87 : vector<4x32xf32>
    %cst_30 = arith.constant 0.000000e+00 : f32
    %89 = vector.shape_cast %58 : vector<4x1xi1> to vector<4x1xi1>
    %90 = vector.broadcast %89 : vector<4x1xi1> to vector<4x32xi1>
    %91 = vector.broadcast %cst_30 : f32 to vector<4x32xf32>
    %92 = arith.select %90, %88, %91 : vector<4x32xi1>, vector<4x32xf32>
    %93 = vector.shape_cast %58 : vector<4x1xi1> to vector<4x1xi1>
    %94 = vector.broadcast %93 : vector<4x1xi1> to vector<4x32xi1>
    %95 = arith.select %94, %88, %8 : vector<4x32xi1>, vector<4x32xf32>
    %96 = vector.shape_cast %58 : vector<4x1xi1> to vector<4x1xi1>
    %97 = vector.broadcast %96 : vector<4x1xi1> to vector<4x32xi1>
    %98 = arith.select %97, %86, %9 : vector<4x32xi1>, vector<4x32xf32>
    %c0_31 = arith.constant 0 : index
    %c0_32 = arith.constant 0 : index
    %c0_33 = arith.constant 0 : index
    %99 = vector.load %arg7[%c0_31, %c0_32, %c0_33] : memref<4x8x32xf32, #tpu.memory_space<vmem>>, vector<4x1x32xf32>
    %100 = vector.shape_cast %99 : vector<4x1x32xf32> to vector<4x32xf32>
    %101 = vector.shape_cast %49 : vector<4x32xf32> to vector<4x1x32xf32>
    tpu.vector_store %arg7[%c0_31, %c0_32, %c0_33], %101 {strides = array<i32>} : memref<4x8x32xf32, #tpu.memory_space<vmem>>, vector<4x1x32xf32>,
    %c0_34 = arith.constant 0 : index
    %c7_35 = arith.constant 7 : index
    %c0_36 = arith.constant 0 : index
    %102 = vector.load %arg8[%c0_34, %c7_35, %c0_36] : memref<4x8x32xf32, #tpu.memory_space<vmem>>, vector<4x1x32xf32>
    %103 = vector.shape_cast %102 : vector<4x1x32xf32> to vector<4x32xf32>
    %104 = vector.shape_cast %92 : vector<4x32xf32> to vector<4x1x32xf32>
    tpu.vector_store %arg8[%c0_34, %c7_35, %c0_36], %104 {strides = array<i32>} : memref<4x8x32xf32, #tpu.memory_space<vmem>>, vector<4x1x32xf32>,
    %c1_i32 = arith.constant 1 : i32
    %105 = arith.addi %10, %c1_i32 : i32
    %106 = vector.broadcast %105 : i32 to vector<4x1xi32>
    %107 = arith.cmpi slt, %106, %3 : vector<4x1xi32>
    %c0_37 = arith.constant 0 : index
    %c1 = arith.constant 1 : index
    %c0_38 = arith.constant 0 : index
    %108 = vector.load %arg2[%c0_37, %c1, %c0_38] : memref<4x8x128xbf16, #tpu.memory_space<vmem>>, vector<4x1x128xbf16>
    %109 = vector.shape_cast %108 : vector<4x1x128xbf16> to vector<4x128xbf16>
    %cst_39 = arith.constant dense<0.000000e+00> : vector<4x128xf32>
    %110 = tpu.matmul %52, %4, %cst_39 {dimension_numbers = #tpu.dot_dimension_numbers<[1], [0], [0], [1], [0, 0, 1, 1], [], []>} : vector<4x32xf32>, vector<32x128xf32>, vector<4x128xf32> -> vector<4x128xf32>
    %111 = arith.extf %109 : vector<4x128xbf16> to vector<4x128xf32>
    %112 = arith.addf %110, %111 : vector<4x128xf32>
    %113 = vector.extract_strided_slice %112 {offsets = [0, 0], sizes = [4, 32], strides = [1, 1]} : vector<4x128xf32> to vector<4x32xf32>
    %114 = arith.negf %113 : vector<4x32xf32>
    %115 = math.exp %114 : vector<4x32xf32>
    %cst_40 = arith.constant 1.000000e+00 : f32
    %116 = vector.broadcast %cst_40 : f32 to vector<4x32xf32>
    %117 = arith.addf %116, %115 : vector<4x32xf32>
    %118 = arith.divf %116, %117 : vector<4x32xf32>
    %119 = vector.extract_strided_slice %112 {offsets = [0, 32], sizes = [4, 32], strides = [1, 1]} : vector<4x128xf32> to vector<4x32xf32>
    %120 = arith.negf %119 : vector<4x32xf32>
    %121 = math.exp %120 : vector<4x32xf32>
    %cst_41 = arith.constant 1.000000e+00 : f32
    %122 = vector.broadcast %cst_41 : f32 to vector<4x32xf32>
    %123 = arith.addf %122, %121 : vector<4x32xf32>
    %124 = arith.divf %122, %123 : vector<4x32xf32>
    %125 = vector.extract_strided_slice %112 {offsets = [0, 64], sizes = [4, 32], strides = [1, 1]} : vector<4x128xf32> to vector<4x32xf32>
    %126 = math.tanh %125 : vector<4x32xf32>
    %127 = vector.extract_strided_slice %112 {offsets = [0, 96], sizes = [4, 32], strides = [1, 1]} : vector<4x128xf32> to vector<4x32xf32>
    %128 = arith.negf %127 : vector<4x32xf32>
    %129 = math.exp %128 : vector<4x32xf32>
    %cst_42 = arith.constant 1.000000e+00 : f32
    %130 = vector.broadcast %cst_42 : f32 to vector<4x32xf32>
    %131 = arith.addf %130, %129 : vector<4x32xf32>
    %132 = arith.divf %130, %131 : vector<4x32xf32>
    %133 = arith.mulf %124, %55 : vector<4x32xf32>
    %134 = arith.mulf %118, %126 : vector<4x32xf32>
    %135 = arith.addf %133, %134 : vector<4x32xf32>
    %136 = math.tanh %135 : vector<4x32xf32>
    %137 = arith.mulf %132, %136 : vector<4x32xf32>
    %cst_43 = arith.constant 0.000000e+00 : f32
    %138 = vector.shape_cast %107 : vector<4x1xi1> to vector<4x1xi1>
    %139 = vector.broadcast %138 : vector<4x1xi1> to vector<4x32xi1>
    %140 = vector.broadcast %cst_43 : f32 to vector<4x32xf32>
    %141 = arith.select %139, %137, %140 : vector<4x32xi1>, vector<4x32xf32>
    %142 = vector.shape_cast %107 : vector<4x1xi1> to vector<4x1xi1>
    %143 = vector.broadcast %142 : vector<4x1xi1> to vector<4x32xi1>
    %144 = arith.select %143, %137, %52 : vector<4x32xi1>, vector<4x32xf32>
    %145 = vector.shape_cast %107 : vector<4x1xi1> to vector<4x1xi1>
    %146 = vector.broadcast %145 : vector<4x1xi1> to vector<4x32xi1>
    %147 = arith.select %146, %135, %55 : vector<4x32xi1>, vector<4x32xf32>
    %c6_i32 = arith.constant 6 : i32
    %148 = arith.addi %12, %c6_i32 : i32
    %149 = vector.broadcast %148 : i32 to vector<4x1xi32>
    %150 = arith.cmpi slt, %149, %3 : vector<4x1xi32>
    %c0_44 = arith.constant 0 : index
    %c6 = arith.constant 6 : index
    %c0_45 = arith.constant 0 : index
    %151 = vector.load %arg3[%c0_44, %c6, %c0_45] : memref<4x8x128xbf16, #tpu.memory_space<vmem>>, vector<4x1x128xbf16>
    %152 = vector.shape_cast %151 : vector<4x1x128xbf16> to vector<4x128xbf16>
    %cst_46 = arith.constant dense<0.000000e+00> : vector<4x128xf32>
    %153 = tpu.matmul %95, %5, %cst_46 {dimension_numbers = #tpu.dot_dimension_numbers<[1], [0], [0], [1], [0, 0, 1, 1], [], []>} : vector<4x32xf32>, vector<32x128xf32>, vector<4x128xf32> -> vector<4x128xf32>
    %154 = arith.extf %152 : vector<4x128xbf16> to vector<4x128xf32>
    %155 = arith.addf %153, %154 : vector<4x128xf32>
    %156 = vector.extract_strided_slice %155 {offsets = [0, 0], sizes = [4, 32], strides = [1, 1]} : vector<4x128xf32> to vector<4x32xf32>
    %157 = arith.negf %156 : vector<4x32xf32>
    %158 = math.exp %157 : vector<4x32xf32>
    %cst_47 = arith.constant 1.000000e+00 : f32
    %159 = vector.broadcast %cst_47 : f32 to vector<4x32xf32>
    %160 = arith.addf %159, %158 : vector<4x32xf32>
    %161 = arith.divf %159, %160 : vector<4x32xf32>
    %162 = vector.extract_strided_slice %155 {offsets = [0, 32], sizes = [4, 32], strides = [1, 1]} : vector<4x128xf32> to vector<4x32xf32>
    %163 = arith.negf %162 : vector<4x32xf32>
    %164 = math.exp %163 : vector<4x32xf32>
    %cst_48 = arith.constant 1.000000e+00 : f32
    %165 = vector.broadcast %cst_48 : f32 to vector<4x32xf32>
    %166 = arith.addf %165, %164 : vector<4x32xf32>
    %167 = arith.divf %165, %166 : vector<4x32xf32>
    %168 = vector.extract_strided_slice %155 {offsets = [0, 64], sizes = [4, 32], strides = [1, 1]} : vector<4x128xf32> to vector<4x32xf32>
    %169 = math.tanh %168 : vector<4x32xf32>
    %170 = vector.extract_strided_slice %155 {offsets = [0, 96], sizes = [4, 32], strides = [1, 1]} : vector<4x128xf32> to vector<4x32xf32>
    %171 = arith.negf %170 : vector<4x32xf32>
    %172 = math.exp %171 : vector<4x32xf32>
    %cst_49 = arith.constant 1.000000e+00 : f32
    %173 = vector.broadcast %cst_49 : f32 to vector<4x32xf32>
    %174 = arith.addf %173, %172 : vector<4x32xf32>
    %175 = arith.divf %173, %174 : vector<4x32xf32>
    %176 = arith.mulf %167, %98 : vector<4x32xf32>
    %177 = arith.mulf %161, %169 : vector<4x32xf32>
    %178 = arith.addf %176, %177 : vector<4x32xf32>
    %179 = math.tanh %178 : vector<4x32xf32>
    %180 = arith.mulf %175, %179 : vector<4x32xf32>
    %cst_50 = arith.constant 0.000000e+00 : f32
    %181 = vector.shape_cast %150 : vector<4x1xi1> to vector<4x1xi1>
    %182 = vector.broadcast %181 : vector<4x1xi1> to vector<4x32xi1>
    %183 = vector.broadcast %cst_50 : f32 to vector<4x32xf32>
    %184 = arith.select %182, %180, %183 : vector<4x32xi1>, vector<4x32xf32>
    %185 = vector.shape_cast %150 : vector<4x1xi1> to vector<4x1xi1>
    %186 = vector.broadcast %185 : vector<4x1xi1> to vector<4x32xi1>
    %187 = arith.select %186, %180, %95 : vector<4x32xi1>, vector<4x32xf32>
    %188 = vector.shape_cast %150 : vector<4x1xi1> to vector<4x1xi1>
    %189 = vector.broadcast %188 : vector<4x1xi1> to vector<4x32xi1>
    %190 = arith.select %189, %178, %98 : vector<4x32xi1>, vector<4x32xf32>
    %c0_51 = arith.constant 0 : index
    %c1_52 = arith.constant 1 : index
    %c0_53 = arith.constant 0 : index
    %191 = vector.load %arg7[%c0_51, %c1_52, %c0_53] : memref<4x8x32xf32, #tpu.memory_space<vmem>>, vector<4x1x32xf32>
    %192 = vector.shape_cast %191 : vector<4x1x32xf32> to vector<4x32xf32>
    %193 = vector.shape_cast %141 : vector<4x32xf32> to vector<4x1x32xf32>
    tpu.vector_store %arg7[%c0_51, %c1_52, %c0_53], %193 {strides = array<i32>} : memref<4x8x32xf32, #tpu.memory_space<vmem>>, vector<4x1x32xf32>,
    %c0_54 = arith.constant 0 : index
    %c6_55 = arith.constant 6 : index
    %c0_56 = arith.constant 0 : index
    %194 = vector.load %arg8[%c0_54, %c6_55, %c0_56] : memref<4x8x32xf32, #tpu.memory_space<vmem>>, vector<4x1x32xf32>
    %195 = vector.shape_cast %194 : vector<4x1x32xf32> to vector<4x32xf32>
    %196 = vector.shape_cast %184 : vector<4x32xf32> to vector<4x1x32xf32>
    tpu.vector_store %arg8[%c0_54, %c6_55, %c0_56], %196 {strides = array<i32>} : memref<4x8x32xf32, #tpu.memory_space<vmem>>, vector<4x1x32xf32>,
    %c2_i32 = arith.constant 2 : i32
    %197 = arith.addi %10, %c2_i32 : i32
    %198 = vector.broadcast %197 : i32 to vector<4x1xi32>
    %199 = arith.cmpi slt, %198, %3 : vector<4x1xi32>
    %c0_57 = arith.constant 0 : index
    %c2 = arith.constant 2 : index
    %c0_58 = arith.constant 0 : index
    %200 = vector.load %arg2[%c0_57, %c2, %c0_58] : memref<4x8x128xbf16, #tpu.memory_space<vmem>>, vector<4x1x128xbf16>
    %201 = vector.shape_cast %200 : vector<4x1x128xbf16> to vector<4x128xbf16>
    %cst_59 = arith.constant dense<0.000000e+00> : vector<4x128xf32>
    %202 = tpu.matmul %144, %4, %cst_59 {dimension_numbers = #tpu.dot_dimension_numbers<[1], [0], [0], [1], [0, 0, 1, 1], [], []>} : vector<4x32xf32>, vector<32x128xf32>, vector<4x128xf32> -> vector<4x128xf32>
    %203 = arith.extf %201 : vector<4x128xbf16> to vector<4x128xf32>
    %204 = arith.addf %202, %203 : vector<4x128xf32>
    %205 = vector.extract_strided_slice %204 {offsets = [0, 0], sizes = [4, 32], strides = [1, 1]} : vector<4x128xf32> to vector<4x32xf32>
    %206 = arith.negf %205 : vector<4x32xf32>
    %207 = math.exp %206 : vector<4x32xf32>
    %cst_60 = arith.constant 1.000000e+00 : f32
    %208 = vector.broadcast %cst_60 : f32 to vector<4x32xf32>
    %209 = arith.addf %208, %207 : vector<4x32xf32>
    %210 = arith.divf %208, %209 : vector<4x32xf32>
    %211 = vector.extract_strided_slice %204 {offsets = [0, 32], sizes = [4, 32], strides = [1, 1]} : vector<4x128xf32> to vector<4x32xf32>
    %212 = arith.negf %211 : vector<4x32xf32>
    %213 = math.exp %212 : vector<4x32xf32>
    %cst_61 = arith.constant 1.000000e+00 : f32
    %214 = vector.broadcast %cst_61 : f32 to vector<4x32xf32>
    %215 = arith.addf %214, %213 : vector<4x32xf32>
    %216 = arith.divf %214, %215 : vector<4x32xf32>
    %217 = vector.extract_strided_slice %204 {offsets = [0, 64], sizes = [4, 32], strides = [1, 1]} : vector<4x128xf32> to vector<4x32xf32>
    %218 = math.tanh %217 : vector<4x32xf32>
    %219 = vector.extract_strided_slice %204 {offsets = [0, 96], sizes = [4, 32], strides = [1, 1]} : vector<4x128xf32> to vector<4x32xf32>
    %220 = arith.negf %219 : vector<4x32xf32>
    %221 = math.exp %220 : vector<4x32xf32>
    %cst_62 = arith.constant 1.000000e+00 : f32
    %222 = vector.broadcast %cst_62 : f32 to vector<4x32xf32>
    %223 = arith.addf %222, %221 : vector<4x32xf32>
    %224 = arith.divf %222, %223 : vector<4x32xf32>
    %225 = arith.mulf %216, %147 : vector<4x32xf32>
    %226 = arith.mulf %210, %218 : vector<4x32xf32>
    %227 = arith.addf %225, %226 : vector<4x32xf32>
    %228 = math.tanh %227 : vector<4x32xf32>
    %229 = arith.mulf %224, %228 : vector<4x32xf32>
    %cst_63 = arith.constant 0.000000e+00 : f32
    %230 = vector.shape_cast %199 : vector<4x1xi1> to vector<4x1xi1>
    %231 = vector.broadcast %230 : vector<4x1xi1> to vector<4x32xi1>
    %232 = vector.broadcast %cst_63 : f32 to vector<4x32xf32>
    %233 = arith.select %231, %229, %232 : vector<4x32xi1>, vector<4x32xf32>
    %234 = vector.shape_cast %199 : vector<4x1xi1> to vector<4x1xi1>
    %235 = vector.broadcast %234 : vector<4x1xi1> to vector<4x32xi1>
    %236 = arith.select %235, %229, %144 : vector<4x32xi1>, vector<4x32xf32>
    %237 = vector.shape_cast %199 : vector<4x1xi1> to vector<4x1xi1>
    %238 = vector.broadcast %237 : vector<4x1xi1> to vector<4x32xi1>
    %239 = arith.select %238, %227, %147 : vector<4x32xi1>, vector<4x32xf32>
    %c5_i32 = arith.constant 5 : i32
    %240 = arith.addi %12, %c5_i32 : i32
    %241 = vector.broadcast %240 : i32 to vector<4x1xi32>
    %242 = arith.cmpi slt, %241, %3 : vector<4x1xi32>
    %c0_64 = arith.constant 0 : index
    %c5 = arith.constant 5 : index
    %c0_65 = arith.constant 0 : index
    %243 = vector.load %arg3[%c0_64, %c5, %c0_65] : memref<4x8x128xbf16, #tpu.memory_space<vmem>>, vector<4x1x128xbf16>
    %244 = vector.shape_cast %243 : vector<4x1x128xbf16> to vector<4x128xbf16>
    %cst_66 = arith.constant dense<0.000000e+00> : vector<4x128xf32>
    %245 = tpu.matmul %187, %5, %cst_66 {dimension_numbers = #tpu.dot_dimension_numbers<[1], [0], [0], [1], [0, 0, 1, 1], [], []>} : vector<4x32xf32>, vector<32x128xf32>, vector<4x128xf32> -> vector<4x128xf32>
    %246 = arith.extf %244 : vector<4x128xbf16> to vector<4x128xf32>
    %247 = arith.addf %245, %246 : vector<4x128xf32>
    %248 = vector.extract_strided_slice %247 {offsets = [0, 0], sizes = [4, 32], strides = [1, 1]} : vector<4x128xf32> to vector<4x32xf32>
    %249 = arith.negf %248 : vector<4x32xf32>
    %250 = math.exp %249 : vector<4x32xf32>
    %cst_67 = arith.constant 1.000000e+00 : f32
    %251 = vector.broadcast %cst_67 : f32 to vector<4x32xf32>
    %252 = arith.addf %251, %250 : vector<4x32xf32>
    %253 = arith.divf %251, %252 : vector<4x32xf32>
    %254 = vector.extract_strided_slice %247 {offsets = [0, 32], sizes = [4, 32], strides = [1, 1]} : vector<4x128xf32> to vector<4x32xf32>
    %255 = arith.negf %254 : vector<4x32xf32>
    %256 = math.exp %255 : vector<4x32xf32>
    %cst_68 = arith.constant 1.000000e+00 : f32
    %257 = vector.broadcast %cst_68 : f32 to vector<4x32xf32>
    %258 = arith.addf %257, %256 : vector<4x32xf32>
    %259 = arith.divf %257, %258 : vector<4x32xf32>
    %260 = vector.extract_strided_slice %247 {offsets = [0, 64], sizes = [4, 32], strides = [1, 1]} : vector<4x128xf32> to vector<4x32xf32>
    %261 = math.tanh %260 : vector<4x32xf32>
    %262 = vector.extract_strided_slice %247 {offsets = [0, 96], sizes = [4, 32], strides = [1, 1]} : vector<4x128xf32> to vector<4x32xf32>
    %263 = arith.negf %262 : vector<4x32xf32>
    %264 = math.exp %263 : vector<4x32xf32>
    %cst_69 = arith.constant 1.000000e+00 : f32
    %265 = vector.broadcast %cst_69 : f32 to vector<4x32xf32>
    %266 = arith.addf %265, %264 : vector<4x32xf32>
    %267 = arith.divf %265, %266 : vector<4x32xf32>
    %268 = arith.mulf %259, %190 : vector<4x32xf32>
    %269 = arith.mulf %253, %261 : vector<4x32xf32>
    %270 = arith.addf %268, %269 : vector<4x32xf32>
    %271 = math.tanh %270 : vector<4x32xf32>
    %272 = arith.mulf %267, %271 : vector<4x32xf32>
    %cst_70 = arith.constant 0.000000e+00 : f32
    %273 = vector.shape_cast %242 : vector<4x1xi1> to vector<4x1xi1>
    %274 = vector.broadcast %273 : vector<4x1xi1> to vector<4x32xi1>
    %275 = vector.broadcast %cst_70 : f32 to vector<4x32xf32>
    %276 = arith.select %274, %272, %275 : vector<4x32xi1>, vector<4x32xf32>
    %277 = vector.shape_cast %242 : vector<4x1xi1> to vector<4x1xi1>
    %278 = vector.broadcast %277 : vector<4x1xi1> to vector<4x32xi1>
    %279 = arith.select %278, %272, %187 : vector<4x32xi1>, vector<4x32xf32>
    %280 = vector.shape_cast %242 : vector<4x1xi1> to vector<4x1xi1>
    %281 = vector.broadcast %280 : vector<4x1xi1> to vector<4x32xi1>
    %282 = arith.select %281, %270, %190 : vector<4x32xi1>, vector<4x32xf32>
    %c0_71 = arith.constant 0 : index
    %c2_72 = arith.constant 2 : index
    %c0_73 = arith.constant 0 : index
    %283 = vector.load %arg7[%c0_71, %c2_72, %c0_73] : memref<4x8x32xf32, #tpu.memory_space<vmem>>, vector<4x1x32xf32>
    %284 = vector.shape_cast %283 : vector<4x1x32xf32> to vector<4x32xf32>
    %285 = vector.shape_cast %233 : vector<4x32xf32> to vector<4x1x32xf32>
    tpu.vector_store %arg7[%c0_71, %c2_72, %c0_73], %285 {strides = array<i32>} : memref<4x8x32xf32, #tpu.memory_space<vmem>>, vector<4x1x32xf32>,
    %c0_74 = arith.constant 0 : index
    %c5_75 = arith.constant 5 : index
    %c0_76 = arith.constant 0 : index
    %286 = vector.load %arg8[%c0_74, %c5_75, %c0_76] : memref<4x8x32xf32, #tpu.memory_space<vmem>>, vector<4x1x32xf32>
    %287 = vector.shape_cast %286 : vector<4x1x32xf32> to vector<4x32xf32>
    %288 = vector.shape_cast %276 : vector<4x32xf32> to vector<4x1x32xf32>
    tpu.vector_store %arg8[%c0_74, %c5_75, %c0_76], %288 {strides = array<i32>} : memref<4x8x32xf32, #tpu.memory_space<vmem>>, vector<4x1x32xf32>,
    %c3_i32 = arith.constant 3 : i32
    %289 = arith.addi %10, %c3_i32 : i32
    %290 = vector.broadcast %289 : i32 to vector<4x1xi32>
    %291 = arith.cmpi slt, %290, %3 : vector<4x1xi32>
    %c0_77 = arith.constant 0 : index
    %c3 = arith.constant 3 : index
    %c0_78 = arith.constant 0 : index
    %292 = vector.load %arg2[%c0_77, %c3, %c0_78] : memref<4x8x128xbf16, #tpu.memory_space<vmem>>, vector<4x1x128xbf16>
    %293 = vector.shape_cast %292 : vector<4x1x128xbf16> to vector<4x128xbf16>
    %cst_79 = arith.constant dense<0.000000e+00> : vector<4x128xf32>
    %294 = tpu.matmul %236, %4, %cst_79 {dimension_numbers = #tpu.dot_dimension_numbers<[1], [0], [0], [1], [0, 0, 1, 1], [], []>} : vector<4x32xf32>, vector<32x128xf32>, vector<4x128xf32> -> vector<4x128xf32>
    %295 = arith.extf %293 : vector<4x128xbf16> to vector<4x128xf32>
    %296 = arith.addf %294, %295 : vector<4x128xf32>
    %297 = vector.extract_strided_slice %296 {offsets = [0, 0], sizes = [4, 32], strides = [1, 1]} : vector<4x128xf32> to vector<4x32xf32>
    %298 = arith.negf %297 : vector<4x32xf32>
    %299 = math.exp %298 : vector<4x32xf32>
    %cst_80 = arith.constant 1.000000e+00 : f32
    %300 = vector.broadcast %cst_80 : f32 to vector<4x32xf32>
    %301 = arith.addf %300, %299 : vector<4x32xf32>
    %302 = arith.divf %300, %301 : vector<4x32xf32>
    %303 = vector.extract_strided_slice %296 {offsets = [0, 32], sizes = [4, 32], strides = [1, 1]} : vector<4x128xf32> to vector<4x32xf32>
    %304 = arith.negf %303 : vector<4x32xf32>
    %305 = math.exp %304 : vector<4x32xf32>
    %cst_81 = arith.constant 1.000000e+00 : f32
    %306 = vector.broadcast %cst_81 : f32 to vector<4x32xf32>
    %307 = arith.addf %306, %305 : vector<4x32xf32>
    %308 = arith.divf %306, %307 : vector<4x32xf32>
    %309 = vector.extract_strided_slice %296 {offsets = [0, 64], sizes = [4, 32], strides = [1, 1]} : vector<4x128xf32> to vector<4x32xf32>
    %310 = math.tanh %309 : vector<4x32xf32>
    %311 = vector.extract_strided_slice %296 {offsets = [0, 96], sizes = [4, 32], strides = [1, 1]} : vector<4x128xf32> to vector<4x32xf32>
    %312 = arith.negf %311 : vector<4x32xf32>
    %313 = math.exp %312 : vector<4x32xf32>
    %cst_82 = arith.constant 1.000000e+00 : f32
    %314 = vector.broadcast %cst_82 : f32 to vector<4x32xf32>
    %315 = arith.addf %314, %313 : vector<4x32xf32>
    %316 = arith.divf %314, %315 : vector<4x32xf32>
    %317 = arith.mulf %308, %239 : vector<4x32xf32>
    %318 = arith.mulf %302, %310 : vector<4x32xf32>
    %319 = arith.addf %317, %318 : vector<4x32xf32>
    %320 = math.tanh %319 : vector<4x32xf32>
    %321 = arith.mulf %316, %320 : vector<4x32xf32>
    %cst_83 = arith.constant 0.000000e+00 : f32
    %322 = vector.shape_cast %291 : vector<4x1xi1> to vector<4x1xi1>
    %323 = vector.broadcast %322 : vector<4x1xi1> to vector<4x32xi1>
    %324 = vector.broadcast %cst_83 : f32 to vector<4x32xf32>
    %325 = arith.select %323, %321, %324 : vector<4x32xi1>, vector<4x32xf32>
    %326 = vector.shape_cast %291 : vector<4x1xi1> to vector<4x1xi1>
    %327 = vector.broadcast %326 : vector<4x1xi1> to vector<4x32xi1>
    %328 = arith.select %327, %321, %236 : vector<4x32xi1>, vector<4x32xf32>
    %329 = vector.shape_cast %291 : vector<4x1xi1> to vector<4x1xi1>
    %330 = vector.broadcast %329 : vector<4x1xi1> to vector<4x32xi1>
    %331 = arith.select %330, %319, %239 : vector<4x32xi1>, vector<4x32xf32>
    %c4_i32 = arith.constant 4 : i32
    %332 = arith.addi %12, %c4_i32 : i32
    %333 = vector.broadcast %332 : i32 to vector<4x1xi32>
    %334 = arith.cmpi slt, %333, %3 : vector<4x1xi32>
    %c0_84 = arith.constant 0 : index
    %c4 = arith.constant 4 : index
    %c0_85 = arith.constant 0 : index
    %335 = vector.load %arg3[%c0_84, %c4, %c0_85] : memref<4x8x128xbf16, #tpu.memory_space<vmem>>, vector<4x1x128xbf16>
    %336 = vector.shape_cast %335 : vector<4x1x128xbf16> to vector<4x128xbf16>
    %cst_86 = arith.constant dense<0.000000e+00> : vector<4x128xf32>
    %337 = tpu.matmul %279, %5, %cst_86 {dimension_numbers = #tpu.dot_dimension_numbers<[1], [0], [0], [1], [0, 0, 1, 1], [], []>} : vector<4x32xf32>, vector<32x128xf32>, vector<4x128xf32> -> vector<4x128xf32>
    %338 = arith.extf %336 : vector<4x128xbf16> to vector<4x128xf32>
    %339 = arith.addf %337, %338 : vector<4x128xf32>
    %340 = vector.extract_strided_slice %339 {offsets = [0, 0], sizes = [4, 32], strides = [1, 1]} : vector<4x128xf32> to vector<4x32xf32>
    %341 = arith.negf %340 : vector<4x32xf32>
    %342 = math.exp %341 : vector<4x32xf32>
    %cst_87 = arith.constant 1.000000e+00 : f32
    %343 = vector.broadcast %cst_87 : f32 to vector<4x32xf32>
    %344 = arith.addf %343, %342 : vector<4x32xf32>
    %345 = arith.divf %343, %344 : vector<4x32xf32>
    %346 = vector.extract_strided_slice %339 {offsets = [0, 32], sizes = [4, 32], strides = [1, 1]} : vector<4x128xf32> to vector<4x32xf32>
    %347 = arith.negf %346 : vector<4x32xf32>
    %348 = math.exp %347 : vector<4x32xf32>
    %cst_88 = arith.constant 1.000000e+00 : f32
    %349 = vector.broadcast %cst_88 : f32 to vector<4x32xf32>
    %350 = arith.addf %349, %348 : vector<4x32xf32>
    %351 = arith.divf %349, %350 : vector<4x32xf32>
    %352 = vector.extract_strided_slice %339 {offsets = [0, 64], sizes = [4, 32], strides = [1, 1]} : vector<4x128xf32> to vector<4x32xf32>
    %353 = math.tanh %352 : vector<4x32xf32>
    %354 = vector.extract_strided_slice %339 {offsets = [0, 96], sizes = [4, 32], strides = [1, 1]} : vector<4x128xf32> to vector<4x32xf32>
    %355 = arith.negf %354 : vector<4x32xf32>
    %356 = math.exp %355 : vector<4x32xf32>
    %cst_89 = arith.constant 1.000000e+00 : f32
    %357 = vector.broadcast %cst_89 : f32 to vector<4x32xf32>
    %358 = arith.addf %357, %356 : vector<4x32xf32>
    %359 = arith.divf %357, %358 : vector<4x32xf32>
    %360 = arith.mulf %351, %282 : vector<4x32xf32>
    %361 = arith.mulf %345, %353 : vector<4x32xf32>
    %362 = arith.addf %360, %361 : vector<4x32xf32>
    %363 = math.tanh %362 : vector<4x32xf32>
    %364 = arith.mulf %359, %363 : vector<4x32xf32>
    %cst_90 = arith.constant 0.000000e+00 : f32
    %365 = vector.shape_cast %334 : vector<4x1xi1> to vector<4x1xi1>
    %366 = vector.broadcast %365 : vector<4x1xi1> to vector<4x32xi1>
    %367 = vector.broadcast %cst_90 : f32 to vector<4x32xf32>
    %368 = arith.select %366, %364, %367 : vector<4x32xi1>, vector<4x32xf32>
    %369 = vector.shape_cast %334 : vector<4x1xi1> to vector<4x1xi1>
    %370 = vector.broadcast %369 : vector<4x1xi1> to vector<4x32xi1>
    %371 = arith.select %370, %364, %279 : vector<4x32xi1>, vector<4x32xf32>
    %372 = vector.shape_cast %334 : vector<4x1xi1> to vector<4x1xi1>
    %373 = vector.broadcast %372 : vector<4x1xi1> to vector<4x32xi1>
    %374 = arith.select %373, %362, %282 : vector<4x32xi1>, vector<4x32xf32>
    %c0_91 = arith.constant 0 : index
    %c3_92 = arith.constant 3 : index
    %c0_93 = arith.constant 0 : index
    %375 = vector.load %arg7[%c0_91, %c3_92, %c0_93] : memref<4x8x32xf32, #tpu.memory_space<vmem>>, vector<4x1x32xf32>
    %376 = vector.shape_cast %375 : vector<4x1x32xf32> to vector<4x32xf32>
    %377 = vector.shape_cast %325 : vector<4x32xf32> to vector<4x1x32xf32>
    tpu.vector_store %arg7[%c0_91, %c3_92, %c0_93], %377 {strides = array<i32>} : memref<4x8x32xf32, #tpu.memory_space<vmem>>, vector<4x1x32xf32>,
    %c0_94 = arith.constant 0 : index
    %c4_95 = arith.constant 4 : index
    %c0_96 = arith.constant 0 : index
    %378 = vector.load %arg8[%c0_94, %c4_95, %c0_96] : memref<4x8x32xf32, #tpu.memory_space<vmem>>, vector<4x1x32xf32>
    %379 = vector.shape_cast %378 : vector<4x1x32xf32> to vector<4x32xf32>
    %380 = vector.shape_cast %368 : vector<4x32xf32> to vector<4x1x32xf32>
    tpu.vector_store %arg8[%c0_94, %c4_95, %c0_96], %380 {strides = array<i32>} : memref<4x8x32xf32, #tpu.memory_space<vmem>>, vector<4x1x32xf32>,
    %c4_i32_97 = arith.constant 4 : i32
    %381 = arith.addi %10, %c4_i32_97 : i32
    %382 = vector.broadcast %381 : i32 to vector<4x1xi32>
    %383 = arith.cmpi slt, %382, %3 : vector<4x1xi32>
    %c0_98 = arith.constant 0 : index
    %c4_99 = arith.constant 4 : index
    %c0_100 = arith.constant 0 : index
    %384 = vector.load %arg2[%c0_98, %c4_99, %c0_100] : memref<4x8x128xbf16, #tpu.memory_space<vmem>>, vector<4x1x128xbf16>
    %385 = vector.shape_cast %384 : vector<4x1x128xbf16> to vector<4x128xbf16>
    %cst_101 = arith.constant dense<0.000000e+00> : vector<4x128xf32>
    %386 = tpu.matmul %328, %4, %cst_101 {dimension_numbers = #tpu.dot_dimension_numbers<[1], [0], [0], [1], [0, 0, 1, 1], [], []>} : vector<4x32xf32>, vector<32x128xf32>, vector<4x128xf32> -> vector<4x128xf32>
    %387 = arith.extf %385 : vector<4x128xbf16> to vector<4x128xf32>
    %388 = arith.addf %386, %387 : vector<4x128xf32>
    %389 = vector.extract_strided_slice %388 {offsets = [0, 0], sizes = [4, 32], strides = [1, 1]} : vector<4x128xf32> to vector<4x32xf32>
    %390 = arith.negf %389 : vector<4x32xf32>
    %391 = math.exp %390 : vector<4x32xf32>
    %cst_102 = arith.constant 1.000000e+00 : f32
    %392 = vector.broadcast %cst_102 : f32 to vector<4x32xf32>
    %393 = arith.addf %392, %391 : vector<4x32xf32>
    %394 = arith.divf %392, %393 : vector<4x32xf32>
    %395 = vector.extract_strided_slice %388 {offsets = [0, 32], sizes = [4, 32], strides = [1, 1]} : vector<4x128xf32> to vector<4x32xf32>
    %396 = arith.negf %395 : vector<4x32xf32>
    %397 = math.exp %396 : vector<4x32xf32>
    %cst_103 = arith.constant 1.000000e+00 : f32
    %398 = vector.broadcast %cst_103 : f32 to vector<4x32xf32>
    %399 = arith.addf %398, %397 : vector<4x32xf32>
    %400 = arith.divf %398, %399 : vector<4x32xf32>
    %401 = vector.extract_strided_slice %388 {offsets = [0, 64], sizes = [4, 32], strides = [1, 1]} : vector<4x128xf32> to vector<4x32xf32>
    %402 = math.tanh %401 : vector<4x32xf32>
    %403 = vector.extract_strided_slice %388 {offsets = [0, 96], sizes = [4, 32], strides = [1, 1]} : vector<4x128xf32> to vector<4x32xf32>
    %404 = arith.negf %403 : vector<4x32xf32>
    %405 = math.exp %404 : vector<4x32xf32>
    %cst_104 = arith.constant 1.000000e+00 : f32
    %406 = vector.broadcast %cst_104 : f32 to vector<4x32xf32>
    %407 = arith.addf %406, %405 : vector<4x32xf32>
    %408 = arith.divf %406, %407 : vector<4x32xf32>
    %409 = arith.mulf %400, %331 : vector<4x32xf32>
    %410 = arith.mulf %394, %402 : vector<4x32xf32>
    %411 = arith.addf %409, %410 : vector<4x32xf32>
    %412 = math.tanh %411 : vector<4x32xf32>
    %413 = arith.mulf %408, %412 : vector<4x32xf32>
    %cst_105 = arith.constant 0.000000e+00 : f32
    %414 = vector.shape_cast %383 : vector<4x1xi1> to vector<4x1xi1>
    %415 = vector.broadcast %414 : vector<4x1xi1> to vector<4x32xi1>
    %416 = vector.broadcast %cst_105 : f32 to vector<4x32xf32>
    %417 = arith.select %415, %413, %416 : vector<4x32xi1>, vector<4x32xf32>
    %418 = vector.shape_cast %383 : vector<4x1xi1> to vector<4x1xi1>
    %419 = vector.broadcast %418 : vector<4x1xi1> to vector<4x32xi1>
    %420 = arith.select %419, %413, %328 : vector<4x32xi1>, vector<4x32xf32>
    %421 = vector.shape_cast %383 : vector<4x1xi1> to vector<4x1xi1>
    %422 = vector.broadcast %421 : vector<4x1xi1> to vector<4x32xi1>
    %423 = arith.select %422, %411, %331 : vector<4x32xi1>, vector<4x32xf32>
    %c3_i32_106 = arith.constant 3 : i32
    %424 = arith.addi %12, %c3_i32_106 : i32
    %425 = vector.broadcast %424 : i32 to vector<4x1xi32>
    %426 = arith.cmpi slt, %425, %3 : vector<4x1xi32>
    %c0_107 = arith.constant 0 : index
    %c3_108 = arith.constant 3 : index
    %c0_109 = arith.constant 0 : index
    %427 = vector.load %arg3[%c0_107, %c3_108, %c0_109] : memref<4x8x128xbf16, #tpu.memory_space<vmem>>, vector<4x1x128xbf16>
    %428 = vector.shape_cast %427 : vector<4x1x128xbf16> to vector<4x128xbf16>
    %cst_110 = arith.constant dense<0.000000e+00> : vector<4x128xf32>
    %429 = tpu.matmul %371, %5, %cst_110 {dimension_numbers = #tpu.dot_dimension_numbers<[1], [0], [0], [1], [0, 0, 1, 1], [], []>} : vector<4x32xf32>, vector<32x128xf32>, vector<4x128xf32> -> vector<4x128xf32>
    %430 = arith.extf %428 : vector<4x128xbf16> to vector<4x128xf32>
    %431 = arith.addf %429, %430 : vector<4x128xf32>
    %432 = vector.extract_strided_slice %431 {offsets = [0, 0], sizes = [4, 32], strides = [1, 1]} : vector<4x128xf32> to vector<4x32xf32>
    %433 = arith.negf %432 : vector<4x32xf32>
    %434 = math.exp %433 : vector<4x32xf32>
    %cst_111 = arith.constant 1.000000e+00 : f32
    %435 = vector.broadcast %cst_111 : f32 to vector<4x32xf32>
    %436 = arith.addf %435, %434 : vector<4x32xf32>
    %437 = arith.divf %435, %436 : vector<4x32xf32>
    %438 = vector.extract_strided_slice %431 {offsets = [0, 32], sizes = [4, 32], strides = [1, 1]} : vector<4x128xf32> to vector<4x32xf32>
    %439 = arith.negf %438 : vector<4x32xf32>
    %440 = math.exp %439 : vector<4x32xf32>
    %cst_112 = arith.constant 1.000000e+00 : f32
    %441 = vector.broadcast %cst_112 : f32 to vector<4x32xf32>
    %442 = arith.addf %441, %440 : vector<4x32xf32>
    %443 = arith.divf %441, %442 : vector<4x32xf32>
    %444 = vector.extract_strided_slice %431 {offsets = [0, 64], sizes = [4, 32], strides = [1, 1]} : vector<4x128xf32> to vector<4x32xf32>
    %445 = math.tanh %444 : vector<4x32xf32>
    %446 = vector.extract_strided_slice %431 {offsets = [0, 96], sizes = [4, 32], strides = [1, 1]} : vector<4x128xf32> to vector<4x32xf32>
    %447 = arith.negf %446 : vector<4x32xf32>
    %448 = math.exp %447 : vector<4x32xf32>
    %cst_113 = arith.constant 1.000000e+00 : f32
    %449 = vector.broadcast %cst_113 : f32 to vector<4x32xf32>
    %450 = arith.addf %449, %448 : vector<4x32xf32>
    %451 = arith.divf %449, %450 : vector<4x32xf32>
    %452 = arith.mulf %443, %374 : vector<4x32xf32>
    %453 = arith.mulf %437, %445 : vector<4x32xf32>
    %454 = arith.addf %452, %453 : vector<4x32xf32>
    %455 = math.tanh %454 : vector<4x32xf32>
    %456 = arith.mulf %451, %455 : vector<4x32xf32>
    %cst_114 = arith.constant 0.000000e+00 : f32
    %457 = vector.shape_cast %426 : vector<4x1xi1> to vector<4x1xi1>
    %458 = vector.broadcast %457 : vector<4x1xi1> to vector<4x32xi1>
    %459 = vector.broadcast %cst_114 : f32 to vector<4x32xf32>
    %460 = arith.select %458, %456, %459 : vector<4x32xi1>, vector<4x32xf32>
    %461 = vector.shape_cast %426 : vector<4x1xi1> to vector<4x1xi1>
    %462 = vector.broadcast %461 : vector<4x1xi1> to vector<4x32xi1>
    %463 = arith.select %462, %456, %371 : vector<4x32xi1>, vector<4x32xf32>
    %464 = vector.shape_cast %426 : vector<4x1xi1> to vector<4x1xi1>
    %465 = vector.broadcast %464 : vector<4x1xi1> to vector<4x32xi1>
    %466 = arith.select %465, %454, %374 : vector<4x32xi1>, vector<4x32xf32>
    %c0_115 = arith.constant 0 : index
    %c4_116 = arith.constant 4 : index
    %c0_117 = arith.constant 0 : index
    %467 = vector.load %arg7[%c0_115, %c4_116, %c0_117] : memref<4x8x32xf32, #tpu.memory_space<vmem>>, vector<4x1x32xf32>
    %468 = vector.shape_cast %467 : vector<4x1x32xf32> to vector<4x32xf32>
    %469 = vector.shape_cast %417 : vector<4x32xf32> to vector<4x1x32xf32>
    tpu.vector_store %arg7[%c0_115, %c4_116, %c0_117], %469 {strides = array<i32>} : memref<4x8x32xf32, #tpu.memory_space<vmem>>, vector<4x1x32xf32>,
    %c0_118 = arith.constant 0 : index
    %c3_119 = arith.constant 3 : index
    %c0_120 = arith.constant 0 : index
    %470 = vector.load %arg8[%c0_118, %c3_119, %c0_120] : memref<4x8x32xf32, #tpu.memory_space<vmem>>, vector<4x1x32xf32>
    %471 = vector.shape_cast %470 : vector<4x1x32xf32> to vector<4x32xf32>
    %472 = vector.shape_cast %460 : vector<4x32xf32> to vector<4x1x32xf32>
    tpu.vector_store %arg8[%c0_118, %c3_119, %c0_120], %472 {strides = array<i32>} : memref<4x8x32xf32, #tpu.memory_space<vmem>>, vector<4x1x32xf32>,
    %c5_i32_121 = arith.constant 5 : i32
    %473 = arith.addi %10, %c5_i32_121 : i32
    %474 = vector.broadcast %473 : i32 to vector<4x1xi32>
    %475 = arith.cmpi slt, %474, %3 : vector<4x1xi32>
    %c0_122 = arith.constant 0 : index
    %c5_123 = arith.constant 5 : index
    %c0_124 = arith.constant 0 : index
    %476 = vector.load %arg2[%c0_122, %c5_123, %c0_124] : memref<4x8x128xbf16, #tpu.memory_space<vmem>>, vector<4x1x128xbf16>
    %477 = vector.shape_cast %476 : vector<4x1x128xbf16> to vector<4x128xbf16>
    %cst_125 = arith.constant dense<0.000000e+00> : vector<4x128xf32>
    %478 = tpu.matmul %420, %4, %cst_125 {dimension_numbers = #tpu.dot_dimension_numbers<[1], [0], [0], [1], [0, 0, 1, 1], [], []>} : vector<4x32xf32>, vector<32x128xf32>, vector<4x128xf32> -> vector<4x128xf32>
    %479 = arith.extf %477 : vector<4x128xbf16> to vector<4x128xf32>
    %480 = arith.addf %478, %479 : vector<4x128xf32>
    %481 = vector.extract_strided_slice %480 {offsets = [0, 0], sizes = [4, 32], strides = [1, 1]} : vector<4x128xf32> to vector<4x32xf32>
    %482 = arith.negf %481 : vector<4x32xf32>
    %483 = math.exp %482 : vector<4x32xf32>
    %cst_126 = arith.constant 1.000000e+00 : f32
    %484 = vector.broadcast %cst_126 : f32 to vector<4x32xf32>
    %485 = arith.addf %484, %483 : vector<4x32xf32>
    %486 = arith.divf %484, %485 : vector<4x32xf32>
    %487 = vector.extract_strided_slice %480 {offsets = [0, 32], sizes = [4, 32], strides = [1, 1]} : vector<4x128xf32> to vector<4x32xf32>
    %488 = arith.negf %487 : vector<4x32xf32>
    %489 = math.exp %488 : vector<4x32xf32>
    %cst_127 = arith.constant 1.000000e+00 : f32
    %490 = vector.broadcast %cst_127 : f32 to vector<4x32xf32>
    %491 = arith.addf %490, %489 : vector<4x32xf32>
    %492 = arith.divf %490, %491 : vector<4x32xf32>
    %493 = vector.extract_strided_slice %480 {offsets = [0, 64], sizes = [4, 32], strides = [1, 1]} : vector<4x128xf32> to vector<4x32xf32>
    %494 = math.tanh %493 : vector<4x32xf32>
    %495 = vector.extract_strided_slice %480 {offsets = [0, 96], sizes = [4, 32], strides = [1, 1]} : vector<4x128xf32> to vector<4x32xf32>
    %496 = arith.negf %495 : vector<4x32xf32>
    %497 = math.exp %496 : vector<4x32xf32>
    %cst_128 = arith.constant 1.000000e+00 : f32
    %498 = vector.broadcast %cst_128 : f32 to vector<4x32xf32>
    %499 = arith.addf %498, %497 : vector<4x32xf32>
    %500 = arith.divf %498, %499 : vector<4x32xf32>
    %501 = arith.mulf %492, %423 : vector<4x32xf32>
    %502 = arith.mulf %486, %494 : vector<4x32xf32>
    %503 = arith.addf %501, %502 : vector<4x32xf32>
    %504 = math.tanh %503 : vector<4x32xf32>
    %505 = arith.mulf %500, %504 : vector<4x32xf32>
    %cst_129 = arith.constant 0.000000e+00 : f32
    %506 = vector.shape_cast %475 : vector<4x1xi1> to vector<4x1xi1>
    %507 = vector.broadcast %506 : vector<4x1xi1> to vector<4x32xi1>
    %508 = vector.broadcast %cst_129 : f32 to vector<4x32xf32>
    %509 = arith.select %507, %505, %508 : vector<4x32xi1>, vector<4x32xf32>
    %510 = vector.shape_cast %475 : vector<4x1xi1> to vector<4x1xi1>
    %511 = vector.broadcast %510 : vector<4x1xi1> to vector<4x32xi1>
    %512 = arith.select %511, %505, %420 : vector<4x32xi1>, vector<4x32xf32>
    %513 = vector.shape_cast %475 : vector<4x1xi1> to vector<4x1xi1>
    %514 = vector.broadcast %513 : vector<4x1xi1> to vector<4x32xi1>
    %515 = arith.select %514, %503, %423 : vector<4x32xi1>, vector<4x32xf32>
    %c2_i32_130 = arith.constant 2 : i32
    %516 = arith.addi %12, %c2_i32_130 : i32
    %517 = vector.broadcast %516 : i32 to vector<4x1xi32>
    %518 = arith.cmpi slt, %517, %3 : vector<4x1xi32>
    %c0_131 = arith.constant 0 : index
    %c2_132 = arith.constant 2 : index
    %c0_133 = arith.constant 0 : index
    %519 = vector.load %arg3[%c0_131, %c2_132, %c0_133] : memref<4x8x128xbf16, #tpu.memory_space<vmem>>, vector<4x1x128xbf16>
    %520 = vector.shape_cast %519 : vector<4x1x128xbf16> to vector<4x128xbf16>
    %cst_134 = arith.constant dense<0.000000e+00> : vector<4x128xf32>
    %521 = tpu.matmul %463, %5, %cst_134 {dimension_numbers = #tpu.dot_dimension_numbers<[1], [0], [0], [1], [0, 0, 1, 1], [], []>} : vector<4x32xf32>, vector<32x128xf32>, vector<4x128xf32> -> vector<4x128xf32>
    %522 = arith.extf %520 : vector<4x128xbf16> to vector<4x128xf32>
    %523 = arith.addf %521, %522 : vector<4x128xf32>
    %524 = vector.extract_strided_slice %523 {offsets = [0, 0], sizes = [4, 32], strides = [1, 1]} : vector<4x128xf32> to vector<4x32xf32>
    %525 = arith.negf %524 : vector<4x32xf32>
    %526 = math.exp %525 : vector<4x32xf32>
    %cst_135 = arith.constant 1.000000e+00 : f32
    %527 = vector.broadcast %cst_135 : f32 to vector<4x32xf32>
    %528 = arith.addf %527, %526 : vector<4x32xf32>
    %529 = arith.divf %527, %528 : vector<4x32xf32>
    %530 = vector.extract_strided_slice %523 {offsets = [0, 32], sizes = [4, 32], strides = [1, 1]} : vector<4x128xf32> to vector<4x32xf32>
    %531 = arith.negf %530 : vector<4x32xf32>
    %532 = math.exp %531 : vector<4x32xf32>
    %cst_136 = arith.constant 1.000000e+00 : f32
    %533 = vector.broadcast %cst_136 : f32 to vector<4x32xf32>
    %534 = arith.addf %533, %532 : vector<4x32xf32>
    %535 = arith.divf %533, %534 : vector<4x32xf32>
    %536 = vector.extract_strided_slice %523 {offsets = [0, 64], sizes = [4, 32], strides = [1, 1]} : vector<4x128xf32> to vector<4x32xf32>
    %537 = math.tanh %536 : vector<4x32xf32>
    %538 = vector.extract_strided_slice %523 {offsets = [0, 96], sizes = [4, 32], strides = [1, 1]} : vector<4x128xf32> to vector<4x32xf32>
    %539 = arith.negf %538 : vector<4x32xf32>
    %540 = math.exp %539 : vector<4x32xf32>
    %cst_137 = arith.constant 1.000000e+00 : f32
    %541 = vector.broadcast %cst_137 : f32 to vector<4x32xf32>
    %542 = arith.addf %541, %540 : vector<4x32xf32>
    %543 = arith.divf %541, %542 : vector<4x32xf32>
    %544 = arith.mulf %535, %466 : vector<4x32xf32>
    %545 = arith.mulf %529, %537 : vector<4x32xf32>
    %546 = arith.addf %544, %545 : vector<4x32xf32>
    %547 = math.tanh %546 : vector<4x32xf32>
    %548 = arith.mulf %543, %547 : vector<4x32xf32>
    %cst_138 = arith.constant 0.000000e+00 : f32
    %549 = vector.shape_cast %518 : vector<4x1xi1> to vector<4x1xi1>
    %550 = vector.broadcast %549 : vector<4x1xi1> to vector<4x32xi1>
    %551 = vector.broadcast %cst_138 : f32 to vector<4x32xf32>
    %552 = arith.select %550, %548, %551 : vector<4x32xi1>, vector<4x32xf32>
    %553 = vector.shape_cast %518 : vector<4x1xi1> to vector<4x1xi1>
    %554 = vector.broadcast %553 : vector<4x1xi1> to vector<4x32xi1>
    %555 = arith.select %554, %548, %463 : vector<4x32xi1>, vector<4x32xf32>
    %556 = vector.shape_cast %518 : vector<4x1xi1> to vector<4x1xi1>
    %557 = vector.broadcast %556 : vector<4x1xi1> to vector<4x32xi1>
    %558 = arith.select %557, %546, %466 : vector<4x32xi1>, vector<4x32xf32>
    %c0_139 = arith.constant 0 : index
    %c5_140 = arith.constant 5 : index
    %c0_141 = arith.constant 0 : index
    %559 = vector.load %arg7[%c0_139, %c5_140, %c0_141] : memref<4x8x32xf32, #tpu.memory_space<vmem>>, vector<4x1x32xf32>
    %560 = vector.shape_cast %559 : vector<4x1x32xf32> to vector<4x32xf32>
    %561 = vector.shape_cast %509 : vector<4x32xf32> to vector<4x1x32xf32>
    tpu.vector_store %arg7[%c0_139, %c5_140, %c0_141], %561 {strides = array<i32>} : memref<4x8x32xf32, #tpu.memory_space<vmem>>, vector<4x1x32xf32>,
    %c0_142 = arith.constant 0 : index
    %c2_143 = arith.constant 2 : index
    %c0_144 = arith.constant 0 : index
    %562 = vector.load %arg8[%c0_142, %c2_143, %c0_144] : memref<4x8x32xf32, #tpu.memory_space<vmem>>, vector<4x1x32xf32>
    %563 = vector.shape_cast %562 : vector<4x1x32xf32> to vector<4x32xf32>
    %564 = vector.shape_cast %552 : vector<4x32xf32> to vector<4x1x32xf32>
    tpu.vector_store %arg8[%c0_142, %c2_143, %c0_144], %564 {strides = array<i32>} : memref<4x8x32xf32, #tpu.memory_space<vmem>>, vector<4x1x32xf32>,
    %c6_i32_145 = arith.constant 6 : i32
    %565 = arith.addi %10, %c6_i32_145 : i32
    %566 = vector.broadcast %565 : i32 to vector<4x1xi32>
    %567 = arith.cmpi slt, %566, %3 : vector<4x1xi32>
    %c0_146 = arith.constant 0 : index
    %c6_147 = arith.constant 6 : index
    %c0_148 = arith.constant 0 : index
    %568 = vector.load %arg2[%c0_146, %c6_147, %c0_148] : memref<4x8x128xbf16, #tpu.memory_space<vmem>>, vector<4x1x128xbf16>
    %569 = vector.shape_cast %568 : vector<4x1x128xbf16> to vector<4x128xbf16>
    %cst_149 = arith.constant dense<0.000000e+00> : vector<4x128xf32>
    %570 = tpu.matmul %512, %4, %cst_149 {dimension_numbers = #tpu.dot_dimension_numbers<[1], [0], [0], [1], [0, 0, 1, 1], [], []>} : vector<4x32xf32>, vector<32x128xf32>, vector<4x128xf32> -> vector<4x128xf32>
    %571 = arith.extf %569 : vector<4x128xbf16> to vector<4x128xf32>
    %572 = arith.addf %570, %571 : vector<4x128xf32>
    %573 = vector.extract_strided_slice %572 {offsets = [0, 0], sizes = [4, 32], strides = [1, 1]} : vector<4x128xf32> to vector<4x32xf32>
    %574 = arith.negf %573 : vector<4x32xf32>
    %575 = math.exp %574 : vector<4x32xf32>
    %cst_150 = arith.constant 1.000000e+00 : f32
    %576 = vector.broadcast %cst_150 : f32 to vector<4x32xf32>
    %577 = arith.addf %576, %575 : vector<4x32xf32>
    %578 = arith.divf %576, %577 : vector<4x32xf32>
    %579 = vector.extract_strided_slice %572 {offsets = [0, 32], sizes = [4, 32], strides = [1, 1]} : vector<4x128xf32> to vector<4x32xf32>
    %580 = arith.negf %579 : vector<4x32xf32>
    %581 = math.exp %580 : vector<4x32xf32>
    %cst_151 = arith.constant 1.000000e+00 : f32
    %582 = vector.broadcast %cst_151 : f32 to vector<4x32xf32>
    %583 = arith.addf %582, %581 : vector<4x32xf32>
    %584 = arith.divf %582, %583 : vector<4x32xf32>
    %585 = vector.extract_strided_slice %572 {offsets = [0, 64], sizes = [4, 32], strides = [1, 1]} : vector<4x128xf32> to vector<4x32xf32>
    %586 = math.tanh %585 : vector<4x32xf32>
    %587 = vector.extract_strided_slice %572 {offsets = [0, 96], sizes = [4, 32], strides = [1, 1]} : vector<4x128xf32> to vector<4x32xf32>
    %588 = arith.negf %587 : vector<4x32xf32>
    %589 = math.exp %588 : vector<4x32xf32>
    %cst_152 = arith.constant 1.000000e+00 : f32
    %590 = vector.broadcast %cst_152 : f32 to vector<4x32xf32>
    %591 = arith.addf %590, %589 : vector<4x32xf32>
    %592 = arith.divf %590, %591 : vector<4x32xf32>
    %593 = arith.mulf %584, %515 : vector<4x32xf32>
    %594 = arith.mulf %578, %586 : vector<4x32xf32>
    %595 = arith.addf %593, %594 : vector<4x32xf32>
    %596 = math.tanh %595 : vector<4x32xf32>
    %597 = arith.mulf %592, %596 : vector<4x32xf32>
    %cst_153 = arith.constant 0.000000e+00 : f32
    %598 = vector.shape_cast %567 : vector<4x1xi1> to vector<4x1xi1>
    %599 = vector.broadcast %598 : vector<4x1xi1> to vector<4x32xi1>
    %600 = vector.broadcast %cst_153 : f32 to vector<4x32xf32>
    %601 = arith.select %599, %597, %600 : vector<4x32xi1>, vector<4x32xf32>
    %602 = vector.shape_cast %567 : vector<4x1xi1> to vector<4x1xi1>
    %603 = vector.broadcast %602 : vector<4x1xi1> to vector<4x32xi1>
    %604 = arith.select %603, %597, %512 : vector<4x32xi1>, vector<4x32xf32>
    %605 = vector.shape_cast %567 : vector<4x1xi1> to vector<4x1xi1>
    %606 = vector.broadcast %605 : vector<4x1xi1> to vector<4x32xi1>
    %607 = arith.select %606, %595, %515 : vector<4x32xi1>, vector<4x32xf32>
    %c1_i32_154 = arith.constant 1 : i32
    %608 = arith.addi %12, %c1_i32_154 : i32
    %609 = vector.broadcast %608 : i32 to vector<4x1xi32>
    %610 = arith.cmpi slt, %609, %3 : vector<4x1xi32>
    %c0_155 = arith.constant 0 : index
    %c1_156 = arith.constant 1 : index
    %c0_157 = arith.constant 0 : index
    %611 = vector.load %arg3[%c0_155, %c1_156, %c0_157] : memref<4x8x128xbf16, #tpu.memory_space<vmem>>, vector<4x1x128xbf16>
    %612 = vector.shape_cast %611 : vector<4x1x128xbf16> to vector<4x128xbf16>
    %cst_158 = arith.constant dense<0.000000e+00> : vector<4x128xf32>
    %613 = tpu.matmul %555, %5, %cst_158 {dimension_numbers = #tpu.dot_dimension_numbers<[1], [0], [0], [1], [0, 0, 1, 1], [], []>} : vector<4x32xf32>, vector<32x128xf32>, vector<4x128xf32> -> vector<4x128xf32>
    %614 = arith.extf %612 : vector<4x128xbf16> to vector<4x128xf32>
    %615 = arith.addf %613, %614 : vector<4x128xf32>
    %616 = vector.extract_strided_slice %615 {offsets = [0, 0], sizes = [4, 32], strides = [1, 1]} : vector<4x128xf32> to vector<4x32xf32>
    %617 = arith.negf %616 : vector<4x32xf32>
    %618 = math.exp %617 : vector<4x32xf32>
    %cst_159 = arith.constant 1.000000e+00 : f32
    %619 = vector.broadcast %cst_159 : f32 to vector<4x32xf32>
    %620 = arith.addf %619, %618 : vector<4x32xf32>
    %621 = arith.divf %619, %620 : vector<4x32xf32>
    %622 = vector.extract_strided_slice %615 {offsets = [0, 32], sizes = [4, 32], strides = [1, 1]} : vector<4x128xf32> to vector<4x32xf32>
    %623 = arith.negf %622 : vector<4x32xf32>
    %624 = math.exp %623 : vector<4x32xf32>
    %cst_160 = arith.constant 1.000000e+00 : f32
    %625 = vector.broadcast %cst_160 : f32 to vector<4x32xf32>
    %626 = arith.addf %625, %624 : vector<4x32xf32>
    %627 = arith.divf %625, %626 : vector<4x32xf32>
    %628 = vector.extract_strided_slice %615 {offsets = [0, 64], sizes = [4, 32], strides = [1, 1]} : vector<4x128xf32> to vector<4x32xf32>
    %629 = math.tanh %628 : vector<4x32xf32>
    %630 = vector.extract_strided_slice %615 {offsets = [0, 96], sizes = [4, 32], strides = [1, 1]} : vector<4x128xf32> to vector<4x32xf32>
    %631 = arith.negf %630 : vector<4x32xf32>
    %632 = math.exp %631 : vector<4x32xf32>
    %cst_161 = arith.constant 1.000000e+00 : f32
    %633 = vector.broadcast %cst_161 : f32 to vector<4x32xf32>
    %634 = arith.addf %633, %632 : vector<4x32xf32>
    %635 = arith.divf %633, %634 : vector<4x32xf32>
    %636 = arith.mulf %627, %558 : vector<4x32xf32>
    %637 = arith.mulf %621, %629 : vector<4x32xf32>
    %638 = arith.addf %636, %637 : vector<4x32xf32>
    %639 = math.tanh %638 : vector<4x32xf32>
    %640 = arith.mulf %635, %639 : vector<4x32xf32>
    %cst_162 = arith.constant 0.000000e+00 : f32
    %641 = vector.shape_cast %610 : vector<4x1xi1> to vector<4x1xi1>
    %642 = vector.broadcast %641 : vector<4x1xi1> to vector<4x32xi1>
    %643 = vector.broadcast %cst_162 : f32 to vector<4x32xf32>
    %644 = arith.select %642, %640, %643 : vector<4x32xi1>, vector<4x32xf32>
    %645 = vector.shape_cast %610 : vector<4x1xi1> to vector<4x1xi1>
    %646 = vector.broadcast %645 : vector<4x1xi1> to vector<4x32xi1>
    %647 = arith.select %646, %640, %555 : vector<4x32xi1>, vector<4x32xf32>
    %648 = vector.shape_cast %610 : vector<4x1xi1> to vector<4x1xi1>
    %649 = vector.broadcast %648 : vector<4x1xi1> to vector<4x32xi1>
    %650 = arith.select %649, %638, %558 : vector<4x32xi1>, vector<4x32xf32>
    %c0_163 = arith.constant 0 : index
    %c6_164 = arith.constant 6 : index
    %c0_165 = arith.constant 0 : index
    %651 = vector.load %arg7[%c0_163, %c6_164, %c0_165] : memref<4x8x32xf32, #tpu.memory_space<vmem>>, vector<4x1x32xf32>
    %652 = vector.shape_cast %651 : vector<4x1x32xf32> to vector<4x32xf32>
    %653 = vector.shape_cast %601 : vector<4x32xf32> to vector<4x1x32xf32>
    tpu.vector_store %arg7[%c0_163, %c6_164, %c0_165], %653 {strides = array<i32>} : memref<4x8x32xf32, #tpu.memory_space<vmem>>, vector<4x1x32xf32>,
    %c0_166 = arith.constant 0 : index
    %c1_167 = arith.constant 1 : index
    %c0_168 = arith.constant 0 : index
    %654 = vector.load %arg8[%c0_166, %c1_167, %c0_168] : memref<4x8x32xf32, #tpu.memory_space<vmem>>, vector<4x1x32xf32>
    %655 = vector.shape_cast %654 : vector<4x1x32xf32> to vector<4x32xf32>
    %656 = vector.shape_cast %644 : vector<4x32xf32> to vector<4x1x32xf32>
    tpu.vector_store %arg8[%c0_166, %c1_167, %c0_168], %656 {strides = array<i32>} : memref<4x8x32xf32, #tpu.memory_space<vmem>>, vector<4x1x32xf32>,
    %c7_i32_169 = arith.constant 7 : i32
    %657 = arith.addi %10, %c7_i32_169 : i32
    %658 = vector.broadcast %657 : i32 to vector<4x1xi32>
    %659 = arith.cmpi slt, %658, %3 : vector<4x1xi32>
    %c0_170 = arith.constant 0 : index
    %c7_171 = arith.constant 7 : index
    %c0_172 = arith.constant 0 : index
    %660 = vector.load %arg2[%c0_170, %c7_171, %c0_172] : memref<4x8x128xbf16, #tpu.memory_space<vmem>>, vector<4x1x128xbf16>
    %661 = vector.shape_cast %660 : vector<4x1x128xbf16> to vector<4x128xbf16>
    %cst_173 = arith.constant dense<0.000000e+00> : vector<4x128xf32>
    %662 = tpu.matmul %604, %4, %cst_173 {dimension_numbers = #tpu.dot_dimension_numbers<[1], [0], [0], [1], [0, 0, 1, 1], [], []>} : vector<4x32xf32>, vector<32x128xf32>, vector<4x128xf32> -> vector<4x128xf32>
    %663 = arith.extf %661 : vector<4x128xbf16> to vector<4x128xf32>
    %664 = arith.addf %662, %663 : vector<4x128xf32>
    %665 = vector.extract_strided_slice %664 {offsets = [0, 0], sizes = [4, 32], strides = [1, 1]} : vector<4x128xf32> to vector<4x32xf32>
    %666 = arith.negf %665 : vector<4x32xf32>
    %667 = math.exp %666 : vector<4x32xf32>
    %cst_174 = arith.constant 1.000000e+00 : f32
    %668 = vector.broadcast %cst_174 : f32 to vector<4x32xf32>
    %669 = arith.addf %668, %667 : vector<4x32xf32>
    %670 = arith.divf %668, %669 : vector<4x32xf32>
    %671 = vector.extract_strided_slice %664 {offsets = [0, 32], sizes = [4, 32], strides = [1, 1]} : vector<4x128xf32> to vector<4x32xf32>
    %672 = arith.negf %671 : vector<4x32xf32>
    %673 = math.exp %672 : vector<4x32xf32>
    %cst_175 = arith.constant 1.000000e+00 : f32
    %674 = vector.broadcast %cst_175 : f32 to vector<4x32xf32>
    %675 = arith.addf %674, %673 : vector<4x32xf32>
    %676 = arith.divf %674, %675 : vector<4x32xf32>
    %677 = vector.extract_strided_slice %664 {offsets = [0, 64], sizes = [4, 32], strides = [1, 1]} : vector<4x128xf32> to vector<4x32xf32>
    %678 = math.tanh %677 : vector<4x32xf32>
    %679 = vector.extract_strided_slice %664 {offsets = [0, 96], sizes = [4, 32], strides = [1, 1]} : vector<4x128xf32> to vector<4x32xf32>
    %680 = arith.negf %679 : vector<4x32xf32>
    %681 = math.exp %680 : vector<4x32xf32>
    %cst_176 = arith.constant 1.000000e+00 : f32
    %682 = vector.broadcast %cst_176 : f32 to vector<4x32xf32>
    %683 = arith.addf %682, %681 : vector<4x32xf32>
    %684 = arith.divf %682, %683 : vector<4x32xf32>
    %685 = arith.mulf %676, %607 : vector<4x32xf32>
    %686 = arith.mulf %670, %678 : vector<4x32xf32>
    %687 = arith.addf %685, %686 : vector<4x32xf32>
    %688 = math.tanh %687 : vector<4x32xf32>
    %689 = arith.mulf %684, %688 : vector<4x32xf32>
    %cst_177 = arith.constant 0.000000e+00 : f32
    %690 = vector.shape_cast %659 : vector<4x1xi1> to vector<4x1xi1>
    %691 = vector.broadcast %690 : vector<4x1xi1> to vector<4x32xi1>
    %692 = vector.broadcast %cst_177 : f32 to vector<4x32xf32>
    %693 = arith.select %691, %689, %692 : vector<4x32xi1>, vector<4x32xf32>
    %694 = vector.shape_cast %659 : vector<4x1xi1> to vector<4x1xi1>
    %695 = vector.broadcast %694 : vector<4x1xi1> to vector<4x32xi1>
    %696 = arith.select %695, %689, %604 : vector<4x32xi1>, vector<4x32xf32>
    %697 = vector.shape_cast %659 : vector<4x1xi1> to vector<4x1xi1>
    %698 = vector.broadcast %697 : vector<4x1xi1> to vector<4x32xi1>
    %699 = arith.select %698, %687, %607 : vector<4x32xi1>, vector<4x32xf32>
    %c0_i32_178 = arith.constant 0 : i32
    %700 = arith.addi %12, %c0_i32_178 : i32
    %701 = vector.broadcast %700 : i32 to vector<4x1xi32>
    %702 = arith.cmpi slt, %701, %3 : vector<4x1xi32>
    %c0_179 = arith.constant 0 : index
    %c0_180 = arith.constant 0 : index
    %c0_181 = arith.constant 0 : index
    %703 = vector.load %arg3[%c0_179, %c0_180, %c0_181] : memref<4x8x128xbf16, #tpu.memory_space<vmem>>, vector<4x1x128xbf16>
    %704 = vector.shape_cast %703 : vector<4x1x128xbf16> to vector<4x128xbf16>
    %cst_182 = arith.constant dense<0.000000e+00> : vector<4x128xf32>
    %705 = tpu.matmul %647, %5, %cst_182 {dimension_numbers = #tpu.dot_dimension_numbers<[1], [0], [0], [1], [0, 0, 1, 1], [], []>} : vector<4x32xf32>, vector<32x128xf32>, vector<4x128xf32> -> vector<4x128xf32>
    %706 = arith.extf %704 : vector<4x128xbf16> to vector<4x128xf32>
    %707 = arith.addf %705, %706 : vector<4x128xf32>
    %708 = vector.extract_strided_slice %707 {offsets = [0, 0], sizes = [4, 32], strides = [1, 1]} : vector<4x128xf32> to vector<4x32xf32>
    %709 = arith.negf %708 : vector<4x32xf32>
    %710 = math.exp %709 : vector<4x32xf32>
    %cst_183 = arith.constant 1.000000e+00 : f32
    %711 = vector.broadcast %cst_183 : f32 to vector<4x32xf32>
    %712 = arith.addf %711, %710 : vector<4x32xf32>
    %713 = arith.divf %711, %712 : vector<4x32xf32>
    %714 = vector.extract_strided_slice %707 {offsets = [0, 32], sizes = [4, 32], strides = [1, 1]} : vector<4x128xf32> to vector<4x32xf32>
    %715 = arith.negf %714 : vector<4x32xf32>
    %716 = math.exp %715 : vector<4x32xf32>
    %cst_184 = arith.constant 1.000000e+00 : f32
    %717 = vector.broadcast %cst_184 : f32 to vector<4x32xf32>
    %718 = arith.addf %717, %716 : vector<4x32xf32>
    %719 = arith.divf %717, %718 : vector<4x32xf32>
    %720 = vector.extract_strided_slice %707 {offsets = [0, 64], sizes = [4, 32], strides = [1, 1]} : vector<4x128xf32> to vector<4x32xf32>
    %721 = math.tanh %720 : vector<4x32xf32>
    %722 = vector.extract_strided_slice %707 {offsets = [0, 96], sizes = [4, 32], strides = [1, 1]} : vector<4x128xf32> to vector<4x32xf32>
    %723 = arith.negf %722 : vector<4x32xf32>
    %724 = math.exp %723 : vector<4x32xf32>
    %cst_185 = arith.constant 1.000000e+00 : f32
    %725 = vector.broadcast %cst_185 : f32 to vector<4x32xf32>
    %726 = arith.addf %725, %724 : vector<4x32xf32>
    %727 = arith.divf %725, %726 : vector<4x32xf32>
    %728 = arith.mulf %719, %650 : vector<4x32xf32>
    %729 = arith.mulf %713, %721 : vector<4x32xf32>
    %730 = arith.addf %728, %729 : vector<4x32xf32>
    %731 = math.tanh %730 : vector<4x32xf32>
    %732 = arith.mulf %727, %731 : vector<4x32xf32>
    %cst_186 = arith.constant 0.000000e+00 : f32
    %733 = vector.shape_cast %702 : vector<4x1xi1> to vector<4x1xi1>
    %734 = vector.broadcast %733 : vector<4x1xi1> to vector<4x32xi1>
    %735 = vector.broadcast %cst_186 : f32 to vector<4x32xf32>
    %736 = arith.select %734, %732, %735 : vector<4x32xi1>, vector<4x32xf32>
    %737 = vector.shape_cast %702 : vector<4x1xi1> to vector<4x1xi1>
    %738 = vector.broadcast %737 : vector<4x1xi1> to vector<4x32xi1>
    %739 = arith.select %738, %732, %647 : vector<4x32xi1>, vector<4x32xf32>
    %740 = vector.shape_cast %702 : vector<4x1xi1> to vector<4x1xi1>
    %741 = vector.broadcast %740 : vector<4x1xi1> to vector<4x32xi1>
    %742 = arith.select %741, %730, %650 : vector<4x32xi1>, vector<4x32xf32>
    %c0_187 = arith.constant 0 : index
    %c7_188 = arith.constant 7 : index
    %c0_189 = arith.constant 0 : index
    %743 = vector.load %arg7[%c0_187, %c7_188, %c0_189] : memref<4x8x32xf32, #tpu.memory_space<vmem>>, vector<4x1x32xf32>
    %744 = vector.shape_cast %743 : vector<4x1x32xf32> to vector<4x32xf32>
    %745 = vector.shape_cast %693 : vector<4x32xf32> to vector<4x1x32xf32>
    tpu.vector_store %arg7[%c0_187, %c7_188, %c0_189], %745 {strides = array<i32>} : memref<4x8x32xf32, #tpu.memory_space<vmem>>, vector<4x1x32xf32>,
    %c0_190 = arith.constant 0 : index
    %c0_191 = arith.constant 0 : index
    %c0_192 = arith.constant 0 : index
    %746 = vector.load %arg8[%c0_190, %c0_191, %c0_192] : memref<4x8x32xf32, #tpu.memory_space<vmem>>, vector<4x1x32xf32>
    %747 = vector.shape_cast %746 : vector<4x1x32xf32> to vector<4x32xf32>
    %748 = vector.shape_cast %736 : vector<4x32xf32> to vector<4x1x32xf32>
    tpu.vector_store %arg8[%c0_190, %c0_191, %c0_192], %748 {strides = array<i32>} : memref<4x8x32xf32, #tpu.memory_space<vmem>>, vector<4x1x32xf32>,
    %c0_193 = arith.constant 0 : index
    %c0_194 = arith.constant 0 : index
    %749 = vector.load %arg9[%c0_193, %c0_194] : memref<4x32xf32, #tpu.memory_space<vmem>>, vector<4x32xf32>
    tpu.vector_store %arg9[%c0_193, %c0_194], %696 {strides = array<i32>} : memref<4x32xf32, #tpu.memory_space<vmem>>, vector<4x32xf32>,
    %c0_195 = arith.constant 0 : index
    %c0_196 = arith.constant 0 : index
    %750 = vector.load %arg10[%c0_195, %c0_196] : memref<4x32xf32, #tpu.memory_space<vmem>>, vector<4x32xf32>
    tpu.vector_store %arg10[%c0_195, %c0_196], %699 {strides = array<i32>} : memref<4x32xf32, #tpu.memory_space<vmem>>, vector<4x32xf32>,
    %c0_197 = arith.constant 0 : index
    %c0_198 = arith.constant 0 : index
    %751 = vector.load %arg11[%c0_197, %c0_198] : memref<4x32xf32, #tpu.memory_space<vmem>>, vector<4x32xf32>
    tpu.vector_store %arg11[%c0_197, %c0_198], %739 {strides = array<i32>} : memref<4x32xf32, #tpu.memory_space<vmem>>, vector<4x32xf32>,
    %c0_199 = arith.constant 0 : index
    %c0_200 = arith.constant 0 : index
    %752 = vector.load %arg12[%c0_199, %c0_200] : memref<4x32xf32, #tpu.memory_space<vmem>>, vector<4x32xf32>
    tpu.vector_store %arg12[%c0_199, %c0_200], %742 {strides = array<i32>} : memref<4x32xf32, #tpu.memory_space<vmem>>, vector<4x32xf32>,
    return
  }
  func.func @transform_0(%arg0: i32, %arg1: i32) -> (i32, i32, i32) {
    %c0_i32 = arith.constant 0 : i32
    %c0_i32_0 = arith.constant 0 : i32
    return %arg0, %arg1, %c0_i32 : i32, i32, i32
  }
  func.func @transform_1(%arg0: i32, %arg1: i32) -> (i32, i32, i32) {
    %c0_i32 = arith.constant 0 : i32
    %0 = arith.subi %c0_i32, %arg1 : i32
    %c0_i32_0 = arith.constant 0 : i32
    %c0_i32_1 = arith.constant 0 : i32
    return %arg0, %0, %c0_i32_0 : i32, i32, i32
  }
  func.func @transform_2(%arg0: i32, %arg1: i32) -> (i32, i32) {
    %c0_i32 = arith.constant 0 : i32
    %c0_i32_0 = arith.constant 0 : i32
    return %arg0, %c0_i32 : i32, i32
  }
  func.func @transform_3(%arg0: i32, %arg1: i32) -> (i32, i32) {
    %c0_i32 = arith.constant 0 : i32
    %c0_i32_0 = arith.constant 0 : i32
    %c0_i32_1 = arith.constant 0 : i32
    return %c0_i32, %c0_i32_0 : i32, i32
  }
  func.func @transform_4(%arg0: i32, %arg1: i32) -> (i32, i32) {
    %c0_i32 = arith.constant 0 : i32
    %c0_i32_0 = arith.constant 0 : i32
    %c0_i32_1 = arith.constant 0 : i32
    return %c0_i32, %c0_i32_0 : i32, i32
  }
  func.func @transform_5(%arg0: i32, %arg1: i32) -> (i32, i32, i32) {
    %c0_i32 = arith.constant 0 : i32
    %c0_i32_0 = arith.constant 0 : i32
    return %arg0, %arg1, %c0_i32 : i32, i32, i32
  }
  func.func @transform_6(%arg0: i32, %arg1: i32) -> (i32, i32, i32) {
    %c0_i32 = arith.constant 0 : i32
    %0 = arith.subi %c0_i32, %arg1 : i32
    %c0_i32_0 = arith.constant 0 : i32
    %c0_i32_1 = arith.constant 0 : i32
    return %arg0, %0, %c0_i32_0 : i32, i32, i32
  }
}

module attributes {stable_mosaic.version = 11 : i64} {
  func.func @kernel(%arg0: i32, %arg1: i32, %arg2: memref<4x8x128xbf16, #tpu.memory_space<vmem>>, %arg3: memref<4x8x128xbf16, #tpu.memory_space<vmem>>, %arg4: memref<4x1xi32, #tpu.memory_space<vmem>>, %arg5: memref<32x128xf32, #tpu.memory_space<vmem>>, %arg6: memref<32x128xf32, #tpu.memory_space<vmem>>, %arg7: memref<4x32xf32, #tpu.memory_space<vmem>>, %arg8: memref<4x32xf32, #tpu.memory_space<vmem>>, %arg9: memref<4x32xf32, #tpu.memory_space<vmem>>, %arg10: memref<4x32xf32, #tpu.memory_space<vmem>>, %arg11: memref<4x32xf32, #tpu.memory_space<vmem>>, %arg12: memref<4x32xf32, #tpu.memory_space<vmem>>) attributes {dimension_semantics = [#tpu.dimension_semantics<parallel>, #tpu.dimension_semantics<arbitrary>], iteration_bounds = array<i64: 1, 1>, scalar_prefetch = 0 : i64, scratch_operands = 4 : i64, tpu.core_type = #tpu.core_type<tc>, window_params = [{transform_indices = @transform_0, window_bounds = array<i64: 4, 8, 128>}, {transform_indices = @transform_1, window_bounds = array<i64: 4, 8, 128>}, {transform_indices = @transform_2, window_bounds = array<i64: 4, 1>}, {pipeline_mode = #tpu.pipeline_mode<synchronous>, transform_indices = @transform_3, window_bounds = array<i64: 32, 128>}, {pipeline_mode = #tpu.pipeline_mode<synchronous>, transform_indices = @transform_4, window_bounds = array<i64: 32, 128>}, {transform_indices = @transform_5, window_bounds = array<i64: 4, 32>}, {transform_indices = @transform_6, window_bounds = array<i64: 4, 32>}]} {
    %c0_i32 = arith.constant 0 : i32
    %0 = arith.cmpi eq, %arg1, %c0_i32 : i32
    %1 = arith.extui %0 : i1 to i32
    %c0_i32_0 = arith.constant 0 : i32
    %2 = arith.cmpi ne, %1, %c0_i32_0 : i32
    scf.if %2 {
      %cst_165 = arith.constant 0.000000e+00 : f32
      %732 = vector.broadcast %cst_165 : f32 to vector<4x32xf32>
      %c0_166 = arith.constant 0 : index
      %c0_167 = arith.constant 0 : index
      %733 = vector.load %arg9[%c0_166, %c0_167] : memref<4x32xf32, #tpu.memory_space<vmem>>, vector<4x32xf32>
      tpu.vector_store %arg9[%c0_166, %c0_167], %732 {strides = array<i32>} : memref<4x32xf32, #tpu.memory_space<vmem>>, vector<4x32xf32>,
      %cst_168 = arith.constant 0.000000e+00 : f32
      %734 = vector.broadcast %cst_168 : f32 to vector<4x32xf32>
      %c0_169 = arith.constant 0 : index
      %c0_170 = arith.constant 0 : index
      %735 = vector.load %arg10[%c0_169, %c0_170] : memref<4x32xf32, #tpu.memory_space<vmem>>, vector<4x32xf32>
      tpu.vector_store %arg10[%c0_169, %c0_170], %734 {strides = array<i32>} : memref<4x32xf32, #tpu.memory_space<vmem>>, vector<4x32xf32>,
      %cst_171 = arith.constant 0.000000e+00 : f32
      %736 = vector.broadcast %cst_171 : f32 to vector<4x32xf32>
      %c0_172 = arith.constant 0 : index
      %c0_173 = arith.constant 0 : index
      %737 = vector.load %arg11[%c0_172, %c0_173] : memref<4x32xf32, #tpu.memory_space<vmem>>, vector<4x32xf32>
      tpu.vector_store %arg11[%c0_172, %c0_173], %736 {strides = array<i32>} : memref<4x32xf32, #tpu.memory_space<vmem>>, vector<4x32xf32>,
      %cst_174 = arith.constant 0.000000e+00 : f32
      %738 = vector.broadcast %cst_174 : f32 to vector<4x32xf32>
      %c0_175 = arith.constant 0 : index
      %c0_176 = arith.constant 0 : index
      %739 = vector.load %arg12[%c0_175, %c0_176] : memref<4x32xf32, #tpu.memory_space<vmem>>, vector<4x32xf32>
      tpu.vector_store %arg12[%c0_175, %c0_176], %738 {strides = array<i32>} : memref<4x32xf32, #tpu.memory_space<vmem>>, vector<4x32xf32>,
      %cst_177 = arith.constant 0.000000e+00 : f32
      %740 = vector.broadcast %cst_177 : f32 to vector<4x32xf32>
      %c0_178 = arith.constant 0 : index
      %c0_179 = arith.constant 0 : index
      %741 = vector.load %arg7[%c0_178, %c0_179] : memref<4x32xf32, #tpu.memory_space<vmem>>, vector<4x32xf32>
      tpu.vector_store %arg7[%c0_178, %c0_179], %740 {strides = array<i32>} : memref<4x32xf32, #tpu.memory_space<vmem>>, vector<4x32xf32>,
      %cst_180 = arith.constant 0.000000e+00 : f32
      %742 = vector.broadcast %cst_180 : f32 to vector<4x32xf32>
      %c0_181 = arith.constant 0 : index
      %c0_182 = arith.constant 0 : index
      %743 = vector.load %arg8[%c0_181, %c0_182] : memref<4x32xf32, #tpu.memory_space<vmem>>, vector<4x32xf32>
      tpu.vector_store %arg8[%c0_181, %c0_182], %742 {strides = array<i32>} : memref<4x32xf32, #tpu.memory_space<vmem>>, vector<4x32xf32>,
    } else {
    }
    %c0 = arith.constant 0 : index
    %c0_1 = arith.constant 0 : index
    %3 = vector.load %arg4[%c0, %c0_1] : memref<4x1xi32, #tpu.memory_space<vmem>>, vector<4x1xi32>
    %c0_2 = arith.constant 0 : index
    %c0_3 = arith.constant 0 : index
    %4 = vector.load %arg5[%c0_2, %c0_3] : memref<32x128xf32, #tpu.memory_space<vmem>>, vector<32x128xf32>
    %c0_4 = arith.constant 0 : index
    %c0_5 = arith.constant 0 : index
    %5 = vector.load %arg6[%c0_4, %c0_5] : memref<32x128xf32, #tpu.memory_space<vmem>>, vector<32x128xf32>
    %c0_6 = arith.constant 0 : index
    %c0_7 = arith.constant 0 : index
    %6 = vector.load %arg9[%c0_6, %c0_7] : memref<4x32xf32, #tpu.memory_space<vmem>>, vector<4x32xf32>
    %c0_8 = arith.constant 0 : index
    %c0_9 = arith.constant 0 : index
    %7 = vector.load %arg10[%c0_8, %c0_9] : memref<4x32xf32, #tpu.memory_space<vmem>>, vector<4x32xf32>
    %c0_10 = arith.constant 0 : index
    %c0_11 = arith.constant 0 : index
    %8 = vector.load %arg11[%c0_10, %c0_11] : memref<4x32xf32, #tpu.memory_space<vmem>>, vector<4x32xf32>
    %c0_12 = arith.constant 0 : index
    %c0_13 = arith.constant 0 : index
    %9 = vector.load %arg12[%c0_12, %c0_13] : memref<4x32xf32, #tpu.memory_space<vmem>>, vector<4x32xf32>
    %cst = arith.constant 0.000000e+00 : f32
    %10 = vector.broadcast %cst : f32 to vector<4x32xf32>
    %cst_14 = arith.constant 0.000000e+00 : f32
    %11 = vector.broadcast %cst_14 : f32 to vector<4x32xf32>
    %c8_i32 = arith.constant 8 : i32
    %12 = arith.muli %arg1, %c8_i32 : i32
    %c0_i32_15 = arith.constant 0 : i32
    %13 = arith.subi %c0_i32_15, %arg1 : i32
    %c8_i32_16 = arith.constant 8 : i32
    %14 = arith.muli %13, %c8_i32_16 : i32
    %c0_i32_17 = arith.constant 0 : i32
    %15 = arith.addi %12, %c0_i32_17 : i32
    %16 = vector.broadcast %15 : i32 to vector<4x1xi32>
    %17 = arith.cmpi slt, %16, %3 : vector<4x1xi32>
    %c0_18 = arith.constant 0 : index
    %c0_19 = arith.constant 0 : index
    %c0_20 = arith.constant 0 : index
    %18 = vector.load %arg2[%c0_18, %c0_19, %c0_20] : memref<4x8x128xbf16, #tpu.memory_space<vmem>>, vector<4x1x128xbf16>
    %19 = vector.shape_cast %18 : vector<4x1x128xbf16> to vector<4x128xbf16>
    %cst_21 = arith.constant dense<0.000000e+00> : vector<4x128xf32>
    %20 = tpu.matmul %6, %4, %cst_21 {dimension_numbers = #tpu.dot_dimension_numbers<[1], [0], [0], [1], [0, 0, 1, 1], [], []>} : vector<4x32xf32>, vector<32x128xf32>, vector<4x128xf32> -> vector<4x128xf32>
    %21 = arith.extf %19 : vector<4x128xbf16> to vector<4x128xf32>
    %22 = arith.addf %20, %21 : vector<4x128xf32>
    %23 = vector.extract_strided_slice %22 {offsets = [0, 0], sizes = [4, 32], strides = [1, 1]} : vector<4x128xf32> to vector<4x32xf32>
    %24 = arith.negf %23 : vector<4x32xf32>
    %25 = math.exp %24 : vector<4x32xf32>
    %cst_22 = arith.constant 1.000000e+00 : f32
    %26 = vector.broadcast %cst_22 : f32 to vector<4x32xf32>
    %27 = arith.addf %26, %25 : vector<4x32xf32>
    %28 = arith.divf %26, %27 : vector<4x32xf32>
    %29 = vector.extract_strided_slice %22 {offsets = [0, 32], sizes = [4, 32], strides = [1, 1]} : vector<4x128xf32> to vector<4x32xf32>
    %30 = arith.negf %29 : vector<4x32xf32>
    %31 = math.exp %30 : vector<4x32xf32>
    %cst_23 = arith.constant 1.000000e+00 : f32
    %32 = vector.broadcast %cst_23 : f32 to vector<4x32xf32>
    %33 = arith.addf %32, %31 : vector<4x32xf32>
    %34 = arith.divf %32, %33 : vector<4x32xf32>
    %35 = vector.extract_strided_slice %22 {offsets = [0, 64], sizes = [4, 32], strides = [1, 1]} : vector<4x128xf32> to vector<4x32xf32>
    %36 = math.tanh %35 : vector<4x32xf32>
    %37 = vector.extract_strided_slice %22 {offsets = [0, 96], sizes = [4, 32], strides = [1, 1]} : vector<4x128xf32> to vector<4x32xf32>
    %38 = arith.negf %37 : vector<4x32xf32>
    %39 = math.exp %38 : vector<4x32xf32>
    %cst_24 = arith.constant 1.000000e+00 : f32
    %40 = vector.broadcast %cst_24 : f32 to vector<4x32xf32>
    %41 = arith.addf %40, %39 : vector<4x32xf32>
    %42 = arith.divf %40, %41 : vector<4x32xf32>
    %43 = arith.mulf %34, %7 : vector<4x32xf32>
    %44 = arith.mulf %28, %36 : vector<4x32xf32>
    %45 = arith.addf %43, %44 : vector<4x32xf32>
    %46 = math.tanh %45 : vector<4x32xf32>
    %47 = arith.mulf %42, %46 : vector<4x32xf32>
    %cst_25 = arith.constant 0.000000e+00 : f32
    %48 = vector.shape_cast %17 : vector<4x1xi1> to vector<4x1xi1>
    %49 = vector.broadcast %48 : vector<4x1xi1> to vector<4x32xi1>
    %50 = vector.broadcast %cst_25 : f32 to vector<4x32xf32>
    %51 = arith.select %49, %47, %50 : vector<4x32xi1>, vector<4x32xf32>
    %52 = vector.shape_cast %17 : vector<4x1xi1> to vector<4x1xi1>
    %53 = vector.broadcast %52 : vector<4x1xi1> to vector<4x32xi1>
    %54 = arith.select %53, %47, %6 : vector<4x32xi1>, vector<4x32xf32>
    %55 = vector.shape_cast %17 : vector<4x1xi1> to vector<4x1xi1>
    %56 = vector.broadcast %55 : vector<4x1xi1> to vector<4x32xi1>
    %57 = arith.select %56, %45, %7 : vector<4x32xi1>, vector<4x32xf32>
    %c7_i32 = arith.constant 7 : i32
    %58 = arith.addi %14, %c7_i32 : i32
    %59 = vector.broadcast %58 : i32 to vector<4x1xi32>
    %60 = arith.cmpi slt, %59, %3 : vector<4x1xi32>
    %c0_26 = arith.constant 0 : index
    %c7 = arith.constant 7 : index
    %c0_27 = arith.constant 0 : index
    %61 = vector.load %arg3[%c0_26, %c7, %c0_27] : memref<4x8x128xbf16, #tpu.memory_space<vmem>>, vector<4x1x128xbf16>
    %62 = vector.shape_cast %61 : vector<4x1x128xbf16> to vector<4x128xbf16>
    %cst_28 = arith.constant dense<0.000000e+00> : vector<4x128xf32>
    %63 = tpu.matmul %8, %5, %cst_28 {dimension_numbers = #tpu.dot_dimension_numbers<[1], [0], [0], [1], [0, 0, 1, 1], [], []>} : vector<4x32xf32>, vector<32x128xf32>, vector<4x128xf32> -> vector<4x128xf32>
    %64 = arith.extf %62 : vector<4x128xbf16> to vector<4x128xf32>
    %65 = arith.addf %63, %64 : vector<4x128xf32>
    %66 = vector.extract_strided_slice %65 {offsets = [0, 0], sizes = [4, 32], strides = [1, 1]} : vector<4x128xf32> to vector<4x32xf32>
    %67 = arith.negf %66 : vector<4x32xf32>
    %68 = math.exp %67 : vector<4x32xf32>
    %cst_29 = arith.constant 1.000000e+00 : f32
    %69 = vector.broadcast %cst_29 : f32 to vector<4x32xf32>
    %70 = arith.addf %69, %68 : vector<4x32xf32>
    %71 = arith.divf %69, %70 : vector<4x32xf32>
    %72 = vector.extract_strided_slice %65 {offsets = [0, 32], sizes = [4, 32], strides = [1, 1]} : vector<4x128xf32> to vector<4x32xf32>
    %73 = arith.negf %72 : vector<4x32xf32>
    %74 = math.exp %73 : vector<4x32xf32>
    %cst_30 = arith.constant 1.000000e+00 : f32
    %75 = vector.broadcast %cst_30 : f32 to vector<4x32xf32>
    %76 = arith.addf %75, %74 : vector<4x32xf32>
    %77 = arith.divf %75, %76 : vector<4x32xf32>
    %78 = vector.extract_strided_slice %65 {offsets = [0, 64], sizes = [4, 32], strides = [1, 1]} : vector<4x128xf32> to vector<4x32xf32>
    %79 = math.tanh %78 : vector<4x32xf32>
    %80 = vector.extract_strided_slice %65 {offsets = [0, 96], sizes = [4, 32], strides = [1, 1]} : vector<4x128xf32> to vector<4x32xf32>
    %81 = arith.negf %80 : vector<4x32xf32>
    %82 = math.exp %81 : vector<4x32xf32>
    %cst_31 = arith.constant 1.000000e+00 : f32
    %83 = vector.broadcast %cst_31 : f32 to vector<4x32xf32>
    %84 = arith.addf %83, %82 : vector<4x32xf32>
    %85 = arith.divf %83, %84 : vector<4x32xf32>
    %86 = arith.mulf %77, %9 : vector<4x32xf32>
    %87 = arith.mulf %71, %79 : vector<4x32xf32>
    %88 = arith.addf %86, %87 : vector<4x32xf32>
    %89 = math.tanh %88 : vector<4x32xf32>
    %90 = arith.mulf %85, %89 : vector<4x32xf32>
    %cst_32 = arith.constant 0.000000e+00 : f32
    %91 = vector.shape_cast %60 : vector<4x1xi1> to vector<4x1xi1>
    %92 = vector.broadcast %91 : vector<4x1xi1> to vector<4x32xi1>
    %93 = vector.broadcast %cst_32 : f32 to vector<4x32xf32>
    %94 = arith.select %92, %90, %93 : vector<4x32xi1>, vector<4x32xf32>
    %95 = vector.shape_cast %60 : vector<4x1xi1> to vector<4x1xi1>
    %96 = vector.broadcast %95 : vector<4x1xi1> to vector<4x32xi1>
    %97 = arith.select %96, %90, %8 : vector<4x32xi1>, vector<4x32xf32>
    %98 = vector.shape_cast %60 : vector<4x1xi1> to vector<4x1xi1>
    %99 = vector.broadcast %98 : vector<4x1xi1> to vector<4x32xi1>
    %100 = arith.select %99, %88, %9 : vector<4x32xi1>, vector<4x32xf32>
    %101 = arith.addf %10, %51 : vector<4x32xf32>
    %102 = arith.addf %11, %94 : vector<4x32xf32>
    %c1_i32 = arith.constant 1 : i32
    %103 = arith.addi %12, %c1_i32 : i32
    %104 = vector.broadcast %103 : i32 to vector<4x1xi32>
    %105 = arith.cmpi slt, %104, %3 : vector<4x1xi32>
    %c0_33 = arith.constant 0 : index
    %c1 = arith.constant 1 : index
    %c0_34 = arith.constant 0 : index
    %106 = vector.load %arg2[%c0_33, %c1, %c0_34] : memref<4x8x128xbf16, #tpu.memory_space<vmem>>, vector<4x1x128xbf16>
    %107 = vector.shape_cast %106 : vector<4x1x128xbf16> to vector<4x128xbf16>
    %cst_35 = arith.constant dense<0.000000e+00> : vector<4x128xf32>
    %108 = tpu.matmul %54, %4, %cst_35 {dimension_numbers = #tpu.dot_dimension_numbers<[1], [0], [0], [1], [0, 0, 1, 1], [], []>} : vector<4x32xf32>, vector<32x128xf32>, vector<4x128xf32> -> vector<4x128xf32>
    %109 = arith.extf %107 : vector<4x128xbf16> to vector<4x128xf32>
    %110 = arith.addf %108, %109 : vector<4x128xf32>
    %111 = vector.extract_strided_slice %110 {offsets = [0, 0], sizes = [4, 32], strides = [1, 1]} : vector<4x128xf32> to vector<4x32xf32>
    %112 = arith.negf %111 : vector<4x32xf32>
    %113 = math.exp %112 : vector<4x32xf32>
    %cst_36 = arith.constant 1.000000e+00 : f32
    %114 = vector.broadcast %cst_36 : f32 to vector<4x32xf32>
    %115 = arith.addf %114, %113 : vector<4x32xf32>
    %116 = arith.divf %114, %115 : vector<4x32xf32>
    %117 = vector.extract_strided_slice %110 {offsets = [0, 32], sizes = [4, 32], strides = [1, 1]} : vector<4x128xf32> to vector<4x32xf32>
    %118 = arith.negf %117 : vector<4x32xf32>
    %119 = math.exp %118 : vector<4x32xf32>
    %cst_37 = arith.constant 1.000000e+00 : f32
    %120 = vector.broadcast %cst_37 : f32 to vector<4x32xf32>
    %121 = arith.addf %120, %119 : vector<4x32xf32>
    %122 = arith.divf %120, %121 : vector<4x32xf32>
    %123 = vector.extract_strided_slice %110 {offsets = [0, 64], sizes = [4, 32], strides = [1, 1]} : vector<4x128xf32> to vector<4x32xf32>
    %124 = math.tanh %123 : vector<4x32xf32>
    %125 = vector.extract_strided_slice %110 {offsets = [0, 96], sizes = [4, 32], strides = [1, 1]} : vector<4x128xf32> to vector<4x32xf32>
    %126 = arith.negf %125 : vector<4x32xf32>
    %127 = math.exp %126 : vector<4x32xf32>
    %cst_38 = arith.constant 1.000000e+00 : f32
    %128 = vector.broadcast %cst_38 : f32 to vector<4x32xf32>
    %129 = arith.addf %128, %127 : vector<4x32xf32>
    %130 = arith.divf %128, %129 : vector<4x32xf32>
    %131 = arith.mulf %122, %57 : vector<4x32xf32>
    %132 = arith.mulf %116, %124 : vector<4x32xf32>
    %133 = arith.addf %131, %132 : vector<4x32xf32>
    %134 = math.tanh %133 : vector<4x32xf32>
    %135 = arith.mulf %130, %134 : vector<4x32xf32>
    %cst_39 = arith.constant 0.000000e+00 : f32
    %136 = vector.shape_cast %105 : vector<4x1xi1> to vector<4x1xi1>
    %137 = vector.broadcast %136 : vector<4x1xi1> to vector<4x32xi1>
    %138 = vector.broadcast %cst_39 : f32 to vector<4x32xf32>
    %139 = arith.select %137, %135, %138 : vector<4x32xi1>, vector<4x32xf32>
    %140 = vector.shape_cast %105 : vector<4x1xi1> to vector<4x1xi1>
    %141 = vector.broadcast %140 : vector<4x1xi1> to vector<4x32xi1>
    %142 = arith.select %141, %135, %54 : vector<4x32xi1>, vector<4x32xf32>
    %143 = vector.shape_cast %105 : vector<4x1xi1> to vector<4x1xi1>
    %144 = vector.broadcast %143 : vector<4x1xi1> to vector<4x32xi1>
    %145 = arith.select %144, %133, %57 : vector<4x32xi1>, vector<4x32xf32>
    %c6_i32 = arith.constant 6 : i32
    %146 = arith.addi %14, %c6_i32 : i32
    %147 = vector.broadcast %146 : i32 to vector<4x1xi32>
    %148 = arith.cmpi slt, %147, %3 : vector<4x1xi32>
    %c0_40 = arith.constant 0 : index
    %c6 = arith.constant 6 : index
    %c0_41 = arith.constant 0 : index
    %149 = vector.load %arg3[%c0_40, %c6, %c0_41] : memref<4x8x128xbf16, #tpu.memory_space<vmem>>, vector<4x1x128xbf16>
    %150 = vector.shape_cast %149 : vector<4x1x128xbf16> to vector<4x128xbf16>
    %cst_42 = arith.constant dense<0.000000e+00> : vector<4x128xf32>
    %151 = tpu.matmul %97, %5, %cst_42 {dimension_numbers = #tpu.dot_dimension_numbers<[1], [0], [0], [1], [0, 0, 1, 1], [], []>} : vector<4x32xf32>, vector<32x128xf32>, vector<4x128xf32> -> vector<4x128xf32>
    %152 = arith.extf %150 : vector<4x128xbf16> to vector<4x128xf32>
    %153 = arith.addf %151, %152 : vector<4x128xf32>
    %154 = vector.extract_strided_slice %153 {offsets = [0, 0], sizes = [4, 32], strides = [1, 1]} : vector<4x128xf32> to vector<4x32xf32>
    %155 = arith.negf %154 : vector<4x32xf32>
    %156 = math.exp %155 : vector<4x32xf32>
    %cst_43 = arith.constant 1.000000e+00 : f32
    %157 = vector.broadcast %cst_43 : f32 to vector<4x32xf32>
    %158 = arith.addf %157, %156 : vector<4x32xf32>
    %159 = arith.divf %157, %158 : vector<4x32xf32>
    %160 = vector.extract_strided_slice %153 {offsets = [0, 32], sizes = [4, 32], strides = [1, 1]} : vector<4x128xf32> to vector<4x32xf32>
    %161 = arith.negf %160 : vector<4x32xf32>
    %162 = math.exp %161 : vector<4x32xf32>
    %cst_44 = arith.constant 1.000000e+00 : f32
    %163 = vector.broadcast %cst_44 : f32 to vector<4x32xf32>
    %164 = arith.addf %163, %162 : vector<4x32xf32>
    %165 = arith.divf %163, %164 : vector<4x32xf32>
    %166 = vector.extract_strided_slice %153 {offsets = [0, 64], sizes = [4, 32], strides = [1, 1]} : vector<4x128xf32> to vector<4x32xf32>
    %167 = math.tanh %166 : vector<4x32xf32>
    %168 = vector.extract_strided_slice %153 {offsets = [0, 96], sizes = [4, 32], strides = [1, 1]} : vector<4x128xf32> to vector<4x32xf32>
    %169 = arith.negf %168 : vector<4x32xf32>
    %170 = math.exp %169 : vector<4x32xf32>
    %cst_45 = arith.constant 1.000000e+00 : f32
    %171 = vector.broadcast %cst_45 : f32 to vector<4x32xf32>
    %172 = arith.addf %171, %170 : vector<4x32xf32>
    %173 = arith.divf %171, %172 : vector<4x32xf32>
    %174 = arith.mulf %165, %100 : vector<4x32xf32>
    %175 = arith.mulf %159, %167 : vector<4x32xf32>
    %176 = arith.addf %174, %175 : vector<4x32xf32>
    %177 = math.tanh %176 : vector<4x32xf32>
    %178 = arith.mulf %173, %177 : vector<4x32xf32>
    %cst_46 = arith.constant 0.000000e+00 : f32
    %179 = vector.shape_cast %148 : vector<4x1xi1> to vector<4x1xi1>
    %180 = vector.broadcast %179 : vector<4x1xi1> to vector<4x32xi1>
    %181 = vector.broadcast %cst_46 : f32 to vector<4x32xf32>
    %182 = arith.select %180, %178, %181 : vector<4x32xi1>, vector<4x32xf32>
    %183 = vector.shape_cast %148 : vector<4x1xi1> to vector<4x1xi1>
    %184 = vector.broadcast %183 : vector<4x1xi1> to vector<4x32xi1>
    %185 = arith.select %184, %178, %97 : vector<4x32xi1>, vector<4x32xf32>
    %186 = vector.shape_cast %148 : vector<4x1xi1> to vector<4x1xi1>
    %187 = vector.broadcast %186 : vector<4x1xi1> to vector<4x32xi1>
    %188 = arith.select %187, %176, %100 : vector<4x32xi1>, vector<4x32xf32>
    %189 = arith.addf %101, %139 : vector<4x32xf32>
    %190 = arith.addf %102, %182 : vector<4x32xf32>
    %c2_i32 = arith.constant 2 : i32
    %191 = arith.addi %12, %c2_i32 : i32
    %192 = vector.broadcast %191 : i32 to vector<4x1xi32>
    %193 = arith.cmpi slt, %192, %3 : vector<4x1xi32>
    %c0_47 = arith.constant 0 : index
    %c2 = arith.constant 2 : index
    %c0_48 = arith.constant 0 : index
    %194 = vector.load %arg2[%c0_47, %c2, %c0_48] : memref<4x8x128xbf16, #tpu.memory_space<vmem>>, vector<4x1x128xbf16>
    %195 = vector.shape_cast %194 : vector<4x1x128xbf16> to vector<4x128xbf16>
    %cst_49 = arith.constant dense<0.000000e+00> : vector<4x128xf32>
    %196 = tpu.matmul %142, %4, %cst_49 {dimension_numbers = #tpu.dot_dimension_numbers<[1], [0], [0], [1], [0, 0, 1, 1], [], []>} : vector<4x32xf32>, vector<32x128xf32>, vector<4x128xf32> -> vector<4x128xf32>
    %197 = arith.extf %195 : vector<4x128xbf16> to vector<4x128xf32>
    %198 = arith.addf %196, %197 : vector<4x128xf32>
    %199 = vector.extract_strided_slice %198 {offsets = [0, 0], sizes = [4, 32], strides = [1, 1]} : vector<4x128xf32> to vector<4x32xf32>
    %200 = arith.negf %199 : vector<4x32xf32>
    %201 = math.exp %200 : vector<4x32xf32>
    %cst_50 = arith.constant 1.000000e+00 : f32
    %202 = vector.broadcast %cst_50 : f32 to vector<4x32xf32>
    %203 = arith.addf %202, %201 : vector<4x32xf32>
    %204 = arith.divf %202, %203 : vector<4x32xf32>
    %205 = vector.extract_strided_slice %198 {offsets = [0, 32], sizes = [4, 32], strides = [1, 1]} : vector<4x128xf32> to vector<4x32xf32>
    %206 = arith.negf %205 : vector<4x32xf32>
    %207 = math.exp %206 : vector<4x32xf32>
    %cst_51 = arith.constant 1.000000e+00 : f32
    %208 = vector.broadcast %cst_51 : f32 to vector<4x32xf32>
    %209 = arith.addf %208, %207 : vector<4x32xf32>
    %210 = arith.divf %208, %209 : vector<4x32xf32>
    %211 = vector.extract_strided_slice %198 {offsets = [0, 64], sizes = [4, 32], strides = [1, 1]} : vector<4x128xf32> to vector<4x32xf32>
    %212 = math.tanh %211 : vector<4x32xf32>
    %213 = vector.extract_strided_slice %198 {offsets = [0, 96], sizes = [4, 32], strides = [1, 1]} : vector<4x128xf32> to vector<4x32xf32>
    %214 = arith.negf %213 : vector<4x32xf32>
    %215 = math.exp %214 : vector<4x32xf32>
    %cst_52 = arith.constant 1.000000e+00 : f32
    %216 = vector.broadcast %cst_52 : f32 to vector<4x32xf32>
    %217 = arith.addf %216, %215 : vector<4x32xf32>
    %218 = arith.divf %216, %217 : vector<4x32xf32>
    %219 = arith.mulf %210, %145 : vector<4x32xf32>
    %220 = arith.mulf %204, %212 : vector<4x32xf32>
    %221 = arith.addf %219, %220 : vector<4x32xf32>
    %222 = math.tanh %221 : vector<4x32xf32>
    %223 = arith.mulf %218, %222 : vector<4x32xf32>
    %cst_53 = arith.constant 0.000000e+00 : f32
    %224 = vector.shape_cast %193 : vector<4x1xi1> to vector<4x1xi1>
    %225 = vector.broadcast %224 : vector<4x1xi1> to vector<4x32xi1>
    %226 = vector.broadcast %cst_53 : f32 to vector<4x32xf32>
    %227 = arith.select %225, %223, %226 : vector<4x32xi1>, vector<4x32xf32>
    %228 = vector.shape_cast %193 : vector<4x1xi1> to vector<4x1xi1>
    %229 = vector.broadcast %228 : vector<4x1xi1> to vector<4x32xi1>
    %230 = arith.select %229, %223, %142 : vector<4x32xi1>, vector<4x32xf32>
    %231 = vector.shape_cast %193 : vector<4x1xi1> to vector<4x1xi1>
    %232 = vector.broadcast %231 : vector<4x1xi1> to vector<4x32xi1>
    %233 = arith.select %232, %221, %145 : vector<4x32xi1>, vector<4x32xf32>
    %c5_i32 = arith.constant 5 : i32
    %234 = arith.addi %14, %c5_i32 : i32
    %235 = vector.broadcast %234 : i32 to vector<4x1xi32>
    %236 = arith.cmpi slt, %235, %3 : vector<4x1xi32>
    %c0_54 = arith.constant 0 : index
    %c5 = arith.constant 5 : index
    %c0_55 = arith.constant 0 : index
    %237 = vector.load %arg3[%c0_54, %c5, %c0_55] : memref<4x8x128xbf16, #tpu.memory_space<vmem>>, vector<4x1x128xbf16>
    %238 = vector.shape_cast %237 : vector<4x1x128xbf16> to vector<4x128xbf16>
    %cst_56 = arith.constant dense<0.000000e+00> : vector<4x128xf32>
    %239 = tpu.matmul %185, %5, %cst_56 {dimension_numbers = #tpu.dot_dimension_numbers<[1], [0], [0], [1], [0, 0, 1, 1], [], []>} : vector<4x32xf32>, vector<32x128xf32>, vector<4x128xf32> -> vector<4x128xf32>
    %240 = arith.extf %238 : vector<4x128xbf16> to vector<4x128xf32>
    %241 = arith.addf %239, %240 : vector<4x128xf32>
    %242 = vector.extract_strided_slice %241 {offsets = [0, 0], sizes = [4, 32], strides = [1, 1]} : vector<4x128xf32> to vector<4x32xf32>
    %243 = arith.negf %242 : vector<4x32xf32>
    %244 = math.exp %243 : vector<4x32xf32>
    %cst_57 = arith.constant 1.000000e+00 : f32
    %245 = vector.broadcast %cst_57 : f32 to vector<4x32xf32>
    %246 = arith.addf %245, %244 : vector<4x32xf32>
    %247 = arith.divf %245, %246 : vector<4x32xf32>
    %248 = vector.extract_strided_slice %241 {offsets = [0, 32], sizes = [4, 32], strides = [1, 1]} : vector<4x128xf32> to vector<4x32xf32>
    %249 = arith.negf %248 : vector<4x32xf32>
    %250 = math.exp %249 : vector<4x32xf32>
    %cst_58 = arith.constant 1.000000e+00 : f32
    %251 = vector.broadcast %cst_58 : f32 to vector<4x32xf32>
    %252 = arith.addf %251, %250 : vector<4x32xf32>
    %253 = arith.divf %251, %252 : vector<4x32xf32>
    %254 = vector.extract_strided_slice %241 {offsets = [0, 64], sizes = [4, 32], strides = [1, 1]} : vector<4x128xf32> to vector<4x32xf32>
    %255 = math.tanh %254 : vector<4x32xf32>
    %256 = vector.extract_strided_slice %241 {offsets = [0, 96], sizes = [4, 32], strides = [1, 1]} : vector<4x128xf32> to vector<4x32xf32>
    %257 = arith.negf %256 : vector<4x32xf32>
    %258 = math.exp %257 : vector<4x32xf32>
    %cst_59 = arith.constant 1.000000e+00 : f32
    %259 = vector.broadcast %cst_59 : f32 to vector<4x32xf32>
    %260 = arith.addf %259, %258 : vector<4x32xf32>
    %261 = arith.divf %259, %260 : vector<4x32xf32>
    %262 = arith.mulf %253, %188 : vector<4x32xf32>
    %263 = arith.mulf %247, %255 : vector<4x32xf32>
    %264 = arith.addf %262, %263 : vector<4x32xf32>
    %265 = math.tanh %264 : vector<4x32xf32>
    %266 = arith.mulf %261, %265 : vector<4x32xf32>
    %cst_60 = arith.constant 0.000000e+00 : f32
    %267 = vector.shape_cast %236 : vector<4x1xi1> to vector<4x1xi1>
    %268 = vector.broadcast %267 : vector<4x1xi1> to vector<4x32xi1>
    %269 = vector.broadcast %cst_60 : f32 to vector<4x32xf32>
    %270 = arith.select %268, %266, %269 : vector<4x32xi1>, vector<4x32xf32>
    %271 = vector.shape_cast %236 : vector<4x1xi1> to vector<4x1xi1>
    %272 = vector.broadcast %271 : vector<4x1xi1> to vector<4x32xi1>
    %273 = arith.select %272, %266, %185 : vector<4x32xi1>, vector<4x32xf32>
    %274 = vector.shape_cast %236 : vector<4x1xi1> to vector<4x1xi1>
    %275 = vector.broadcast %274 : vector<4x1xi1> to vector<4x32xi1>
    %276 = arith.select %275, %264, %188 : vector<4x32xi1>, vector<4x32xf32>
    %277 = arith.addf %189, %227 : vector<4x32xf32>
    %278 = arith.addf %190, %270 : vector<4x32xf32>
    %c3_i32 = arith.constant 3 : i32
    %279 = arith.addi %12, %c3_i32 : i32
    %280 = vector.broadcast %279 : i32 to vector<4x1xi32>
    %281 = arith.cmpi slt, %280, %3 : vector<4x1xi32>
    %c0_61 = arith.constant 0 : index
    %c3 = arith.constant 3 : index
    %c0_62 = arith.constant 0 : index
    %282 = vector.load %arg2[%c0_61, %c3, %c0_62] : memref<4x8x128xbf16, #tpu.memory_space<vmem>>, vector<4x1x128xbf16>
    %283 = vector.shape_cast %282 : vector<4x1x128xbf16> to vector<4x128xbf16>
    %cst_63 = arith.constant dense<0.000000e+00> : vector<4x128xf32>
    %284 = tpu.matmul %230, %4, %cst_63 {dimension_numbers = #tpu.dot_dimension_numbers<[1], [0], [0], [1], [0, 0, 1, 1], [], []>} : vector<4x32xf32>, vector<32x128xf32>, vector<4x128xf32> -> vector<4x128xf32>
    %285 = arith.extf %283 : vector<4x128xbf16> to vector<4x128xf32>
    %286 = arith.addf %284, %285 : vector<4x128xf32>
    %287 = vector.extract_strided_slice %286 {offsets = [0, 0], sizes = [4, 32], strides = [1, 1]} : vector<4x128xf32> to vector<4x32xf32>
    %288 = arith.negf %287 : vector<4x32xf32>
    %289 = math.exp %288 : vector<4x32xf32>
    %cst_64 = arith.constant 1.000000e+00 : f32
    %290 = vector.broadcast %cst_64 : f32 to vector<4x32xf32>
    %291 = arith.addf %290, %289 : vector<4x32xf32>
    %292 = arith.divf %290, %291 : vector<4x32xf32>
    %293 = vector.extract_strided_slice %286 {offsets = [0, 32], sizes = [4, 32], strides = [1, 1]} : vector<4x128xf32> to vector<4x32xf32>
    %294 = arith.negf %293 : vector<4x32xf32>
    %295 = math.exp %294 : vector<4x32xf32>
    %cst_65 = arith.constant 1.000000e+00 : f32
    %296 = vector.broadcast %cst_65 : f32 to vector<4x32xf32>
    %297 = arith.addf %296, %295 : vector<4x32xf32>
    %298 = arith.divf %296, %297 : vector<4x32xf32>
    %299 = vector.extract_strided_slice %286 {offsets = [0, 64], sizes = [4, 32], strides = [1, 1]} : vector<4x128xf32> to vector<4x32xf32>
    %300 = math.tanh %299 : vector<4x32xf32>
    %301 = vector.extract_strided_slice %286 {offsets = [0, 96], sizes = [4, 32], strides = [1, 1]} : vector<4x128xf32> to vector<4x32xf32>
    %302 = arith.negf %301 : vector<4x32xf32>
    %303 = math.exp %302 : vector<4x32xf32>
    %cst_66 = arith.constant 1.000000e+00 : f32
    %304 = vector.broadcast %cst_66 : f32 to vector<4x32xf32>
    %305 = arith.addf %304, %303 : vector<4x32xf32>
    %306 = arith.divf %304, %305 : vector<4x32xf32>
    %307 = arith.mulf %298, %233 : vector<4x32xf32>
    %308 = arith.mulf %292, %300 : vector<4x32xf32>
    %309 = arith.addf %307, %308 : vector<4x32xf32>
    %310 = math.tanh %309 : vector<4x32xf32>
    %311 = arith.mulf %306, %310 : vector<4x32xf32>
    %cst_67 = arith.constant 0.000000e+00 : f32
    %312 = vector.shape_cast %281 : vector<4x1xi1> to vector<4x1xi1>
    %313 = vector.broadcast %312 : vector<4x1xi1> to vector<4x32xi1>
    %314 = vector.broadcast %cst_67 : f32 to vector<4x32xf32>
    %315 = arith.select %313, %311, %314 : vector<4x32xi1>, vector<4x32xf32>
    %316 = vector.shape_cast %281 : vector<4x1xi1> to vector<4x1xi1>
    %317 = vector.broadcast %316 : vector<4x1xi1> to vector<4x32xi1>
    %318 = arith.select %317, %311, %230 : vector<4x32xi1>, vector<4x32xf32>
    %319 = vector.shape_cast %281 : vector<4x1xi1> to vector<4x1xi1>
    %320 = vector.broadcast %319 : vector<4x1xi1> to vector<4x32xi1>
    %321 = arith.select %320, %309, %233 : vector<4x32xi1>, vector<4x32xf32>
    %c4_i32 = arith.constant 4 : i32
    %322 = arith.addi %14, %c4_i32 : i32
    %323 = vector.broadcast %322 : i32 to vector<4x1xi32>
    %324 = arith.cmpi slt, %323, %3 : vector<4x1xi32>
    %c0_68 = arith.constant 0 : index
    %c4 = arith.constant 4 : index
    %c0_69 = arith.constant 0 : index
    %325 = vector.load %arg3[%c0_68, %c4, %c0_69] : memref<4x8x128xbf16, #tpu.memory_space<vmem>>, vector<4x1x128xbf16>
    %326 = vector.shape_cast %325 : vector<4x1x128xbf16> to vector<4x128xbf16>
    %cst_70 = arith.constant dense<0.000000e+00> : vector<4x128xf32>
    %327 = tpu.matmul %273, %5, %cst_70 {dimension_numbers = #tpu.dot_dimension_numbers<[1], [0], [0], [1], [0, 0, 1, 1], [], []>} : vector<4x32xf32>, vector<32x128xf32>, vector<4x128xf32> -> vector<4x128xf32>
    %328 = arith.extf %326 : vector<4x128xbf16> to vector<4x128xf32>
    %329 = arith.addf %327, %328 : vector<4x128xf32>
    %330 = vector.extract_strided_slice %329 {offsets = [0, 0], sizes = [4, 32], strides = [1, 1]} : vector<4x128xf32> to vector<4x32xf32>
    %331 = arith.negf %330 : vector<4x32xf32>
    %332 = math.exp %331 : vector<4x32xf32>
    %cst_71 = arith.constant 1.000000e+00 : f32
    %333 = vector.broadcast %cst_71 : f32 to vector<4x32xf32>
    %334 = arith.addf %333, %332 : vector<4x32xf32>
    %335 = arith.divf %333, %334 : vector<4x32xf32>
    %336 = vector.extract_strided_slice %329 {offsets = [0, 32], sizes = [4, 32], strides = [1, 1]} : vector<4x128xf32> to vector<4x32xf32>
    %337 = arith.negf %336 : vector<4x32xf32>
    %338 = math.exp %337 : vector<4x32xf32>
    %cst_72 = arith.constant 1.000000e+00 : f32
    %339 = vector.broadcast %cst_72 : f32 to vector<4x32xf32>
    %340 = arith.addf %339, %338 : vector<4x32xf32>
    %341 = arith.divf %339, %340 : vector<4x32xf32>
    %342 = vector.extract_strided_slice %329 {offsets = [0, 64], sizes = [4, 32], strides = [1, 1]} : vector<4x128xf32> to vector<4x32xf32>
    %343 = math.tanh %342 : vector<4x32xf32>
    %344 = vector.extract_strided_slice %329 {offsets = [0, 96], sizes = [4, 32], strides = [1, 1]} : vector<4x128xf32> to vector<4x32xf32>
    %345 = arith.negf %344 : vector<4x32xf32>
    %346 = math.exp %345 : vector<4x32xf32>
    %cst_73 = arith.constant 1.000000e+00 : f32
    %347 = vector.broadcast %cst_73 : f32 to vector<4x32xf32>
    %348 = arith.addf %347, %346 : vector<4x32xf32>
    %349 = arith.divf %347, %348 : vector<4x32xf32>
    %350 = arith.mulf %341, %276 : vector<4x32xf32>
    %351 = arith.mulf %335, %343 : vector<4x32xf32>
    %352 = arith.addf %350, %351 : vector<4x32xf32>
    %353 = math.tanh %352 : vector<4x32xf32>
    %354 = arith.mulf %349, %353 : vector<4x32xf32>
    %cst_74 = arith.constant 0.000000e+00 : f32
    %355 = vector.shape_cast %324 : vector<4x1xi1> to vector<4x1xi1>
    %356 = vector.broadcast %355 : vector<4x1xi1> to vector<4x32xi1>
    %357 = vector.broadcast %cst_74 : f32 to vector<4x32xf32>
    %358 = arith.select %356, %354, %357 : vector<4x32xi1>, vector<4x32xf32>
    %359 = vector.shape_cast %324 : vector<4x1xi1> to vector<4x1xi1>
    %360 = vector.broadcast %359 : vector<4x1xi1> to vector<4x32xi1>
    %361 = arith.select %360, %354, %273 : vector<4x32xi1>, vector<4x32xf32>
    %362 = vector.shape_cast %324 : vector<4x1xi1> to vector<4x1xi1>
    %363 = vector.broadcast %362 : vector<4x1xi1> to vector<4x32xi1>
    %364 = arith.select %363, %352, %276 : vector<4x32xi1>, vector<4x32xf32>
    %365 = arith.addf %277, %315 : vector<4x32xf32>
    %366 = arith.addf %278, %358 : vector<4x32xf32>
    %c4_i32_75 = arith.constant 4 : i32
    %367 = arith.addi %12, %c4_i32_75 : i32
    %368 = vector.broadcast %367 : i32 to vector<4x1xi32>
    %369 = arith.cmpi slt, %368, %3 : vector<4x1xi32>
    %c0_76 = arith.constant 0 : index
    %c4_77 = arith.constant 4 : index
    %c0_78 = arith.constant 0 : index
    %370 = vector.load %arg2[%c0_76, %c4_77, %c0_78] : memref<4x8x128xbf16, #tpu.memory_space<vmem>>, vector<4x1x128xbf16>
    %371 = vector.shape_cast %370 : vector<4x1x128xbf16> to vector<4x128xbf16>
    %cst_79 = arith.constant dense<0.000000e+00> : vector<4x128xf32>
    %372 = tpu.matmul %318, %4, %cst_79 {dimension_numbers = #tpu.dot_dimension_numbers<[1], [0], [0], [1], [0, 0, 1, 1], [], []>} : vector<4x32xf32>, vector<32x128xf32>, vector<4x128xf32> -> vector<4x128xf32>
    %373 = arith.extf %371 : vector<4x128xbf16> to vector<4x128xf32>
    %374 = arith.addf %372, %373 : vector<4x128xf32>
    %375 = vector.extract_strided_slice %374 {offsets = [0, 0], sizes = [4, 32], strides = [1, 1]} : vector<4x128xf32> to vector<4x32xf32>
    %376 = arith.negf %375 : vector<4x32xf32>
    %377 = math.exp %376 : vector<4x32xf32>
    %cst_80 = arith.constant 1.000000e+00 : f32
    %378 = vector.broadcast %cst_80 : f32 to vector<4x32xf32>
    %379 = arith.addf %378, %377 : vector<4x32xf32>
    %380 = arith.divf %378, %379 : vector<4x32xf32>
    %381 = vector.extract_strided_slice %374 {offsets = [0, 32], sizes = [4, 32], strides = [1, 1]} : vector<4x128xf32> to vector<4x32xf32>
    %382 = arith.negf %381 : vector<4x32xf32>
    %383 = math.exp %382 : vector<4x32xf32>
    %cst_81 = arith.constant 1.000000e+00 : f32
    %384 = vector.broadcast %cst_81 : f32 to vector<4x32xf32>
    %385 = arith.addf %384, %383 : vector<4x32xf32>
    %386 = arith.divf %384, %385 : vector<4x32xf32>
    %387 = vector.extract_strided_slice %374 {offsets = [0, 64], sizes = [4, 32], strides = [1, 1]} : vector<4x128xf32> to vector<4x32xf32>
    %388 = math.tanh %387 : vector<4x32xf32>
    %389 = vector.extract_strided_slice %374 {offsets = [0, 96], sizes = [4, 32], strides = [1, 1]} : vector<4x128xf32> to vector<4x32xf32>
    %390 = arith.negf %389 : vector<4x32xf32>
    %391 = math.exp %390 : vector<4x32xf32>
    %cst_82 = arith.constant 1.000000e+00 : f32
    %392 = vector.broadcast %cst_82 : f32 to vector<4x32xf32>
    %393 = arith.addf %392, %391 : vector<4x32xf32>
    %394 = arith.divf %392, %393 : vector<4x32xf32>
    %395 = arith.mulf %386, %321 : vector<4x32xf32>
    %396 = arith.mulf %380, %388 : vector<4x32xf32>
    %397 = arith.addf %395, %396 : vector<4x32xf32>
    %398 = math.tanh %397 : vector<4x32xf32>
    %399 = arith.mulf %394, %398 : vector<4x32xf32>
    %cst_83 = arith.constant 0.000000e+00 : f32
    %400 = vector.shape_cast %369 : vector<4x1xi1> to vector<4x1xi1>
    %401 = vector.broadcast %400 : vector<4x1xi1> to vector<4x32xi1>
    %402 = vector.broadcast %cst_83 : f32 to vector<4x32xf32>
    %403 = arith.select %401, %399, %402 : vector<4x32xi1>, vector<4x32xf32>
    %404 = vector.shape_cast %369 : vector<4x1xi1> to vector<4x1xi1>
    %405 = vector.broadcast %404 : vector<4x1xi1> to vector<4x32xi1>
    %406 = arith.select %405, %399, %318 : vector<4x32xi1>, vector<4x32xf32>
    %407 = vector.shape_cast %369 : vector<4x1xi1> to vector<4x1xi1>
    %408 = vector.broadcast %407 : vector<4x1xi1> to vector<4x32xi1>
    %409 = arith.select %408, %397, %321 : vector<4x32xi1>, vector<4x32xf32>
    %c3_i32_84 = arith.constant 3 : i32
    %410 = arith.addi %14, %c3_i32_84 : i32
    %411 = vector.broadcast %410 : i32 to vector<4x1xi32>
    %412 = arith.cmpi slt, %411, %3 : vector<4x1xi32>
    %c0_85 = arith.constant 0 : index
    %c3_86 = arith.constant 3 : index
    %c0_87 = arith.constant 0 : index
    %413 = vector.load %arg3[%c0_85, %c3_86, %c0_87] : memref<4x8x128xbf16, #tpu.memory_space<vmem>>, vector<4x1x128xbf16>
    %414 = vector.shape_cast %413 : vector<4x1x128xbf16> to vector<4x128xbf16>
    %cst_88 = arith.constant dense<0.000000e+00> : vector<4x128xf32>
    %415 = tpu.matmul %361, %5, %cst_88 {dimension_numbers = #tpu.dot_dimension_numbers<[1], [0], [0], [1], [0, 0, 1, 1], [], []>} : vector<4x32xf32>, vector<32x128xf32>, vector<4x128xf32> -> vector<4x128xf32>
    %416 = arith.extf %414 : vector<4x128xbf16> to vector<4x128xf32>
    %417 = arith.addf %415, %416 : vector<4x128xf32>
    %418 = vector.extract_strided_slice %417 {offsets = [0, 0], sizes = [4, 32], strides = [1, 1]} : vector<4x128xf32> to vector<4x32xf32>
    %419 = arith.negf %418 : vector<4x32xf32>
    %420 = math.exp %419 : vector<4x32xf32>
    %cst_89 = arith.constant 1.000000e+00 : f32
    %421 = vector.broadcast %cst_89 : f32 to vector<4x32xf32>
    %422 = arith.addf %421, %420 : vector<4x32xf32>
    %423 = arith.divf %421, %422 : vector<4x32xf32>
    %424 = vector.extract_strided_slice %417 {offsets = [0, 32], sizes = [4, 32], strides = [1, 1]} : vector<4x128xf32> to vector<4x32xf32>
    %425 = arith.negf %424 : vector<4x32xf32>
    %426 = math.exp %425 : vector<4x32xf32>
    %cst_90 = arith.constant 1.000000e+00 : f32
    %427 = vector.broadcast %cst_90 : f32 to vector<4x32xf32>
    %428 = arith.addf %427, %426 : vector<4x32xf32>
    %429 = arith.divf %427, %428 : vector<4x32xf32>
    %430 = vector.extract_strided_slice %417 {offsets = [0, 64], sizes = [4, 32], strides = [1, 1]} : vector<4x128xf32> to vector<4x32xf32>
    %431 = math.tanh %430 : vector<4x32xf32>
    %432 = vector.extract_strided_slice %417 {offsets = [0, 96], sizes = [4, 32], strides = [1, 1]} : vector<4x128xf32> to vector<4x32xf32>
    %433 = arith.negf %432 : vector<4x32xf32>
    %434 = math.exp %433 : vector<4x32xf32>
    %cst_91 = arith.constant 1.000000e+00 : f32
    %435 = vector.broadcast %cst_91 : f32 to vector<4x32xf32>
    %436 = arith.addf %435, %434 : vector<4x32xf32>
    %437 = arith.divf %435, %436 : vector<4x32xf32>
    %438 = arith.mulf %429, %364 : vector<4x32xf32>
    %439 = arith.mulf %423, %431 : vector<4x32xf32>
    %440 = arith.addf %438, %439 : vector<4x32xf32>
    %441 = math.tanh %440 : vector<4x32xf32>
    %442 = arith.mulf %437, %441 : vector<4x32xf32>
    %cst_92 = arith.constant 0.000000e+00 : f32
    %443 = vector.shape_cast %412 : vector<4x1xi1> to vector<4x1xi1>
    %444 = vector.broadcast %443 : vector<4x1xi1> to vector<4x32xi1>
    %445 = vector.broadcast %cst_92 : f32 to vector<4x32xf32>
    %446 = arith.select %444, %442, %445 : vector<4x32xi1>, vector<4x32xf32>
    %447 = vector.shape_cast %412 : vector<4x1xi1> to vector<4x1xi1>
    %448 = vector.broadcast %447 : vector<4x1xi1> to vector<4x32xi1>
    %449 = arith.select %448, %442, %361 : vector<4x32xi1>, vector<4x32xf32>
    %450 = vector.shape_cast %412 : vector<4x1xi1> to vector<4x1xi1>
    %451 = vector.broadcast %450 : vector<4x1xi1> to vector<4x32xi1>
    %452 = arith.select %451, %440, %364 : vector<4x32xi1>, vector<4x32xf32>
    %453 = arith.addf %365, %403 : vector<4x32xf32>
    %454 = arith.addf %366, %446 : vector<4x32xf32>
    %c5_i32_93 = arith.constant 5 : i32
    %455 = arith.addi %12, %c5_i32_93 : i32
    %456 = vector.broadcast %455 : i32 to vector<4x1xi32>
    %457 = arith.cmpi slt, %456, %3 : vector<4x1xi32>
    %c0_94 = arith.constant 0 : index
    %c5_95 = arith.constant 5 : index
    %c0_96 = arith.constant 0 : index
    %458 = vector.load %arg2[%c0_94, %c5_95, %c0_96] : memref<4x8x128xbf16, #tpu.memory_space<vmem>>, vector<4x1x128xbf16>
    %459 = vector.shape_cast %458 : vector<4x1x128xbf16> to vector<4x128xbf16>
    %cst_97 = arith.constant dense<0.000000e+00> : vector<4x128xf32>
    %460 = tpu.matmul %406, %4, %cst_97 {dimension_numbers = #tpu.dot_dimension_numbers<[1], [0], [0], [1], [0, 0, 1, 1], [], []>} : vector<4x32xf32>, vector<32x128xf32>, vector<4x128xf32> -> vector<4x128xf32>
    %461 = arith.extf %459 : vector<4x128xbf16> to vector<4x128xf32>
    %462 = arith.addf %460, %461 : vector<4x128xf32>
    %463 = vector.extract_strided_slice %462 {offsets = [0, 0], sizes = [4, 32], strides = [1, 1]} : vector<4x128xf32> to vector<4x32xf32>
    %464 = arith.negf %463 : vector<4x32xf32>
    %465 = math.exp %464 : vector<4x32xf32>
    %cst_98 = arith.constant 1.000000e+00 : f32
    %466 = vector.broadcast %cst_98 : f32 to vector<4x32xf32>
    %467 = arith.addf %466, %465 : vector<4x32xf32>
    %468 = arith.divf %466, %467 : vector<4x32xf32>
    %469 = vector.extract_strided_slice %462 {offsets = [0, 32], sizes = [4, 32], strides = [1, 1]} : vector<4x128xf32> to vector<4x32xf32>
    %470 = arith.negf %469 : vector<4x32xf32>
    %471 = math.exp %470 : vector<4x32xf32>
    %cst_99 = arith.constant 1.000000e+00 : f32
    %472 = vector.broadcast %cst_99 : f32 to vector<4x32xf32>
    %473 = arith.addf %472, %471 : vector<4x32xf32>
    %474 = arith.divf %472, %473 : vector<4x32xf32>
    %475 = vector.extract_strided_slice %462 {offsets = [0, 64], sizes = [4, 32], strides = [1, 1]} : vector<4x128xf32> to vector<4x32xf32>
    %476 = math.tanh %475 : vector<4x32xf32>
    %477 = vector.extract_strided_slice %462 {offsets = [0, 96], sizes = [4, 32], strides = [1, 1]} : vector<4x128xf32> to vector<4x32xf32>
    %478 = arith.negf %477 : vector<4x32xf32>
    %479 = math.exp %478 : vector<4x32xf32>
    %cst_100 = arith.constant 1.000000e+00 : f32
    %480 = vector.broadcast %cst_100 : f32 to vector<4x32xf32>
    %481 = arith.addf %480, %479 : vector<4x32xf32>
    %482 = arith.divf %480, %481 : vector<4x32xf32>
    %483 = arith.mulf %474, %409 : vector<4x32xf32>
    %484 = arith.mulf %468, %476 : vector<4x32xf32>
    %485 = arith.addf %483, %484 : vector<4x32xf32>
    %486 = math.tanh %485 : vector<4x32xf32>
    %487 = arith.mulf %482, %486 : vector<4x32xf32>
    %cst_101 = arith.constant 0.000000e+00 : f32
    %488 = vector.shape_cast %457 : vector<4x1xi1> to vector<4x1xi1>
    %489 = vector.broadcast %488 : vector<4x1xi1> to vector<4x32xi1>
    %490 = vector.broadcast %cst_101 : f32 to vector<4x32xf32>
    %491 = arith.select %489, %487, %490 : vector<4x32xi1>, vector<4x32xf32>
    %492 = vector.shape_cast %457 : vector<4x1xi1> to vector<4x1xi1>
    %493 = vector.broadcast %492 : vector<4x1xi1> to vector<4x32xi1>
    %494 = arith.select %493, %487, %406 : vector<4x32xi1>, vector<4x32xf32>
    %495 = vector.shape_cast %457 : vector<4x1xi1> to vector<4x1xi1>
    %496 = vector.broadcast %495 : vector<4x1xi1> to vector<4x32xi1>
    %497 = arith.select %496, %485, %409 : vector<4x32xi1>, vector<4x32xf32>
    %c2_i32_102 = arith.constant 2 : i32
    %498 = arith.addi %14, %c2_i32_102 : i32
    %499 = vector.broadcast %498 : i32 to vector<4x1xi32>
    %500 = arith.cmpi slt, %499, %3 : vector<4x1xi32>
    %c0_103 = arith.constant 0 : index
    %c2_104 = arith.constant 2 : index
    %c0_105 = arith.constant 0 : index
    %501 = vector.load %arg3[%c0_103, %c2_104, %c0_105] : memref<4x8x128xbf16, #tpu.memory_space<vmem>>, vector<4x1x128xbf16>
    %502 = vector.shape_cast %501 : vector<4x1x128xbf16> to vector<4x128xbf16>
    %cst_106 = arith.constant dense<0.000000e+00> : vector<4x128xf32>
    %503 = tpu.matmul %449, %5, %cst_106 {dimension_numbers = #tpu.dot_dimension_numbers<[1], [0], [0], [1], [0, 0, 1, 1], [], []>} : vector<4x32xf32>, vector<32x128xf32>, vector<4x128xf32> -> vector<4x128xf32>
    %504 = arith.extf %502 : vector<4x128xbf16> to vector<4x128xf32>
    %505 = arith.addf %503, %504 : vector<4x128xf32>
    %506 = vector.extract_strided_slice %505 {offsets = [0, 0], sizes = [4, 32], strides = [1, 1]} : vector<4x128xf32> to vector<4x32xf32>
    %507 = arith.negf %506 : vector<4x32xf32>
    %508 = math.exp %507 : vector<4x32xf32>
    %cst_107 = arith.constant 1.000000e+00 : f32
    %509 = vector.broadcast %cst_107 : f32 to vector<4x32xf32>
    %510 = arith.addf %509, %508 : vector<4x32xf32>
    %511 = arith.divf %509, %510 : vector<4x32xf32>
    %512 = vector.extract_strided_slice %505 {offsets = [0, 32], sizes = [4, 32], strides = [1, 1]} : vector<4x128xf32> to vector<4x32xf32>
    %513 = arith.negf %512 : vector<4x32xf32>
    %514 = math.exp %513 : vector<4x32xf32>
    %cst_108 = arith.constant 1.000000e+00 : f32
    %515 = vector.broadcast %cst_108 : f32 to vector<4x32xf32>
    %516 = arith.addf %515, %514 : vector<4x32xf32>
    %517 = arith.divf %515, %516 : vector<4x32xf32>
    %518 = vector.extract_strided_slice %505 {offsets = [0, 64], sizes = [4, 32], strides = [1, 1]} : vector<4x128xf32> to vector<4x32xf32>
    %519 = math.tanh %518 : vector<4x32xf32>
    %520 = vector.extract_strided_slice %505 {offsets = [0, 96], sizes = [4, 32], strides = [1, 1]} : vector<4x128xf32> to vector<4x32xf32>
    %521 = arith.negf %520 : vector<4x32xf32>
    %522 = math.exp %521 : vector<4x32xf32>
    %cst_109 = arith.constant 1.000000e+00 : f32
    %523 = vector.broadcast %cst_109 : f32 to vector<4x32xf32>
    %524 = arith.addf %523, %522 : vector<4x32xf32>
    %525 = arith.divf %523, %524 : vector<4x32xf32>
    %526 = arith.mulf %517, %452 : vector<4x32xf32>
    %527 = arith.mulf %511, %519 : vector<4x32xf32>
    %528 = arith.addf %526, %527 : vector<4x32xf32>
    %529 = math.tanh %528 : vector<4x32xf32>
    %530 = arith.mulf %525, %529 : vector<4x32xf32>
    %cst_110 = arith.constant 0.000000e+00 : f32
    %531 = vector.shape_cast %500 : vector<4x1xi1> to vector<4x1xi1>
    %532 = vector.broadcast %531 : vector<4x1xi1> to vector<4x32xi1>
    %533 = vector.broadcast %cst_110 : f32 to vector<4x32xf32>
    %534 = arith.select %532, %530, %533 : vector<4x32xi1>, vector<4x32xf32>
    %535 = vector.shape_cast %500 : vector<4x1xi1> to vector<4x1xi1>
    %536 = vector.broadcast %535 : vector<4x1xi1> to vector<4x32xi1>
    %537 = arith.select %536, %530, %449 : vector<4x32xi1>, vector<4x32xf32>
    %538 = vector.shape_cast %500 : vector<4x1xi1> to vector<4x1xi1>
    %539 = vector.broadcast %538 : vector<4x1xi1> to vector<4x32xi1>
    %540 = arith.select %539, %528, %452 : vector<4x32xi1>, vector<4x32xf32>
    %541 = arith.addf %453, %491 : vector<4x32xf32>
    %542 = arith.addf %454, %534 : vector<4x32xf32>
    %c6_i32_111 = arith.constant 6 : i32
    %543 = arith.addi %12, %c6_i32_111 : i32
    %544 = vector.broadcast %543 : i32 to vector<4x1xi32>
    %545 = arith.cmpi slt, %544, %3 : vector<4x1xi32>
    %c0_112 = arith.constant 0 : index
    %c6_113 = arith.constant 6 : index
    %c0_114 = arith.constant 0 : index
    %546 = vector.load %arg2[%c0_112, %c6_113, %c0_114] : memref<4x8x128xbf16, #tpu.memory_space<vmem>>, vector<4x1x128xbf16>
    %547 = vector.shape_cast %546 : vector<4x1x128xbf16> to vector<4x128xbf16>
    %cst_115 = arith.constant dense<0.000000e+00> : vector<4x128xf32>
    %548 = tpu.matmul %494, %4, %cst_115 {dimension_numbers = #tpu.dot_dimension_numbers<[1], [0], [0], [1], [0, 0, 1, 1], [], []>} : vector<4x32xf32>, vector<32x128xf32>, vector<4x128xf32> -> vector<4x128xf32>
    %549 = arith.extf %547 : vector<4x128xbf16> to vector<4x128xf32>
    %550 = arith.addf %548, %549 : vector<4x128xf32>
    %551 = vector.extract_strided_slice %550 {offsets = [0, 0], sizes = [4, 32], strides = [1, 1]} : vector<4x128xf32> to vector<4x32xf32>
    %552 = arith.negf %551 : vector<4x32xf32>
    %553 = math.exp %552 : vector<4x32xf32>
    %cst_116 = arith.constant 1.000000e+00 : f32
    %554 = vector.broadcast %cst_116 : f32 to vector<4x32xf32>
    %555 = arith.addf %554, %553 : vector<4x32xf32>
    %556 = arith.divf %554, %555 : vector<4x32xf32>
    %557 = vector.extract_strided_slice %550 {offsets = [0, 32], sizes = [4, 32], strides = [1, 1]} : vector<4x128xf32> to vector<4x32xf32>
    %558 = arith.negf %557 : vector<4x32xf32>
    %559 = math.exp %558 : vector<4x32xf32>
    %cst_117 = arith.constant 1.000000e+00 : f32
    %560 = vector.broadcast %cst_117 : f32 to vector<4x32xf32>
    %561 = arith.addf %560, %559 : vector<4x32xf32>
    %562 = arith.divf %560, %561 : vector<4x32xf32>
    %563 = vector.extract_strided_slice %550 {offsets = [0, 64], sizes = [4, 32], strides = [1, 1]} : vector<4x128xf32> to vector<4x32xf32>
    %564 = math.tanh %563 : vector<4x32xf32>
    %565 = vector.extract_strided_slice %550 {offsets = [0, 96], sizes = [4, 32], strides = [1, 1]} : vector<4x128xf32> to vector<4x32xf32>
    %566 = arith.negf %565 : vector<4x32xf32>
    %567 = math.exp %566 : vector<4x32xf32>
    %cst_118 = arith.constant 1.000000e+00 : f32
    %568 = vector.broadcast %cst_118 : f32 to vector<4x32xf32>
    %569 = arith.addf %568, %567 : vector<4x32xf32>
    %570 = arith.divf %568, %569 : vector<4x32xf32>
    %571 = arith.mulf %562, %497 : vector<4x32xf32>
    %572 = arith.mulf %556, %564 : vector<4x32xf32>
    %573 = arith.addf %571, %572 : vector<4x32xf32>
    %574 = math.tanh %573 : vector<4x32xf32>
    %575 = arith.mulf %570, %574 : vector<4x32xf32>
    %cst_119 = arith.constant 0.000000e+00 : f32
    %576 = vector.shape_cast %545 : vector<4x1xi1> to vector<4x1xi1>
    %577 = vector.broadcast %576 : vector<4x1xi1> to vector<4x32xi1>
    %578 = vector.broadcast %cst_119 : f32 to vector<4x32xf32>
    %579 = arith.select %577, %575, %578 : vector<4x32xi1>, vector<4x32xf32>
    %580 = vector.shape_cast %545 : vector<4x1xi1> to vector<4x1xi1>
    %581 = vector.broadcast %580 : vector<4x1xi1> to vector<4x32xi1>
    %582 = arith.select %581, %575, %494 : vector<4x32xi1>, vector<4x32xf32>
    %583 = vector.shape_cast %545 : vector<4x1xi1> to vector<4x1xi1>
    %584 = vector.broadcast %583 : vector<4x1xi1> to vector<4x32xi1>
    %585 = arith.select %584, %573, %497 : vector<4x32xi1>, vector<4x32xf32>
    %c1_i32_120 = arith.constant 1 : i32
    %586 = arith.addi %14, %c1_i32_120 : i32
    %587 = vector.broadcast %586 : i32 to vector<4x1xi32>
    %588 = arith.cmpi slt, %587, %3 : vector<4x1xi32>
    %c0_121 = arith.constant 0 : index
    %c1_122 = arith.constant 1 : index
    %c0_123 = arith.constant 0 : index
    %589 = vector.load %arg3[%c0_121, %c1_122, %c0_123] : memref<4x8x128xbf16, #tpu.memory_space<vmem>>, vector<4x1x128xbf16>
    %590 = vector.shape_cast %589 : vector<4x1x128xbf16> to vector<4x128xbf16>
    %cst_124 = arith.constant dense<0.000000e+00> : vector<4x128xf32>
    %591 = tpu.matmul %537, %5, %cst_124 {dimension_numbers = #tpu.dot_dimension_numbers<[1], [0], [0], [1], [0, 0, 1, 1], [], []>} : vector<4x32xf32>, vector<32x128xf32>, vector<4x128xf32> -> vector<4x128xf32>
    %592 = arith.extf %590 : vector<4x128xbf16> to vector<4x128xf32>
    %593 = arith.addf %591, %592 : vector<4x128xf32>
    %594 = vector.extract_strided_slice %593 {offsets = [0, 0], sizes = [4, 32], strides = [1, 1]} : vector<4x128xf32> to vector<4x32xf32>
    %595 = arith.negf %594 : vector<4x32xf32>
    %596 = math.exp %595 : vector<4x32xf32>
    %cst_125 = arith.constant 1.000000e+00 : f32
    %597 = vector.broadcast %cst_125 : f32 to vector<4x32xf32>
    %598 = arith.addf %597, %596 : vector<4x32xf32>
    %599 = arith.divf %597, %598 : vector<4x32xf32>
    %600 = vector.extract_strided_slice %593 {offsets = [0, 32], sizes = [4, 32], strides = [1, 1]} : vector<4x128xf32> to vector<4x32xf32>
    %601 = arith.negf %600 : vector<4x32xf32>
    %602 = math.exp %601 : vector<4x32xf32>
    %cst_126 = arith.constant 1.000000e+00 : f32
    %603 = vector.broadcast %cst_126 : f32 to vector<4x32xf32>
    %604 = arith.addf %603, %602 : vector<4x32xf32>
    %605 = arith.divf %603, %604 : vector<4x32xf32>
    %606 = vector.extract_strided_slice %593 {offsets = [0, 64], sizes = [4, 32], strides = [1, 1]} : vector<4x128xf32> to vector<4x32xf32>
    %607 = math.tanh %606 : vector<4x32xf32>
    %608 = vector.extract_strided_slice %593 {offsets = [0, 96], sizes = [4, 32], strides = [1, 1]} : vector<4x128xf32> to vector<4x32xf32>
    %609 = arith.negf %608 : vector<4x32xf32>
    %610 = math.exp %609 : vector<4x32xf32>
    %cst_127 = arith.constant 1.000000e+00 : f32
    %611 = vector.broadcast %cst_127 : f32 to vector<4x32xf32>
    %612 = arith.addf %611, %610 : vector<4x32xf32>
    %613 = arith.divf %611, %612 : vector<4x32xf32>
    %614 = arith.mulf %605, %540 : vector<4x32xf32>
    %615 = arith.mulf %599, %607 : vector<4x32xf32>
    %616 = arith.addf %614, %615 : vector<4x32xf32>
    %617 = math.tanh %616 : vector<4x32xf32>
    %618 = arith.mulf %613, %617 : vector<4x32xf32>
    %cst_128 = arith.constant 0.000000e+00 : f32
    %619 = vector.shape_cast %588 : vector<4x1xi1> to vector<4x1xi1>
    %620 = vector.broadcast %619 : vector<4x1xi1> to vector<4x32xi1>
    %621 = vector.broadcast %cst_128 : f32 to vector<4x32xf32>
    %622 = arith.select %620, %618, %621 : vector<4x32xi1>, vector<4x32xf32>
    %623 = vector.shape_cast %588 : vector<4x1xi1> to vector<4x1xi1>
    %624 = vector.broadcast %623 : vector<4x1xi1> to vector<4x32xi1>
    %625 = arith.select %624, %618, %537 : vector<4x32xi1>, vector<4x32xf32>
    %626 = vector.shape_cast %588 : vector<4x1xi1> to vector<4x1xi1>
    %627 = vector.broadcast %626 : vector<4x1xi1> to vector<4x32xi1>
    %628 = arith.select %627, %616, %540 : vector<4x32xi1>, vector<4x32xf32>
    %629 = arith.addf %541, %579 : vector<4x32xf32>
    %630 = arith.addf %542, %622 : vector<4x32xf32>
    %c7_i32_129 = arith.constant 7 : i32
    %631 = arith.addi %12, %c7_i32_129 : i32
    %632 = vector.broadcast %631 : i32 to vector<4x1xi32>
    %633 = arith.cmpi slt, %632, %3 : vector<4x1xi32>
    %c0_130 = arith.constant 0 : index
    %c7_131 = arith.constant 7 : index
    %c0_132 = arith.constant 0 : index
    %634 = vector.load %arg2[%c0_130, %c7_131, %c0_132] : memref<4x8x128xbf16, #tpu.memory_space<vmem>>, vector<4x1x128xbf16>
    %635 = vector.shape_cast %634 : vector<4x1x128xbf16> to vector<4x128xbf16>
    %cst_133 = arith.constant dense<0.000000e+00> : vector<4x128xf32>
    %636 = tpu.matmul %582, %4, %cst_133 {dimension_numbers = #tpu.dot_dimension_numbers<[1], [0], [0], [1], [0, 0, 1, 1], [], []>} : vector<4x32xf32>, vector<32x128xf32>, vector<4x128xf32> -> vector<4x128xf32>
    %637 = arith.extf %635 : vector<4x128xbf16> to vector<4x128xf32>
    %638 = arith.addf %636, %637 : vector<4x128xf32>
    %639 = vector.extract_strided_slice %638 {offsets = [0, 0], sizes = [4, 32], strides = [1, 1]} : vector<4x128xf32> to vector<4x32xf32>
    %640 = arith.negf %639 : vector<4x32xf32>
    %641 = math.exp %640 : vector<4x32xf32>
    %cst_134 = arith.constant 1.000000e+00 : f32
    %642 = vector.broadcast %cst_134 : f32 to vector<4x32xf32>
    %643 = arith.addf %642, %641 : vector<4x32xf32>
    %644 = arith.divf %642, %643 : vector<4x32xf32>
    %645 = vector.extract_strided_slice %638 {offsets = [0, 32], sizes = [4, 32], strides = [1, 1]} : vector<4x128xf32> to vector<4x32xf32>
    %646 = arith.negf %645 : vector<4x32xf32>
    %647 = math.exp %646 : vector<4x32xf32>
    %cst_135 = arith.constant 1.000000e+00 : f32
    %648 = vector.broadcast %cst_135 : f32 to vector<4x32xf32>
    %649 = arith.addf %648, %647 : vector<4x32xf32>
    %650 = arith.divf %648, %649 : vector<4x32xf32>
    %651 = vector.extract_strided_slice %638 {offsets = [0, 64], sizes = [4, 32], strides = [1, 1]} : vector<4x128xf32> to vector<4x32xf32>
    %652 = math.tanh %651 : vector<4x32xf32>
    %653 = vector.extract_strided_slice %638 {offsets = [0, 96], sizes = [4, 32], strides = [1, 1]} : vector<4x128xf32> to vector<4x32xf32>
    %654 = arith.negf %653 : vector<4x32xf32>
    %655 = math.exp %654 : vector<4x32xf32>
    %cst_136 = arith.constant 1.000000e+00 : f32
    %656 = vector.broadcast %cst_136 : f32 to vector<4x32xf32>
    %657 = arith.addf %656, %655 : vector<4x32xf32>
    %658 = arith.divf %656, %657 : vector<4x32xf32>
    %659 = arith.mulf %650, %585 : vector<4x32xf32>
    %660 = arith.mulf %644, %652 : vector<4x32xf32>
    %661 = arith.addf %659, %660 : vector<4x32xf32>
    %662 = math.tanh %661 : vector<4x32xf32>
    %663 = arith.mulf %658, %662 : vector<4x32xf32>
    %cst_137 = arith.constant 0.000000e+00 : f32
    %664 = vector.shape_cast %633 : vector<4x1xi1> to vector<4x1xi1>
    %665 = vector.broadcast %664 : vector<4x1xi1> to vector<4x32xi1>
    %666 = vector.broadcast %cst_137 : f32 to vector<4x32xf32>
    %667 = arith.select %665, %663, %666 : vector<4x32xi1>, vector<4x32xf32>
    %668 = vector.shape_cast %633 : vector<4x1xi1> to vector<4x1xi1>
    %669 = vector.broadcast %668 : vector<4x1xi1> to vector<4x32xi1>
    %670 = arith.select %669, %663, %582 : vector<4x32xi1>, vector<4x32xf32>
    %671 = vector.shape_cast %633 : vector<4x1xi1> to vector<4x1xi1>
    %672 = vector.broadcast %671 : vector<4x1xi1> to vector<4x32xi1>
    %673 = arith.select %672, %661, %585 : vector<4x32xi1>, vector<4x32xf32>
    %c0_i32_138 = arith.constant 0 : i32
    %674 = arith.addi %14, %c0_i32_138 : i32
    %675 = vector.broadcast %674 : i32 to vector<4x1xi32>
    %676 = arith.cmpi slt, %675, %3 : vector<4x1xi32>
    %c0_139 = arith.constant 0 : index
    %c0_140 = arith.constant 0 : index
    %c0_141 = arith.constant 0 : index
    %677 = vector.load %arg3[%c0_139, %c0_140, %c0_141] : memref<4x8x128xbf16, #tpu.memory_space<vmem>>, vector<4x1x128xbf16>
    %678 = vector.shape_cast %677 : vector<4x1x128xbf16> to vector<4x128xbf16>
    %cst_142 = arith.constant dense<0.000000e+00> : vector<4x128xf32>
    %679 = tpu.matmul %625, %5, %cst_142 {dimension_numbers = #tpu.dot_dimension_numbers<[1], [0], [0], [1], [0, 0, 1, 1], [], []>} : vector<4x32xf32>, vector<32x128xf32>, vector<4x128xf32> -> vector<4x128xf32>
    %680 = arith.extf %678 : vector<4x128xbf16> to vector<4x128xf32>
    %681 = arith.addf %679, %680 : vector<4x128xf32>
    %682 = vector.extract_strided_slice %681 {offsets = [0, 0], sizes = [4, 32], strides = [1, 1]} : vector<4x128xf32> to vector<4x32xf32>
    %683 = arith.negf %682 : vector<4x32xf32>
    %684 = math.exp %683 : vector<4x32xf32>
    %cst_143 = arith.constant 1.000000e+00 : f32
    %685 = vector.broadcast %cst_143 : f32 to vector<4x32xf32>
    %686 = arith.addf %685, %684 : vector<4x32xf32>
    %687 = arith.divf %685, %686 : vector<4x32xf32>
    %688 = vector.extract_strided_slice %681 {offsets = [0, 32], sizes = [4, 32], strides = [1, 1]} : vector<4x128xf32> to vector<4x32xf32>
    %689 = arith.negf %688 : vector<4x32xf32>
    %690 = math.exp %689 : vector<4x32xf32>
    %cst_144 = arith.constant 1.000000e+00 : f32
    %691 = vector.broadcast %cst_144 : f32 to vector<4x32xf32>
    %692 = arith.addf %691, %690 : vector<4x32xf32>
    %693 = arith.divf %691, %692 : vector<4x32xf32>
    %694 = vector.extract_strided_slice %681 {offsets = [0, 64], sizes = [4, 32], strides = [1, 1]} : vector<4x128xf32> to vector<4x32xf32>
    %695 = math.tanh %694 : vector<4x32xf32>
    %696 = vector.extract_strided_slice %681 {offsets = [0, 96], sizes = [4, 32], strides = [1, 1]} : vector<4x128xf32> to vector<4x32xf32>
    %697 = arith.negf %696 : vector<4x32xf32>
    %698 = math.exp %697 : vector<4x32xf32>
    %cst_145 = arith.constant 1.000000e+00 : f32
    %699 = vector.broadcast %cst_145 : f32 to vector<4x32xf32>
    %700 = arith.addf %699, %698 : vector<4x32xf32>
    %701 = arith.divf %699, %700 : vector<4x32xf32>
    %702 = arith.mulf %693, %628 : vector<4x32xf32>
    %703 = arith.mulf %687, %695 : vector<4x32xf32>
    %704 = arith.addf %702, %703 : vector<4x32xf32>
    %705 = math.tanh %704 : vector<4x32xf32>
    %706 = arith.mulf %701, %705 : vector<4x32xf32>
    %cst_146 = arith.constant 0.000000e+00 : f32
    %707 = vector.shape_cast %676 : vector<4x1xi1> to vector<4x1xi1>
    %708 = vector.broadcast %707 : vector<4x1xi1> to vector<4x32xi1>
    %709 = vector.broadcast %cst_146 : f32 to vector<4x32xf32>
    %710 = arith.select %708, %706, %709 : vector<4x32xi1>, vector<4x32xf32>
    %711 = vector.shape_cast %676 : vector<4x1xi1> to vector<4x1xi1>
    %712 = vector.broadcast %711 : vector<4x1xi1> to vector<4x32xi1>
    %713 = arith.select %712, %706, %625 : vector<4x32xi1>, vector<4x32xf32>
    %714 = vector.shape_cast %676 : vector<4x1xi1> to vector<4x1xi1>
    %715 = vector.broadcast %714 : vector<4x1xi1> to vector<4x32xi1>
    %716 = arith.select %715, %704, %628 : vector<4x32xi1>, vector<4x32xf32>
    %717 = arith.addf %629, %667 : vector<4x32xf32>
    %718 = arith.addf %630, %710 : vector<4x32xf32>
    %c0_147 = arith.constant 0 : index
    %c0_148 = arith.constant 0 : index
    %719 = vector.load %arg9[%c0_147, %c0_148] : memref<4x32xf32, #tpu.memory_space<vmem>>, vector<4x32xf32>
    tpu.vector_store %arg9[%c0_147, %c0_148], %670 {strides = array<i32>} : memref<4x32xf32, #tpu.memory_space<vmem>>, vector<4x32xf32>,
    %c0_149 = arith.constant 0 : index
    %c0_150 = arith.constant 0 : index
    %720 = vector.load %arg10[%c0_149, %c0_150] : memref<4x32xf32, #tpu.memory_space<vmem>>, vector<4x32xf32>
    tpu.vector_store %arg10[%c0_149, %c0_150], %673 {strides = array<i32>} : memref<4x32xf32, #tpu.memory_space<vmem>>, vector<4x32xf32>,
    %c0_151 = arith.constant 0 : index
    %c0_152 = arith.constant 0 : index
    %721 = vector.load %arg11[%c0_151, %c0_152] : memref<4x32xf32, #tpu.memory_space<vmem>>, vector<4x32xf32>
    tpu.vector_store %arg11[%c0_151, %c0_152], %713 {strides = array<i32>} : memref<4x32xf32, #tpu.memory_space<vmem>>, vector<4x32xf32>,
    %c0_153 = arith.constant 0 : index
    %c0_154 = arith.constant 0 : index
    %722 = vector.load %arg12[%c0_153, %c0_154] : memref<4x32xf32, #tpu.memory_space<vmem>>, vector<4x32xf32>
    tpu.vector_store %arg12[%c0_153, %c0_154], %716 {strides = array<i32>} : memref<4x32xf32, #tpu.memory_space<vmem>>, vector<4x32xf32>,
    %c0_155 = arith.constant 0 : index
    %c0_156 = arith.constant 0 : index
    %723 = vector.load %arg7[%c0_155, %c0_156] : memref<4x32xf32, #tpu.memory_space<vmem>>, vector<4x32xf32>
    %724 = arith.addf %723, %717 : vector<4x32xf32>
    %c0_157 = arith.constant 0 : index
    %c0_158 = arith.constant 0 : index
    %725 = vector.load %arg7[%c0_157, %c0_158] : memref<4x32xf32, #tpu.memory_space<vmem>>, vector<4x32xf32>
    tpu.vector_store %arg7[%c0_157, %c0_158], %724 {strides = array<i32>} : memref<4x32xf32, #tpu.memory_space<vmem>>, vector<4x32xf32>,
    %c0_159 = arith.constant 0 : index
    %c0_160 = arith.constant 0 : index
    %726 = vector.load %arg8[%c0_159, %c0_160] : memref<4x32xf32, #tpu.memory_space<vmem>>, vector<4x32xf32>
    %727 = arith.addf %726, %718 : vector<4x32xf32>
    %c0_161 = arith.constant 0 : index
    %c0_162 = arith.constant 0 : index
    %728 = vector.load %arg8[%c0_161, %c0_162] : memref<4x32xf32, #tpu.memory_space<vmem>>, vector<4x32xf32>
    tpu.vector_store %arg8[%c0_161, %c0_162], %727 {strides = array<i32>} : memref<4x32xf32, #tpu.memory_space<vmem>>, vector<4x32xf32>,
    %c0_i32_163 = arith.constant 0 : i32
    %729 = arith.cmpi eq, %arg1, %c0_i32_163 : i32
    %730 = arith.extui %729 : i1 to i32
    %c0_i32_164 = arith.constant 0 : i32
    %731 = arith.cmpi ne, %730, %c0_i32_164 : i32
    scf.if %731 {
      %732 = arith.sitofp %3 : vector<4x1xi32> to vector<4x1xf32>
      %cst_165 = arith.constant 1.000000e+00 : f32
      %733 = vector.broadcast %cst_165 : f32 to vector<4x1xf32>
      %734 = arith.maximumf %732, %733 : vector<4x1xf32>
      %cst_166 = arith.constant 1.000000e+00 : f32
      %735 = vector.broadcast %cst_166 : f32 to vector<4x1xf32>
      %736 = arith.divf %735, %734 : vector<4x1xf32>
      %c0_167 = arith.constant 0 : index
      %c0_168 = arith.constant 0 : index
      %737 = vector.load %arg7[%c0_167, %c0_168] : memref<4x32xf32, #tpu.memory_space<vmem>>, vector<4x32xf32>
      %738 = vector.broadcast %736 : vector<4x1xf32> to vector<4x32xf32>
      %739 = arith.mulf %737, %738 : vector<4x32xf32>
      %c0_169 = arith.constant 0 : index
      %c0_170 = arith.constant 0 : index
      %740 = vector.load %arg7[%c0_169, %c0_170] : memref<4x32xf32, #tpu.memory_space<vmem>>, vector<4x32xf32>
      tpu.vector_store %arg7[%c0_169, %c0_170], %739 {strides = array<i32>} : memref<4x32xf32, #tpu.memory_space<vmem>>, vector<4x32xf32>,
      %c0_171 = arith.constant 0 : index
      %c0_172 = arith.constant 0 : index
      %741 = vector.load %arg8[%c0_171, %c0_172] : memref<4x32xf32, #tpu.memory_space<vmem>>, vector<4x32xf32>
      %742 = vector.broadcast %736 : vector<4x1xf32> to vector<4x32xf32>
      %743 = arith.mulf %741, %742 : vector<4x32xf32>
      %c0_173 = arith.constant 0 : index
      %c0_174 = arith.constant 0 : index
      %744 = vector.load %arg8[%c0_173, %c0_174] : memref<4x32xf32, #tpu.memory_space<vmem>>, vector<4x32xf32>
      tpu.vector_store %arg8[%c0_173, %c0_174], %743 {strides = array<i32>} : memref<4x32xf32, #tpu.memory_space<vmem>>, vector<4x32xf32>,
    } else {
    }
    return
  }
  func.func @transform_0(%arg0: i32, %arg1: i32) -> (i32, i32, i32) {
    %c0_i32 = arith.constant 0 : i32
    %c0_i32_0 = arith.constant 0 : i32
    return %arg0, %arg1, %c0_i32 : i32, i32, i32
  }
  func.func @transform_1(%arg0: i32, %arg1: i32) -> (i32, i32, i32) {
    %c0_i32 = arith.constant 0 : i32
    %0 = arith.subi %c0_i32, %arg1 : i32
    %c0_i32_0 = arith.constant 0 : i32
    %c0_i32_1 = arith.constant 0 : i32
    return %arg0, %0, %c0_i32_0 : i32, i32, i32
  }
  func.func @transform_2(%arg0: i32, %arg1: i32) -> (i32, i32) {
    %c0_i32 = arith.constant 0 : i32
    %c0_i32_0 = arith.constant 0 : i32
    return %arg0, %c0_i32 : i32, i32
  }
  func.func @transform_3(%arg0: i32, %arg1: i32) -> (i32, i32) {
    %c0_i32 = arith.constant 0 : i32
    %c0_i32_0 = arith.constant 0 : i32
    %c0_i32_1 = arith.constant 0 : i32
    return %c0_i32, %c0_i32_0 : i32, i32
  }
  func.func @transform_4(%arg0: i32, %arg1: i32) -> (i32, i32) {
    %c0_i32 = arith.constant 0 : i32
    %c0_i32_0 = arith.constant 0 : i32
    %c0_i32_1 = arith.constant 0 : i32
    return %c0_i32, %c0_i32_0 : i32, i32
  }
  func.func @transform_5(%arg0: i32, %arg1: i32) -> (i32, i32) {
    %c0_i32 = arith.constant 0 : i32
    %c0_i32_0 = arith.constant 0 : i32
    return %arg0, %c0_i32 : i32, i32
  }
  func.func @transform_6(%arg0: i32, %arg1: i32) -> (i32, i32) {
    %c0_i32 = arith.constant 0 : i32
    %c0_i32_0 = arith.constant 0 : i32
    return %arg0, %c0_i32 : i32, i32
  }
}

module attributes {stable_mosaic.version = 11 : i64} {
  func.func @_classifier_kernel(%arg0: i32, %arg1: memref<1x2x32xf32, #tpu.memory_space<vmem>>, %arg2: memref<1x2x32xf32, #tpu.memory_space<vmem>>, %arg3: memref<1x2x32xf32, #tpu.memory_space<vmem>>, %arg4: memref<1x2x32xf32, #tpu.memory_space<vmem>>, %arg5: memref<128x64xf32, #tpu.memory_space<vmem>>, %arg6: memref<1x64xf32, #tpu.memory_space<vmem>>, %arg7: memref<64x3xf32, #tpu.memory_space<vmem>>, %arg8: memref<1x3xf32, #tpu.memory_space<vmem>>, %arg9: memref<2x3xf32, #tpu.memory_space<vmem>>) attributes {dimension_semantics = [#tpu.dimension_semantics<parallel>], iteration_bounds = array<i64: 1>, scalar_prefetch = 0 : i64, scratch_operands = 0 : i64, tpu.core_type = #tpu.core_type<tc>, window_params = [{transform_indices = @transform_0, window_bounds = array<i64: 1, 2, 32>}, {transform_indices = @transform_1, window_bounds = array<i64: 1, 2, 32>}, {transform_indices = @transform_2, window_bounds = array<i64: 1, 2, 32>}, {transform_indices = @transform_3, window_bounds = array<i64: 1, 2, 32>}, {pipeline_mode = #tpu.pipeline_mode<synchronous>, transform_indices = @transform_4, window_bounds = array<i64: 128, 64>}, {pipeline_mode = #tpu.pipeline_mode<synchronous>, transform_indices = @transform_5, window_bounds = array<i64: 1, 64>}, {pipeline_mode = #tpu.pipeline_mode<synchronous>, transform_indices = @transform_6, window_bounds = array<i64: 64, 3>}, {pipeline_mode = #tpu.pipeline_mode<synchronous>, transform_indices = @transform_7, window_bounds = array<i64: 1, 3>}, {transform_indices = @transform_8, window_bounds = array<i64: 2, 3>}]} {
    %c0 = arith.constant 0 : index
    %c0_0 = arith.constant 0 : index
    %0 = vector.load %arg5[%c0, %c0_0] : memref<128x64xf32, #tpu.memory_space<vmem>>, vector<128x64xf32>
    %1 = arith.truncf %0 : vector<128x64xf32> to vector<128x64xbf16>
    %c0_1 = arith.constant 0 : index
    %c0_2 = arith.constant 0 : index
    %2 = vector.load %arg6[%c0_1, %c0_2] : memref<1x64xf32, #tpu.memory_space<vmem>>, vector<1x64xf32>
    %c0_3 = arith.constant 0 : index
    %c0_4 = arith.constant 0 : index
    %c0_5 = arith.constant 0 : index
    %3 = vector.load %arg1[%c0_3, %c0_4, %c0_5] : memref<1x2x32xf32, #tpu.memory_space<vmem>>, vector<1x2x32xf32>
    %4 = vector.shape_cast %3 : vector<1x2x32xf32> to vector<2x32xf32>
    %c0_6 = arith.constant 0 : index
    %c0_7 = arith.constant 0 : index
    %c0_8 = arith.constant 0 : index
    %5 = vector.load %arg2[%c0_6, %c0_7, %c0_8] : memref<1x2x32xf32, #tpu.memory_space<vmem>>, vector<1x2x32xf32>
    %6 = vector.shape_cast %5 : vector<1x2x32xf32> to vector<2x32xf32>
    %c0_9 = arith.constant 0 : index
    %c0_10 = arith.constant 0 : index
    %c0_11 = arith.constant 0 : index
    %7 = vector.load %arg3[%c0_9, %c0_10, %c0_11] : memref<1x2x32xf32, #tpu.memory_space<vmem>>, vector<1x2x32xf32>
    %8 = vector.shape_cast %7 : vector<1x2x32xf32> to vector<2x32xf32>
    %c0_12 = arith.constant 0 : index
    %c0_13 = arith.constant 0 : index
    %c0_14 = arith.constant 0 : index
    %9 = vector.load %arg4[%c0_12, %c0_13, %c0_14] : memref<1x2x32xf32, #tpu.memory_space<vmem>>, vector<1x2x32xf32>
    %10 = vector.shape_cast %9 : vector<1x2x32xf32> to vector<2x32xf32>
    %11 = arith.truncf %4 : vector<2x32xf32> to vector<2x32xbf16>
    %12 = vector.extract_strided_slice %1 {offsets = [0, 0], sizes = [32, 64], strides = [1, 1]} : vector<128x64xbf16> to vector<32x64xbf16>
    %cst = arith.constant dense<0.000000e+00> : vector<2x64xf32>
    %13 = tpu.matmul %11, %12, %cst {dimension_numbers = #tpu.dot_dimension_numbers<[1], [0], [0], [1], [0, 0, 1, 1], [], []>} : vector<2x32xbf16>, vector<32x64xbf16>, vector<2x64xf32> -> vector<2x64xf32>
    %14 = vector.broadcast %2 : vector<1x64xf32> to vector<2x64xf32>
    %15 = arith.addf %14, %13 : vector<2x64xf32>
    %16 = arith.truncf %6 : vector<2x32xf32> to vector<2x32xbf16>
    %17 = vector.extract_strided_slice %1 {offsets = [32, 0], sizes = [32, 64], strides = [1, 1]} : vector<128x64xbf16> to vector<32x64xbf16>
    %cst_15 = arith.constant dense<0.000000e+00> : vector<2x64xf32>
    %18 = tpu.matmul %16, %17, %cst_15 {dimension_numbers = #tpu.dot_dimension_numbers<[1], [0], [0], [1], [0, 0, 1, 1], [], []>} : vector<2x32xbf16>, vector<32x64xbf16>, vector<2x64xf32> -> vector<2x64xf32>
    %19 = arith.addf %15, %18 : vector<2x64xf32>
    %20 = arith.truncf %8 : vector<2x32xf32> to vector<2x32xbf16>
    %21 = vector.extract_strided_slice %1 {offsets = [64, 0], sizes = [32, 64], strides = [1, 1]} : vector<128x64xbf16> to vector<32x64xbf16>
    %cst_16 = arith.constant dense<0.000000e+00> : vector<2x64xf32>
    %22 = tpu.matmul %20, %21, %cst_16 {dimension_numbers = #tpu.dot_dimension_numbers<[1], [0], [0], [1], [0, 0, 1, 1], [], []>} : vector<2x32xbf16>, vector<32x64xbf16>, vector<2x64xf32> -> vector<2x64xf32>
    %23 = arith.addf %19, %22 : vector<2x64xf32>
    %24 = arith.truncf %10 : vector<2x32xf32> to vector<2x32xbf16>
    %25 = vector.extract_strided_slice %1 {offsets = [96, 0], sizes = [32, 64], strides = [1, 1]} : vector<128x64xbf16> to vector<32x64xbf16>
    %cst_17 = arith.constant dense<0.000000e+00> : vector<2x64xf32>
    %26 = tpu.matmul %24, %25, %cst_17 {dimension_numbers = #tpu.dot_dimension_numbers<[1], [0], [0], [1], [0, 0, 1, 1], [], []>} : vector<2x32xbf16>, vector<32x64xbf16>, vector<2x64xf32> -> vector<2x64xf32>
    %27 = arith.addf %23, %26 : vector<2x64xf32>
    %28 = math.tanh %27 : vector<2x64xf32>
    %c0_18 = arith.constant 0 : index
    %c0_19 = arith.constant 0 : index
    %29 = vector.load %arg7[%c0_18, %c0_19] : memref<64x3xf32, #tpu.memory_space<vmem>>, vector<64x3xf32>
    %30 = arith.truncf %28 : vector<2x64xf32> to vector<2x64xbf16>
    %31 = arith.truncf %29 : vector<64x3xf32> to vector<64x3xbf16>
    %cst_20 = arith.constant dense<0.000000e+00> : vector<2x3xf32>
    %32 = tpu.matmul %30, %31, %cst_20 {dimension_numbers = #tpu.dot_dimension_numbers<[1], [0], [0], [1], [0, 0, 1, 1], [], []>} : vector<2x64xbf16>, vector<64x3xbf16>, vector<2x3xf32> -> vector<2x3xf32>
    %c0_21 = arith.constant 0 : index
    %c0_22 = arith.constant 0 : index
    %33 = vector.load %arg8[%c0_21, %c0_22] : memref<1x3xf32, #tpu.memory_space<vmem>>, vector<1x3xf32>
    %34 = vector.broadcast %33 : vector<1x3xf32> to vector<2x3xf32>
    %35 = arith.addf %32, %34 : vector<2x3xf32>
    %c0_23 = arith.constant 0 : index
    %c0_24 = arith.constant 0 : index
    %36 = vector.load %arg9[%c0_23, %c0_24] : memref<2x3xf32, #tpu.memory_space<vmem>>, vector<2x3xf32>
    tpu.vector_store %arg9[%c0_23, %c0_24], %35 {strides = array<i32>} : memref<2x3xf32, #tpu.memory_space<vmem>>, vector<2x3xf32>,
    return
  }
  func.func @transform_0(%arg0: i32) -> (i32, i32, i32) {
    %c0_i32 = arith.constant 0 : i32
    %c0_i32_0 = arith.constant 0 : i32
    %c0_i32_1 = arith.constant 0 : i32
    return %c0_i32, %arg0, %c0_i32_0 : i32, i32, i32
  }
  func.func @transform_1(%arg0: i32) -> (i32, i32, i32) {
    %c0_i32 = arith.constant 0 : i32
    %c0_i32_0 = arith.constant 0 : i32
    %c0_i32_1 = arith.constant 0 : i32
    return %c0_i32, %arg0, %c0_i32_0 : i32, i32, i32
  }
  func.func @transform_2(%arg0: i32) -> (i32, i32, i32) {
    %c1_i32 = arith.constant 1 : i32
    %c0_i32 = arith.constant 0 : i32
    %c0_i32_0 = arith.constant 0 : i32
    return %c1_i32, %arg0, %c0_i32 : i32, i32, i32
  }
  func.func @transform_3(%arg0: i32) -> (i32, i32, i32) {
    %c1_i32 = arith.constant 1 : i32
    %c0_i32 = arith.constant 0 : i32
    %c0_i32_0 = arith.constant 0 : i32
    return %c1_i32, %arg0, %c0_i32 : i32, i32, i32
  }
  func.func @transform_4(%arg0: i32) -> (i32, i32) {
    %c0_i32 = arith.constant 0 : i32
    %c0_i32_0 = arith.constant 0 : i32
    %c0_i32_1 = arith.constant 0 : i32
    return %c0_i32, %c0_i32_0 : i32, i32
  }
  func.func @transform_5(%arg0: i32) -> (i32, i32) {
    %c0_i32 = arith.constant 0 : i32
    %c0_i32_0 = arith.constant 0 : i32
    %c0_i32_1 = arith.constant 0 : i32
    return %c0_i32, %c0_i32_0 : i32, i32
  }
  func.func @transform_6(%arg0: i32) -> (i32, i32) {
    %c0_i32 = arith.constant 0 : i32
    %c0_i32_0 = arith.constant 0 : i32
    %c0_i32_1 = arith.constant 0 : i32
    return %c0_i32, %c0_i32_0 : i32, i32
  }
  func.func @transform_7(%arg0: i32) -> (i32, i32) {
    %c0_i32 = arith.constant 0 : i32
    %c0_i32_0 = arith.constant 0 : i32
    %c0_i32_1 = arith.constant 0 : i32
    return %c0_i32, %c0_i32_0 : i32, i32
  }
  func.func @transform_8(%arg0: i32) -> (i32, i32) {
    %c0_i32 = arith.constant 0 : i32
    %c0_i32_0 = arith.constant 0 : i32
    return %arg0, %c0_i32 : i32, i32
  }
}

</mosaic_0001>

<llo_original>
// kernel: sem_attn_forward.7
$region0: #{sem_attn_forward.7}
  #allocation0 [shape = 'u32[]', space=smem, size = 0x4, offset = 0x4, fixed_abs, tag = 'smem constant byte address 0x4 - core index']
  #allocation1 [shape = 'u32[144,128]{1,0:T(1,128)}', space=vmem, size = 0x12000, scoped, tag = 'internal scratch']
  %s0 = inlined_call_operand.vmem [shape: f32[2,2,32], index: 0, kind: input, shape index: {}, may-alias: {0,2}]
  %s1 = inlined_call_operand.vmem [shape: f32[2,2,32], index: 1, kind: input, shape index: {}, may-alias: {1,3}]
  %s2 = inlined_call_operand.vmem [shape: f32[2,2,32], index: 2, kind: input, shape index: {}, may-alias: {0,2}]
  %s3 = inlined_call_operand.vmem [shape: f32[2,2,32], index: 3, kind: input, shape index: {}, may-alias: {1,3}]
  %s4 = inlined_call_operand.vmem [shape: f32[128,64], index: 4, kind: input, shape index: {}]
  %s5 = inlined_call_operand.vmem [shape: f32[1,64], index: 5, kind: input, shape index: {}]
  %s6 = inlined_call_operand.vmem [shape: f32[64,3], index: 6, kind: input, shape index: {}]
  %s7 = inlined_call_operand.vmem [shape: f32[1,3], index: 7, kind: input, shape index: {}]
  %s8 = inlined_call_operand.hbm [shape: f32[2,3], index: 8, kind: output, shape index: {}]
  %s9 = sld [smem:[#allocation0]]
  $region42: #{sem_attn_forward.7} parent=0
    _
  %s11 = ssub.s32 1, %s9
  %s12 = scalar_select 0, %s11, %s9
  $region1: #{sem_attn_forward.7} parent=0
    #allocation2 [shape = 'u8[1024]{0}', space=vmem, size = 0x400, scoped, tag = 'output window, operand 0, single buffered']
    #allocation3 [shape = 's32[1]{0}', space=sflag, size = 0x4, scoped, tag = 'scoped memory for sem_attn_forward.7']
    %13 = vsyncpa [#allocation3], 0
    // Predicated region
    $region2: #{sem_attn_forward.7} parent=1 // pred_check
      _
    $region3: #{sem_attn_forward.7} parent=1 // pred_check_branch
      %15 = sbr.rel (0) target = $region5
    $region4: #{sem_attn_forward.7} parent=1 // pred_region
      _
    $region5: #{sem_attn_forward.7} parent=1 // pred_fallthru
      _
    // Predicated region
    $region6: #{sem_attn_forward.7} parent=1 // pred_check
      _
    $region7: #{sem_attn_forward.7} parent=1 // pred_check_branch
      %17 = sbr.rel (0) target = $region9
    $region8: #{sem_attn_forward.7} parent=1 // pred_region
      _
    $region9: #{sem_attn_forward.7} parent=1 // pred_fallthru
      _
    // Predicated region
    $region10: #{sem_attn_forward.7} parent=1 // pred_check
      _
    $region11: #{sem_attn_forward.7} parent=1 // pred_check_branch
      %19 = sbr.rel (0) target = $region13
    $region12: #{sem_attn_forward.7} parent=1 // pred_region
      %s20 = scalar_lea.vmem %s2, 2
    $region13: #{sem_attn_forward.7} parent=1 // pred_fallthru
      _
    // Predicated region
    $region14: #{sem_attn_forward.7} parent=1 // pred_check
      _
    $region15: #{sem_attn_forward.7} parent=1 // pred_check_branch
      %22 = sbr.rel (0) target = $region17
    $region16: #{sem_attn_forward.7} parent=1 // pred_region
      %s23 = scalar_lea.vmem %s3, 2
    $region17: #{sem_attn_forward.7} parent=1 // pred_fallthru
      _
    // Predicated region
    $region18: #{sem_attn_forward.7} parent=1 // pred_check
      _
    $region19: #{sem_attn_forward.7} parent=1 // pred_check_branch
      %25 = sbr.rel (0) target = $region21
    $region20: #{sem_attn_forward.7} parent=1 // pred_region
      _
    $region21: #{sem_attn_forward.7} parent=1 // pred_fallthru
      _
    // Predicated region
    $region22: #{sem_attn_forward.7} parent=1 // pred_check
      _
    $region23: #{sem_attn_forward.7} parent=1 // pred_check_branch
      %27 = sbr.rel (0) target = $region25
    $region24: #{sem_attn_forward.7} parent=1 // pred_region
      _
    $region25: #{sem_attn_forward.7} parent=1 // pred_fallthru
      _
    // Predicated region
    $region26: #{sem_attn_forward.7} parent=1 // pred_check
      _
    $region27: #{sem_attn_forward.7} parent=1 // pred_check_branch
      %29 = sbr.rel (0) target = $region29
    $region28: #{sem_attn_forward.7} parent=1 // pred_region
      _
    $region29: #{sem_attn_forward.7} parent=1 // pred_fallthru
      _
    // Predicated region
    $region30: #{sem_attn_forward.7} parent=1 // pred_check
      _
    $region31: #{sem_attn_forward.7} parent=1 // pred_check_branch
      %31 = sbr.rel (0) target = $region33
    $region32: #{sem_attn_forward.7} parent=1 // pred_region
      _
    $region33: #{sem_attn_forward.7} parent=1 // pred_fallthru
      _
    %s32 = scalar_lea.vmem %s2, 2
    %s33 = scalar_lea.vmem %s3, 2
    %s34 = scalar_lea.vmem %s2, 2
    %s35 = scalar_lea.vmem %s3, 2
    %v37 = vld [vmem:[%s4] sm:$0xff]
    %v38 = vld [vmem:[%s4 + $0x8] sm:$0xff]
    %v39 = vld [vmem:[%s4 + $0x10] sm:$0xff]
    %v40 = vld [vmem:[%s4 + $0x18] sm:$0xff]
    %v41 = vld [vmem:[%s4 + $0x20] sm:$0xff]
    %v42 = vld [vmem:[%s4 + $0x28] sm:$0xff]
    %v43 = vld [vmem:[%s4 + $0x30] sm:$0xff]
    %v44 = vld [vmem:[%s4 + $0x38] sm:$0xff]
    %v45 = vld [vmem:[%s4 + $0x40] sm:$0xff]
    %v46 = vld [vmem:[%s4 + $0x48] sm:$0xff]
    %v47 = vld [vmem:[%s4 + $0x50] sm:$0xff]
    %v48 = vld [vmem:[%s4 + $0x58] sm:$0xff]
    %v49 = vld [vmem:[%s4 + $0x60] sm:$0xff]
    %v50 = vld [vmem:[%s4 + $0x68] sm:$0xff]
    %v51 = vld [vmem:[%s4 + $0x70] sm:$0xff]
    %v52 = vld [vmem:[%s4 + $0x78] sm:$0xff]
    %v53 = vpack.c.bf16 %v38, %v37
    %v54 = vpack.c.bf16 %v40, %v39
    %v55 = vpack.c.bf16 %v42, %v41
    %v56 = vpack.c.bf16 %v44, %v43
    %v57 = vpack.c.bf16 %v46, %v45
    %v58 = vpack.c.bf16 %v48, %v47
    %v59 = vpack.c.bf16 %v50, %v49
    %v60 = vpack.c.bf16 %v52, %v51
    %v61 = vld [vmem:[%s5] sm:$0x1]
    %v62 = vld [vmem:[%s0] sm:$0x3]
    %v63 = vld [vmem:[%s1] sm:$0x3]
    %v64 = vld [vmem:[%s34] sm:$0x3]
    %v65 = vld [vmem:[%s35] sm:$0x3]
    %v66 = vpack.c.bf16 %v62, %v62
    %vm67 = vcmask 261120
    %v69 = vsel %vm67, %v66, 0
    %71 = vmatprep.subr.bf16.mxu0 0
    %72 = vmatpush1.bf16.msra.mxu0 %v53
    %73 = vmatprep.subr.bf16.mxu0 0
    %74 = vmatpush1.bf16.msra.mxu0 %v54
    %75 = vmatprep.subr.bf16.mxu0 0
    %76 = vmatpush1.bf16.msra.mxu0 0
    %77 = vmatprep.subr.bf16.mxu0 0
    %78 = vmatpush1.bf16.msra.mxu0 0
    %79 = vmatprep.subr.bf16.mxu0 0
    %80 = vmatpush1.bf16.msra.mxu0 0
    %81 = vmatprep.subr.bf16.mxu0 0
    %82 = vmatpush1.bf16.msra.mxu0 0
    %83 = vmatprep.subr.bf16.mxu0 0
    %84 = vmatpush1.bf16.msra.mxu0 0
    %85 = vmatprep.subr.bf16.mxu0 0
    %86 = vmatpush1.bf16.msra.mxu0 0
    %87 = vmatprep.subr.bf16.mxu0 0
    %88 = vmatpush1.bf16.msra.mxu0 0
    %89 = vmatprep.subr.bf16.mxu0 0
    %90 = vmatpush1.bf16.msra.mxu0 0
    %91 = vmatprep.subr.bf16.mxu0 0
    %92 = vmatpush1.bf16.msra.mxu0 0
    %93 = vmatprep.subr.bf16.mxu0 0
    %94 = vmatpush1.bf16.msra.mxu0 0
    %95 = vmatprep.subr.bf16.mxu0 0
    %96 = vmatpush1.bf16.msra.mxu0 0
    %97 = vmatprep.subr.bf16.mxu0 0
    %98 = vmatpush1.bf16.msra.mxu0 0
    %99 = vmatprep.subr.bf16.mxu0 0
    %100 = vmatpush1.bf16.msra.mxu0 0
    %101 = vmatprep.subr.bf16.mxu0 0
    %102 = vmatpush1.bf16.msra.mxu0 0
    %103 = vmatprep.mubr.bf16.mxu0 0
    %104 = vmatmul.mubr.bf16.gmra.mrb[0].mxu0 %v69
    %v105 = vpop.f32.mrb[0].mxu0
    %v106 = vadd.f32 0.0, %v105
    %v107 = vpop.f32.mrb[0].mxu0
    %v108 = vpop.f32.mrb[0].mxu0
    %v109 = vpop.f32.mrb[0].mxu0
    %110 = vdwg.mxu0
    %v112 = vlaneseq
    %v113 = vshrl.u32 %v112, 7
    %v114 = vsub.s32 0, %v113
    %v115 = vrot.slane %v61, %v114
    %v117 = vadd.f32 %v115, %v106
    %v118 = vpack.c.bf16 %v63, %v63
    %v120 = vsel %vm67, %v118, 0
    %122 = vmatprep.subr.bf16.mxu0 0
    %123 = vmatpush1.bf16.msra.mxu0 %v55
    %124 = vmatprep.subr.bf16.mxu0 0
    %125 = vmatpush1.bf16.msra.mxu0 %v56
    %126 = vmatprep.subr.bf16.mxu0 0
    %127 = vmatpush1.bf16.msra.mxu0 0
    %128 = vmatprep.subr.bf16.mxu0 0
    %129 = vmatpush1.bf16.msra.mxu0 0
    %130 = vmatprep.subr.bf16.mxu0 0
    %131 = vmatpush1.bf16.msra.mxu0 0
    %132 = vmatprep.subr.bf16.mxu0 0
    %133 = vmatpush1.bf16.msra.mxu0 0
    %134 = vmatprep.subr.bf16.mxu0 0
    %135 = vmatpush1.bf16.msra.mxu0 0
    %136 = vmatprep.subr.bf16.mxu0 0
    %137 = vmatpush1.bf16.msra.mxu0 0
    %138 = vmatprep.subr.bf16.mxu0 0
    %139 = vmatpush1.bf16.msra.mxu0 0
    %140 = vmatprep.subr.bf16.mxu0 0
    %141 = vmatpush1.bf16.msra.mxu0 0
    %142 = vmatprep.subr.bf16.mxu0 0
    %143 = vmatpush1.bf16.msra.mxu0 0
    %144 = vmatprep.subr.bf16.mxu0 0
    %145 = vmatpush1.bf16.msra.mxu0 0
    %146 = vmatprep.subr.bf16.mxu0 0
    %147 = vmatpush1.bf16.msra.mxu0 0
    %148 = vmatprep.subr.bf16.mxu0 0
    %149 = vmatpush1.bf16.msra.mxu0 0
    %150 = vmatprep.subr.bf16.mxu0 0
    %151 = vmatpush1.bf16.msra.mxu0 0
    %152 = vmatprep.subr.bf16.mxu0 0
    %153 = vmatpush1.bf16.msra.mxu0 0
    %154 = vmatprep.mubr.bf16.mxu0 0
    %155 = vmatmul.mubr.bf16.gmra.mrb[0].mxu0 %v120
    %v156 = vpop.f32.mrb[0].mxu0
    %v157 = vadd.f32 0.0, %v156
    %v158 = vpop.f32.mrb[0].mxu0
    %v159 = vpop.f32.mrb[0].mxu0
    %v160 = vpop.f32.mrb[0].mxu0
    %161 = vdwg.mxu0
    %v162 = vadd.f32 %v117, %v157
    %v163 = vpack.c.bf16 %v64, %v64
    %v165 = vsel %vm67, %v163, 0
    %167 = vmatprep.subr.bf16.mxu0 0
    %168 = vmatpush1.bf16.msra.mxu0 %v57
    %169 = vmatprep.subr.bf16.mxu0 0
    %170 = vmatpush1.bf16.msra.mxu0 %v58
    %171 = vmatprep.subr.bf16.mxu0 0
    %172 = vmatpush1.bf16.msra.mxu0 0
    %173 = vmatprep.subr.bf16.mxu0 0
    %174 = vmatpush1.bf16.msra.mxu0 0
    %175 = vmatprep.subr.bf16.mxu0 0
    %176 = vmatpush1.bf16.msra.mxu0 0
    %177 = vmatprep.subr.bf16.mxu0 0
    %178 = vmatpush1.bf16.msra.mxu0 0
    %179 = vmatprep.subr.bf16.mxu0 0
    %180 = vmatpush1.bf16.msra.mxu0 0
    %181 = vmatprep.subr.bf16.mxu0 0
    %182 = vmatpush1.bf16.msra.mxu0 0
    %183 = vmatprep.subr.bf16.mxu0 0
    %184 = vmatpush1.bf16.msra.mxu0 0
    %185 = vmatprep.subr.bf16.mxu0 0
    %186 = vmatpush1.bf16.msra.mxu0 0
    %187 = vmatprep.subr.bf16.mxu0 0
    %188 = vmatpush1.bf16.msra.mxu0 0
    %189 = vmatprep.subr.bf16.mxu0 0
    %190 = vmatpush1.bf16.msra.mxu0 0
    %191 = vmatprep.subr.bf16.mxu0 0
    %192 = vmatpush1.bf16.msra.mxu0 0
    %193 = vmatprep.subr.bf16.mxu0 0
    %194 = vmatpush1.bf16.msra.mxu0 0
    %195 = vmatprep.subr.bf16.mxu0 0
    %196 = vmatpush1.bf16.msra.mxu0 0
    %197 = vmatprep.subr.bf16.mxu0 0
    %198 = vmatpush1.bf16.msra.mxu0 0
    %199 = vmatprep.mubr.bf16.mxu0 0
    %200 = vmatmul.mubr.bf16.gmra.mrb[0].mxu0 %v165
    %v201 = vpop.f32.mrb[0].mxu0
    %v202 = vadd.f32 0.0, %v201
    %v203 = vpop.f32.mrb[0].mxu0
    %v204 = vpop.f32.mrb[0].mxu0
    %v205 = vpop.f32.mrb[0].mxu0
    %206 = vdwg.mxu0
    %v207 = vadd.f32 %v162, %v202
    %v208 = vpack.c.bf16 %v65, %v65
    %v210 = vsel %vm67, %v208, 0
    %212 = vmatprep.subr.bf16.mxu0 0
    %213 = vmatpush1.bf16.msra.mxu0 %v59
    %214 = vmatprep.subr.bf16.mxu0 0
    %215 = vmatpush1.bf16.msra.mxu0 %v60
    %216 = vmatprep.subr.bf16.mxu0 0
    %217 = vmatpush1.bf16.msra.mxu0 0
    %218 = vmatprep.subr.bf16.mxu0 0
    %219 = vmatpush1.bf16.msra.mxu0 0
    %220 = vmatprep.subr.bf16.mxu0 0
    %221 = vmatpush1.bf16.msra.mxu0 0
    %222 = vmatprep.subr.bf16.mxu0 0
    %223 = vmatpush1.bf16.msra.mxu0 0
    %224 = vmatprep.subr.bf16.mxu0 0
    %225 = vmatpush1.bf16.msra.mxu0 0
    %226 = vmatprep.subr.bf16.mxu0 0
    %227 = vmatpush1.bf16.msra.mxu0 0
    %228 = vmatprep.subr.bf16.mxu0 0
    %229 = vmatpush1.bf16.msra.mxu0 0
    %230 = vmatprep.subr.bf16.mxu0 0
    %231 = vmatpush1.bf16.msra.mxu0 0
    %232 = vmatprep.subr.bf16.mxu0 0
    %233 = vmatpush1.bf16.msra.mxu0 0
    %234 = vmatprep.subr.bf16.mxu0 0
    %235 = vmatpush1.bf16.msra.mxu0 0
    %236 = vmatprep.subr.bf16.mxu0 0
    %237 = vmatpush1.bf16.msra.mxu0 0
    %238 = vmatprep.subr.bf16.mxu0 0
    %239 = vmatpush1.bf16.msra.mxu0 0
    %240 = vmatprep.subr.bf16.mxu0 0
    %241 = vmatpush1.bf16.msra.mxu0 0
    %242 = vmatprep.subr.bf16.mxu0 0
    %243 = vmatpush1.bf16.msra.mxu0 0
    %244 = vmatprep.mubr.bf16.mxu0 0
    %245 = vmatmul.mubr.bf16.gmra.mrb[0].mxu0 %v210
    %v246 = vpop.f32.mrb[0].mxu0
    %v247 = vadd.f32 0.0, %v246
    %v248 = vpop.f32.mrb[0].mxu0
    %v249 = vpop.f32.mrb[0].mxu0
    %v250 = vpop.f32.mrb[0].mxu0
    %251 = vdwg.mxu0
    %v252 = vadd.f32 %v207, %v247
    %v253 = vtanh.pop %v252
    %v254 = vld [vmem:[%s6] sm:$0xff]
    %v255 = vld [vmem:[%s6 + $0x8] sm:$0xff]
    %v256 = vld [vmem:[%s6 + $0x10] sm:$0xff]
    %v257 = vld [vmem:[%s6 + $0x18] sm:$0xff]
    %v258 = vld [vmem:[%s6 + $0x20] sm:$0xff]
    %v259 = vld [vmem:[%s6 + $0x28] sm:$0xff]
    %v260 = vld [vmem:[%s6 + $0x30] sm:$0xff]
    %v261 = vld [vmem:[%s6 + $0x38] sm:$0xff]
    %v262 = vpack.c.bf16 %v253, %v253
    %v263 = vpack.c.bf16 %v255, %v254
    %v264 = vpack.c.bf16 %v257, %v256
    %v265 = vpack.c.bf16 %v259, %v258
    %v266 = vpack.c.bf16 %v261, %v260
    %v267 = vld [vmem:[%s7] sm:$0x1]
    %v269 = vlaneseq
    %v270 = vshrl.u32 %v269, 7
    %v271 = vsub.s32 0, %v270
    %v272 = vrot.slane %v267, %v271
    %vm274 = vcmask 523264
    %v276 = vsel %vm274, %v262, 0
    %278 = vmatprep.subr.bf16.mxu0 0
    %279 = vmatpush1.bf16.msra.mxu0 %v263
    %280 = vmatprep.subr.bf16.mxu0 0
    %281 = vmatpush1.bf16.msra.mxu0 %v264
    %282 = vmatprep.subr.bf16.mxu0 0
    %283 = vmatpush1.bf16.msra.mxu0 %v265
    %284 = vmatprep.subr.bf16.mxu0 0
    %285 = vmatpush1.bf16.msra.mxu0 %v266
    %286 = vmatprep.subr.bf16.mxu0 0
    %287 = vmatpush1.bf16.msra.mxu0 0
    %288 = vmatprep.subr.bf16.mxu0 0
    %289 = vmatpush1.bf16.msra.mxu0 0
    %290 = vmatprep.subr.bf16.mxu0 0
    %291 = vmatpush1.bf16.msra.mxu0 0
    %292 = vmatprep.subr.bf16.mxu0 0
    %293 = vmatpush1.bf16.msra.mxu0 0
    %294 = vmatprep.subr.bf16.mxu0 0
    %295 = vmatpush1.bf16.msra.mxu0 0
    %296 = vmatprep.subr.bf16.mxu0 0
    %297 = vmatpush1.bf16.msra.mxu0 0
    %298 = vmatprep.subr.bf16.mxu0 0
    %299 = vmatpush1.bf16.msra.mxu0 0
    %300 = vmatprep.subr.bf16.mxu0 0
    %301 = vmatpush1.bf16.msra.mxu0 0
    %302 = vmatprep.subr.bf16.mxu0 0
    %303 = vmatpush1.bf16.msra.mxu0 0
    %304 = vmatprep.subr.bf16.mxu0 0
    %305 = vmatpush1.bf16.msra.mxu0 0
    %306 = vmatprep.subr.bf16.mxu0 0
    %307 = vmatpush1.bf16.msra.mxu0 0
    %308 = vmatprep.subr.bf16.mxu0 0
    %309 = vmatpush1.bf16.msra.mxu0 0
    %310 = vmatprep.mubr.bf16.mxu0 0
    %311 = vmatmul.mubr.bf16.gmra.mrb[0].mxu0 %v276
    %v312 = vpop.f32.mrb[0].mxu0
    %v313 = vadd.f32 %v272, %v312
    %v314 = vpop.f32.mrb[0].mxu0
    %v315 = vpop.f32.mrb[0].mxu0
    %v316 = vpop.f32.mrb[0].mxu0
    %317 = vdwg.mxu0
    %vm318 = vcmask 17408
    %319 = vst.msk [vmem:[#allocation2] sm:$0x3] %vm318, %v313
    // Predicated region
    $region34: #{sem_attn_forward.7} parent=1 // pred_check
      _
    $region35: #{sem_attn_forward.7} parent=1 // pred_check_branch
      %321 = sbr.rel (0) target = $region37
    $region36: #{sem_attn_forward.7} parent=1 // pred_region
      %s323 = ssub.s32 32, 32
      %324 = vsyncadd [#allocation3], %s323
      %s326 = sshll.u32 [#allocation2], 4
      %s327 = int_to_ptr.vmem [resolvable:$true] %s326
      %329 = dma.vmem_to_hbm [thread:$0]  %s327, 32, %s8, [#allocation3]
    $region37: #{sem_attn_forward.7} parent=1 // pred_fallthru
      _
    // Predicated region
    $region38: #{sem_attn_forward.7} parent=1 // pred_check
      _
    $region39: #{sem_attn_forward.7} parent=1 // pred_check_branch
      %331 = sbr.rel (0) target = $region41
    $region40: #{sem_attn_forward.7} parent=1 // pred_region
      %332 = dma.done [#allocation3], 32
    $region41: #{sem_attn_forward.7} parent=1 // pred_fallthru
      _
    %333 = vsyncpa [#allocation3], 1

// kernel: sem_attn_forward.5
$region0: #{sem_attn_forward.5}
  #allocation0 [shape = 'u32[]', space=smem, size = 0x4, offset = 0x4, fixed_abs, tag = 'smem constant byte address 0x4 - core index']
  #allocation1 [shape = 'u32[144,128]{1,0:T(1,128)}', space=vmem, size = 0x12000, scoped, tag = 'internal scratch']
  %s0 = inlined_call_operand.vmem [shape: f32[4,8,32], index: 0, kind: input, shape index: {}, may-alias: {0,2}]
  %s1 = inlined_call_operand.vmem [shape: f32[4,8,32], index: 1, kind: input, shape index: {}, may-alias: {1,3}]
  %s2 = inlined_call_operand.vmem [shape: f32[4,8,32], index: 2, kind: input, shape index: {}, may-alias: {0,2}]
  %s3 = inlined_call_operand.vmem [shape: f32[4,8,32], index: 3, kind: input, shape index: {}, may-alias: {1,3}]
  %s4 = inlined_call_operand.vmem [shape: s32[2,2,1], index: 4, kind: input, shape index: {}, may-alias: {4,5}]
  %s5 = inlined_call_operand.vmem [shape: s32[2,2,1], index: 5, kind: input, shape index: {}, may-alias: {4,5}]
  %s6 = inlined_call_operand.vmem [shape: f32[256,32], index: 6, kind: input, shape index: {}]
  %s7 = inlined_call_operand.vmem [shape: f32[1,32], index: 7, kind: input, shape index: {}]
  %s8 = inlined_call_operand.vmem [shape: f32[2,2,8,32], index: 8, kind: output, shape index: {}]
  %s9 = sld [smem:[#allocation0]]
  $region42: #{sem_attn_forward.5} parent=0
    _
  %s11 = ssub.s32 1, %s9
  %s12 = scalar_select 0, %s11, %s9
  // Predicated region
  $region2: #{sem_attn_forward.5} parent=0 // pred_check
    _
  $region3: #{sem_attn_forward.5} parent=0 // pred_check_branch
    %14 = sbr.rel (0) target = $region5
  $region4: #{sem_attn_forward.5} parent=0 // pred_region
    _
  $region5: #{sem_attn_forward.5} parent=0 // pred_fallthru
    _
  // Predicated region
  $region6: #{sem_attn_forward.5} parent=0 // pred_check
    _
  $region7: #{sem_attn_forward.5} parent=0 // pred_check_branch
    %16 = sbr.rel (0) target = $region9
  $region8: #{sem_attn_forward.5} parent=0 // pred_region
    _
  $region9: #{sem_attn_forward.5} parent=0 // pred_fallthru
    _
  // Predicated region
  $region10: #{sem_attn_forward.5} parent=0 // pred_check
    _
  $region11: #{sem_attn_forward.5} parent=0 // pred_check_branch
    %18 = sbr.rel (0) target = $region13
  $region12: #{sem_attn_forward.5} parent=0 // pred_region
    %s19 = sadd.s32 0, 1
    %s20 = smul.u32 2, %s19
    %p21 = scmp.lt.s32.totalorder %s20, 3
    %s22 = scalar_select %p21, %s20, 3
    %s23 = smul.addr %s22, 8
    %s24 = scalar_lea.vmem %s2, %s23
    %s25 = sadd.s32 0, 1
    %s26 = smul.u32 2, %s25
  $region13: #{sem_attn_forward.5} parent=0 // pred_fallthru
    _
  // Predicated region
  $region14: #{sem_attn_forward.5} parent=0 // pred_check
    _
  $region15: #{sem_attn_forward.5} parent=0 // pred_check_branch
    %28 = sbr.rel (0) target = $region17
  $region16: #{sem_attn_forward.5} parent=0 // pred_region
    %s29 = sadd.s32 0, 1
    %s30 = smul.u32 2, %s29
    %p31 = scmp.lt.s32.totalorder %s30, 3
    %s32 = scalar_select %p31, %s30, 3
    %s33 = smul.addr %s32, 8
    %s34 = scalar_lea.vmem %s3, %s33
    %s35 = sadd.s32 0, 1
    %s36 = smul.u32 2, %s35
  $region17: #{sem_attn_forward.5} parent=0 // pred_fallthru
    _
  // Predicated region
  $region18: #{sem_attn_forward.5} parent=0 // pred_check
    _
  $region19: #{sem_attn_forward.5} parent=0 // pred_check_branch
    %38 = sbr.rel (0) target = $region21
  $region20: #{sem_attn_forward.5} parent=0 // pred_region
    _
  $region21: #{sem_attn_forward.5} parent=0 // pred_fallthru
    _
  // Predicated region
  $region22: #{sem_attn_forward.5} parent=0 // pred_check
    _
  $region23: #{sem_attn_forward.5} parent=0 // pred_check_branch
    %40 = sbr.rel (0) target = $region25
  $region24: #{sem_attn_forward.5} parent=0 // pred_region
    %s41 = scalar_lea.vmem %s5, 2
  $region25: #{sem_attn_forward.5} parent=0 // pred_fallthru
    _
  // Predicated region
  $region26: #{sem_attn_forward.5} parent=0 // pred_check
    _
  $region27: #{sem_attn_forward.5} parent=0 // pred_check_branch
    %43 = sbr.rel (0) target = $region29
  $region28: #{sem_attn_forward.5} parent=0 // pred_region
    _
  $region29: #{sem_attn_forward.5} parent=0 // pred_fallthru
    _
  // Predicated region
  $region30: #{sem_attn_forward.5} parent=0 // pred_check
    _
  $region31: #{sem_attn_forward.5} parent=0 // pred_check_branch
    %45 = sbr.rel (0) target = $region33
  $region32: #{sem_attn_forward.5} parent=0 // pred_region
    _
  $region33: #{sem_attn_forward.5} parent=0 // pred_fallthru
    _
  %s46 = sadd.s32 0, 1
  %s47 = smul.u32 2, %s46
  %p48 = scmp.lt.s32.totalorder %s47, 3
  %s49 = scalar_select %p48, %s47, 3
  %s50 = smul.addr %s49, 8
  %s51 = scalar_lea.vmem %s2, %s50
  %s52 = sadd.s32 0, 1
  %s53 = smul.u32 2, %s52
  %p54 = scmp.lt.s32.totalorder %s53, 3
  %s55 = scalar_select %p54, %s53, 3
  %s56 = smul.addr %s55, 8
  %s57 = scalar_lea.vmem %s3, %s56
  %s58 = scalar_lea.vmem %s5, 2
  %s59 = sadd.s32 0, 1
  %s60 = smul.u32 2, %s59
  %p61 = scmp.lt.s32.totalorder %s60, 3
  %s62 = scalar_select %p61, %s60, 3
  %s63 = smul.addr %s62, 8
  %s64 = scalar_lea.vmem %s2, %s63
  %s65 = sadd.s32 0, 1
  %s66 = smul.u32 2, %s65
  %s67 = sadd.s32 0, 1
  %s68 = smul.u32 2, %s67
  %p69 = scmp.lt.s32.totalorder %s68, 3
  %s70 = scalar_select %p69, %s68, 3
  %s71 = smul.addr %s70, 8
  %s72 = scalar_lea.vmem %s3, %s71
  %s73 = sadd.s32 0, 1
  %s74 = smul.u32 2, %s73
  %s75 = scalar_lea.vmem %s5, 2
  %v77 = vld [vmem:[%s0] sm:$0xff]
  %v78 = vld [vmem:[%s0 + $0x8] sm:$0xff]
  %v79 = vld [vmem:[%s1] sm:$0xff]
  %v80 = vld [vmem:[%s1 + $0x8] sm:$0xff]
  %83 = vrot.lane.b32.xlu0 %v79, 32
  %v84 = vpop.permute.xlu0 %83
  %85 = vrot.lane.b32.xlu0 %v80, 32
  %v86 = vpop.permute.xlu0 %85
  %vm89 = vcmask 261120
  %v90 = vsel %vm89, %v77, %v84
  %v91 = vsel %vm89, %v78, %v86
  %v92 = vld [vmem:[%s64] sm:$0xff]
  %v93 = vld [vmem:[%s64 + $0x8] sm:$0xff]
  %v94 = vld [vmem:[%s72] sm:$0xff]
  %v95 = vld [vmem:[%s72 + $0x8] sm:$0xff]
  %98 = vrot.lane.b32.xlu0 %v94, 32
  %v99 = vpop.permute.xlu0 %98
  %100 = vrot.lane.b32.xlu0 %v95, 32
  %v101 = vpop.permute.xlu0 %100
  %v104 = vsel %vm89, %v92, %v99
  %v105 = vsel %vm89, %v93, %v101
  %v106 = vld [vmem:[%s4] sm:$0x3]
  %v107 = vld [vmem:[%s75] sm:$0x3]
  %v108 = vpack.c.bf16 %v90, %v90
  %v109 = vpack.c.bf16 %v91, %v91
  %v110 = vpack.c.bf16 %v104, %v104
  %v111 = vpack.c.bf16 %v105, %v105
  %vm112 = vcmask 523264
  %v114 = vsel %vm112, %v108, 0
  %v117 = vsel %vm112, %v110, 0
  %119 = vmatprep.subr.bf16.mxu0 0
  %120 = vmatpush1.bf16.xpose.msra.mxu0 %v117
  %121 = vmatprep.subr.bf16.mxu0 0
  %122 = vmatpush1.bf16.xpose.msra.mxu0 0
  %123 = vmatprep.subr.bf16.mxu0 0
  %124 = vmatpush1.bf16.xpose.msra.mxu0 0
  %125 = vmatprep.subr.bf16.mxu0 0
  %126 = vmatpush1.bf16.xpose.msra.mxu0 0
  %127 = vmatprep.subr.bf16.mxu0 0
  %128 = vmatpush1.bf16.xpose.msra.mxu0 0
  %129 = vmatprep.subr.bf16.mxu0 0
  %130 = vmatpush1.bf16.xpose.msra.mxu0 0
  %131 = vmatprep.subr.bf16.mxu0 0
  %132 = vmatpush1.bf16.xpose.msra.mxu0 0
  %133 = vmatprep.subr.bf16.mxu0 0
  %134 = vmatpush1.bf16.xpose.msra.mxu0 0
  %135 = vmatprep.subr.bf16.mxu0 0
  %136 = vmatpush1.bf16.xpose.msra.mxu0 0
  %137 = vmatprep.subr.bf16.mxu0 0
  %138 = vmatpush1.bf16.xpose.msra.mxu0 0
  %139 = vmatprep.subr.bf16.mxu0 0
  %140 = vmatpush1.bf16.xpose.msra.mxu0 0
  %141 = vmatprep.subr.bf16.mxu0 0
  %142 = vmatpush1.bf16.xpose.msra.mxu0 0
  %143 = vmatprep.subr.bf16.mxu0 0
  %144 = vmatpush1.bf16.xpose.msra.mxu0 0
  %145 = vmatprep.subr.bf16.mxu0 0
  %146 = vmatpush1.bf16.xpose.msra.mxu0 0
  %147 = vmatprep.subr.bf16.mxu0 0
  %148 = vmatpush1.bf16.xpose.msra.mxu0 0
  %149 = vmatprep.subr.bf16.mxu0 0
  %150 = vmatpush1.bf16.xpose.msra.mxu0 0
  %151 = vmatprep.mubr.bf16.mxu0 0
  %152 = vmatmul.mubr.bf16.gmra.mrb[0].mxu0 %v114
  %v153 = vpop.f32.mrb[0].mxu0
  %v154 = vadd.f32 0.0, %v153
  %v155 = vpop.f32.mrb[0].mxu0
  %v156 = vpop.f32.mrb[0].mxu0
  %v157 = vpop.f32.mrb[0].mxu0
  %158 = vdwg.mxu0
  %v160 = vsel %vm112, %v109, 0
  %v163 = vsel %vm112, %v111, 0
  %165 = vmatprep.subr.bf16.mxu0 0
  %166 = vmatpush1.bf16.xpose.msra.mxu0 %v163
  %167 = vmatprep.subr.bf16.mxu0 0
  %168 = vmatpush1.bf16.xpose.msra.mxu0 0
  %169 = vmatprep.subr.bf16.mxu0 0
  %170 = vmatpush1.bf16.xpose.msra.mxu0 0
  %171 = vmatprep.subr.bf16.mxu0 0
  %172 = vmatpush1.bf16.xpose.msra.mxu0 0
  %173 = vmatprep.subr.bf16.mxu0 0
  %174 = vmatpush1.bf16.xpose.msra.mxu0 0
  %175 = vmatprep.subr.bf16.mxu0 0
  %176 = vmatpush1.bf16.xpose.msra.mxu0 0
  %177 = vmatprep.subr.bf16.mxu0 0
  %178 = vmatpush1.bf16.xpose.msra.mxu0 0
  %179 = vmatprep.subr.bf16.mxu0 0
  %180 = vmatpush1.bf16.xpose.msra.mxu0 0
  %181 = vmatprep.subr.bf16.mxu0 0
  %182 = vmatpush1.bf16.xpose.msra.mxu0 0
  %183 = vmatprep.subr.bf16.mxu0 0
  %184 = vmatpush1.bf16.xpose.msra.mxu0 0
  %185 = vmatprep.subr.bf16.mxu0 0
  %186 = vmatpush1.bf16.xpose.msra.mxu0 0
  %187 = vmatprep.subr.bf16.mxu0 0
  %188 = vmatpush1.bf16.xpose.msra.mxu0 0
  %189 = vmatprep.subr.bf16.mxu0 0
  %190 = vmatpush1.bf16.xpose.msra.mxu0 0
  %191 = vmatprep.subr.bf16.mxu0 0
  %192 = vmatpush1.bf16.xpose.msra.mxu0 0
  %193 = vmatprep.subr.bf16.mxu0 0
  %194 = vmatpush1.bf16.xpose.msra.mxu0 0
  %195 = vmatprep.subr.bf16.mxu0 0
  %196 = vmatpush1.bf16.xpose.msra.mxu0 0
  %197 = vmatprep.mubr.bf16.mxu0 0
  %198 = vmatmul.mubr.bf16.gmra.mrb[0].mxu0 %v160
  %v199 = vpop.f32.mrb[0].mxu0
  %v200 = vadd.f32 0.0, %v199
  %v201 = vpop.f32.mrb[0].mxu0
  %v202 = vpop.f32.mrb[0].mxu0
  %v203 = vpop.f32.mrb[0].mxu0
  %204 = vdwg.mxu0
  %205 = vxpose.xlu0.b32.start [1/16] %v154, 128
  %206 = vxpose.xlu0.b32.cont [2/16] 0.0, 128
  %207 = vxpose.xlu0.b32.cont [3/16] 0.0, 128
  %208 = vxpose.xlu0.b32.cont [4/16] 0.0, 128
  %209 = vxpose.xlu0.b32.cont [5/16] 0.0, 128
  %210 = vxpose.xlu0.b32.cont [6/16] 0.0, 128
  %211 = vxpose.xlu0.b32.cont [7/16] 0.0, 128
  %212 = vxpose.xlu0.b32.cont [8/16] 0.0, 128
  %213 = vxpose.xlu0.b32.cont [9/16] 0.0, 128
  %214 = vxpose.xlu0.b32.cont [10/16] 0.0, 128
  %215 = vxpose.xlu0.b32.cont [11/16] 0.0, 128
  %216 = vxpose.xlu0.b32.cont [12/16] 0.0, 128
  %217 = vxpose.xlu0.b32.cont [13/16] 0.0, 128
  %218 = vxpose.xlu0.b32.cont [14/16] 0.0, 128
  %219 = vxpose.xlu0.b32.cont [15/16] 0.0, 128
  %220 = vxpose.xlu0.b32.end [16/16] 0.0, 128
  %v221 = vpop.trf.xlu0
  %v222 = vpop.trf.xlu0
  %v223 = vpop.trf.xlu0
  %v224 = vpop.trf.xlu0
  %v225 = vpop.trf.xlu0
  %v226 = vpop.trf.xlu0
  %v227 = vpop.trf.xlu0
  %v228 = vpop.trf.xlu0
  %v229 = vpop.trf.xlu0
  %v230 = vpop.trf.xlu0
  %v231 = vpop.trf.xlu0
  %v232 = vpop.trf.xlu0
  %v233 = vpop.trf.xlu0
  %v234 = vpop.trf.xlu0
  %v235 = vpop.trf.xlu0
  %v236 = vpop.trf.xlu0
  %237 = vxpose.xlu0.b32.start [1/16] %v200, 128
  %238 = vxpose.xlu0.b32.cont [2/16] 0.0, 128
  %239 = vxpose.xlu0.b32.cont [3/16] 0.0, 128
  %240 = vxpose.xlu0.b32.cont [4/16] 0.0, 128
  %241 = vxpose.xlu0.b32.cont [5/16] 0.0, 128
  %242 = vxpose.xlu0.b32.cont [6/16] 0.0, 128
  %243 = vxpose.xlu0.b32.cont [7/16] 0.0, 128
  %244 = vxpose.xlu0.b32.cont [8/16] 0.0, 128
  %245 = vxpose.xlu0.b32.cont [9/16] 0.0, 128
  %246 = vxpose.xlu0.b32.cont [10/16] 0.0, 128
  %247 = vxpose.xlu0.b32.cont [11/16] 0.0, 128
  %248 = vxpose.xlu0.b32.cont [12/16] 0.0, 128
  %249 = vxpose.xlu0.b32.cont [13/16] 0.0, 128
  %250 = vxpose.xlu0.b32.cont [14/16] 0.0, 128
  %251 = vxpose.xlu0.b32.cont [15/16] 0.0, 128
  %252 = vxpose.xlu0.b32.end [16/16] 0.0, 128
  %v253 = vpop.trf.xlu0
  %v254 = vpop.trf.xlu0
  %v255 = vpop.trf.xlu0
  %v256 = vpop.trf.xlu0
  %v257 = vpop.trf.xlu0
  %v258 = vpop.trf.xlu0
  %v259 = vpop.trf.xlu0
  %v260 = vpop.trf.xlu0
  %v261 = vpop.trf.xlu0
  %v262 = vpop.trf.xlu0
  %v263 = vpop.trf.xlu0
  %v264 = vpop.trf.xlu0
  %v265 = vpop.trf.xlu0
  %v266 = vpop.trf.xlu0
  %v267 = vpop.trf.xlu0
  %v268 = vpop.trf.xlu0
  %v269 = vlaneseq
  %v270 = vand.u32 %v269, 127
  %v272 = vunpack.c.l.s4 1966171168
  %v273 = vunpack.c.0.s8 %v272
  %v274 = vlaneseq
  %v275 = vshrl.u32 %v274, 7
  %v276 = vsub.s32 %v273, %v275
  %v277 = vrot.slane %v107, %v276
  %v278 = vcombine.high %v277, %v277
  %v280 = vunpack.c.l.s4 1966171168
  %v281 = vunpack.c.0.s8 %v280
  %v282 = vlaneseq
  %v283 = vshrl.u32 %v282, 7
  %v284 = vsub.s32 %v281, %v283
  %v285 = vrot.slane %v277, %v284
  %v287 = vunpack.c.l.s4 1966171168
  %v288 = vunpack.c.0.s8 %v287
  %v289 = vlaneseq
  %v290 = vshrl.u32 %v289, 7
  %v291 = vsub.s32 %v288, %v290
  %v292 = vrot.slane %v278, %v291
  %293 = vset.pattern.permute.xlu0 0
  %294 = vperm.xlu0 %293, %v285
  %v295 = vpop.permute.xlu0 %294
  %v296 = vlaneseq
  %v297 = vshrl.u32 %v296, 7
  %v298 = vsub.s32 0, %v297
  %v299 = vrot.slane %v295, %v298
  %300 = vset.pattern.permute.xlu0 0
  %301 = vperm.xlu0 %300, %v292
  %v302 = vpop.permute.xlu0 %301
  %v303 = vlaneseq
  %v304 = vshrl.u32 %v303, 7
  %v305 = vsub.s32 0, %v304
  %v306 = vrot.slane %v302, %v305
  %vm307 = vcmp.lt.s32.totalorder %v270, %v299
  %vm308 = vcmp.lt.s32.totalorder %v270, %v306
  %v309 = vsel %vm307, 1, 0
  %v310 = vsel %vm308, 1, 0
  %vm311 = vcmp.eq.s32.totalorder %v309, 1
  %vm312 = vcmp.eq.s32.totalorder %v310, 1
  %v313 = vsel %vm311, %v154, -1e+09
  %v314 = vsel %vm312, %v200, -1e+09
  %vm315 = vcmask 64512
  %v316 = vsel %vm315, %v313, -inf
  %317 = vmax.xlane.f32.xlu0 %v316
  %v318 = vpop.xlane.xlu0 %317
  %v319 = vsel %vm315, %v314, -inf
  %320 = vmax.xlane.f32.xlu0 %v319
  %v321 = vpop.xlane.xlu0 %320
  %v322 = vsub.f32 %v313, %v318
  %v323 = vsub.f32 %v314, %v321
  %v324 = vmul.f32 %v322, 1.442695
  %v325 = vpow.pop %v324
  %v326 = vmul.f32 %v323, 1.442695
  %v327 = vpow.pop %v326
  %v328 = vsel %vm315, %v325, 0.0
  %329 = vadd.xlane.f32.xlu0 %v328
  %v330 = vpop.xlane.xlu0 %329
  %v331 = vsel %vm315, %v327, 0.0
  %332 = vadd.xlane.f32.xlu0 %v331
  %v333 = vpop.xlane.xlu0 %332
  %v334 = vrcp.pop %v330
  %v335 = vmul.f32 %v325, %v334
  %v336 = vrcp.pop %v333
  %v337 = vmul.f32 %v327, %v336
  %v339 = vunpack.c.l.s4 1966171168
  %v340 = vunpack.c.0.s8 %v339
  %v341 = vlaneseq
  %v342 = vshrl.u32 %v341, 7
  %v343 = vsub.s32 %v340, %v342
  %v344 = vrot.slane %v106, %v343
  %v345 = vcombine.high %v344, %v344
  %v347 = vunpack.c.l.s4 1966171168
  %v348 = vunpack.c.0.s8 %v347
  %v349 = vlaneseq
  %v350 = vshrl.u32 %v349, 7
  %v351 = vsub.s32 %v348, %v350
  %v352 = vrot.slane %v344, %v351
  %v354 = vunpack.c.l.s4 1966171168
  %v355 = vunpack.c.0.s8 %v354
  %v356 = vlaneseq
  %v357 = vshrl.u32 %v356, 7
  %v358 = vsub.s32 %v355, %v357
  %v359 = vrot.slane %v345, %v358
  %360 = vset.pattern.permute.xlu0 0
  %361 = vperm.xlu0 %360, %v352
  %v362 = vpop.permute.xlu0 %361
  %v363 = vlaneseq
  %v364 = vshrl.u32 %v363, 7
  %v365 = vsub.s32 0, %v364
  %v366 = vrot.slane %v362, %v365
  %367 = vset.pattern.permute.xlu0 0
  %368 = vperm.xlu0 %367, %v359
  %v369 = vpop.permute.xlu0 %368
  %v370 = vlaneseq
  %v371 = vshrl.u32 %v370, 7
  %v372 = vsub.s32 0, %v371
  %v373 = vrot.slane %v369, %v372
  %vm374 = vcmp.lt.s32.totalorder %v270, %v366
  %vm375 = vcmp.lt.s32.totalorder %v270, %v373
  %v376 = vsel %vm374, 1, 0
  %v377 = vsel %vm375, 1, 0
  %vm378 = vcmp.eq.s32.totalorder %v376, 1
  %vm379 = vcmp.eq.s32.totalorder %v377, 1
  %v380 = vsel %vm378, %v221, -1e+09
  %v381 = vsel %vm379, %v253, -1e+09
  %v382 = vsel %vm315, %v380, -inf
  %383 = vmax.xlane.f32.xlu0 %v382
  %v384 = vpop.xlane.xlu0 %383
  %v385 = vsel %vm315, %v381, -inf
  %386 = vmax.xlane.f32.xlu0 %v385
  %v387 = vpop.xlane.xlu0 %386
  %v388 = vsub.f32 %v380, %v384
  %v389 = vsub.f32 %v381, %v387
  %v390 = vmul.f32 %v388, 1.442695
  %v391 = vpow.pop %v390
  %v392 = vmul.f32 %v389, 1.442695
  %v393 = vpow.pop %v392
  %v394 = vsel %vm315, %v391, 0.0
  %395 = vadd.xlane.f32.xlu0 %v394
  %v396 = vpop.xlane.xlu0 %395
  %v397 = vsel %vm315, %v393, 0.0
  %398 = vadd.xlane.f32.xlu0 %v397
  %v399 = vpop.xlane.xlu0 %398
  %v400 = vrcp.pop %v396
  %v401 = vmul.f32 %v391, %v400
  %v402 = vrcp.pop %v399
  %v403 = vmul.f32 %v393, %v402
  %v404 = vpack.c.bf16 %v335, %v335
  %v405 = vpack.c.bf16 %v337, %v337
  %v407 = vsel %vm315, %v404, 0
  %vm409 = vcmask 1043456
  %v410 = vsel %vm409, %v110, 0
  %412 = vmatprep.subr.bf16.mxu0 0
  %413 = vmatpush1.bf16.msra.mxu0 %v410
  %414 = vmatprep.subr.bf16.mxu0 0
  %415 = vmatpush1.bf16.msra.mxu0 0
  %416 = vmatprep.subr.bf16.mxu0 0
  %417 = vmatpush1.bf16.msra.mxu0 0
  %418 = vmatprep.subr.bf16.mxu0 0
  %419 = vmatpush1.bf16.msra.mxu0 0
  %420 = vmatprep.subr.bf16.mxu0 0
  %421 = vmatpush1.bf16.msra.mxu0 0
  %422 = vmatprep.subr.bf16.mxu0 0
  %423 = vmatpush1.bf16.msra.mxu0 0
  %424 = vmatprep.subr.bf16.mxu0 0
  %425 = vmatpush1.bf16.msra.mxu0 0
  %426 = vmatprep.subr.bf16.mxu0 0
  %427 = vmatpush1.bf16.msra.mxu0 0
  %428 = vmatprep.subr.bf16.mxu0 0
  %429 = vmatpush1.bf16.msra.mxu0 0
  %430 = vmatprep.subr.bf16.mxu0 0
  %431 = vmatpush1.bf16.msra.mxu0 0
  %432 = vmatprep.subr.bf16.mxu0 0
  %433 = vmatpush1.bf16.msra.mxu0 0
  %434 = vmatprep.subr.bf16.mxu0 0
  %435 = vmatpush1.bf16.msra.mxu0 0
  %436 = vmatprep.subr.bf16.mxu0 0
  %437 = vmatpush1.bf16.msra.mxu0 0
  %438 = vmatprep.subr.bf16.mxu0 0
  %439 = vmatpush1.bf16.msra.mxu0 0
  %440 = vmatprep.subr.bf16.mxu0 0
  %441 = vmatpush1.bf16.msra.mxu0 0
  %442 = vmatprep.subr.bf16.mxu0 0
  %443 = vmatpush1.bf16.msra.mxu0 0
  %444 = vmatprep.mubr.bf16.mxu0 0
  %445 = vmatmul.mubr.bf16.gmra.mrb[0].mxu0 %v407
  %v446 = vpop.f32.mrb[0].mxu0
  %v447 = vadd.f32 0.0, %v446
  %v448 = vpop.f32.mrb[0].mxu0
  %v449 = vpop.f32.mrb[0].mxu0
  %v450 = vpop.f32.mrb[0].mxu0
  %451 = vdwg.mxu0
  %v453 = vsel %vm315, %v405, 0
  %v455 = vsel %vm409, %v111, 0
  %457 = vmatprep.subr.bf16.mxu0 0
  %458 = vmatpush1.bf16.msra.mxu0 %v455
  %459 = vmatprep.subr.bf16.mxu0 0
  %460 = vmatpush1.bf16.msra.mxu0 0
  %461 = vmatprep.subr.bf16.mxu0 0
  %462 = vmatpush1.bf16.msra.mxu0 0
  %463 = vmatprep.subr.bf16.mxu0 0
  %464 = vmatpush1.bf16.msra.mxu0 0
  %465 = vmatprep.subr.bf16.mxu0 0
  %466 = vmatpush1.bf16.msra.mxu0 0
  %467 = vmatprep.subr.bf16.mxu0 0
  %468 = vmatpush1.bf16.msra.mxu0 0
  %469 = vmatprep.subr.bf16.mxu0 0
  %470 = vmatpush1.bf16.msra.mxu0 0
  %471 = vmatprep.subr.bf16.mxu0 0
  %472 = vmatpush1.bf16.msra.mxu0 0
  %473 = vmatprep.subr.bf16.mxu0 0
  %474 = vmatpush1.bf16.msra.mxu0 0
  %475 = vmatprep.subr.bf16.mxu0 0
  %476 = vmatpush1.bf16.msra.mxu0 0
  %477 = vmatprep.subr.bf16.mxu0 0
  %478 = vmatpush1.bf16.msra.mxu0 0
  %479 = vmatprep.subr.bf16.mxu0 0
  %480 = vmatpush1.bf16.msra.mxu0 0
  %481 = vmatprep.subr.bf16.mxu0 0
  %482 = vmatpush1.bf16.msra.mxu0 0
  %483 = vmatprep.subr.bf16.mxu0 0
  %484 = vmatpush1.bf16.msra.mxu0 0
  %485 = vmatprep.subr.bf16.mxu0 0
  %486 = vmatpush1.bf16.msra.mxu0 0
  %487 = vmatprep.subr.bf16.mxu0 0
  %488 = vmatpush1.bf16.msra.mxu0 0
  %489 = vmatprep.mubr.bf16.mxu0 0
  %490 = vmatmul.mubr.bf16.gmra.mrb[0].mxu0 %v453
  %v491 = vpop.f32.mrb[0].mxu0
  %v492 = vadd.f32 0.0, %v491
  %v493 = vpop.f32.mrb[0].mxu0
  %v494 = vpop.f32.mrb[0].mxu0
  %v495 = vpop.f32.mrb[0].mxu0
  %496 = vdwg.mxu0
  %v497 = vpack.c.bf16 %v401, %v401
  %v498 = vpack.c.bf16 %v403, %v403
  %v500 = vsel %vm315, %v497, 0
  %v502 = vsel %vm409, %v108, 0
  %504 = vmatprep.subr.bf16.mxu0 0
  %505 = vmatpush1.bf16.msra.mxu0 %v502
  %506 = vmatprep.subr.bf16.mxu0 0
  %507 = vmatpush1.bf16.msra.mxu0 0
  %508 = vmatprep.subr.bf16.mxu0 0
  %509 = vmatpush1.bf16.msra.mxu0 0
  %510 = vmatprep.subr.bf16.mxu0 0
  %511 = vmatpush1.bf16.msra.mxu0 0
  %512 = vmatprep.subr.bf16.mxu0 0
  %513 = vmatpush1.bf16.msra.mxu0 0
  %514 = vmatprep.subr.bf16.mxu0 0
  %515 = vmatpush1.bf16.msra.mxu0 0
  %516 = vmatprep.subr.bf16.mxu0 0
  %517 = vmatpush1.bf16.msra.mxu0 0
  %518 = vmatprep.subr.bf16.mxu0 0
  %519 = vmatpush1.bf16.msra.mxu0 0
  %520 = vmatprep.subr.bf16.mxu0 0
  %521 = vmatpush1.bf16.msra.mxu0 0
  %522 = vmatprep.subr.bf16.mxu0 0
  %523 = vmatpush1.bf16.msra.mxu0 0
  %524 = vmatprep.subr.bf16.mxu0 0
  %525 = vmatpush1.bf16.msra.mxu0 0
  %526 = vmatprep.subr.bf16.mxu0 0
  %527 = vmatpush1.bf16.msra.mxu0 0
  %528 = vmatprep.subr.bf16.mxu0 0
  %529 = vmatpush1.bf16.msra.mxu0 0
  %530 = vmatprep.subr.bf16.mxu0 0
  %531 = vmatpush1.bf16.msra.mxu0 0
  %532 = vmatprep.subr.bf16.mxu0 0
  %533 = vmatpush1.bf16.msra.mxu0 0
  %534 = vmatprep.subr.bf16.mxu0 0
  %535 = vmatpush1.bf16.msra.mxu0 0
  %536 = vmatprep.mubr.bf16.mxu0 0
  %537 = vmatmul.mubr.bf16.gmra.mrb[0].mxu0 %v500
  %v538 = vpop.f32.mrb[0].mxu0
  %v539 = vadd.f32 0.0, %v538
  %v540 = vpop.f32.mrb[0].mxu0
  %v541 = vpop.f32.mrb[0].mxu0
  %v542 = vpop.f32.mrb[0].mxu0
  %543 = vdwg.mxu0
  %v545 = vsel %vm315, %v498, 0
  %v547 = vsel %vm409, %v109, 0
  %549 = vmatprep.subr.bf16.mxu0 0
  %550 = vmatpush1.bf16.msra.mxu0 %v547
  %551 = vmatprep.subr.bf16.mxu0 0
  %552 = vmatpush1.bf16.msra.mxu0 0
  %553 = vmatprep.subr.bf16.mxu0 0
  %554 = vmatpush1.bf16.msra.mxu0 0
  %555 = vmatprep.subr.bf16.mxu0 0
  %556 = vmatpush1.bf16.msra.mxu0 0
  %557 = vmatprep.subr.bf16.mxu0 0
  %558 = vmatpush1.bf16.msra.mxu0 0
  %559 = vmatprep.subr.bf16.mxu0 0
  %560 = vmatpush1.bf16.msra.mxu0 0
  %561 = vmatprep.subr.bf16.mxu0 0
  %562 = vmatpush1.bf16.msra.mxu0 0
  %563 = vmatprep.subr.bf16.mxu0 0
  %564 = vmatpush1.bf16.msra.mxu0 0
  %565 = vmatprep.subr.bf16.mxu0 0
  %566 = vmatpush1.bf16.msra.mxu0 0
  %567 = vmatprep.subr.bf16.mxu0 0
  %568 = vmatpush1.bf16.msra.mxu0 0
  %569 = vmatprep.subr.bf16.mxu0 0
  %570 = vmatpush1.bf16.msra.mxu0 0
  %571 = vmatprep.subr.bf16.mxu0 0
  %572 = vmatpush1.bf16.msra.mxu0 0
  %573 = vmatprep.subr.bf16.mxu0 0
  %574 = vmatpush1.bf16.msra.mxu0 0
  %575 = vmatprep.subr.bf16.mxu0 0
  %576 = vmatpush1.bf16.msra.mxu0 0
  %577 = vmatprep.subr.bf16.mxu0 0
  %578 = vmatpush1.bf16.msra.mxu0 0
  %579 = vmatprep.subr.bf16.mxu0 0
  %580 = vmatpush1.bf16.msra.mxu0 0
  %581 = vmatprep.mubr.bf16.mxu0 0
  %582 = vmatmul.mubr.bf16.gmra.mrb[0].mxu0 %v545
  %v583 = vpop.f32.mrb[0].mxu0
  %v584 = vadd.f32 0.0, %v583
  %v585 = vpop.f32.mrb[0].mxu0
  %v586 = vpop.f32.mrb[0].mxu0
  %v587 = vpop.f32.mrb[0].mxu0
  %588 = vdwg.mxu0
  %v589 = vld [vmem:[%s6] sm:$0xff]
  %v590 = vld [vmem:[%s6 + $0x8] sm:$0xff]
  %v591 = vld [vmem:[%s6 + $0x10] sm:$0xff]
  %v592 = vld [vmem:[%s6 + $0x18] sm:$0xff]
  %v593 = vld [vmem:[%s6 + $0x20] sm:$0xff]
  %v594 = vld [vmem:[%s6 + $0x28] sm:$0xff]
  %v595 = vld [vmem:[%s6 + $0x30] sm:$0xff]
  %v596 = vld [vmem:[%s6 + $0x38] sm:$0xff]
  %v597 = vld [vmem:[%s6 + $0x40] sm:$0xff]
  %v598 = vld [vmem:[%s6 + $0x48] sm:$0xff]
  %v599 = vld [vmem:[%s6 + $0x50] sm:$0xff]
  %v600 = vld [vmem:[%s6 + $0x58] sm:$0xff]
  %v601 = vld [vmem:[%s6 + $0x60] sm:$0xff]
  %v602 = vld [vmem:[%s6 + $0x68] sm:$0xff]
  %v603 = vld [vmem:[%s6 + $0x70] sm:$0xff]
  %v604 = vld [vmem:[%s6 + $0x78] sm:$0xff]
  %v605 = vld [vmem:[%s6 + $0x80] sm:$0xff]
  %v606 = vld [vmem:[%s6 + $0x88] sm:$0xff]
  %v607 = vld [vmem:[%s6 + $0x90] sm:$0xff]
  %v608 = vld [vmem:[%s6 + $0x98] sm:$0xff]
  %v609 = vld [vmem:[%s6 + $0xa0] sm:$0xff]
  %v610 = vld [vmem:[%s6 + $0xa8] sm:$0xff]
  %v611 = vld [vmem:[%s6 + $0xb0] sm:$0xff]
  %v612 = vld [vmem:[%s6 + $0xb8] sm:$0xff]
  %v613 = vld [vmem:[%s6 + $0xc0] sm:$0xff]
  %v614 = vld [vmem:[%s6 + $0xc8] sm:$0xff]
  %v615 = vld [vmem:[%s6 + $0xd0] sm:$0xff]
  %v616 = vld [vmem:[%s6 + $0xd8] sm:$0xff]
  %v617 = vld [vmem:[%s6 + $0xe0] sm:$0xff]
  %v618 = vld [vmem:[%s6 + $0xe8] sm:$0xff]
  %v619 = vld [vmem:[%s6 + $0xf0] sm:$0xff]
  %v620 = vld [vmem:[%s6 + $0xf8] sm:$0xff]
  %v621 = vpack.c.bf16 %v590, %v589
  %v622 = vpack.c.bf16 %v592, %v591
  %v623 = vpack.c.bf16 %v594, %v593
  %v624 = vpack.c.bf16 %v596, %v595
  %v625 = vpack.c.bf16 %v598, %v597
  %v626 = vpack.c.bf16 %v600, %v599
  %v627 = vpack.c.bf16 %v602, %v601
  %v628 = vpack.c.bf16 %v604, %v603
  %v629 = vpack.c.bf16 %v606, %v605
  %v630 = vpack.c.bf16 %v608, %v607
  %v631 = vpack.c.bf16 %v610, %v609
  %v632 = vpack.c.bf16 %v612, %v611
  %v633 = vpack.c.bf16 %v614, %v613
  %v634 = vpack.c.bf16 %v616, %v615
  %v635 = vpack.c.bf16 %v618, %v617
  %v636 = vpack.c.bf16 %v620, %v619
  %v637 = vld [vmem:[%s7] sm:$0x1]
  %v638 = vsub.f32 %v90, %v447
  %v639 = vsub.f32 %v91, %v492
  %v640 = vmul.f32 %v90, %v447
  %v641 = vmul.f32 %v91, %v492
  %v642 = vpack.c.bf16 %v91, %v90
  %v644 = vsel %vm112, %v642, 0
  %646 = vmatprep.subr.bf16.mxu0 0
  %647 = vmatpush1.bf16.msra.mxu0 %v621
  %648 = vmatprep.subr.bf16.mxu0 0
  %649 = vmatpush1.bf16.msra.mxu0 %v622
  %650 = vmatprep.subr.bf16.mxu0 0
  %651 = vmatpush1.bf16.msra.mxu0 %v623
  %652 = vmatprep.subr.bf16.mxu0 0
  %653 = vmatpush1.bf16.msra.mxu0 %v624
  %654 = vmatprep.subr.bf16.mxu0 0
  %655 = vmatpush1.bf16.msra.mxu0 0
  %656 = vmatprep.subr.bf16.mxu0 0
  %657 = vmatpush1.bf16.msra.mxu0 0
  %658 = vmatprep.subr.bf16.mxu0 0
  %659 = vmatpush1.bf16.msra.mxu0 0
  %660 = vmatprep.subr.bf16.mxu0 0
  %661 = vmatpush1.bf16.msra.mxu0 0
  %662 = vmatprep.subr.bf16.mxu0 0
  %663 = vmatpush1.bf16.msra.mxu0 0
  %664 = vmatprep.subr.bf16.mxu0 0
  %665 = vmatpush1.bf16.msra.mxu0 0
  %666 = vmatprep.subr.bf16.mxu0 0
  %667 = vmatpush1.bf16.msra.mxu0 0
  %668 = vmatprep.subr.bf16.mxu0 0
  %669 = vmatpush1.bf16.msra.mxu0 0
  %670 = vmatprep.subr.bf16.mxu0 0
  %671 = vmatpush1.bf16.msra.mxu0 0
  %672 = vmatprep.subr.bf16.mxu0 0
  %673 = vmatpush1.bf16.msra.mxu0 0
  %674 = vmatprep.subr.bf16.mxu0 0
  %675 = vmatpush1.bf16.msra.mxu0 0
  %676 = vmatprep.subr.bf16.mxu0 0
  %677 = vmatpush1.bf16.msra.mxu0 0
  %678 = vmatprep.mubr.bf16.mxu0 0
  %679 = vmatmul.mubr.bf16.gmra.mrb[0].mxu0 %v644
  %v680 = vpop.f32.mrb[0].mxu0
  %v681 = vadd.f32 0.0, %v680
  %v682 = vpop.f32.mrb[0].mxu0
  %v683 = vpop.f32.mrb[0].mxu0
  %v684 = vadd.f32 0.0, %v683
  %v685 = vpop.f32.mrb[0].mxu0
  %686 = vdwg.mxu0
  %v688 = vlaneseq
  %v689 = vshrl.u32 %v688, 7
  %v690 = vsub.s32 0, %v689
  %v691 = vrot.slane %v637, %v690
  %v693 = vadd.f32 %v691, %v681
  %v694 = vadd.f32 %v691, %v684
  %v695 = vpack.c.bf16 %v492, %v447
  %v697 = vsel %vm112, %v695, 0
  %699 = vmatprep.subr.bf16.mxu0 0
  %700 = vmatpush1.bf16.msra.mxu0 %v625
  %701 = vmatprep.subr.bf16.mxu0 0
  %702 = vmatpush1.bf16.msra.mxu0 %v626
  %703 = vmatprep.subr.bf16.mxu0 0
  %704 = vmatpush1.bf16.msra.mxu0 %v627
  %705 = vmatprep.subr.bf16.mxu0 0
  %706 = vmatpush1.bf16.msra.mxu0 %v628
  %707 = vmatprep.subr.bf16.mxu0 0
  %708 = vmatpush1.bf16.msra.mxu0 0
  %709 = vmatprep.subr.bf16.mxu0 0
  %710 = vmatpush1.bf16.msra.mxu0 0
  %711 = vmatprep.subr.bf16.mxu0 0
  %712 = vmatpush1.bf16.msra.mxu0 0
  %713 = vmatprep.subr.bf16.mxu0 0
  %714 = vmatpush1.bf16.msra.mxu0 0
  %715 = vmatprep.subr.bf16.mxu0 0
  %716 = vmatpush1.bf16.msra.mxu0 0
  %717 = vmatprep.subr.bf16.mxu0 0
  %718 = vmatpush1.bf16.msra.mxu0 0
  %719 = vmatprep.subr.bf16.mxu0 0
  %720 = vmatpush1.bf16.msra.mxu0 0
  %721 = vmatprep.subr.bf16.mxu0 0
  %722 = vmatpush1.bf16.msra.mxu0 0
  %723 = vmatprep.subr.bf16.mxu0 0
  %724 = vmatpush1.bf16.msra.mxu0 0
  %725 = vmatprep.subr.bf16.mxu0 0
  %726 = vmatpush1.bf16.msra.mxu0 0
  %727 = vmatprep.subr.bf16.mxu0 0
  %728 = vmatpush1.bf16.msra.mxu0 0
  %729 = vmatprep.subr.bf16.mxu0 0
  %730 = vmatpush1.bf16.msra.mxu0 0
  %731 = vmatprep.mubr.bf16.mxu0 0
  %732 = vmatmul.mubr.bf16.gmra.mrb[0].mxu0 %v697
  %v733 = vpop.f32.mrb[0].mxu0
  %v734 = vadd.f32 0.0, %v733
  %v735 = vpop.f32.mrb[0].mxu0
  %v736 = vpop.f32.mrb[0].mxu0
  %v737 = vadd.f32 0.0, %v736
  %v738 = vpop.f32.mrb[0].mxu0
  %739 = vdwg.mxu0
  %v740 = vadd.f32 %v693, %v734
  %v741 = vadd.f32 %v694, %v737
  %v742 = vpack.c.bf16 %v639, %v638
  %v744 = vsel %vm112, %v742, 0
  %746 = vmatprep.subr.bf16.mxu0 0
  %747 = vmatpush1.bf16.msra.mxu0 %v629
  %748 = vmatprep.subr.bf16.mxu0 0
  %749 = vmatpush1.bf16.msra.mxu0 %v630
  %750 = vmatprep.subr.bf16.mxu0 0
  %751 = vmatpush1.bf16.msra.mxu0 %v631
  %752 = vmatprep.subr.bf16.mxu0 0
  %753 = vmatpush1.bf16.msra.mxu0 %v632
  %754 = vmatprep.subr.bf16.mxu0 0
  %755 = vmatpush1.bf16.msra.mxu0 0
  %756 = vmatprep.subr.bf16.mxu0 0
  %757 = vmatpush1.bf16.msra.mxu0 0
  %758 = vmatprep.subr.bf16.mxu0 0
  %759 = vmatpush1.bf16.msra.mxu0 0
  %760 = vmatprep.subr.bf16.mxu0 0
  %761 = vmatpush1.bf16.msra.mxu0 0
  %762 = vmatprep.subr.bf16.mxu0 0
  %763 = vmatpush1.bf16.msra.mxu0 0
  %764 = vmatprep.subr.bf16.mxu0 0
  %765 = vmatpush1.bf16.msra.mxu0 0
  %766 = vmatprep.subr.bf16.mxu0 0
  %767 = vmatpush1.bf16.msra.mxu0 0
  %768 = vmatprep.subr.bf16.mxu0 0
  %769 = vmatpush1.bf16.msra.mxu0 0
  %770 = vmatprep.subr.bf16.mxu0 0
  %771 = vmatpush1.bf16.msra.mxu0 0
  %772 = vmatprep.subr.bf16.mxu0 0
  %773 = vmatpush1.bf16.msra.mxu0 0
  %774 = vmatprep.subr.bf16.mxu0 0
  %775 = vmatpush1.bf16.msra.mxu0 0
  %776 = vmatprep.subr.bf16.mxu0 0
  %777 = vmatpush1.bf16.msra.mxu0 0
  %778 = vmatprep.mubr.bf16.mxu0 0
  %779 = vmatmul.mubr.bf16.gmra.mrb[0].mxu0 %v744
  %v780 = vpop.f32.mrb[0].mxu0
  %v781 = vadd.f32 0.0, %v780
  %v782 = vpop.f32.mrb[0].mxu0
  %v783 = vpop.f32.mrb[0].mxu0
  %v784 = vadd.f32 0.0, %v783
  %v785 = vpop.f32.mrb[0].mxu0
  %786 = vdwg.mxu0
  %v787 = vadd.f32 %v740, %v781
  %v788 = vadd.f32 %v741, %v784
  %v789 = vpack.c.bf16 %v641, %v640
  %v791 = vsel %vm112, %v789, 0
  %793 = vmatprep.subr.bf16.mxu0 0
  %794 = vmatpush1.bf16.msra.mxu0 %v633
  %795 = vmatprep.subr.bf16.mxu0 0
  %796 = vmatpush1.bf16.msra.mxu0 %v634
  %797 = vmatprep.subr.bf16.mxu0 0
  %798 = vmatpush1.bf16.msra.mxu0 %v635
  %799 = vmatprep.subr.bf16.mxu0 0
  %800 = vmatpush1.bf16.msra.mxu0 %v636
  %801 = vmatprep.subr.bf16.mxu0 0
  %802 = vmatpush1.bf16.msra.mxu0 0
  %803 = vmatprep.subr.bf16.mxu0 0
  %804 = vmatpush1.bf16.msra.mxu0 0
  %805 = vmatprep.subr.bf16.mxu0 0
  %806 = vmatpush1.bf16.msra.mxu0 0
  %807 = vmatprep.subr.bf16.mxu0 0
  %808 = vmatpush1.bf16.msra.mxu0 0
  %809 = vmatprep.subr.bf16.mxu0 0
  %810 = vmatpush1.bf16.msra.mxu0 0
  %811 = vmatprep.subr.bf16.mxu0 0
  %812 = vmatpush1.bf16.msra.mxu0 0
  %813 = vmatprep.subr.bf16.mxu0 0
  %814 = vmatpush1.bf16.msra.mxu0 0
  %815 = vmatprep.subr.bf16.mxu0 0
  %816 = vmatpush1.bf16.msra.mxu0 0
  %817 = vmatprep.subr.bf16.mxu0 0
  %818 = vmatpush1.bf16.msra.mxu0 0
  %819 = vmatprep.subr.bf16.mxu0 0
  %820 = vmatpush1.bf16.msra.mxu0 0
  %821 = vmatprep.subr.bf16.mxu0 0
  %822 = vmatpush1.bf16.msra.mxu0 0
  %823 = vmatprep.subr.bf16.mxu0 0
  %824 = vmatpush1.bf16.msra.mxu0 0
  %825 = vmatprep.mubr.bf16.mxu0 0
  %826 = vmatmul.mubr.bf16.gmra.mrb[0].mxu0 %v791
  %v827 = vpop.f32.mrb[0].mxu0
  %v828 = vadd.f32 0.0, %v827
  %v829 = vpop.f32.mrb[0].mxu0
  %v830 = vpop.f32.mrb[0].mxu0
  %v831 = vadd.f32 0.0, %v830
  %v832 = vpop.f32.mrb[0].mxu0
  %833 = vdwg.mxu0
  %v834 = vadd.f32 %v787, %v828
  %v835 = vadd.f32 %v788, %v831
  %v836 = vmax.f32 %v834, 0.0
  %v837 = vmax.f32 %v835, 0.0
  %838 = vst.msk [vmem:[%s8] sm:$0xff] %vm89, %v836
  %839 = vst.msk [vmem:[%s8 + $0x8] sm:$0xff] %vm89, %v837
  %v840 = vsub.f32 %v104, %v539
  %v841 = vsub.f32 %v105, %v584
  %v842 = vmul.f32 %v104, %v539
  %v843 = vmul.f32 %v105, %v584
  %v844 = vpack.c.bf16 %v105, %v104
  %v846 = vsel %vm112, %v844, 0
  %848 = vmatprep.subr.bf16.mxu0 0
  %849 = vmatpush1.bf16.msra.mxu0 %v621
  %850 = vmatprep.subr.bf16.mxu0 0
  %851 = vmatpush1.bf16.msra.mxu0 %v622
  %852 = vmatprep.subr.bf16.mxu0 0
  %853 = vmatpush1.bf16.msra.mxu0 %v623
  %854 = vmatprep.subr.bf16.mxu0 0
  %855 = vmatpush1.bf16.msra.mxu0 %v624
  %856 = vmatprep.subr.bf16.mxu0 0
  %857 = vmatpush1.bf16.msra.mxu0 0
  %858 = vmatprep.subr.bf16.mxu0 0
  %859 = vmatpush1.bf16.msra.mxu0 0
  %860 = vmatprep.subr.bf16.mxu0 0
  %861 = vmatpush1.bf16.msra.mxu0 0
  %862 = vmatprep.subr.bf16.mxu0 0
  %863 = vmatpush1.bf16.msra.mxu0 0
  %864 = vmatprep.subr.bf16.mxu0 0
  %865 = vmatpush1.bf16.msra.mxu0 0
  %866 = vmatprep.subr.bf16.mxu0 0
  %867 = vmatpush1.bf16.msra.mxu0 0
  %868 = vmatprep.subr.bf16.mxu0 0
  %869 = vmatpush1.bf16.msra.mxu0 0
  %870 = vmatprep.subr.bf16.mxu0 0
  %871 = vmatpush1.bf16.msra.mxu0 0
  %872 = vmatprep.subr.bf16.mxu0 0
  %873 = vmatpush1.bf16.msra.mxu0 0
  %874 = vmatprep.subr.bf16.mxu0 0
  %875 = vmatpush1.bf16.msra.mxu0 0
  %876 = vmatprep.subr.bf16.mxu0 0
  %877 = vmatpush1.bf16.msra.mxu0 0
  %878 = vmatprep.subr.bf16.mxu0 0
  %879 = vmatpush1.bf16.msra.mxu0 0
  %880 = vmatprep.mubr.bf16.mxu0 0
  %881 = vmatmul.mubr.bf16.gmra.mrb[0].mxu0 %v846
  %v882 = vpop.f32.mrb[0].mxu0
  %v883 = vadd.f32 0.0, %v882
  %v884 = vpop.f32.mrb[0].mxu0
  %v885 = vpop.f32.mrb[0].mxu0
  %v886 = vadd.f32 0.0, %v885
  %v887 = vpop.f32.mrb[0].mxu0
  %888 = vdwg.mxu0
  %v889 = vadd.f32 %v691, %v883
  %v890 = vadd.f32 %v691, %v886
  %v891 = vpack.c.bf16 %v584, %v539
  %v893 = vsel %vm112, %v891, 0
  %895 = vmatprep.subr.bf16.mxu0 0
  %896 = vmatpush1.bf16.msra.mxu0 %v625
  %897 = vmatprep.subr.bf16.mxu0 0
  %898 = vmatpush1.bf16.msra.mxu0 %v626
  %899 = vmatprep.subr.bf16.mxu0 0
  %900 = vmatpush1.bf16.msra.mxu0 %v627
  %901 = vmatprep.subr.bf16.mxu0 0
  %902 = vmatpush1.bf16.msra.mxu0 %v628
  %903 = vmatprep.subr.bf16.mxu0 0
  %904 = vmatpush1.bf16.msra.mxu0 0
  %905 = vmatprep.subr.bf16.mxu0 0
  %906 = vmatpush1.bf16.msra.mxu0 0
  %907 = vmatprep.subr.bf16.mxu0 0
  %908 = vmatpush1.bf16.msra.mxu0 0
  %909 = vmatprep.subr.bf16.mxu0 0
  %910 = vmatpush1.bf16.msra.mxu0 0
  %911 = vmatprep.subr.bf16.mxu0 0
  %912 = vmatpush1.bf16.msra.mxu0 0
  %913 = vmatprep.subr.bf16.mxu0 0
  %914 = vmatpush1.bf16.msra.mxu0 0
  %915 = vmatprep.subr.bf16.mxu0 0
  %916 = vmatpush1.bf16.msra.mxu0 0
  %917 = vmatprep.subr.bf16.mxu0 0
  %918 = vmatpush1.bf16.msra.mxu0 0
  %919 = vmatprep.subr.bf16.mxu0 0
  %920 = vmatpush1.bf16.msra.mxu0 0
  %921 = vmatprep.subr.bf16.mxu0 0
  %922 = vmatpush1.bf16.msra.mxu0 0
  %923 = vmatprep.subr.bf16.mxu0 0
  %924 = vmatpush1.bf16.msra.mxu0 0
  %925 = vmatprep.subr.bf16.mxu0 0
  %926 = vmatpush1.bf16.msra.mxu0 0
  %927 = vmatprep.mubr.bf16.mxu0 0
  %928 = vmatmul.mubr.bf16.gmra.mrb[0].mxu0 %v893
  %v929 = vpop.f32.mrb[0].mxu0
  %v930 = vadd.f32 0.0, %v929
  %v931 = vpop.f32.mrb[0].mxu0
  %v932 = vpop.f32.mrb[0].mxu0
  %v933 = vadd.f32 0.0, %v932
  %v934 = vpop.f32.mrb[0].mxu0
  %935 = vdwg.mxu0
  %v936 = vadd.f32 %v889, %v930
  %v937 = vadd.f32 %v890, %v933
  %v938 = vpack.c.bf16 %v841, %v840
  %v940 = vsel %vm112, %v938, 0
  %942 = vmatprep.subr.bf16.mxu0 0
  %943 = vmatpush1.bf16.msra.mxu0 %v629
  %944 = vmatprep.subr.bf16.mxu0 0
  %945 = vmatpush1.bf16.msra.mxu0 %v630
  %946 = vmatprep.subr.bf16.mxu0 0
  %947 = vmatpush1.bf16.msra.mxu0 %v631
  %948 = vmatprep.subr.bf16.mxu0 0
  %949 = vmatpush1.bf16.msra.mxu0 %v632
  %950 = vmatprep.subr.bf16.mxu0 0
  %951 = vmatpush1.bf16.msra.mxu0 0
  %952 = vmatprep.subr.bf16.mxu0 0
  %953 = vmatpush1.bf16.msra.mxu0 0
  %954 = vmatprep.subr.bf16.mxu0 0
  %955 = vmatpush1.bf16.msra.mxu0 0
  %956 = vmatprep.subr.bf16.mxu0 0
  %957 = vmatpush1.bf16.msra.mxu0 0
  %958 = vmatprep.subr.bf16.mxu0 0
  %959 = vmatpush1.bf16.msra.mxu0 0
  %960 = vmatprep.subr.bf16.mxu0 0
  %961 = vmatpush1.bf16.msra.mxu0 0
  %962 = vmatprep.subr.bf16.mxu0 0
  %963 = vmatpush1.bf16.msra.mxu0 0
  %964 = vmatprep.subr.bf16.mxu0 0
  %965 = vmatpush1.bf16.msra.mxu0 0
  %966 = vmatprep.subr.bf16.mxu0 0
  %967 = vmatpush1.bf16.msra.mxu0 0
  %968 = vmatprep.subr.bf16.mxu0 0
  %969 = vmatpush1.bf16.msra.mxu0 0
  %970 = vmatprep.subr.bf16.mxu0 0
  %971 = vmatpush1.bf16.msra.mxu0 0
  %972 = vmatprep.subr.bf16.mxu0 0
  %973 = vmatpush1.bf16.msra.mxu0 0
  %974 = vmatprep.mubr.bf16.mxu0 0
  %975 = vmatmul.mubr.bf16.gmra.mrb[0].mxu0 %v940
  %v976 = vpop.f32.mrb[0].mxu0
  %v977 = vadd.f32 0.0, %v976
  %v978 = vpop.f32.mrb[0].mxu0
  %v979 = vpop.f32.mrb[0].mxu0
  %v980 = vadd.f32 0.0, %v979
  %v981 = vpop.f32.mrb[0].mxu0
  %982 = vdwg.mxu0
  %v983 = vadd.f32 %v936, %v977
  %v984 = vadd.f32 %v937, %v980
  %v985 = vpack.c.bf16 %v843, %v842
  %v987 = vsel %vm112, %v985, 0
  %989 = vmatprep.subr.bf16.mxu0 0
  %990 = vmatpush1.bf16.msra.mxu0 %v633
  %991 = vmatprep.subr.bf16.mxu0 0
  %992 = vmatpush1.bf16.msra.mxu0 %v634
  %993 = vmatprep.subr.bf16.mxu0 0
  %994 = vmatpush1.bf16.msra.mxu0 %v635
  %995 = vmatprep.subr.bf16.mxu0 0
  %996 = vmatpush1.bf16.msra.mxu0 %v636
  %997 = vmatprep.subr.bf16.mxu0 0
  %998 = vmatpush1.bf16.msra.mxu0 0
  %999 = vmatprep.subr.bf16.mxu0 0
  %1000 = vmatpush1.bf16.msra.mxu0 0
  %1001 = vmatprep.subr.bf16.mxu0 0
  %1002 = vmatpush1.bf16.msra.mxu0 0
  %1003 = vmatprep.subr.bf16.mxu0 0
  %1004 = vmatpush1.bf16.msra.mxu0 0
  %1005 = vmatprep.subr.bf16.mxu0 0
  %1006 = vmatpush1.bf16.msra.mxu0 0
  %1007 = vmatprep.subr.bf16.mxu0 0
  %1008 = vmatpush1.bf16.msra.mxu0 0
  %1009 = vmatprep.subr.bf16.mxu0 0
  %1010 = vmatpush1.bf16.msra.mxu0 0
  %1011 = vmatprep.subr.bf16.mxu0 0
  %1012 = vmatpush1.bf16.msra.mxu0 0
  %1013 = vmatprep.subr.bf16.mxu0 0
  %1014 = vmatpush1.bf16.msra.mxu0 0
  %1015 = vmatprep.subr.bf16.mxu0 0
  %1016 = vmatpush1.bf16.msra.mxu0 0
  %1017 = vmatprep.subr.bf16.mxu0 0
  %1018 = vmatpush1.bf16.msra.mxu0 0
  %1019 = vmatprep.subr.bf16.mxu0 0
  %1020 = vmatpush1.bf16.msra.mxu0 0
  %1021 = vmatprep.mubr.bf16.mxu0 0
  %1022 = vmatmul.mubr.bf16.gmra.mrb[0].mxu0 %v987
  %v1023 = vpop.f32.mrb[0].mxu0
  %v1024 = vadd.f32 0.0, %v1023
  %v1025 = vpop.f32.mrb[0].mxu0
  %v1026 = vpop.f32.mrb[0].mxu0
  %v1027 = vadd.f32 0.0, %v1026
  %v1028 = vpop.f32.mrb[0].mxu0
  %1029 = vdwg.mxu0
  %v1030 = vadd.f32 %v983, %v1024
  %v1031 = vadd.f32 %v984, %v1027
  %v1032 = vmax.f32 %v1030, 0.0
  %v1033 = vmax.f32 %v1031, 0.0
  %s1034 = scalar_lea.vmem %s8, 16
  %1035 = vst.msk [vmem:[%s1034] sm:$0xff] %vm89, %v1032
  %1036 = vst.msk [vmem:[%s1034 + $0x8] sm:$0xff] %vm89, %v1033
  // Predicated region
  $region34: #{sem_attn_forward.5} parent=0 // pred_check
    _
  $region35: #{sem_attn_forward.5} parent=0 // pred_check_branch
    %1038 = sbr.rel (0) target = $region37
  $region36: #{sem_attn_forward.5} parent=0 // pred_region
    _
  $region37: #{sem_attn_forward.5} parent=0 // pred_fallthru
    _
  // Predicated region
  $region38: #{sem_attn_forward.5} parent=0 // pred_check
    _
  $region39: #{sem_attn_forward.5} parent=0 // pred_check_branch
    %1040 = sbr.rel (0) target = $region41
  $region40: #{sem_attn_forward.5} parent=0 // pred_region
    _
  $region41: #{sem_attn_forward.5} parent=0 // pred_fallthru
    _

// kernel: sem_attn_forward.4
$region0: #{sem_attn_forward.4}
  #allocation0 [shape = 'u32[]', space=smem, size = 0x4, offset = 0x4, fixed_abs, tag = 'smem constant byte address 0x4 - core index']
  #allocation1 [shape = 'u32[144,128]{1,0:T(1,128)}', space=vmem, size = 0x12000, scoped, tag = 'internal scratch']
  #allocation2 [shape = 'f32[4,32]{1,0:T(4,128)}', space=vmem, size = 0x800, scoped, tag = 'scratch operand']
  #allocation3 [shape = 'f32[4,32]{1,0:T(4,128)}', space=vmem, size = 0x800, scoped, tag = 'scratch operand']
  #allocation4 [shape = 'f32[4,32]{1,0:T(4,128)}', space=vmem, size = 0x800, scoped, tag = 'scratch operand']
  #allocation5 [shape = 'f32[4,32]{1,0:T(4,128)}', space=vmem, size = 0x800, scoped, tag = 'scratch operand']
  %s0 = inlined_call_operand.vmem [shape: bf16[4,8,128], index: 0, kind: input, shape index: {}]
  %s1 = inlined_call_operand.vmem [shape: bf16[4,8,128], index: 1, kind: input, shape index: {}]
  %s2 = inlined_call_operand.vmem [shape: s32[4,1], index: 2, kind: input, shape index: {}]
  %s3 = inlined_call_operand.vmem [shape: f32[32,128], index: 3, kind: input, shape index: {}]
  %s4 = inlined_call_operand.vmem [shape: f32[32,128], index: 4, kind: input, shape index: {}]
  %s5 = inlined_call_operand.vmem [shape: f32[4,8,32], index: 5, kind: output, shape index: {0}]
  %s6 = inlined_call_operand.vmem [shape: f32[4,8,32], index: 6, kind: output, shape index: {1}]
  %7 = xla_tuple %s5, %s6
  %s8 = sld [smem:[#allocation0]]
  $region42: #{sem_attn_forward.4} parent=0
    _
  %s10 = ssub.s32 1, %s8
  %s11 = scalar_select 0, %s10, %s8
  // Predicated region
  $region2: #{sem_attn_forward.4} parent=0 // pred_check
    _
  $region3: #{sem_attn_forward.4} parent=0 // pred_check_branch
    %13 = sbr.rel (0) target = $region5
  $region4: #{sem_attn_forward.4} parent=0 // pred_region
    _
  $region5: #{sem_attn_forward.4} parent=0 // pred_fallthru
    _
  // Predicated region
  $region6: #{sem_attn_forward.4} parent=0 // pred_check
    _
  $region7: #{sem_attn_forward.4} parent=0 // pred_check_branch
    %15 = sbr.rel (0) target = $region9
  $region8: #{sem_attn_forward.4} parent=0 // pred_region
    %s16 = ssub.s32 0, 0
    %p17 = scmp.lt.s32.totalorder %s16, 0
    %s18 = scalar_select %p17, %s16, 0
    %s19 = smul.addr %s18, 4
    %s20 = scalar_lea.vmem %s1, %s19
    %s21 = ssub.s32 0, 0
  $region9: #{sem_attn_forward.4} parent=0 // pred_fallthru
    _
  // Predicated region
  $region10: #{sem_attn_forward.4} parent=0 // pred_check
    _
  $region11: #{sem_attn_forward.4} parent=0 // pred_check_branch
    %23 = sbr.rel (0) target = $region13
  $region12: #{sem_attn_forward.4} parent=0 // pred_region
    _
  $region13: #{sem_attn_forward.4} parent=0 // pred_fallthru
    _
  // Predicated region
  $region14: #{sem_attn_forward.4} parent=0 // pred_check
    _
  $region15: #{sem_attn_forward.4} parent=0 // pred_check_branch
    %25 = sbr.rel (0) target = $region17
  $region16: #{sem_attn_forward.4} parent=0 // pred_region
    _
  $region17: #{sem_attn_forward.4} parent=0 // pred_fallthru
    _
  // Predicated region
  $region18: #{sem_attn_forward.4} parent=0 // pred_check
    _
  $region19: #{sem_attn_forward.4} parent=0 // pred_check_branch
    %27 = sbr.rel (0) target = $region21
  $region20: #{sem_attn_forward.4} parent=0 // pred_region
    _
  $region21: #{sem_attn_forward.4} parent=0 // pred_fallthru
    _
  %s28 = ssub.s32 0, 0
  %p29 = scmp.lt.s32.totalorder %s28, 0
  %s30 = scalar_select %p29, %s28, 0
  %s31 = smul.addr %s30, 4
  %s32 = scalar_lea.vmem %s1, %s31
  %s33 = ssub.s32 0, 0
  %p34 = scmp.lt.s32.totalorder %s33, 0
  %s35 = scalar_select %p34, %s33, 0
  %s36 = smul.addr %s35, 8
  %s37 = scalar_lea.vmem %s6, %s36
  %s38 = ssub.s32 0, 0
  %p39 = scmp.lt.s32.totalorder %s38, 0
  %s40 = scalar_select %p39, %s38, 0
  %s41 = smul.addr %s40, 4
  %s42 = scalar_lea.vmem %s1, %s41
  %s43 = ssub.s32 0, 0
  %s44 = ssub.s32 0, 0
  %p45 = scmp.lt.s32.totalorder %s44, 0
  %s46 = scalar_select %p45, %s44, 0
  %s47 = smul.addr %s46, 8
  %s48 = scalar_lea.vmem %s6, %s47
  %s49 = ssub.s32 0, 0
  %p50 = scmp.eq.s32.totalorder 0, 0
  // Predicated region
  $region22: #{sem_attn_forward.4} parent=0 // pred_check
    %p51 = pneg %p50
  $region23: #{sem_attn_forward.4} parent=0 // pred_check_branch
    %53 = sbr.rel (%p51) target = $region25
  $region24: #{sem_attn_forward.4} parent=0 // pred_region
    %vm54 = vcmask 257024
    %55 = vst.msk [vmem:[#allocation2] sm:$0xf] %vm54, 0.0
    %56 = vst.msk [vmem:[#allocation3] sm:$0xf] %vm54, 0.0
    %57 = vst.msk [vmem:[#allocation4] sm:$0xf] %vm54, 0.0
    %58 = vst.msk [vmem:[#allocation5] sm:$0xf] %vm54, 0.0
  $region25: #{sem_attn_forward.4} parent=0 // pred_fallthru
    _
  %v59 = vld [vmem:[%s2] sm:$0xf]
  %v60 = vld [vmem:[%s3] sm:$0xff]
  %v61 = vld [vmem:[%s3 + $0x8] sm:$0xff]
  %v62 = vld [vmem:[%s3 + $0x10] sm:$0xff]
  %v63 = vld [vmem:[%s3 + $0x18] sm:$0xff]
  %v64 = vld [vmem:[%s4] sm:$0xff]
  %v65 = vld [vmem:[%s4 + $0x8] sm:$0xff]
  %v66 = vld [vmem:[%s4 + $0x10] sm:$0xff]
  %v67 = vld [vmem:[%s4 + $0x18] sm:$0xff]
  %v68 = vld [vmem:[#allocation2] sm:$0xf]
  %v69 = vld [vmem:[#allocation3] sm:$0xf]
  %v70 = vld [vmem:[#allocation4] sm:$0xf]
  %v71 = vld [vmem:[#allocation5] sm:$0xf]
  %s72 = smul.u32 0, 8
  %s73 = ssub.s32 0, 0
  %s74 = smul.u32 %s73, 8
  %v75 = vstv %s72
  %vm76 = vcmp.lt.s32.totalorder %v75, %v59
  %v77 = vld [vmem:[%s0] sm:$0x1]
  %v78 = vld [vmem:[%s0 + $0x4] sm:$0x1]
  %v79 = vld [vmem:[%s0 + $0x8] sm:$0x1]
  %v80 = vld [vmem:[%s0 + $0xc] sm:$0x1]
  %v81 = vunpack.c.l.bf16 %v77
  %v82 = vunpack.c.l.bf16 %v78
  %v83 = vunpack.c.l.bf16 %v79
  %v84 = vunpack.c.l.bf16 %v80
  %v89 = vrot.slane %v82, 7
  %vm90 = vcmask 1041409
  %v91 = vsel %vm90, %v89, %v81
  %v92 = vrot.slane %v83, 6
  %vm93 = vcmask 1042434
  %v94 = vsel %vm93, %v92, %v91
  %v95 = vrot.slane %v84, 5
  %vm96 = vcmask 1043459
  %v97 = vsel %vm96, %v95, %v94
  %vm99 = vcmask 261120
  %v101 = vsel %vm99, %v68, 0
  %103 = vmatprep.subr.mxu0 0.0
  %104 = vmatpush1.msra.mxu0 %v60
  %105 = vmatprep.subr.mxu0 0.0
  %106 = vmatpush1.msra.mxu0 %v61
  %107 = vmatprep.subr.mxu0 0.0
  %108 = vmatpush1.msra.mxu0 %v62
  %109 = vmatprep.subr.mxu0 0.0
  %110 = vmatpush1.msra.mxu0 %v63
  %111 = vmatprep.subr.mxu0 0.0
  %112 = vmatpush1.msra.mxu0 0.0
  %113 = vmatprep.subr.mxu0 0.0
  %114 = vmatpush1.msra.mxu0 0.0
  %115 = vmatprep.subr.mxu0 0.0
  %116 = vmatpush1.msra.mxu0 0.0
  %117 = vmatprep.subr.mxu0 0.0
  %118 = vmatpush1.msra.mxu0 0.0
  %119 = vmatprep.subr.mxu0 0.0
  %120 = vmatpush1.msra.mxu0 0.0
  %121 = vmatprep.subr.mxu0 0.0
  %122 = vmatpush1.msra.mxu0 0.0
  %123 = vmatprep.subr.mxu0 0.0
  %124 = vmatpush1.msra.mxu0 0.0
  %125 = vmatprep.subr.mxu0 0.0
  %126 = vmatpush1.msra.mxu0 0.0
  %127 = vmatprep.subr.mxu0 0.0
  %128 = vmatpush1.msra.mxu0 0.0
  %129 = vmatprep.subr.mxu0 0.0
  %130 = vmatpush1.msra.mxu0 0.0
  %131 = vmatprep.subr.mxu0 0.0
  %132 = vmatpush1.msra.mxu0 0.0
  %133 = vmatprep.subr.mxu0 0.0
  %134 = vmatpush1.msra.mxu0 0.0
  %135 = vmatprep.subr.mxu0 0.0
  %136 = vmatpush1.msra.mxu0 0.0
  %137 = vmatprep.subr.mxu0 0.0
  %138 = vmatpush1.msra.mxu0 0.0
  %139 = vmatprep.subr.mxu0 0.0
  %140 = vmatpush1.msra.mxu0 0.0
  %141 = vmatprep.subr.mxu0 0.0
  %142 = vmatpush1.msra.mxu0 0.0
  %143 = vmatprep.subr.mxu0 0.0
  %144 = vmatpush1.msra.mxu0 0.0
  %145 = vmatprep.subr.mxu0 0.0
  %146 = vmatpush1.msra.mxu0 0.0
  %147 = vmatprep.subr.mxu0 0.0
  %148 = vmatpush1.msra.mxu0 0.0
  %149 = vmatprep.subr.mxu0 0.0
  %150 = vmatpush1.msra.mxu0 0.0
  %151 = vmatprep.subr.mxu0 0.0
  %152 = vmatpush1.msra.mxu0 0.0
  %153 = vmatprep.subr.mxu0 0.0
  %154 = vmatpush1.msra.mxu0 0.0
  %155 = vmatprep.subr.mxu0 0.0
  %156 = vmatpush1.msra.mxu0 0.0
  %157 = vmatprep.subr.mxu0 0.0
  %158 = vmatpush1.msra.mxu0 0.0
  %159 = vmatprep.subr.mxu0 0.0
  %160 = vmatpush1.msra.mxu0 0.0
  %161 = vmatprep.subr.mxu0 0.0
  %162 = vmatpush1.msra.mxu0 0.0
  %163 = vmatprep.subr.mxu0 0.0
  %164 = vmatpush1.msra.mxu0 0.0
  %165 = vmatprep.subr.mxu0 0.0
  %166 = vmatpush1.msra.mxu0 0.0
  %167 = vmatprep.mubr.f32.mxu0 0.0
  %168 = vmatmul.mubr.f32.gmra.mrb[0].mxu0 %v101
  %v169 = vpop.f32.mrb[0].mxu0
  %v170 = vadd.f32 %v97, %v169
  %v171 = vpop.f32.mrb[0].mxu0
  %172 = vdwg.mxu0
  %v173 = vxor.u32 %v170, 2147483648
  %v174 = vmul.f32 %v173, 1.442695
  %v175 = vpow.pop %v174
  %v176 = vadd.f32 %v175, 1.0
  %v177 = vrcp.pop %v176
  %v178 = vmul.f32 1.0, %v177
  %v179 = vtanh.pop %v170
  %181 = vrot.lane.b32.xlu0 %v69, 32
  %v182 = vpop.permute.xlu0 %181
  %v184 = vmul.f32 %v178, %v182
  %186 = vrot.lane.b32.xlu0 %v179, 64
  %v187 = vpop.permute.xlu0 %186
  %v189 = vmul.f32 %v178, %v187
  %191 = vrot.lane.b32.xlu0 %v189, 32
  %v192 = vpop.permute.xlu0 %191
  %v194 = vadd.f32 %v184, %v192
  %v195 = vtanh.pop %v194
  %197 = vrot.lane.b32.xlu0 %v195, 64
  %v198 = vpop.permute.xlu0 %197
  %v200 = vmul.f32 %v178, %v198
  %v201 = vsel %vm76, 1, 0
  %202 = vset.pattern.permute.xlu0 0
  %203 = vperm.xlu0 %202, %v201
  %v204 = vpop.permute.xlu0 %203
  %vm205 = vcmp.eq.s32.totalorder %v204, 1
  %v206 = vsel %vm205, %v200, 0.0
  %207 = vrot.lane.b32.xlu0 %v68, 96
  %v208 = vpop.permute.xlu0 %207
  %v210 = vsel %vm205, %v200, %v208
  %v211 = vsel %vm205, %v194, %v182
  %s212 = sadd.s32 %s74, 7
  %v213 = vstv %s212
  %vm214 = vcmp.lt.s32.totalorder %v213, %v59
  %v215 = vld [vmem:[%s42] sm:$0x8]
  %v216 = vld [vmem:[%s42 + $0x4] sm:$0x8]
  %v217 = vld [vmem:[%s42 + $0x8] sm:$0x8]
  %v218 = vld [vmem:[%s42 + $0xc] sm:$0x8]
  %v219 = vunpack.c.l.bf16 %v215
  %v220 = vunpack.c.l.bf16 %v216
  %v221 = vunpack.c.l.bf16 %v217
  %v222 = vunpack.c.l.bf16 %v218
  %v227 = vrot.slane %v219, 7
  %v228 = vrot.slane %v220, 6
  %v229 = vsel %vm90, %v228, %v227
  %v230 = vrot.slane %v221, 5
  %v231 = vsel %vm93, %v230, %v229
  %v232 = vrot.slane %v222, 4
  %v233 = vsel %vm96, %v232, %v231
  %v236 = vsel %vm99, %v70, 0
  %238 = vmatprep.subr.mxu0 0.0
  %239 = vmatpush1.msra.mxu0 %v64
  %240 = vmatprep.subr.mxu0 0.0
  %241 = vmatpush1.msra.mxu0 %v65
  %242 = vmatprep.subr.mxu0 0.0
  %243 = vmatpush1.msra.mxu0 %v66
  %244 = vmatprep.subr.mxu0 0.0
  %245 = vmatpush1.msra.mxu0 %v67
  %246 = vmatprep.subr.mxu0 0.0
  %247 = vmatpush1.msra.mxu0 0.0
  %248 = vmatprep.subr.mxu0 0.0
  %249 = vmatpush1.msra.mxu0 0.0
  %250 = vmatprep.subr.mxu0 0.0
  %251 = vmatpush1.msra.mxu0 0.0
  %252 = vmatprep.subr.mxu0 0.0
  %253 = vmatpush1.msra.mxu0 0.0
  %254 = vmatprep.subr.mxu0 0.0
  %255 = vmatpush1.msra.mxu0 0.0
  %256 = vmatprep.subr.mxu0 0.0
  %257 = vmatpush1.msra.mxu0 0.0
  %258 = vmatprep.subr.mxu0 0.0
  %259 = vmatpush1.msra.mxu0 0.0
  %260 = vmatprep.subr.mxu0 0.0
  %261 = vmatpush1.msra.mxu0 0.0
  %262 = vmatprep.subr.mxu0 0.0
  %263 = vmatpush1.msra.mxu0 0.0
  %264 = vmatprep.subr.mxu0 0.0
  %265 = vmatpush1.msra.mxu0 0.0
  %266 = vmatprep.subr.mxu0 0.0
  %267 = vmatpush1.msra.mxu0 0.0
  %268 = vmatprep.subr.mxu0 0.0
  %269 = vmatpush1.msra.mxu0 0.0
  %270 = vmatprep.subr.mxu0 0.0
  %271 = vmatpush1.msra.mxu0 0.0
  %272 = vmatprep.subr.mxu0 0.0
  %273 = vmatpush1.msra.mxu0 0.0
  %274 = vmatprep.subr.mxu0 0.0
  %275 = vmatpush1.msra.mxu0 0.0
  %276 = vmatprep.subr.mxu0 0.0
  %277 = vmatpush1.msra.mxu0 0.0
  %278 = vmatprep.subr.mxu0 0.0
  %279 = vmatpush1.msra.mxu0 0.0
  %280 = vmatprep.subr.mxu0 0.0
  %281 = vmatpush1.msra.mxu0 0.0
  %282 = vmatprep.subr.mxu0 0.0
  %283 = vmatpush1.msra.mxu0 0.0
  %284 = vmatprep.subr.mxu0 0.0
  %285 = vmatpush1.msra.mxu0 0.0
  %286 = vmatprep.subr.mxu0 0.0
  %287 = vmatpush1.msra.mxu0 0.0
  %288 = vmatprep.subr.mxu0 0.0
  %289 = vmatpush1.msra.mxu0 0.0
  %290 = vmatprep.subr.mxu0 0.0
  %291 = vmatpush1.msra.mxu0 0.0
  %292 = vmatprep.subr.mxu0 0.0
  %293 = vmatpush1.msra.mxu0 0.0
  %294 = vmatprep.subr.mxu0 0.0
  %295 = vmatpush1.msra.mxu0 0.0
  %296 = vmatprep.subr.mxu0 0.0
  %297 = vmatpush1.msra.mxu0 0.0
  %298 = vmatprep.subr.mxu0 0.0
  %299 = vmatpush1.msra.mxu0 0.0
  %300 = vmatprep.subr.mxu0 0.0
  %301 = vmatpush1.msra.mxu0 0.0
  %302 = vmatprep.mubr.f32.mxu0 0.0
  %303 = vmatmul.mubr.f32.gmra.mrb[0].mxu0 %v236
  %v304 = vpop.f32.mrb[0].mxu0
  %v305 = vadd.f32 %v233, %v304
  %v306 = vpop.f32.mrb[0].mxu0
  %307 = vdwg.mxu0
  %v308 = vxor.u32 %v305, 2147483648
  %v309 = vmul.f32 %v308, 1.442695
  %v310 = vpow.pop %v309
  %v311 = vadd.f32 %v310, 1.0
  %v312 = vrcp.pop %v311
  %v313 = vmul.f32 1.0, %v312
  %v314 = vtanh.pop %v305
  %316 = vrot.lane.b32.xlu0 %v71, 32
  %v317 = vpop.permute.xlu0 %316
  %v319 = vmul.f32 %v313, %v317
  %321 = vrot.lane.b32.xlu0 %v314, 64
  %v322 = vpop.permute.xlu0 %321
  %v324 = vmul.f32 %v313, %v322
  %326 = vrot.lane.b32.xlu0 %v324, 32
  %v327 = vpop.permute.xlu0 %326
  %v329 = vadd.f32 %v319, %v327
  %v330 = vtanh.pop %v329
  %332 = vrot.lane.b32.xlu0 %v330, 64
  %v333 = vpop.permute.xlu0 %332
  %v335 = vmul.f32 %v313, %v333
  %v336 = vsel %vm214, 1, 0
  %337 = vset.pattern.permute.xlu0 0
  %338 = vperm.xlu0 %337, %v336
  %v339 = vpop.permute.xlu0 %338
  %vm340 = vcmp.eq.s32.totalorder %v339, 1
  %v341 = vsel %vm340, %v335, 0.0
  %342 = vrot.lane.b32.xlu0 %v70, 96
  %v343 = vpop.permute.xlu0 %342
  %v345 = vsel %vm340, %v335, %v343
  %v346 = vsel %vm340, %v329, %v317
  %v349 = vunpack.c.l.s4 1966171168
  %v350 = vunpack.c.0.s8 %v349
  %v351 = vlaneseq
  %v352 = vshrl.u32 %v351, 7
  %v353 = vsub.s32 %v350, %v352
  %v354 = vrot.slane %v206, %v353
  %v355 = vcombine.high %v354, %v354
  %v357 = vunpack.c.l.s4 1966171168
  %v358 = vunpack.c.0.s8 %v357
  %v359 = vlaneseq
  %v360 = vshrl.u32 %v359, 7
  %v361 = vsub.s32 %v358, %v360
  %v362 = vrot.slane %v354, %v361
  %v364 = vunpack.c.l.s4 1966171168
  %v365 = vunpack.c.0.s8 %v364
  %v366 = vlaneseq
  %v367 = vshrl.u32 %v366, 7
  %v368 = vsub.s32 %v365, %v367
  %v369 = vrot.slane %v355, %v368
  %v370 = vcombine.high %v362, %v362
  %v371 = vcombine.high %v369, %v369
  %v372 = vlaneseq
  %v373 = vshrl.u32 %v372, 7
  %v374 = vsub.s32 0, %v373
  %v375 = vrot.slane %v362, %v374
  %v376 = vlaneseq
  %v377 = vshrl.u32 %v376, 7
  %v378 = vsub.s32 0, %v377
  %v379 = vrot.slane %v369, %v378
  %v380 = vlaneseq
  %v381 = vshrl.u32 %v380, 7
  %v382 = vsub.s32 0, %v381
  %v383 = vrot.slane %v370, %v382
  %v384 = vlaneseq
  %v385 = vshrl.u32 %v384, 7
  %v386 = vsub.s32 0, %v385
  %v387 = vrot.slane %v371, %v386
  %388 = vrot.lane.b32.xlu0 %v375, 32
  %v389 = vpop.permute.xlu0 %388
  %390 = vrot.lane.b32.xlu0 %v379, 32
  %v391 = vpop.permute.xlu0 %390
  %392 = vrot.lane.b32.xlu0 %v383, 32
  %v393 = vpop.permute.xlu0 %392
  %394 = vrot.lane.b32.xlu0 %v387, 32
  %v395 = vpop.permute.xlu0 %394
  %vm400 = vcmask 253952
  %401 = vst.msk [vmem:[%s5] sm:$0x1] %vm400, %v389
  %402 = vst.msk [vmem:[%s5 + $0x8] sm:$0x1] %vm400, %v391
  %403 = vst.msk [vmem:[%s5 + $0x10] sm:$0x1] %vm400, %v393
  %404 = vst.msk [vmem:[%s5 + $0x18] sm:$0x1] %vm400, %v395
  %v407 = vunpack.c.l.s4 1966171168
  %v408 = vunpack.c.0.s8 %v407
  %v409 = vlaneseq
  %v410 = vshrl.u32 %v409, 7
  %v411 = vsub.s32 %v408, %v410
  %v412 = vrot.slane %v341, %v411
  %v413 = vcombine.high %v412, %v412
  %v415 = vunpack.c.l.s4 1966171168
  %v416 = vunpack.c.0.s8 %v415
  %v417 = vlaneseq
  %v418 = vshrl.u32 %v417, 7
  %v419 = vsub.s32 %v416, %v418
  %v420 = vrot.slane %v412, %v419
  %v422 = vunpack.c.l.s4 1966171168
  %v423 = vunpack.c.0.s8 %v422
  %v424 = vlaneseq
  %v425 = vshrl.u32 %v424, 7
  %v426 = vsub.s32 %v423, %v425
  %v427 = vrot.slane %v413, %v426
  %v428 = vcombine.high %v420, %v420
  %v429 = vcombine.high %v427, %v427
  %v430 = vlaneseq
  %v431 = vshrl.u32 %v430, 7
  %v432 = vsub.s32 0, %v431
  %v433 = vrot.slane %v420, %v432
  %v434 = vlaneseq
  %v435 = vshrl.u32 %v434, 7
  %v436 = vsub.s32 0, %v435
  %v437 = vrot.slane %v427, %v436
  %v438 = vlaneseq
  %v439 = vshrl.u32 %v438, 7
  %v440 = vsub.s32 0, %v439
  %v441 = vrot.slane %v428, %v440
  %v442 = vlaneseq
  %v443 = vshrl.u32 %v442, 7
  %v444 = vsub.s32 0, %v443
  %v445 = vrot.slane %v429, %v444
  %446 = vrot.lane.b32.xlu0 %v433, 32
  %v447 = vpop.permute.xlu0 %446
  %448 = vrot.lane.b32.xlu0 %v437, 32
  %v449 = vpop.permute.xlu0 %448
  %450 = vrot.lane.b32.xlu0 %v441, 32
  %v451 = vpop.permute.xlu0 %450
  %452 = vrot.lane.b32.xlu0 %v445, 32
  %v453 = vpop.permute.xlu0 %452
  %458 = vst.msk [vmem:[%s48 + $0x7] sm:$0x1] %vm400, %v447
  %459 = vst.msk [vmem:[%s48 + $0xf] sm:$0x1] %vm400, %v449
  %460 = vst.msk [vmem:[%s48 + $0x17] sm:$0x1] %vm400, %v451
  %461 = vst.msk [vmem:[%s48 + $0x1f] sm:$0x1] %vm400, %v453
  %s462 = sadd.s32 %s72, 1
  %v463 = vstv %s462
  %vm464 = vcmp.lt.s32.totalorder %v463, %v59
  %v465 = vld [vmem:[%s0] sm:$0x1]
  %v466 = vld [vmem:[%s0 + $0x4] sm:$0x1]
  %v467 = vld [vmem:[%s0 + $0x8] sm:$0x1]
  %v468 = vld [vmem:[%s0 + $0xc] sm:$0x1]
  %v469 = vunpack.c.l.bf16 %v465
  %v470 = vunpack.c.l.bf16 %v466
  %v471 = vunpack.c.l.bf16 %v467
  %v472 = vunpack.c.l.bf16 %v468
  %474 = vrot.lane.b32.xlu0 %v210, 32
  %v475 = vpop.permute.xlu0 %474
  %v480 = vrot.slane %v469, 1
  %v481 = vsel %vm90, %v470, %v480
  %v482 = vrot.slane %v471, 7
  %v483 = vsel %vm93, %v482, %v481
  %v484 = vrot.slane %v472, 6
  %v485 = vsel %vm96, %v484, %v483
  %v487 = vsel %vm99, %v475, 0
  %489 = vmatprep.subr.mxu0 0.0
  %490 = vmatpush1.msra.mxu0 %v60
  %491 = vmatprep.subr.mxu0 0.0
  %492 = vmatpush1.msra.mxu0 %v61
  %493 = vmatprep.subr.mxu0 0.0
  %494 = vmatpush1.msra.mxu0 %v62
  %495 = vmatprep.subr.mxu0 0.0
  %496 = vmatpush1.msra.mxu0 %v63
  %497 = vmatprep.subr.mxu0 0.0
  %498 = vmatpush1.msra.mxu0 0.0
  %499 = vmatprep.subr.mxu0 0.0
  %500 = vmatpush1.msra.mxu0 0.0
  %501 = vmatprep.subr.mxu0 0.0
  %502 = vmatpush1.msra.mxu0 0.0
  %503 = vmatprep.subr.mxu0 0.0
  %504 = vmatpush1.msra.mxu0 0.0
  %505 = vmatprep.subr.mxu0 0.0
  %506 = vmatpush1.msra.mxu0 0.0
  %507 = vmatprep.subr.mxu0 0.0
  %508 = vmatpush1.msra.mxu0 0.0
  %509 = vmatprep.subr.mxu0 0.0
  %510 = vmatpush1.msra.mxu0 0.0
  %511 = vmatprep.subr.mxu0 0.0
  %512 = vmatpush1.msra.mxu0 0.0
  %513 = vmatprep.subr.mxu0 0.0
  %514 = vmatpush1.msra.mxu0 0.0
  %515 = vmatprep.subr.mxu0 0.0
  %516 = vmatpush1.msra.mxu0 0.0
  %517 = vmatprep.subr.mxu0 0.0
  %518 = vmatpush1.msra.mxu0 0.0
  %519 = vmatprep.subr.mxu0 0.0
  %520 = vmatpush1.msra.mxu0 0.0
  %521 = vmatprep.subr.mxu0 0.0
  %522 = vmatpush1.msra.mxu0 0.0
  %523 = vmatprep.subr.mxu0 0.0
  %524 = vmatpush1.msra.mxu0 0.0
  %525 = vmatprep.subr.mxu0 0.0
  %526 = vmatpush1.msra.mxu0 0.0
  %527 = vmatprep.subr.mxu0 0.0
  %528 = vmatpush1.msra.mxu0 0.0
  %529 = vmatprep.subr.mxu0 0.0
  %530 = vmatpush1.msra.mxu0 0.0
  %531 = vmatprep.subr.mxu0 0.0
  %532 = vmatpush1.msra.mxu0 0.0
  %533 = vmatprep.subr.mxu0 0.0
  %534 = vmatpush1.msra.mxu0 0.0
  %535 = vmatprep.subr.mxu0 0.0
  %536 = vmatpush1.msra.mxu0 0.0
  %537 = vmatprep.subr.mxu0 0.0
  %538 = vmatpush1.msra.mxu0 0.0
  %539 = vmatprep.subr.mxu0 0.0
  %540 = vmatpush1.msra.mxu0 0.0
  %541 = vmatprep.subr.mxu0 0.0
  %542 = vmatpush1.msra.mxu0 0.0
  %543 = vmatprep.subr.mxu0 0.0
  %544 = vmatpush1.msra.mxu0 0.0
  %545 = vmatprep.subr.mxu0 0.0
  %546 = vmatpush1.msra.mxu0 0.0
  %547 = vmatprep.subr.mxu0 0.0
  %548 = vmatpush1.msra.mxu0 0.0
  %549 = vmatprep.subr.mxu0 0.0
  %550 = vmatpush1.msra.mxu0 0.0
  %551 = vmatprep.subr.mxu0 0.0
  %552 = vmatpush1.msra.mxu0 0.0
  %553 = vmatprep.mubr.f32.mxu0 0.0
  %554 = vmatmul.mubr.f32.gmra.mrb[0].mxu0 %v487
  %v555 = vpop.f32.mrb[0].mxu0
  %v556 = vadd.f32 %v485, %v555
  %v557 = vpop.f32.mrb[0].mxu0
  %558 = vdwg.mxu0
  %v559 = vxor.u32 %v556, 2147483648
  %v560 = vmul.f32 %v559, 1.442695
  %v561 = vpow.pop %v560
  %v562 = vadd.f32 %v561, 1.0
  %v563 = vrcp.pop %v562
  %v564 = vmul.f32 1.0, %v563
  %v565 = vtanh.pop %v556
  %v566 = vmul.f32 %v564, %v211
  %568 = vrot.lane.b32.xlu0 %v565, 64
  %v569 = vpop.permute.xlu0 %568
  %v571 = vmul.f32 %v564, %v569
  %573 = vrot.lane.b32.xlu0 %v571, 32
  %v574 = vpop.permute.xlu0 %573
  %v576 = vadd.f32 %v566, %v574
  %v577 = vtanh.pop %v576
  %579 = vrot.lane.b32.xlu0 %v577, 64
  %v580 = vpop.permute.xlu0 %579
  %v582 = vmul.f32 %v564, %v580
  %v583 = vsel %vm464, 1, 0
  %584 = vset.pattern.permute.xlu0 0
  %585 = vperm.xlu0 %584, %v583
  %v586 = vpop.permute.xlu0 %585
  %vm587 = vcmp.eq.s32.totalorder %v586, 1
  %v588 = vsel %vm587, %v582, 0.0
  %v589 = vsel %vm587, %v582, %v210
  %v590 = vsel %vm587, %v576, %v211
  %s591 = sadd.s32 %s74, 6
  %v592 = vstv %s591
  %vm593 = vcmp.lt.s32.totalorder %v592, %v59
  %v594 = vld [vmem:[%s42] sm:$0x8]
  %v595 = vld [vmem:[%s42 + $0x4] sm:$0x8]
  %v596 = vld [vmem:[%s42 + $0x8] sm:$0x8]
  %v597 = vld [vmem:[%s42 + $0xc] sm:$0x8]
  %v598 = vunpack.c.l.bf16 %v594
  %v599 = vunpack.c.l.bf16 %v595
  %v600 = vunpack.c.l.bf16 %v596
  %v601 = vunpack.c.l.bf16 %v597
  %603 = vrot.lane.b32.xlu0 %v345, 32
  %v604 = vpop.permute.xlu0 %603
  %v609 = vrot.slane %v598, 6
  %v610 = vrot.slane %v599, 5
  %v611 = vsel %vm90, %v610, %v609
  %v612 = vrot.slane %v600, 4
  %v613 = vsel %vm93, %v612, %v611
  %v614 = vrot.slane %v601, 3
  %v615 = vsel %vm96, %v614, %v613
  %v617 = vsel %vm99, %v604, 0
  %619 = vmatprep.subr.mxu0 0.0
  %620 = vmatpush1.msra.mxu0 %v64
  %621 = vmatprep.subr.mxu0 0.0
  %622 = vmatpush1.msra.mxu0 %v65
  %623 = vmatprep.subr.mxu0 0.0
  %624 = vmatpush1.msra.mxu0 %v66
  %625 = vmatprep.subr.mxu0 0.0
  %626 = vmatpush1.msra.mxu0 %v67
  %627 = vmatprep.subr.mxu0 0.0
  %628 = vmatpush1.msra.mxu0 0.0
  %629 = vmatprep.subr.mxu0 0.0
  %630 = vmatpush1.msra.mxu0 0.0
  %631 = vmatprep.subr.mxu0 0.0
  %632 = vmatpush1.msra.mxu0 0.0
  %633 = vmatprep.subr.mxu0 0.0
  %634 = vmatpush1.msra.mxu0 0.0
  %635 = vmatprep.subr.mxu0 0.0
  %636 = vmatpush1.msra.mxu0 0.0
  %637 = vmatprep.subr.mxu0 0.0
  %638 = vmatpush1.msra.mxu0 0.0
  %639 = vmatprep.subr.mxu0 0.0
  %640 = vmatpush1.msra.mxu0 0.0
  %641 = vmatprep.subr.mxu0 0.0
  %642 = vmatpush1.msra.mxu0 0.0
  %643 = vmatprep.subr.mxu0 0.0
  %644 = vmatpush1.msra.mxu0 0.0
  %645 = vmatprep.subr.mxu0 0.0
  %646 = vmatpush1.msra.mxu0 0.0
  %647 = vmatprep.subr.mxu0 0.0
  %648 = vmatpush1.msra.mxu0 0.0
  %649 = vmatprep.subr.mxu0 0.0
  %650 = vmatpush1.msra.mxu0 0.0
  %651 = vmatprep.subr.mxu0 0.0
  %652 = vmatpush1.msra.mxu0 0.0
  %653 = vmatprep.subr.mxu0 0.0
  %654 = vmatpush1.msra.mxu0 0.0
  %655 = vmatprep.subr.mxu0 0.0
  %656 = vmatpush1.msra.mxu0 0.0
  %657 = vmatprep.subr.mxu0 0.0
  %658 = vmatpush1.msra.mxu0 0.0
  %659 = vmatprep.subr.mxu0 0.0
  %660 = vmatpush1.msra.mxu0 0.0
  %661 = vmatprep.subr.mxu0 0.0
  %662 = vmatpush1.msra.mxu0 0.0
  %663 = vmatprep.subr.mxu0 0.0
  %664 = vmatpush1.msra.mxu0 0.0
  %665 = vmatprep.subr.mxu0 0.0
  %666 = vmatpush1.msra.mxu0 0.0
  %667 = vmatprep.subr.mxu0 0.0
  %668 = vmatpush1.msra.mxu0 0.0
  %669 = vmatprep.subr.mxu0 0.0
  %670 = vmatpush1.msra.mxu0 0.0
  %671 = vmatprep.subr.mxu0 0.0
  %672 = vmatpush1.msra.mxu0 0.0
  %673 = vmatprep.subr.mxu0 0.0
  %674 = vmatpush1.msra.mxu0 0.0
  %675 = vmatprep.subr.mxu0 0.0
  %676 = vmatpush1.msra.mxu0 0.0
  %677 = vmatprep.subr.mxu0 0.0
  %678 = vmatpush1.msra.mxu0 0.0
  %679 = vmatprep.subr.mxu0 0.0
  %680 = vmatpush1.msra.mxu0 0.0
  %681 = vmatprep.subr.mxu0 0.0
  %682 = vmatpush1.msra.mxu0 0.0
  %683 = vmatprep.mubr.f32.mxu0 0.0
  %684 = vmatmul.mubr.f32.gmra.mrb[0].mxu0 %v617
  %v685 = vpop.f32.mrb[0].mxu0
  %v686 = vadd.f32 %v615, %v685
  %v687 = vpop.f32.mrb[0].mxu0
  %688 = vdwg.mxu0
  %v689 = vxor.u32 %v686, 2147483648
  %v690 = vmul.f32 %v689, 1.442695
  %v691 = vpow.pop %v690
  %v692 = vadd.f32 %v691, 1.0
  %v693 = vrcp.pop %v692
  %v694 = vmul.f32 1.0, %v693
  %v695 = vtanh.pop %v686
  %v696 = vmul.f32 %v694, %v346
  %698 = vrot.lane.b32.xlu0 %v695, 64
  %v699 = vpop.permute.xlu0 %698
  %v701 = vmul.f32 %v694, %v699
  %703 = vrot.lane.b32.xlu0 %v701, 32
  %v704 = vpop.permute.xlu0 %703
  %v706 = vadd.f32 %v696, %v704
  %v707 = vtanh.pop %v706
  %709 = vrot.lane.b32.xlu0 %v707, 64
  %v710 = vpop.permute.xlu0 %709
  %v712 = vmul.f32 %v694, %v710
  %v713 = vsel %vm593, 1, 0
  %714 = vset.pattern.permute.xlu0 0
  %715 = vperm.xlu0 %714, %v713
  %v716 = vpop.permute.xlu0 %715
  %vm717 = vcmp.eq.s32.totalorder %v716, 1
  %v718 = vsel %vm717, %v712, 0.0
  %v719 = vsel %vm717, %v712, %v345
  %v720 = vsel %vm717, %v706, %v346
  %v723 = vunpack.c.l.s4 1966171168
  %v724 = vunpack.c.0.s8 %v723
  %v725 = vlaneseq
  %v726 = vshrl.u32 %v725, 7
  %v727 = vsub.s32 %v724, %v726
  %v728 = vrot.slane %v588, %v727
  %v729 = vcombine.high %v728, %v728
  %v731 = vunpack.c.l.s4 1966171168
  %v732 = vunpack.c.0.s8 %v731
  %v733 = vlaneseq
  %v734 = vshrl.u32 %v733, 7
  %v735 = vsub.s32 %v732, %v734
  %v736 = vrot.slane %v728, %v735
  %v738 = vunpack.c.l.s4 1966171168
  %v739 = vunpack.c.0.s8 %v738
  %v740 = vlaneseq
  %v741 = vshrl.u32 %v740, 7
  %v742 = vsub.s32 %v739, %v741
  %v743 = vrot.slane %v729, %v742
  %v744 = vcombine.high %v736, %v736
  %v745 = vcombine.high %v743, %v743
  %v746 = vlaneseq
  %v747 = vshrl.u32 %v746, 7
  %v748 = vsub.s32 0, %v747
  %v749 = vrot.slane %v736, %v748
  %v750 = vlaneseq
  %v751 = vshrl.u32 %v750, 7
  %v752 = vsub.s32 0, %v751
  %v753 = vrot.slane %v743, %v752
  %v754 = vlaneseq
  %v755 = vshrl.u32 %v754, 7
  %v756 = vsub.s32 0, %v755
  %v757 = vrot.slane %v744, %v756
  %v758 = vlaneseq
  %v759 = vshrl.u32 %v758, 7
  %v760 = vsub.s32 0, %v759
  %v761 = vrot.slane %v745, %v760
  %762 = vrot.lane.b32.xlu0 %v749, 32
  %v763 = vpop.permute.xlu0 %762
  %764 = vrot.lane.b32.xlu0 %v753, 32
  %v765 = vpop.permute.xlu0 %764
  %766 = vrot.lane.b32.xlu0 %v757, 32
  %v767 = vpop.permute.xlu0 %766
  %768 = vrot.lane.b32.xlu0 %v761, 32
  %v769 = vpop.permute.xlu0 %768
  %774 = vst.msk [vmem:[%s5 + $0x1] sm:$0x1] %vm400, %v763
  %775 = vst.msk [vmem:[%s5 + $0x9] sm:$0x1] %vm400, %v765
  %776 = vst.msk [vmem:[%s5 + $0x11] sm:$0x1] %vm400, %v767
  %777 = vst.msk [vmem:[%s5 + $0x19] sm:$0x1] %vm400, %v769
  %v780 = vunpack.c.l.s4 1966171168
  %v781 = vunpack.c.0.s8 %v780
  %v782 = vlaneseq
  %v783 = vshrl.u32 %v782, 7
  %v784 = vsub.s32 %v781, %v783
  %v785 = vrot.slane %v718, %v784
  %v786 = vcombine.high %v785, %v785
  %v788 = vunpack.c.l.s4 1966171168
  %v789 = vunpack.c.0.s8 %v788
  %v790 = vlaneseq
  %v791 = vshrl.u32 %v790, 7
  %v792 = vsub.s32 %v789, %v791
  %v793 = vrot.slane %v785, %v792
  %v795 = vunpack.c.l.s4 1966171168
  %v796 = vunpack.c.0.s8 %v795
  %v797 = vlaneseq
  %v798 = vshrl.u32 %v797, 7
  %v799 = vsub.s32 %v796, %v798
  %v800 = vrot.slane %v786, %v799
  %v801 = vcombine.high %v793, %v793
  %v802 = vcombine.high %v800, %v800
  %v803 = vlaneseq
  %v804 = vshrl.u32 %v803, 7
  %v805 = vsub.s32 0, %v804
  %v806 = vrot.slane %v793, %v805
  %v807 = vlaneseq
  %v808 = vshrl.u32 %v807, 7
  %v809 = vsub.s32 0, %v808
  %v810 = vrot.slane %v800, %v809
  %v811 = vlaneseq
  %v812 = vshrl.u32 %v811, 7
  %v813 = vsub.s32 0, %v812
  %v814 = vrot.slane %v801, %v813
  %v815 = vlaneseq
  %v816 = vshrl.u32 %v815, 7
  %v817 = vsub.s32 0, %v816
  %v818 = vrot.slane %v802, %v817
  %819 = vrot.lane.b32.xlu0 %v806, 32
  %v820 = vpop.permute.xlu0 %819
  %821 = vrot.lane.b32.xlu0 %v810, 32
  %v822 = vpop.permute.xlu0 %821
  %823 = vrot.lane.b32.xlu0 %v814, 32
  %v824 = vpop.permute.xlu0 %823
  %825 = vrot.lane.b32.xlu0 %v818, 32
  %v826 = vpop.permute.xlu0 %825
  %831 = vst.msk [vmem:[%s48 + $0x6] sm:$0x1] %vm400, %v820
  %832 = vst.msk [vmem:[%s48 + $0xe] sm:$0x1] %vm400, %v822
  %833 = vst.msk [vmem:[%s48 + $0x16] sm:$0x1] %vm400, %v824
  %834 = vst.msk [vmem:[%s48 + $0x1e] sm:$0x1] %vm400, %v826
  %s835 = sadd.s32 %s72, 2
  %v836 = vstv %s835
  %vm837 = vcmp.lt.s32.totalorder %v836, %v59
  %v838 = vld [vmem:[%s0] sm:$0x2]
  %v839 = vld [vmem:[%s0 + $0x4] sm:$0x2]
  %v840 = vld [vmem:[%s0 + $0x8] sm:$0x2]
  %v841 = vld [vmem:[%s0 + $0xc] sm:$0x2]
  %v842 = vunpack.c.l.bf16 %v838
  %v843 = vunpack.c.l.bf16 %v839
  %v844 = vunpack.c.l.bf16 %v840
  %v845 = vunpack.c.l.bf16 %v841
  %847 = vrot.lane.b32.xlu0 %v589, 32
  %v848 = vpop.permute.xlu0 %847
  %v853 = vrot.slane %v842, 2
  %v854 = vrot.slane %v843, 1
  %v855 = vsel %vm90, %v854, %v853
  %v856 = vsel %vm93, %v844, %v855
  %v857 = vrot.slane %v845, 7
  %v858 = vsel %vm96, %v857, %v856
  %v860 = vsel %vm99, %v848, 0
  %862 = vmatprep.subr.mxu0 0.0
  %863 = vmatpush1.msra.mxu0 %v60
  %864 = vmatprep.subr.mxu0 0.0
  %865 = vmatpush1.msra.mxu0 %v61
  %866 = vmatprep.subr.mxu0 0.0
  %867 = vmatpush1.msra.mxu0 %v62
  %868 = vmatprep.subr.mxu0 0.0
  %869 = vmatpush1.msra.mxu0 %v63
  %870 = vmatprep.subr.mxu0 0.0
  %871 = vmatpush1.msra.mxu0 0.0
  %872 = vmatprep.subr.mxu0 0.0
  %873 = vmatpush1.msra.mxu0 0.0
  %874 = vmatprep.subr.mxu0 0.0
  %875 = vmatpush1.msra.mxu0 0.0
  %876 = vmatprep.subr.mxu0 0.0
  %877 = vmatpush1.msra.mxu0 0.0
  %878 = vmatprep.subr.mxu0 0.0
  %879 = vmatpush1.msra.mxu0 0.0
  %880 = vmatprep.subr.mxu0 0.0
  %881 = vmatpush1.msra.mxu0 0.0
  %882 = vmatprep.subr.mxu0 0.0
  %883 = vmatpush1.msra.mxu0 0.0
  %884 = vmatprep.subr.mxu0 0.0
  %885 = vmatpush1.msra.mxu0 0.0
  %886 = vmatprep.subr.mxu0 0.0
  %887 = vmatpush1.msra.mxu0 0.0
  %888 = vmatprep.subr.mxu0 0.0
  %889 = vmatpush1.msra.mxu0 0.0
  %890 = vmatprep.subr.mxu0 0.0
  %891 = vmatpush1.msra.mxu0 0.0
  %892 = vmatprep.subr.mxu0 0.0
  %893 = vmatpush1.msra.mxu0 0.0
  %894 = vmatprep.subr.mxu0 0.0
  %895 = vmatpush1.msra.mxu0 0.0
  %896 = vmatprep.subr.mxu0 0.0
  %897 = vmatpush1.msra.mxu0 0.0
  %898 = vmatprep.subr.mxu0 0.0
  %899 = vmatpush1.msra.mxu0 0.0
  %900 = vmatprep.subr.mxu0 0.0
  %901 = vmatpush1.msra.mxu0 0.0
  %902 = vmatprep.subr.mxu0 0.0
  %903 = vmatpush1.msra.mxu0 0.0
  %904 = vmatprep.subr.mxu0 0.0
  %905 = vmatpush1.msra.mxu0 0.0
  %906 = vmatprep.subr.mxu0 0.0
  %907 = vmatpush1.msra.mxu0 0.0
  %908 = vmatprep.subr.mxu0 0.0
  %909 = vmatpush1.msra.mxu0 0.0
  %910 = vmatprep.subr.mxu0 0.0
  %911 = vmatpush1.msra.mxu0 0.0
  %912 = vmatprep.subr.mxu0 0.0
  %913 = vmatpush1.msra.mxu0 0.0
  %914 = vmatprep.subr.mxu0 0.0
  %915 = vmatpush1.msra.mxu0 0.0
  %916 = vmatprep.subr.mxu0 0.0
  %917 = vmatpush1.msra.mxu0 0.0
  %918 = vmatprep.subr.mxu0 0.0
  %919 = vmatpush1.msra.mxu0 0.0
  %920 = vmatprep.subr.mxu0 0.0
  %921 = vmatpush1.msra.mxu0 0.0
  %922 = vmatprep.subr.mxu0 0.0
  %923 = vmatpush1.msra.mxu0 0.0
  %924 = vmatprep.subr.mxu0 0.0
  %925 = vmatpush1.msra.mxu0 0.0
  %926 = vmatprep.mubr.f32.mxu0 0.0
  %927 = vmatmul.mubr.f32.gmra.mrb[0].mxu0 %v860
  %v928 = vpop.f32.mrb[0].mxu0
  %v929 = vadd.f32 %v858, %v928
  %v930 = vpop.f32.mrb[0].mxu0
  %931 = vdwg.mxu0
  %v932 = vxor.u32 %v929, 2147483648
  %v933 = vmul.f32 %v932, 1.442695
  %v934 = vpow.pop %v933
  %v935 = vadd.f32 %v934, 1.0
  %v936 = vrcp.pop %v935
  %v937 = vmul.f32 1.0, %v936
  %v938 = vtanh.pop %v929
  %v939 = vmul.f32 %v937, %v590
  %941 = vrot.lane.b32.xlu0 %v938, 64
  %v942 = vpop.permute.xlu0 %941
  %v944 = vmul.f32 %v937, %v942
  %946 = vrot.lane.b32.xlu0 %v944, 32
  %v947 = vpop.permute.xlu0 %946
  %v949 = vadd.f32 %v939, %v947
  %v950 = vtanh.pop %v949
  %952 = vrot.lane.b32.xlu0 %v950, 64
  %v953 = vpop.permute.xlu0 %952
  %v955 = vmul.f32 %v937, %v953
  %v956 = vsel %vm837, 1, 0
  %957 = vset.pattern.permute.xlu0 0
  %958 = vperm.xlu0 %957, %v956
  %v959 = vpop.permute.xlu0 %958
  %vm960 = vcmp.eq.s32.totalorder %v959, 1
  %v961 = vsel %vm960, %v955, 0.0
  %v962 = vsel %vm960, %v955, %v589
  %v963 = vsel %vm960, %v949, %v590
  %s964 = sadd.s32 %s74, 5
  %v965 = vstv %s964
  %vm966 = vcmp.lt.s32.totalorder %v965, %v59
  %v967 = vld [vmem:[%s42] sm:$0x4]
  %v968 = vld [vmem:[%s42 + $0x4] sm:$0x4]
  %v969 = vld [vmem:[%s42 + $0x8] sm:$0x4]
  %v970 = vld [vmem:[%s42 + $0xc] sm:$0x4]
  %v971 = vunpack.c.l.bf16 %v967
  %v972 = vunpack.c.l.bf16 %v968
  %v973 = vunpack.c.l.bf16 %v969
  %v974 = vunpack.c.l.bf16 %v970
  %976 = vrot.lane.b32.xlu0 %v719, 32
  %v977 = vpop.permute.xlu0 %976
  %v982 = vrot.slane %v971, 5
  %v983 = vrot.slane %v972, 4
  %v984 = vsel %vm90, %v983, %v982
  %v985 = vrot.slane %v973, 3
  %v986 = vsel %vm93, %v985, %v984
  %v987 = vrot.slane %v974, 2
  %v988 = vsel %vm96, %v987, %v986
  %v990 = vsel %vm99, %v977, 0
  %992 = vmatprep.subr.mxu0 0.0
  %993 = vmatpush1.msra.mxu0 %v64
  %994 = vmatprep.subr.mxu0 0.0
  %995 = vmatpush1.msra.mxu0 %v65
  %996 = vmatprep.subr.mxu0 0.0
  %997 = vmatpush1.msra.mxu0 %v66
  %998 = vmatprep.subr.mxu0 0.0
  %999 = vmatpush1.msra.mxu0 %v67
  %1000 = vmatprep.subr.mxu0 0.0
  %1001 = vmatpush1.msra.mxu0 0.0
  %1002 = vmatprep.subr.mxu0 0.0
  %1003 = vmatpush1.msra.mxu0 0.0
  %1004 = vmatprep.subr.mxu0 0.0
  %1005 = vmatpush1.msra.mxu0 0.0
  %1006 = vmatprep.subr.mxu0 0.0
  %1007 = vmatpush1.msra.mxu0 0.0
  %1008 = vmatprep.subr.mxu0 0.0
  %1009 = vmatpush1.msra.mxu0 0.0
  %1010 = vmatprep.subr.mxu0 0.0
  %1011 = vmatpush1.msra.mxu0 0.0
  %1012 = vmatprep.subr.mxu0 0.0
  %1013 = vmatpush1.msra.mxu0 0.0
  %1014 = vmatprep.subr.mxu0 0.0
  %1015 = vmatpush1.msra.mxu0 0.0
  %1016 = vmatprep.subr.mxu0 0.0
  %1017 = vmatpush1.msra.mxu0 0.0
  %1018 = vmatprep.subr.mxu0 0.0
  %1019 = vmatpush1.msra.mxu0 0.0
  %1020 = vmatprep.subr.mxu0 0.0
  %1021 = vmatpush1.msra.mxu0 0.0
  %1022 = vmatprep.subr.mxu0 0.0
  %1023 = vmatpush1.msra.mxu0 0.0
  %1024 = vmatprep.subr.mxu0 0.0
  %1025 = vmatpush1.msra.mxu0 0.0
  %1026 = vmatprep.subr.mxu0 0.0
  %1027 = vmatpush1.msra.mxu0 0.0
  %1028 = vmatprep.subr.mxu0 0.0
  %1029 = vmatpush1.msra.mxu0 0.0
  %1030 = vmatprep.subr.mxu0 0.0
  %1031 = vmatpush1.msra.mxu0 0.0
  %1032 = vmatprep.subr.mxu0 0.0
  %1033 = vmatpush1.msra.mxu0 0.0
  %1034 = vmatprep.subr.mxu0 0.0
  %1035 = vmatpush1.msra.mxu0 0.0
  %1036 = vmatprep.subr.mxu0 0.0
  %1037 = vmatpush1.msra.mxu0 0.0
  %1038 = vmatprep.subr.mxu0 0.0
  %1039 = vmatpush1.msra.mxu0 0.0
  %1040 = vmatprep.subr.mxu0 0.0
  %1041 = vmatpush1.msra.mxu0 0.0
  %1042 = vmatprep.subr.mxu0 0.0
  %1043 = vmatpush1.msra.mxu0 0.0
  %1044 = vmatprep.subr.mxu0 0.0
  %1045 = vmatpush1.msra.mxu0 0.0
  %1046 = vmatprep.subr.mxu0 0.0
  %1047 = vmatpush1.msra.mxu0 0.0
  %1048 = vmatprep.subr.mxu0 0.0
  %1049 = vmatpush1.msra.mxu0 0.0
  %1050 = vmatprep.subr.mxu0 0.0
  %1051 = vmatpush1.msra.mxu0 0.0
  %1052 = vmatprep.subr.mxu0 0.0
  %1053 = vmatpush1.msra.mxu0 0.0
  %1054 = vmatprep.subr.mxu0 0.0
  %1055 = vmatpush1.msra.mxu0 0.0
  %1056 = vmatprep.mubr.f32.mxu0 0.0
  %1057 = vmatmul.mubr.f32.gmra.mrb[0].mxu0 %v990
  %v1058 = vpop.f32.mrb[0].mxu0
  %v1059 = vadd.f32 %v988, %v1058
  %v1060 = vpop.f32.mrb[0].mxu0
  %1061 = vdwg.mxu0
  %v1062 = vxor.u32 %v1059, 2147483648
  %v1063 = vmul.f32 %v1062, 1.442695
  %v1064 = vpow.pop %v1063
  %v1065 = vadd.f32 %v1064, 1.0
  %v1066 = vrcp.pop %v1065
  %v1067 = vmul.f32 1.0, %v1066
  %v1068 = vtanh.pop %v1059
  %v1069 = vmul.f32 %v1067, %v720
  %1071 = vrot.lane.b32.xlu0 %v1068, 64
  %v1072 = vpop.permute.xlu0 %1071
  %v1074 = vmul.f32 %v1067, %v1072
  %1076 = vrot.lane.b32.xlu0 %v1074, 32
  %v1077 = vpop.permute.xlu0 %1076
  %v1079 = vadd.f32 %v1069, %v1077
  %v1080 = vtanh.pop %v1079
  %1082 = vrot.lane.b32.xlu0 %v1080, 64
  %v1083 = vpop.permute.xlu0 %1082
  %v1085 = vmul.f32 %v1067, %v1083
  %v1086 = vsel %vm966, 1, 0
  %1087 = vset.pattern.permute.xlu0 0
  %1088 = vperm.xlu0 %1087, %v1086
  %v1089 = vpop.permute.xlu0 %1088
  %vm1090 = vcmp.eq.s32.totalorder %v1089, 1
  %v1091 = vsel %vm1090, %v1085, 0.0
  %v1092 = vsel %vm1090, %v1085, %v719
  %v1093 = vsel %vm1090, %v1079, %v720
  %v1096 = vunpack.c.l.s4 1966171168
  %v1097 = vunpack.c.0.s8 %v1096
  %v1098 = vlaneseq
  %v1099 = vshrl.u32 %v1098, 7
  %v1100 = vsub.s32 %v1097, %v1099
  %v1101 = vrot.slane %v961, %v1100
  %v1102 = vcombine.high %v1101, %v1101
  %v1104 = vunpack.c.l.s4 1966171168
  %v1105 = vunpack.c.0.s8 %v1104
  %v1106 = vlaneseq
  %v1107 = vshrl.u32 %v1106, 7
  %v1108 = vsub.s32 %v1105, %v1107
  %v1109 = vrot.slane %v1101, %v1108
  %v1111 = vunpack.c.l.s4 1966171168
  %v1112 = vunpack.c.0.s8 %v1111
  %v1113 = vlaneseq
  %v1114 = vshrl.u32 %v1113, 7
  %v1115 = vsub.s32 %v1112, %v1114
  %v1116 = vrot.slane %v1102, %v1115
  %v1117 = vcombine.high %v1109, %v1109
  %v1118 = vcombine.high %v1116, %v1116
  %v1119 = vlaneseq
  %v1120 = vshrl.u32 %v1119, 7
  %v1121 = vsub.s32 0, %v1120
  %v1122 = vrot.slane %v1109, %v1121
  %v1123 = vlaneseq
  %v1124 = vshrl.u32 %v1123, 7
  %v1125 = vsub.s32 0, %v1124
  %v1126 = vrot.slane %v1116, %v1125
  %v1127 = vlaneseq
  %v1128 = vshrl.u32 %v1127, 7
  %v1129 = vsub.s32 0, %v1128
  %v1130 = vrot.slane %v1117, %v1129
  %v1131 = vlaneseq
  %v1132 = vshrl.u32 %v1131, 7
  %v1133 = vsub.s32 0, %v1132
  %v1134 = vrot.slane %v1118, %v1133
  %1135 = vrot.lane.b32.xlu0 %v1122, 32
  %v1136 = vpop.permute.xlu0 %1135
  %1137 = vrot.lane.b32.xlu0 %v1126, 32
  %v1138 = vpop.permute.xlu0 %1137
  %1139 = vrot.lane.b32.xlu0 %v1130, 32
  %v1140 = vpop.permute.xlu0 %1139
  %1141 = vrot.lane.b32.xlu0 %v1134, 32
  %v1142 = vpop.permute.xlu0 %1141
  %1147 = vst.msk [vmem:[%s5 + $0x2] sm:$0x1] %vm400, %v1136
  %1148 = vst.msk [vmem:[%s5 + $0xa] sm:$0x1] %vm400, %v1138
  %1149 = vst.msk [vmem:[%s5 + $0x12] sm:$0x1] %vm400, %v1140
  %1150 = vst.msk [vmem:[%s5 + $0x1a] sm:$0x1] %vm400, %v1142
  %v1153 = vunpack.c.l.s4 1966171168
  %v1154 = vunpack.c.0.s8 %v1153
  %v1155 = vlaneseq
  %v1156 = vshrl.u32 %v1155, 7
  %v1157 = vsub.s32 %v1154, %v1156
  %v1158 = vrot.slane %v1091, %v1157
  %v1159 = vcombine.high %v1158, %v1158
  %v1161 = vunpack.c.l.s4 1966171168
  %v1162 = vunpack.c.0.s8 %v1161
  %v1163 = vlaneseq
  %v1164 = vshrl.u32 %v1163, 7
  %v1165 = vsub.s32 %v1162, %v1164
  %v1166 = vrot.slane %v1158, %v1165
  %v1168 = vunpack.c.l.s4 1966171168
  %v1169 = vunpack.c.0.s8 %v1168
  %v1170 = vlaneseq
  %v1171 = vshrl.u32 %v1170, 7
  %v1172 = vsub.s32 %v1169, %v1171
  %v1173 = vrot.slane %v1159, %v1172
  %v1174 = vcombine.high %v1166, %v1166
  %v1175 = vcombine.high %v1173, %v1173
  %v1176 = vlaneseq
  %v1177 = vshrl.u32 %v1176, 7
  %v1178 = vsub.s32 0, %v1177
  %v1179 = vrot.slane %v1166, %v1178
  %v1180 = vlaneseq
  %v1181 = vshrl.u32 %v1180, 7
  %v1182 = vsub.s32 0, %v1181
  %v1183 = vrot.slane %v1173, %v1182
  %v1184 = vlaneseq
  %v1185 = vshrl.u32 %v1184, 7
  %v1186 = vsub.s32 0, %v1185
  %v1187 = vrot.slane %v1174, %v1186
  %v1188 = vlaneseq
  %v1189 = vshrl.u32 %v1188, 7
  %v1190 = vsub.s32 0, %v1189
  %v1191 = vrot.slane %v1175, %v1190
  %1192 = vrot.lane.b32.xlu0 %v1179, 32
  %v1193 = vpop.permute.xlu0 %1192
  %1194 = vrot.lane.b32.xlu0 %v1183, 32
  %v1195 = vpop.permute.xlu0 %1194
  %1196 = vrot.lane.b32.xlu0 %v1187, 32
  %v1197 = vpop.permute.xlu0 %1196
  %1198 = vrot.lane.b32.xlu0 %v1191, 32
  %v1199 = vpop.permute.xlu0 %1198
  %1204 = vst.msk [vmem:[%s48 + $0x5] sm:$0x1] %vm400, %v1193
  %1205 = vst.msk [vmem:[%s48 + $0xd] sm:$0x1] %vm400, %v1195
  %1206 = vst.msk [vmem:[%s48 + $0x15] sm:$0x1] %vm400, %v1197
  %1207 = vst.msk [vmem:[%s48 + $0x1d] sm:$0x1] %vm400, %v1199
  %s1208 = sadd.s32 %s72, 3
  %v1209 = vstv %s1208
  %vm1210 = vcmp.lt.s32.totalorder %v1209, %v59
  %v1211 = vld [vmem:[%s0] sm:$0x2]
  %v1212 = vld [vmem:[%s0 + $0x4] sm:$0x2]
  %v1213 = vld [vmem:[%s0 + $0x8] sm:$0x2]
  %v1214 = vld [vmem:[%s0 + $0xc] sm:$0x2]
  %v1215 = vunpack.c.l.bf16 %v1211
  %v1216 = vunpack.c.l.bf16 %v1212
  %v1217 = vunpack.c.l.bf16 %v1213
  %v1218 = vunpack.c.l.bf16 %v1214
  %1220 = vrot.lane.b32.xlu0 %v962, 32
  %v1221 = vpop.permute.xlu0 %1220
  %v1226 = vrot.slane %v1215, 3
  %v1227 = vrot.slane %v1216, 2
  %v1228 = vsel %vm90, %v1227, %v1226
  %v1229 = vrot.slane %v1217, 1
  %v1230 = vsel %vm93, %v1229, %v1228
  %v1231 = vsel %vm96, %v1218, %v1230
  %v1233 = vsel %vm99, %v1221, 0
  %1235 = vmatprep.subr.mxu0 0.0
  %1236 = vmatpush1.msra.mxu0 %v60
  %1237 = vmatprep.subr.mxu0 0.0
  %1238 = vmatpush1.msra.mxu0 %v61
  %1239 = vmatprep.subr.mxu0 0.0
  %1240 = vmatpush1.msra.mxu0 %v62
  %1241 = vmatprep.subr.mxu0 0.0
  %1242 = vmatpush1.msra.mxu0 %v63
  %1243 = vmatprep.subr.mxu0 0.0
  %1244 = vmatpush1.msra.mxu0 0.0
  %1245 = vmatprep.subr.mxu0 0.0
  %1246 = vmatpush1.msra.mxu0 0.0
  %1247 = vmatprep.subr.mxu0 0.0
  %1248 = vmatpush1.msra.mxu0 0.0
  %1249 = vmatprep.subr.mxu0 0.0
  %1250 = vmatpush1.msra.mxu0 0.0
  %1251 = vmatprep.subr.mxu0 0.0
  %1252 = vmatpush1.msra.mxu0 0.0
  %1253 = vmatprep.subr.mxu0 0.0
  %1254 = vmatpush1.msra.mxu0 0.0
  %1255 = vmatprep.subr.mxu0 0.0
  %1256 = vmatpush1.msra.mxu0 0.0
  %1257 = vmatprep.subr.mxu0 0.0
  %1258 = vmatpush1.msra.mxu0 0.0
  %1259 = vmatprep.subr.mxu0 0.0
  %1260 = vmatpush1.msra.mxu0 0.0
  %1261 = vmatprep.subr.mxu0 0.0
  %1262 = vmatpush1.msra.mxu0 0.0
  %1263 = vmatprep.subr.mxu0 0.0
  %1264 = vmatpush1.msra.mxu0 0.0
  %1265 = vmatprep.subr.mxu0 0.0
  %1266 = vmatpush1.msra.mxu0 0.0
  %1267 = vmatprep.subr.mxu0 0.0
  %1268 = vmatpush1.msra.mxu0 0.0
  %1269 = vmatprep.subr.mxu0 0.0
  %1270 = vmatpush1.msra.mxu0 0.0
  %1271 = vmatprep.subr.mxu0 0.0
  %1272 = vmatpush1.msra.mxu0 0.0
  %1273 = vmatprep.subr.mxu0 0.0
  %1274 = vmatpush1.msra.mxu0 0.0
  %1275 = vmatprep.subr.mxu0 0.0
  %1276 = vmatpush1.msra.mxu0 0.0
  %1277 = vmatprep.subr.mxu0 0.0
  %1278 = vmatpush1.msra.mxu0 0.0
  %1279 = vmatprep.subr.mxu0 0.0
  %1280 = vmatpush1.msra.mxu0 0.0
  %1281 = vmatprep.subr.mxu0 0.0
  %1282 = vmatpush1.msra.mxu0 0.0
  %1283 = vmatprep.subr.mxu0 0.0
  %1284 = vmatpush1.msra.mxu0 0.0
  %1285 = vmatprep.subr.mxu0 0.0
  %1286 = vmatpush1.msra.mxu0 0.0
  %1287 = vmatprep.subr.mxu0 0.0
  %1288 = vmatpush1.msra.mxu0 0.0
  %1289 = vmatprep.subr.mxu0 0.0
  %1290 = vmatpush1.msra.mxu0 0.0
  %1291 = vmatprep.subr.mxu0 0.0
  %1292 = vmatpush1.msra.mxu0 0.0
  %1293 = vmatprep.subr.mxu0 0.0
  %1294 = vmatpush1.msra.mxu0 0.0
  %1295 = vmatprep.subr.mxu0 0.0
  %1296 = vmatpush1.msra.mxu0 0.0
  %1297 = vmatprep.subr.mxu0 0.0
  %1298 = vmatpush1.msra.mxu0 0.0
  %1299 = vmatprep.mubr.f32.mxu0 0.0
  %1300 = vmatmul.mubr.f32.gmra.mrb[0].mxu0 %v1233
  %v1301 = vpop.f32.mrb[0].mxu0
  %v1302 = vadd.f32 %v1231, %v1301
  %v1303 = vpop.f32.mrb[0].mxu0
  %1304 = vdwg.mxu0
  %v1305 = vxor.u32 %v1302, 2147483648
  %v1306 = vmul.f32 %v1305, 1.442695
  %v1307 = vpow.pop %v1306
  %v1308 = vadd.f32 %v1307, 1.0
  %v1309 = vrcp.pop %v1308
  %v1310 = vmul.f32 1.0, %v1309
  %v1311 = vtanh.pop %v1302
  %v1312 = vmul.f32 %v1310, %v963
  %1314 = vrot.lane.b32.xlu0 %v1311, 64
  %v1315 = vpop.permute.xlu0 %1314
  %v1317 = vmul.f32 %v1310, %v1315
  %1319 = vrot.lane.b32.xlu0 %v1317, 32
  %v1320 = vpop.permute.xlu0 %1319
  %v1322 = vadd.f32 %v1312, %v1320
  %v1323 = vtanh.pop %v1322
  %1325 = vrot.lane.b32.xlu0 %v1323, 64
  %v1326 = vpop.permute.xlu0 %1325
  %v1328 = vmul.f32 %v1310, %v1326
  %v1329 = vsel %vm1210, 1, 0
  %1330 = vset.pattern.permute.xlu0 0
  %1331 = vperm.xlu0 %1330, %v1329
  %v1332 = vpop.permute.xlu0 %1331
  %vm1333 = vcmp.eq.s32.totalorder %v1332, 1
  %v1334 = vsel %vm1333, %v1328, 0.0
  %v1335 = vsel %vm1333, %v1328, %v962
  %v1336 = vsel %vm1333, %v1322, %v963
  %s1337 = sadd.s32 %s74, 4
  %v1338 = vstv %s1337
  %vm1339 = vcmp.lt.s32.totalorder %v1338, %v59
  %v1340 = vld [vmem:[%s42] sm:$0x4]
  %v1341 = vld [vmem:[%s42 + $0x4] sm:$0x4]
  %v1342 = vld [vmem:[%s42 + $0x8] sm:$0x4]
  %v1343 = vld [vmem:[%s42 + $0xc] sm:$0x4]
  %v1344 = vunpack.c.l.bf16 %v1340
  %v1345 = vunpack.c.l.bf16 %v1341
  %v1346 = vunpack.c.l.bf16 %v1342
  %v1347 = vunpack.c.l.bf16 %v1343
  %1349 = vrot.lane.b32.xlu0 %v1092, 32
  %v1350 = vpop.permute.xlu0 %1349
  %v1355 = vrot.slane %v1344, 4
  %v1356 = vrot.slane %v1345, 3
  %v1357 = vsel %vm90, %v1356, %v1355
  %v1358 = vrot.slane %v1346, 2
  %v1359 = vsel %vm93, %v1358, %v1357
  %v1360 = vrot.slane %v1347, 1
  %v1361 = vsel %vm96, %v1360, %v1359
  %v1363 = vsel %vm99, %v1350, 0
  %1365 = vmatprep.subr.mxu0 0.0
  %1366 = vmatpush1.msra.mxu0 %v64
  %1367 = vmatprep.subr.mxu0 0.0
  %1368 = vmatpush1.msra.mxu0 %v65
  %1369 = vmatprep.subr.mxu0 0.0
  %1370 = vmatpush1.msra.mxu0 %v66
  %1371 = vmatprep.subr.mxu0 0.0
  %1372 = vmatpush1.msra.mxu0 %v67
  %1373 = vmatprep.subr.mxu0 0.0
  %1374 = vmatpush1.msra.mxu0 0.0
  %1375 = vmatprep.subr.mxu0 0.0
  %1376 = vmatpush1.msra.mxu0 0.0
  %1377 = vmatprep.subr.mxu0 0.0
  %1378 = vmatpush1.msra.mxu0 0.0
  %1379 = vmatprep.subr.mxu0 0.0
  %1380 = vmatpush1.msra.mxu0 0.0
  %1381 = vmatprep.subr.mxu0 0.0
  %1382 = vmatpush1.msra.mxu0 0.0
  %1383 = vmatprep.subr.mxu0 0.0
  %1384 = vmatpush1.msra.mxu0 0.0
  %1385 = vmatprep.subr.mxu0 0.0
  %1386 = vmatpush1.msra.mxu0 0.0
  %1387 = vmatprep.subr.mxu0 0.0
  %1388 = vmatpush1.msra.mxu0 0.0
  %1389 = vmatprep.subr.mxu0 0.0
  %1390 = vmatpush1.msra.mxu0 0.0
  %1391 = vmatprep.subr.mxu0 0.0
  %1392 = vmatpush1.msra.mxu0 0.0
  %1393 = vmatprep.subr.mxu0 0.0
  %1394 = vmatpush1.msra.mxu0 0.0
  %1395 = vmatprep.subr.mxu0 0.0
  %1396 = vmatpush1.msra.mxu0 0.0
  %1397 = vmatprep.subr.mxu0 0.0
  %1398 = vmatpush1.msra.mxu0 0.0
  %1399 = vmatprep.subr.mxu0 0.0
  %1400 = vmatpush1.msra.mxu0 0.0
  %1401 = vmatprep.subr.mxu0 0.0
  %1402 = vmatpush1.msra.mxu0 0.0
  %1403 = vmatprep.subr.mxu0 0.0
  %1404 = vmatpush1.msra.mxu0 0.0
  %1405 = vmatprep.subr.mxu0 0.0
  %1406 = vmatpush1.msra.mxu0 0.0
  %1407 = vmatprep.subr.mxu0 0.0
  %1408 = vmatpush1.msra.mxu0 0.0
  %1409 = vmatprep.subr.mxu0 0.0
  %1410 = vmatpush1.msra.mxu0 0.0
  %1411 = vmatprep.subr.mxu0 0.0
  %1412 = vmatpush1.msra.mxu0 0.0
  %1413 = vmatprep.subr.mxu0 0.0
  %1414 = vmatpush1.msra.mxu0 0.0
  %1415 = vmatprep.subr.mxu0 0.0
  %1416 = vmatpush1.msra.mxu0 0.0
  %1417 = vmatprep.subr.mxu0 0.0
  %1418 = vmatpush1.msra.mxu0 0.0
  %1419 = vmatprep.subr.mxu0 0.0
  %1420 = vmatpush1.msra.mxu0 0.0
  %1421 = vmatprep.subr.mxu0 0.0
  %1422 = vmatpush1.msra.mxu0 0.0
  %1423 = vmatprep.subr.mxu0 0.0
  %1424 = vmatpush1.msra.mxu0 0.0
  %1425 = vmatprep.subr.mxu0 0.0
  %1426 = vmatpush1.msra.mxu0 0.0
  %1427 = vmatprep.subr.mxu0 0.0
  %1428 = vmatpush1.msra.mxu0 0.0
  %1429 = vmatprep.mubr.f32.mxu0 0.0
  %1430 = vmatmul.mubr.f32.gmra.mrb[0].mxu0 %v1363
  %v1431 = vpop.f32.mrb[0].mxu0
  %v1432 = vadd.f32 %v1361, %v1431
  %v1433 = vpop.f32.mrb[0].mxu0
  %1434 = vdwg.mxu0
  %v1435 = vxor.u32 %v1432, 2147483648
  %v1436 = vmul.f32 %v1435, 1.442695
  %v1437 = vpow.pop %v1436
  %v1438 = vadd.f32 %v1437, 1.0
  %v1439 = vrcp.pop %v1438
  %v1440 = vmul.f32 1.0, %v1439
  %v1441 = vtanh.pop %v1432
  %v1442 = vmul.f32 %v1440, %v1093
  %1444 = vrot.lane.b32.xlu0 %v1441, 64
  %v1445 = vpop.permute.xlu0 %1444
  %v1447 = vmul.f32 %v1440, %v1445
  %1449 = vrot.lane.b32.xlu0 %v1447, 32
  %v1450 = vpop.permute.xlu0 %1449
  %v1452 = vadd.f32 %v1442, %v1450
  %v1453 = vtanh.pop %v1452
  %1455 = vrot.lane.b32.xlu0 %v1453, 64
  %v1456 = vpop.permute.xlu0 %1455
  %v1458 = vmul.f32 %v1440, %v1456
  %v1459 = vsel %vm1339, 1, 0
  %1460 = vset.pattern.permute.xlu0 0
  %1461 = vperm.xlu0 %1460, %v1459
  %v1462 = vpop.permute.xlu0 %1461
  %vm1463 = vcmp.eq.s32.totalorder %v1462, 1
  %v1464 = vsel %vm1463, %v1458, 0.0
  %v1465 = vsel %vm1463, %v1458, %v1092
  %v1466 = vsel %vm1463, %v1452, %v1093
  %v1469 = vunpack.c.l.s4 1966171168
  %v1470 = vunpack.c.0.s8 %v1469
  %v1471 = vlaneseq
  %v1472 = vshrl.u32 %v1471, 7
  %v1473 = vsub.s32 %v1470, %v1472
  %v1474 = vrot.slane %v1334, %v1473
  %v1475 = vcombine.high %v1474, %v1474
  %v1477 = vunpack.c.l.s4 1966171168
  %v1478 = vunpack.c.0.s8 %v1477
  %v1479 = vlaneseq
  %v1480 = vshrl.u32 %v1479, 7
  %v1481 = vsub.s32 %v1478, %v1480
  %v1482 = vrot.slane %v1474, %v1481
  %v1484 = vunpack.c.l.s4 1966171168
  %v1485 = vunpack.c.0.s8 %v1484
  %v1486 = vlaneseq
  %v1487 = vshrl.u32 %v1486, 7
  %v1488 = vsub.s32 %v1485, %v1487
  %v1489 = vrot.slane %v1475, %v1488
  %v1490 = vcombine.high %v1482, %v1482
  %v1491 = vcombine.high %v1489, %v1489
  %v1492 = vlaneseq
  %v1493 = vshrl.u32 %v1492, 7
  %v1494 = vsub.s32 0, %v1493
  %v1495 = vrot.slane %v1482, %v1494
  %v1496 = vlaneseq
  %v1497 = vshrl.u32 %v1496, 7
  %v1498 = vsub.s32 0, %v1497
  %v1499 = vrot.slane %v1489, %v1498
  %v1500 = vlaneseq
  %v1501 = vshrl.u32 %v1500, 7
  %v1502 = vsub.s32 0, %v1501
  %v1503 = vrot.slane %v1490, %v1502
  %v1504 = vlaneseq
  %v1505 = vshrl.u32 %v1504, 7
  %v1506 = vsub.s32 0, %v1505
  %v1507 = vrot.slane %v1491, %v1506
  %1508 = vrot.lane.b32.xlu0 %v1495, 32
  %v1509 = vpop.permute.xlu0 %1508
  %1510 = vrot.lane.b32.xlu0 %v1499, 32
  %v1511 = vpop.permute.xlu0 %1510
  %1512 = vrot.lane.b32.xlu0 %v1503, 32
  %v1513 = vpop.permute.xlu0 %1512
  %1514 = vrot.lane.b32.xlu0 %v1507, 32
  %v1515 = vpop.permute.xlu0 %1514
  %1520 = vst.msk [vmem:[%s5 + $0x3] sm:$0x1] %vm400, %v1509
  %1521 = vst.msk [vmem:[%s5 + $0xb] sm:$0x1] %vm400, %v1511
  %1522 = vst.msk [vmem:[%s5 + $0x13] sm:$0x1] %vm400, %v1513
  %1523 = vst.msk [vmem:[%s5 + $0x1b] sm:$0x1] %vm400, %v1515
  %v1526 = vunpack.c.l.s4 1966171168
  %v1527 = vunpack.c.0.s8 %v1526
  %v1528 = vlaneseq
  %v1529 = vshrl.u32 %v1528, 7
  %v1530 = vsub.s32 %v1527, %v1529
  %v1531 = vrot.slane %v1464, %v1530
  %v1532 = vcombine.high %v1531, %v1531
  %v1534 = vunpack.c.l.s4 1966171168
  %v1535 = vunpack.c.0.s8 %v1534
  %v1536 = vlaneseq
  %v1537 = vshrl.u32 %v1536, 7
  %v1538 = vsub.s32 %v1535, %v1537
  %v1539 = vrot.slane %v1531, %v1538
  %v1541 = vunpack.c.l.s4 1966171168
  %v1542 = vunpack.c.0.s8 %v1541
  %v1543 = vlaneseq
  %v1544 = vshrl.u32 %v1543, 7
  %v1545 = vsub.s32 %v1542, %v1544
  %v1546 = vrot.slane %v1532, %v1545
  %v1547 = vcombine.high %v1539, %v1539
  %v1548 = vcombine.high %v1546, %v1546
  %v1549 = vlaneseq
  %v1550 = vshrl.u32 %v1549, 7
  %v1551 = vsub.s32 0, %v1550
  %v1552 = vrot.slane %v1539, %v1551
  %v1553 = vlaneseq
  %v1554 = vshrl.u32 %v1553, 7
  %v1555 = vsub.s32 0, %v1554
  %v1556 = vrot.slane %v1546, %v1555
  %v1557 = vlaneseq
  %v1558 = vshrl.u32 %v1557, 7
  %v1559 = vsub.s32 0, %v1558
  %v1560 = vrot.slane %v1547, %v1559
  %v1561 = vlaneseq
  %v1562 = vshrl.u32 %v1561, 7
  %v1563 = vsub.s32 0, %v1562
  %v1564 = vrot.slane %v1548, %v1563
  %1565 = vrot.lane.b32.xlu0 %v1552, 32
  %v1566 = vpop.permute.xlu0 %1565
  %1567 = vrot.lane.b32.xlu0 %v1556, 32
  %v1568 = vpop.permute.xlu0 %1567
  %1569 = vrot.lane.b32.xlu0 %v1560, 32
  %v1570 = vpop.permute.xlu0 %1569
  %1571 = vrot.lane.b32.xlu0 %v1564, 32
  %v1572 = vpop.permute.xlu0 %1571
  %1577 = vst.msk [vmem:[%s48 + $0x4] sm:$0x1] %vm400, %v1566
  %1578 = vst.msk [vmem:[%s48 + $0xc] sm:$0x1] %vm400, %v1568
  %1579 = vst.msk [vmem:[%s48 + $0x14] sm:$0x1] %vm400, %v1570
  %1580 = vst.msk [vmem:[%s48 + $0x1c] sm:$0x1] %vm400, %v1572
  %s1581 = sadd.s32 %s72, 4
  %v1582 = vstv %s1581
  %vm1583 = vcmp.lt.s32.totalorder %v1582, %v59
  %v1584 = vld [vmem:[%s0] sm:$0x4]
  %v1585 = vld [vmem:[%s0 + $0x4] sm:$0x4]
  %v1586 = vld [vmem:[%s0 + $0x8] sm:$0x4]
  %v1587 = vld [vmem:[%s0 + $0xc] sm:$0x4]
  %v1588 = vunpack.c.l.bf16 %v1584
  %v1589 = vunpack.c.l.bf16 %v1585
  %v1590 = vunpack.c.l.bf16 %v1586
  %v1591 = vunpack.c.l.bf16 %v1587
  %1593 = vrot.lane.b32.xlu0 %v1335, 32
  %v1594 = vpop.permute.xlu0 %1593
  %v1599 = vrot.slane %v1588, 4
  %v1600 = vrot.slane %v1589, 3
  %v1601 = vsel %vm90, %v1600, %v1599
  %v1602 = vrot.slane %v1590, 2
  %v1603 = vsel %vm93, %v1602, %v1601
  %v1604 = vrot.slane %v1591, 1
  %v1605 = vsel %vm96, %v1604, %v1603
  %v1607 = vsel %vm99, %v1594, 0
  %1609 = vmatprep.subr.mxu0 0.0
  %1610 = vmatpush1.msra.mxu0 %v60
  %1611 = vmatprep.subr.mxu0 0.0
  %1612 = vmatpush1.msra.mxu0 %v61
  %1613 = vmatprep.subr.mxu0 0.0
  %1614 = vmatpush1.msra.mxu0 %v62
  %1615 = vmatprep.subr.mxu0 0.0
  %1616 = vmatpush1.msra.mxu0 %v63
  %1617 = vmatprep.subr.mxu0 0.0
  %1618 = vmatpush1.msra.mxu0 0.0
  %1619 = vmatprep.subr.mxu0 0.0
  %1620 = vmatpush1.msra.mxu0 0.0
  %1621 = vmatprep.subr.mxu0 0.0
  %1622 = vmatpush1.msra.mxu0 0.0
  %1623 = vmatprep.subr.mxu0 0.0
  %1624 = vmatpush1.msra.mxu0 0.0
  %1625 = vmatprep.subr.mxu0 0.0
  %1626 = vmatpush1.msra.mxu0 0.0
  %1627 = vmatprep.subr.mxu0 0.0
  %1628 = vmatpush1.msra.mxu0 0.0
  %1629 = vmatprep.subr.mxu0 0.0
  %1630 = vmatpush1.msra.mxu0 0.0
  %1631 = vmatprep.subr.mxu0 0.0
  %1632 = vmatpush1.msra.mxu0 0.0
  %1633 = vmatprep.subr.mxu0 0.0
  %1634 = vmatpush1.msra.mxu0 0.0
  %1635 = vmatprep.subr.mxu0 0.0
  %1636 = vmatpush1.msra.mxu0 0.0
  %1637 = vmatprep.subr.mxu0 0.0
  %1638 = vmatpush1.msra.mxu0 0.0
  %1639 = vmatprep.subr.mxu0 0.0
  %1640 = vmatpush1.msra.mxu0 0.0
  %1641 = vmatprep.subr.mxu0 0.0
  %1642 = vmatpush1.msra.mxu0 0.0
  %1643 = vmatprep.subr.mxu0 0.0
  %1644 = vmatpush1.msra.mxu0 0.0
  %1645 = vmatprep.subr.mxu0 0.0
  %1646 = vmatpush1.msra.mxu0 0.0
  %1647 = vmatprep.subr.mxu0 0.0
  %1648 = vmatpush1.msra.mxu0 0.0
  %1649 = vmatprep.subr.mxu0 0.0
  %1650 = vmatpush1.msra.mxu0 0.0
  %1651 = vmatprep.subr.mxu0 0.0
  %1652 = vmatpush1.msra.mxu0 0.0
  %1653 = vmatprep.subr.mxu0 0.0
  %1654 = vmatpush1.msra.mxu0 0.0
  %1655 = vmatprep.subr.mxu0 0.0
  %1656 = vmatpush1.msra.mxu0 0.0
  %1657 = vmatprep.subr.mxu0 0.0
  %1658 = vmatpush1.msra.mxu0 0.0
  %1659 = vmatprep.subr.mxu0 0.0
  %1660 = vmatpush1.msra.mxu0 0.0
  %1661 = vmatprep.subr.mxu0 0.0
  %1662 = vmatpush1.msra.mxu0 0.0
  %1663 = vmatprep.subr.mxu0 0.0
  %1664 = vmatpush1.msra.mxu0 0.0
  %1665 = vmatprep.subr.mxu0 0.0
  %1666 = vmatpush1.msra.mxu0 0.0
  %1667 = vmatprep.subr.mxu0 0.0
  %1668 = vmatpush1.msra.mxu0 0.0
  %1669 = vmatprep.subr.mxu0 0.0
  %1670 = vmatpush1.msra.mxu0 0.0
  %1671 = vmatprep.subr.mxu0 0.0
  %1672 = vmatpush1.msra.mxu0 0.0
  %1673 = vmatprep.mubr.f32.mxu0 0.0
  %1674 = vmatmul.mubr.f32.gmra.mrb[0].mxu0 %v1607
  %v1675 = vpop.f32.mrb[0].mxu0
  %v1676 = vadd.f32 %v1605, %v1675
  %v1677 = vpop.f32.mrb[0].mxu0
  %1678 = vdwg.mxu0
  %v1679 = vxor.u32 %v1676, 2147483648
  %v1680 = vmul.f32 %v1679, 1.442695
  %v1681 = vpow.pop %v1680
  %v1682 = vadd.f32 %v1681, 1.0
  %v1683 = vrcp.pop %v1682
  %v1684 = vmul.f32 1.0, %v1683
  %v1685 = vtanh.pop %v1676
  %v1686 = vmul.f32 %v1684, %v1336
  %1688 = vrot.lane.b32.xlu0 %v1685, 64
  %v1689 = vpop.permute.xlu0 %1688
  %v1691 = vmul.f32 %v1684, %v1689
  %1693 = vrot.lane.b32.xlu0 %v1691, 32
  %v1694 = vpop.permute.xlu0 %1693
  %v1696 = vadd.f32 %v1686, %v1694
  %v1697 = vtanh.pop %v1696
  %1699 = vrot.lane.b32.xlu0 %v1697, 64
  %v1700 = vpop.permute.xlu0 %1699
  %v1702 = vmul.f32 %v1684, %v1700
  %v1703 = vsel %vm1583, 1, 0
  %1704 = vset.pattern.permute.xlu0 0
  %1705 = vperm.xlu0 %1704, %v1703
  %v1706 = vpop.permute.xlu0 %1705
  %vm1707 = vcmp.eq.s32.totalorder %v1706, 1
  %v1708 = vsel %vm1707, %v1702, 0.0
  %v1709 = vsel %vm1707, %v1702, %v1335
  %v1710 = vsel %vm1707, %v1696, %v1336
  %s1711 = sadd.s32 %s74, 3
  %v1712 = vstv %s1711
  %vm1713 = vcmp.lt.s32.totalorder %v1712, %v59
  %v1714 = vld [vmem:[%s42] sm:$0x2]
  %v1715 = vld [vmem:[%s42 + $0x4] sm:$0x2]
  %v1716 = vld [vmem:[%s42 + $0x8] sm:$0x2]
  %v1717 = vld [vmem:[%s42 + $0xc] sm:$0x2]
  %v1718 = vunpack.c.l.bf16 %v1714
  %v1719 = vunpack.c.l.bf16 %v1715
  %v1720 = vunpack.c.l.bf16 %v1716
  %v1721 = vunpack.c.l.bf16 %v1717
  %1723 = vrot.lane.b32.xlu0 %v1465, 32
  %v1724 = vpop.permute.xlu0 %1723
  %v1729 = vrot.slane %v1718, 3
  %v1730 = vrot.slane %v1719, 2
  %v1731 = vsel %vm90, %v1730, %v1729
  %v1732 = vrot.slane %v1720, 1
  %v1733 = vsel %vm93, %v1732, %v1731
  %v1734 = vsel %vm96, %v1721, %v1733
  %v1736 = vsel %vm99, %v1724, 0
  %1738 = vmatprep.subr.mxu0 0.0
  %1739 = vmatpush1.msra.mxu0 %v64
  %1740 = vmatprep.subr.mxu0 0.0
  %1741 = vmatpush1.msra.mxu0 %v65
  %1742 = vmatprep.subr.mxu0 0.0
  %1743 = vmatpush1.msra.mxu0 %v66
  %1744 = vmatprep.subr.mxu0 0.0
  %1745 = vmatpush1.msra.mxu0 %v67
  %1746 = vmatprep.subr.mxu0 0.0
  %1747 = vmatpush1.msra.mxu0 0.0
  %1748 = vmatprep.subr.mxu0 0.0
  %1749 = vmatpush1.msra.mxu0 0.0
  %1750 = vmatprep.subr.mxu0 0.0
  %1751 = vmatpush1.msra.mxu0 0.0
  %1752 = vmatprep.subr.mxu0 0.0
  %1753 = vmatpush1.msra.mxu0 0.0
  %1754 = vmatprep.subr.mxu0 0.0
  %1755 = vmatpush1.msra.mxu0 0.0
  %1756 = vmatprep.subr.mxu0 0.0
  %1757 = vmatpush1.msra.mxu0 0.0
  %1758 = vmatprep.subr.mxu0 0.0
  %1759 = vmatpush1.msra.mxu0 0.0
  %1760 = vmatprep.subr.mxu0 0.0
  %1761 = vmatpush1.msra.mxu0 0.0
  %1762 = vmatprep.subr.mxu0 0.0
  %1763 = vmatpush1.msra.mxu0 0.0
  %1764 = vmatprep.subr.mxu0 0.0
  %1765 = vmatpush1.msra.mxu0 0.0
  %1766 = vmatprep.subr.mxu0 0.0
  %1767 = vmatpush1.msra.mxu0 0.0
  %1768 = vmatprep.subr.mxu0 0.0
  %1769 = vmatpush1.msra.mxu0 0.0
  %1770 = vmatprep.subr.mxu0 0.0
  %1771 = vmatpush1.msra.mxu0 0.0
  %1772 = vmatprep.subr.mxu0 0.0
  %1773 = vmatpush1.msra.mxu0 0.0
  %1774 = vmatprep.subr.mxu0 0.0
  %1775 = vmatpush1.msra.mxu0 0.0
  %1776 = vmatprep.subr.mxu0 0.0
  %1777 = vmatpush1.msra.mxu0 0.0
  %1778 = vmatprep.subr.mxu0 0.0
  %1779 = vmatpush1.msra.mxu0 0.0
  %1780 = vmatprep.subr.mxu0 0.0
  %1781 = vmatpush1.msra.mxu0 0.0
  %1782 = vmatprep.subr.mxu0 0.0
  %1783 = vmatpush1.msra.mxu0 0.0
  %1784 = vmatprep.subr.mxu0 0.0
  %1785 = vmatpush1.msra.mxu0 0.0
  %1786 = vmatprep.subr.mxu0 0.0
  %1787 = vmatpush1.msra.mxu0 0.0
  %1788 = vmatprep.subr.mxu0 0.0
  %1789 = vmatpush1.msra.mxu0 0.0
  %1790 = vmatprep.subr.mxu0 0.0
  %1791 = vmatpush1.msra.mxu0 0.0
  %1792 = vmatprep.subr.mxu0 0.0
  %1793 = vmatpush1.msra.mxu0 0.0
  %1794 = vmatprep.subr.mxu0 0.0
  %1795 = vmatpush1.msra.mxu0 0.0
  %1796 = vmatprep.subr.mxu0 0.0
  %1797 = vmatpush1.msra.mxu0 0.0
  %1798 = vmatprep.subr.mxu0 0.0
  %1799 = vmatpush1.msra.mxu0 0.0
  %1800 = vmatprep.subr.mxu0 0.0
  %1801 = vmatpush1.msra.mxu0 0.0
  %1802 = vmatprep.mubr.f32.mxu0 0.0
  %1803 = vmatmul.mubr.f32.gmra.mrb[0].mxu0 %v1736
  %v1804 = vpop.f32.mrb[0].mxu0
  %v1805 = vadd.f32 %v1734, %v1804
  %v1806 = vpop.f32.mrb[0].mxu0
  %1807 = vdwg.mxu0
  %v1808 = vxor.u32 %v1805, 2147483648
  %v1809 = vmul.f32 %v1808, 1.442695
  %v1810 = vpow.pop %v1809
  %v1811 = vadd.f32 %v1810, 1.0
  %v1812 = vrcp.pop %v1811
  %v1813 = vmul.f32 1.0, %v1812
  %v1814 = vtanh.pop %v1805
  %v1815 = vmul.f32 %v1813, %v1466
  %1817 = vrot.lane.b32.xlu0 %v1814, 64
  %v1818 = vpop.permute.xlu0 %1817
  %v1820 = vmul.f32 %v1813, %v1818
  %1822 = vrot.lane.b32.xlu0 %v1820, 32
  %v1823 = vpop.permute.xlu0 %1822
  %v1825 = vadd.f32 %v1815, %v1823
  %v1826 = vtanh.pop %v1825
  %1828 = vrot.lane.b32.xlu0 %v1826, 64
  %v1829 = vpop.permute.xlu0 %1828
  %v1831 = vmul.f32 %v1813, %v1829
  %v1832 = vsel %vm1713, 1, 0
  %1833 = vset.pattern.permute.xlu0 0
  %1834 = vperm.xlu0 %1833, %v1832
  %v1835 = vpop.permute.xlu0 %1834
  %vm1836 = vcmp.eq.s32.totalorder %v1835, 1
  %v1837 = vsel %vm1836, %v1831, 0.0
  %v1838 = vsel %vm1836, %v1831, %v1465
  %v1839 = vsel %vm1836, %v1825, %v1466
  %v1842 = vunpack.c.l.s4 1966171168
  %v1843 = vunpack.c.0.s8 %v1842
  %v1844 = vlaneseq
  %v1845 = vshrl.u32 %v1844, 7
  %v1846 = vsub.s32 %v1843, %v1845
  %v1847 = vrot.slane %v1708, %v1846
  %v1848 = vcombine.high %v1847, %v1847
  %v1850 = vunpack.c.l.s4 1966171168
  %v1851 = vunpack.c.0.s8 %v1850
  %v1852 = vlaneseq
  %v1853 = vshrl.u32 %v1852, 7
  %v1854 = vsub.s32 %v1851, %v1853
  %v1855 = vrot.slane %v1847, %v1854
  %v1857 = vunpack.c.l.s4 1966171168
  %v1858 = vunpack.c.0.s8 %v1857
  %v1859 = vlaneseq
  %v1860 = vshrl.u32 %v1859, 7
  %v1861 = vsub.s32 %v1858, %v1860
  %v1862 = vrot.slane %v1848, %v1861
  %v1863 = vcombine.high %v1855, %v1855
  %v1864 = vcombine.high %v1862, %v1862
  %v1865 = vlaneseq
  %v1866 = vshrl.u32 %v1865, 7
  %v1867 = vsub.s32 0, %v1866
  %v1868 = vrot.slane %v1855, %v1867
  %v1869 = vlaneseq
  %v1870 = vshrl.u32 %v1869, 7
  %v1871 = vsub.s32 0, %v1870
  %v1872 = vrot.slane %v1862, %v1871
  %v1873 = vlaneseq
  %v1874 = vshrl.u32 %v1873, 7
  %v1875 = vsub.s32 0, %v1874
  %v1876 = vrot.slane %v1863, %v1875
  %v1877 = vlaneseq
  %v1878 = vshrl.u32 %v1877, 7
  %v1879 = vsub.s32 0, %v1878
  %v1880 = vrot.slane %v1864, %v1879
  %1881 = vrot.lane.b32.xlu0 %v1868, 32
  %v1882 = vpop.permute.xlu0 %1881
  %1883 = vrot.lane.b32.xlu0 %v1872, 32
  %v1884 = vpop.permute.xlu0 %1883
  %1885 = vrot.lane.b32.xlu0 %v1876, 32
  %v1886 = vpop.permute.xlu0 %1885
  %1887 = vrot.lane.b32.xlu0 %v1880, 32
  %v1888 = vpop.permute.xlu0 %1887
  %1893 = vst.msk [vmem:[%s5 + $0x4] sm:$0x1] %vm400, %v1882
  %1894 = vst.msk [vmem:[%s5 + $0xc] sm:$0x1] %vm400, %v1884
  %1895 = vst.msk [vmem:[%s5 + $0x14] sm:$0x1] %vm400, %v1886
  %1896 = vst.msk [vmem:[%s5 + $0x1c] sm:$0x1] %vm400, %v1888
  %v1899 = vunpack.c.l.s4 1966171168
  %v1900 = vunpack.c.0.s8 %v1899
  %v1901 = vlaneseq
  %v1902 = vshrl.u32 %v1901, 7
  %v1903 = vsub.s32 %v1900, %v1902
  %v1904 = vrot.slane %v1837, %v1903
  %v1905 = vcombine.high %v1904, %v1904
  %v1907 = vunpack.c.l.s4 1966171168
  %v1908 = vunpack.c.0.s8 %v1907
  %v1909 = vlaneseq
  %v1910 = vshrl.u32 %v1909, 7
  %v1911 = vsub.s32 %v1908, %v1910
  %v1912 = vrot.slane %v1904, %v1911
  %v1914 = vunpack.c.l.s4 1966171168
  %v1915 = vunpack.c.0.s8 %v1914
  %v1916 = vlaneseq
  %v1917 = vshrl.u32 %v1916, 7
  %v1918 = vsub.s32 %v1915, %v1917
  %v1919 = vrot.slane %v1905, %v1918
  %v1920 = vcombine.high %v1912, %v1912
  %v1921 = vcombine.high %v1919, %v1919
  %v1922 = vlaneseq
  %v1923 = vshrl.u32 %v1922, 7
  %v1924 = vsub.s32 0, %v1923
  %v1925 = vrot.slane %v1912, %v1924
  %v1926 = vlaneseq
  %v1927 = vshrl.u32 %v1926, 7
  %v1928 = vsub.s32 0, %v1927
  %v1929 = vrot.slane %v1919, %v1928
  %v1930 = vlaneseq
  %v1931 = vshrl.u32 %v1930, 7
  %v1932 = vsub.s32 0, %v1931
  %v1933 = vrot.slane %v1920, %v1932
  %v1934 = vlaneseq
  %v1935 = vshrl.u32 %v1934, 7
  %v1936 = vsub.s32 0, %v1935
  %v1937 = vrot.slane %v1921, %v1936
  %1938 = vrot.lane.b32.xlu0 %v1925, 32
  %v1939 = vpop.permute.xlu0 %1938
  %1940 = vrot.lane.b32.xlu0 %v1929, 32
  %v1941 = vpop.permute.xlu0 %1940
  %1942 = vrot.lane.b32.xlu0 %v1933, 32
  %v1943 = vpop.permute.xlu0 %1942
  %1944 = vrot.lane.b32.xlu0 %v1937, 32
  %v1945 = vpop.permute.xlu0 %1944
  %1950 = vst.msk [vmem:[%s48 + $0x3] sm:$0x1] %vm400, %v1939
  %1951 = vst.msk [vmem:[%s48 + $0xb] sm:$0x1] %vm400, %v1941
  %1952 = vst.msk [vmem:[%s48 + $0x13] sm:$0x1] %vm400, %v1943
  %1953 = vst.msk [vmem:[%s48 + $0x1b] sm:$0x1] %vm400, %v1945
  %s1954 = sadd.s32 %s72, 5
  %v1955 = vstv %s1954
  %vm1956 = vcmp.lt.s32.totalorder %v1955, %v59
  %v1957 = vld [vmem:[%s0] sm:$0x4]
  %v1958 = vld [vmem:[%s0 + $0x4] sm:$0x4]
  %v1959 = vld [vmem:[%s0 + $0x8] sm:$0x4]
  %v1960 = vld [vmem:[%s0 + $0xc] sm:$0x4]
  %v1961 = vunpack.c.l.bf16 %v1957
  %v1962 = vunpack.c.l.bf16 %v1958
  %v1963 = vunpack.c.l.bf16 %v1959
  %v1964 = vunpack.c.l.bf16 %v1960
  %1966 = vrot.lane.b32.xlu0 %v1709, 32
  %v1967 = vpop.permute.xlu0 %1966
  %v1972 = vrot.slane %v1961, 5
  %v1973 = vrot.slane %v1962, 4
  %v1974 = vsel %vm90, %v1973, %v1972
  %v1975 = vrot.slane %v1963, 3
  %v1976 = vsel %vm93, %v1975, %v1974
  %v1977 = vrot.slane %v1964, 2
  %v1978 = vsel %vm96, %v1977, %v1976
  %v1980 = vsel %vm99, %v1967, 0
  %1982 = vmatprep.subr.mxu0 0.0
  %1983 = vmatpush1.msra.mxu0 %v60
  %1984 = vmatprep.subr.mxu0 0.0
  %1985 = vmatpush1.msra.mxu0 %v61
  %1986 = vmatprep.subr.mxu0 0.0
  %1987 = vmatpush1.msra.mxu0 %v62
  %1988 = vmatprep.subr.mxu0 0.0
  %1989 = vmatpush1.msra.mxu0 %v63
  %1990 = vmatprep.subr.mxu0 0.0
  %1991 = vmatpush1.msra.mxu0 0.0
  %1992 = vmatprep.subr.mxu0 0.0
  %1993 = vmatpush1.msra.mxu0 0.0
  %1994 = vmatprep.subr.mxu0 0.0
  %1995 = vmatpush1.msra.mxu0 0.0
  %1996 = vmatprep.subr.mxu0 0.0
  %1997 = vmatpush1.msra.mxu0 0.0
  %1998 = vmatprep.subr.mxu0 0.0
  %1999 = vmatpush1.msra.mxu0 0.0
  %2000 = vmatprep.subr.mxu0 0.0
  %2001 = vmatpush1.msra.mxu0 0.0
  %2002 = vmatprep.subr.mxu0 0.0
  %2003 = vmatpush1.msra.mxu0 0.0
  %2004 = vmatprep.subr.mxu0 0.0
  %2005 = vmatpush1.msra.mxu0 0.0
  %2006 = vmatprep.subr.mxu0 0.0
  %2007 = vmatpush1.msra.mxu0 0.0
  %2008 = vmatprep.subr.mxu0 0.0
  %2009 = vmatpush1.msra.mxu0 0.0
  %2010 = vmatprep.subr.mxu0 0.0
  %2011 = vmatpush1.msra.mxu0 0.0
  %2012 = vmatprep.subr.mxu0 0.0
  %2013 = vmatpush1.msra.mxu0 0.0
  %2014 = vmatprep.subr.mxu0 0.0
  %2015 = vmatpush1.msra.mxu0 0.0
  %2016 = vmatprep.subr.mxu0 0.0
  %2017 = vmatpush1.msra.mxu0 0.0
  %2018 = vmatprep.subr.mxu0 0.0
  %2019 = vmatpush1.msra.mxu0 0.0
  %2020 = vmatprep.subr.mxu0 0.0
  %2021 = vmatpush1.msra.mxu0 0.0
  %2022 = vmatprep.subr.mxu0 0.0
  %2023 = vmatpush1.msra.mxu0 0.0
  %2024 = vmatprep.subr.mxu0 0.0
  %2025 = vmatpush1.msra.mxu0 0.0
  %2026 = vmatprep.subr.mxu0 0.0
  %2027 = vmatpush1.msra.mxu0 0.0
  %2028 = vmatprep.subr.mxu0 0.0
  %2029 = vmatpush1.msra.mxu0 0.0
  %2030 = vmatprep.subr.mxu0 0.0
  %2031 = vmatpush1.msra.mxu0 0.0
  %2032 = vmatprep.subr.mxu0 0.0
  %2033 = vmatpush1.msra.mxu0 0.0
  %2034 = vmatprep.subr.mxu0 0.0
  %2035 = vmatpush1.msra.mxu0 0.0
  %2036 = vmatprep.subr.mxu0 0.0
  %2037 = vmatpush1.msra.mxu0 0.0
  %2038 = vmatprep.subr.mxu0 0.0
  %2039 = vmatpush1.msra.mxu0 0.0
  %2040 = vmatprep.subr.mxu0 0.0
  %2041 = vmatpush1.msra.mxu0 0.0
  %2042 = vmatprep.subr.mxu0 0.0
  %2043 = vmatpush1.msra.mxu0 0.0
  %2044 = vmatprep.subr.mxu0 0.0
  %2045 = vmatpush1.msra.mxu0 0.0
  %2046 = vmatprep.mubr.f32.mxu0 0.0
  %2047 = vmatmul.mubr.f32.gmra.mrb[0].mxu0 %v1980
  %v2048 = vpop.f32.mrb[0].mxu0
  %v2049 = vadd.f32 %v1978, %v2048
  %v2050 = vpop.f32.mrb[0].mxu0
  %2051 = vdwg.mxu0
  %v2052 = vxor.u32 %v2049, 2147483648
  %v2053 = vmul.f32 %v2052, 1.442695
  %v2054 = vpow.pop %v2053
  %v2055 = vadd.f32 %v2054, 1.0
  %v2056 = vrcp.pop %v2055
  %v2057 = vmul.f32 1.0, %v2056
  %v2058 = vtanh.pop %v2049
  %v2059 = vmul.f32 %v2057, %v1710
  %2061 = vrot.lane.b32.xlu0 %v2058, 64
  %v2062 = vpop.permute.xlu0 %2061
  %v2064 = vmul.f32 %v2057, %v2062
  %2066 = vrot.lane.b32.xlu0 %v2064, 32
  %v2067 = vpop.permute.xlu0 %2066
  %v2069 = vadd.f32 %v2059, %v2067
  %v2070 = vtanh.pop %v2069
  %2072 = vrot.lane.b32.xlu0 %v2070, 64
  %v2073 = vpop.permute.xlu0 %2072
  %v2075 = vmul.f32 %v2057, %v2073
  %v2076 = vsel %vm1956, 1, 0
  %2077 = vset.pattern.permute.xlu0 0
  %2078 = vperm.xlu0 %2077, %v2076
  %v2079 = vpop.permute.xlu0 %2078
  %vm2080 = vcmp.eq.s32.totalorder %v2079, 1
  %v2081 = vsel %vm2080, %v2075, 0.0
  %v2082 = vsel %vm2080, %v2075, %v1709
  %v2083 = vsel %vm2080, %v2069, %v1710
  %s2084 = sadd.s32 %s74, 2
  %v2085 = vstv %s2084
  %vm2086 = vcmp.lt.s32.totalorder %v2085, %v59
  %v2087 = vld [vmem:[%s42] sm:$0x2]
  %v2088 = vld [vmem:[%s42 + $0x4] sm:$0x2]
  %v2089 = vld [vmem:[%s42 + $0x8] sm:$0x2]
  %v2090 = vld [vmem:[%s42 + $0xc] sm:$0x2]
  %v2091 = vunpack.c.l.bf16 %v2087
  %v2092 = vunpack.c.l.bf16 %v2088
  %v2093 = vunpack.c.l.bf16 %v2089
  %v2094 = vunpack.c.l.bf16 %v2090
  %2096 = vrot.lane.b32.xlu0 %v1838, 32
  %v2097 = vpop.permute.xlu0 %2096
  %v2102 = vrot.slane %v2091, 2
  %v2103 = vrot.slane %v2092, 1
  %v2104 = vsel %vm90, %v2103, %v2102
  %v2105 = vsel %vm93, %v2093, %v2104
  %v2106 = vrot.slane %v2094, 7
  %v2107 = vsel %vm96, %v2106, %v2105
  %v2109 = vsel %vm99, %v2097, 0
  %2111 = vmatprep.subr.mxu0 0.0
  %2112 = vmatpush1.msra.mxu0 %v64
  %2113 = vmatprep.subr.mxu0 0.0
  %2114 = vmatpush1.msra.mxu0 %v65
  %2115 = vmatprep.subr.mxu0 0.0
  %2116 = vmatpush1.msra.mxu0 %v66
  %2117 = vmatprep.subr.mxu0 0.0
  %2118 = vmatpush1.msra.mxu0 %v67
  %2119 = vmatprep.subr.mxu0 0.0
  %2120 = vmatpush1.msra.mxu0 0.0
  %2121 = vmatprep.subr.mxu0 0.0
  %2122 = vmatpush1.msra.mxu0 0.0
  %2123 = vmatprep.subr.mxu0 0.0
  %2124 = vmatpush1.msra.mxu0 0.0
  %2125 = vmatprep.subr.mxu0 0.0
  %2126 = vmatpush1.msra.mxu0 0.0
  %2127 = vmatprep.subr.mxu0 0.0
  %2128 = vmatpush1.msra.mxu0 0.0
  %2129 = vmatprep.subr.mxu0 0.0
  %2130 = vmatpush1.msra.mxu0 0.0
  %2131 = vmatprep.subr.mxu0 0.0
  %2132 = vmatpush1.msra.mxu0 0.0
  %2133 = vmatprep.subr.mxu0 0.0
  %2134 = vmatpush1.msra.mxu0 0.0
  %2135 = vmatprep.subr.mxu0 0.0
  %2136 = vmatpush1.msra.mxu0 0.0
  %2137 = vmatprep.subr.mxu0 0.0
  %2138 = vmatpush1.msra.mxu0 0.0
  %2139 = vmatprep.subr.mxu0 0.0
  %2140 = vmatpush1.msra.mxu0 0.0
  %2141 = vmatprep.subr.mxu0 0.0
  %2142 = vmatpush1.msra.mxu0 0.0
  %2143 = vmatprep.subr.mxu0 0.0
  %2144 = vmatpush1.msra.mxu0 0.0
  %2145 = vmatprep.subr.mxu0 0.0
  %2146 = vmatpush1.msra.mxu0 0.0
  %2147 = vmatprep.subr.mxu0 0.0
  %2148 = vmatpush1.msra.mxu0 0.0
  %2149 = vmatprep.subr.mxu0 0.0
  %2150 = vmatpush1.msra.mxu0 0.0
  %2151 = vmatprep.subr.mxu0 0.0
  %2152 = vmatpush1.msra.mxu0 0.0
  %2153 = vmatprep.subr.mxu0 0.0
  %2154 = vmatpush1.msra.mxu0 0.0
  %2155 = vmatprep.subr.mxu0 0.0
  %2156 = vmatpush1.msra.mxu0 0.0
  %2157 = vmatprep.subr.mxu0 0.0
  %2158 = vmatpush1.msra.mxu0 0.0
  %2159 = vmatprep.subr.mxu0 0.0
  %2160 = vmatpush1.msra.mxu0 0.0
  %2161 = vmatprep.subr.mxu0 0.0
  %2162 = vmatpush1.msra.mxu0 0.0
  %2163 = vmatprep.subr.mxu0 0.0
  %2164 = vmatpush1.msra.mxu0 0.0
  %2165 = vmatprep.subr.mxu0 0.0
  %2166 = vmatpush1.msra.mxu0 0.0
  %2167 = vmatprep.subr.mxu0 0.0
  %2168 = vmatpush1.msra.mxu0 0.0
  %2169 = vmatprep.subr.mxu0 0.0
  %2170 = vmatpush1.msra.mxu0 0.0
  %2171 = vmatprep.subr.mxu0 0.0
  %2172 = vmatpush1.msra.mxu0 0.0
  %2173 = vmatprep.subr.mxu0 0.0
  %2174 = vmatpush1.msra.mxu0 0.0
  %2175 = vmatprep.mubr.f32.mxu0 0.0
  %2176 = vmatmul.mubr.f32.gmra.mrb[0].mxu0 %v2109
  %v2177 = vpop.f32.mrb[0].mxu0
  %v2178 = vadd.f32 %v2107, %v2177
  %v2179 = vpop.f32.mrb[0].mxu0
  %2180 = vdwg.mxu0
  %v2181 = vxor.u32 %v2178, 2147483648
  %v2182 = vmul.f32 %v2181, 1.442695
  %v2183 = vpow.pop %v2182
  %v2184 = vadd.f32 %v2183, 1.0
  %v2185 = vrcp.pop %v2184
  %v2186 = vmul.f32 1.0, %v2185
  %v2187 = vtanh.pop %v2178
  %v2188 = vmul.f32 %v2186, %v1839
  %2190 = vrot.lane.b32.xlu0 %v2187, 64
  %v2191 = vpop.permute.xlu0 %2190
  %v2193 = vmul.f32 %v2186, %v2191
  %2195 = vrot.lane.b32.xlu0 %v2193, 32
  %v2196 = vpop.permute.xlu0 %2195
  %v2198 = vadd.f32 %v2188, %v2196
  %v2199 = vtanh.pop %v2198
  %2201 = vrot.lane.b32.xlu0 %v2199, 64
  %v2202 = vpop.permute.xlu0 %2201
  %v2204 = vmul.f32 %v2186, %v2202
  %v2205 = vsel %vm2086, 1, 0
  %2206 = vset.pattern.permute.xlu0 0
  %2207 = vperm.xlu0 %2206, %v2205
  %v2208 = vpop.permute.xlu0 %2207
  %vm2209 = vcmp.eq.s32.totalorder %v2208, 1
  %v2210 = vsel %vm2209, %v2204, 0.0
  %v2211 = vsel %vm2209, %v2204, %v1838
  %v2212 = vsel %vm2209, %v2198, %v1839
  %v2215 = vunpack.c.l.s4 1966171168
  %v2216 = vunpack.c.0.s8 %v2215
  %v2217 = vlaneseq
  %v2218 = vshrl.u32 %v2217, 7
  %v2219 = vsub.s32 %v2216, %v2218
  %v2220 = vrot.slane %v2081, %v2219
  %v2221 = vcombine.high %v2220, %v2220
  %v2223 = vunpack.c.l.s4 1966171168
  %v2224 = vunpack.c.0.s8 %v2223
  %v2225 = vlaneseq
  %v2226 = vshrl.u32 %v2225, 7
  %v2227 = vsub.s32 %v2224, %v2226
  %v2228 = vrot.slane %v2220, %v2227
  %v2230 = vunpack.c.l.s4 1966171168
  %v2231 = vunpack.c.0.s8 %v2230
  %v2232 = vlaneseq
  %v2233 = vshrl.u32 %v2232, 7
  %v2234 = vsub.s32 %v2231, %v2233
  %v2235 = vrot.slane %v2221, %v2234
  %v2236 = vcombine.high %v2228, %v2228
  %v2237 = vcombine.high %v2235, %v2235
  %v2238 = vlaneseq
  %v2239 = vshrl.u32 %v2238, 7
  %v2240 = vsub.s32 0, %v2239
  %v2241 = vrot.slane %v2228, %v2240
  %v2242 = vlaneseq
  %v2243 = vshrl.u32 %v2242, 7
  %v2244 = vsub.s32 0, %v2243
  %v2245 = vrot.slane %v2235, %v2244
  %v2246 = vlaneseq
  %v2247 = vshrl.u32 %v2246, 7
  %v2248 = vsub.s32 0, %v2247
  %v2249 = vrot.slane %v2236, %v2248
  %v2250 = vlaneseq
  %v2251 = vshrl.u32 %v2250, 7
  %v2252 = vsub.s32 0, %v2251
  %v2253 = vrot.slane %v2237, %v2252
  %2254 = vrot.lane.b32.xlu0 %v2241, 32
  %v2255 = vpop.permute.xlu0 %2254
  %2256 = vrot.lane.b32.xlu0 %v2245, 32
  %v2257 = vpop.permute.xlu0 %2256
  %2258 = vrot.lane.b32.xlu0 %v2249, 32
  %v2259 = vpop.permute.xlu0 %2258
  %2260 = vrot.lane.b32.xlu0 %v2253, 32
  %v2261 = vpop.permute.xlu0 %2260
  %2266 = vst.msk [vmem:[%s5 + $0x5] sm:$0x1] %vm400, %v2255
  %2267 = vst.msk [vmem:[%s5 + $0xd] sm:$0x1] %vm400, %v2257
  %2268 = vst.msk [vmem:[%s5 + $0x15] sm:$0x1] %vm400, %v2259
  %2269 = vst.msk [vmem:[%s5 + $0x1d] sm:$0x1] %vm400, %v2261
  %v2272 = vunpack.c.l.s4 1966171168
  %v2273 = vunpack.c.0.s8 %v2272
  %v2274 = vlaneseq
  %v2275 = vshrl.u32 %v2274, 7
  %v2276 = vsub.s32 %v2273, %v2275
  %v2277 = vrot.slane %v2210, %v2276
  %v2278 = vcombine.high %v2277, %v2277
  %v2280 = vunpack.c.l.s4 1966171168
  %v2281 = vunpack.c.0.s8 %v2280
  %v2282 = vlaneseq
  %v2283 = vshrl.u32 %v2282, 7
  %v2284 = vsub.s32 %v2281, %v2283
  %v2285 = vrot.slane %v2277, %v2284
  %v2287 = vunpack.c.l.s4 1966171168
  %v2288 = vunpack.c.0.s8 %v2287
  %v2289 = vlaneseq
  %v2290 = vshrl.u32 %v2289, 7
  %v2291 = vsub.s32 %v2288, %v2290
  %v2292 = vrot.slane %v2278, %v2291
  %v2293 = vcombine.high %v2285, %v2285
  %v2294 = vcombine.high %v2292, %v2292
  %v2295 = vlaneseq
  %v2296 = vshrl.u32 %v2295, 7
  %v2297 = vsub.s32 0, %v2296
  %v2298 = vrot.slane %v2285, %v2297
  %v2299 = vlaneseq
  %v2300 = vshrl.u32 %v2299, 7
  %v2301 = vsub.s32 0, %v2300
  %v2302 = vrot.slane %v2292, %v2301
  %v2303 = vlaneseq
  %v2304 = vshrl.u32 %v2303, 7
  %v2305 = vsub.s32 0, %v2304
  %v2306 = vrot.slane %v2293, %v2305
  %v2307 = vlaneseq
  %v2308 = vshrl.u32 %v2307, 7
  %v2309 = vsub.s32 0, %v2308
  %v2310 = vrot.slane %v2294, %v2309
  %2311 = vrot.lane.b32.xlu0 %v2298, 32
  %v2312 = vpop.permute.xlu0 %2311
  %2313 = vrot.lane.b32.xlu0 %v2302, 32
  %v2314 = vpop.permute.xlu0 %2313
  %2315 = vrot.lane.b32.xlu0 %v2306, 32
  %v2316 = vpop.permute.xlu0 %2315
  %2317 = vrot.lane.b32.xlu0 %v2310, 32
  %v2318 = vpop.permute.xlu0 %2317
  %2323 = vst.msk [vmem:[%s48 + $0x2] sm:$0x1] %vm400, %v2312
  %2324 = vst.msk [vmem:[%s48 + $0xa] sm:$0x1] %vm400, %v2314
  %2325 = vst.msk [vmem:[%s48 + $0x12] sm:$0x1] %vm400, %v2316
  %2326 = vst.msk [vmem:[%s48 + $0x1a] sm:$0x1] %vm400, %v2318
  %s2327 = sadd.s32 %s72, 6
  %v2328 = vstv %s2327
  %vm2329 = vcmp.lt.s32.totalorder %v2328, %v59
  %v2330 = vld [vmem:[%s0] sm:$0x8]
  %v2331 = vld [vmem:[%s0 + $0x4] sm:$0x8]
  %v2332 = vld [vmem:[%s0 + $0x8] sm:$0x8]
  %v2333 = vld [vmem:[%s0 + $0xc] sm:$0x8]
  %v2334 = vunpack.c.l.bf16 %v2330
  %v2335 = vunpack.c.l.bf16 %v2331
  %v2336 = vunpack.c.l.bf16 %v2332
  %v2337 = vunpack.c.l.bf16 %v2333
  %2339 = vrot.lane.b32.xlu0 %v2082, 32
  %v2340 = vpop.permute.xlu0 %2339
  %v2345 = vrot.slane %v2334, 6
  %v2346 = vrot.slane %v2335, 5
  %v2347 = vsel %vm90, %v2346, %v2345
  %v2348 = vrot.slane %v2336, 4
  %v2349 = vsel %vm93, %v2348, %v2347
  %v2350 = vrot.slane %v2337, 3
  %v2351 = vsel %vm96, %v2350, %v2349
  %v2353 = vsel %vm99, %v2340, 0
  %2355 = vmatprep.subr.mxu0 0.0
  %2356 = vmatpush1.msra.mxu0 %v60
  %2357 = vmatprep.subr.mxu0 0.0
  %2358 = vmatpush1.msra.mxu0 %v61
  %2359 = vmatprep.subr.mxu0 0.0
  %2360 = vmatpush1.msra.mxu0 %v62
  %2361 = vmatprep.subr.mxu0 0.0
  %2362 = vmatpush1.msra.mxu0 %v63
  %2363 = vmatprep.subr.mxu0 0.0
  %2364 = vmatpush1.msra.mxu0 0.0
  %2365 = vmatprep.subr.mxu0 0.0
  %2366 = vmatpush1.msra.mxu0 0.0
  %2367 = vmatprep.subr.mxu0 0.0
  %2368 = vmatpush1.msra.mxu0 0.0
  %2369 = vmatprep.subr.mxu0 0.0
  %2370 = vmatpush1.msra.mxu0 0.0
  %2371 = vmatprep.subr.mxu0 0.0
  %2372 = vmatpush1.msra.mxu0 0.0
  %2373 = vmatprep.subr.mxu0 0.0
  %2374 = vmatpush1.msra.mxu0 0.0
  %2375 = vmatprep.subr.mxu0 0.0
  %2376 = vmatpush1.msra.mxu0 0.0
  %2377 = vmatprep.subr.mxu0 0.0
  %2378 = vmatpush1.msra.mxu0 0.0
  %2379 = vmatprep.subr.mxu0 0.0
  %2380 = vmatpush1.msra.mxu0 0.0
  %2381 = vmatprep.subr.mxu0 0.0
  %2382 = vmatpush1.msra.mxu0 0.0
  %2383 = vmatprep.subr.mxu0 0.0
  %2384 = vmatpush1.msra.mxu0 0.0
  %2385 = vmatprep.subr.mxu0 0.0
  %2386 = vmatpush1.msra.mxu0 0.0
  %2387 = vmatprep.subr.mxu0 0.0
  %2388 = vmatpush1.msra.mxu0 0.0
  %2389 = vmatprep.subr.mxu0 0.0
  %2390 = vmatpush1.msra.mxu0 0.0
  %2391 = vmatprep.subr.mxu0 0.0
  %2392 = vmatpush1.msra.mxu0 0.0
  %2393 = vmatprep.subr.mxu0 0.0
  %2394 = vmatpush1.msra.mxu0 0.0
  %2395 = vmatprep.subr.mxu0 0.0
  %2396 = vmatpush1.msra.mxu0 0.0
  %2397 = vmatprep.subr.mxu0 0.0
  %2398 = vmatpush1.msra.mxu0 0.0
  %2399 = vmatprep.subr.mxu0 0.0
  %2400 = vmatpush1.msra.mxu0 0.0
  %2401 = vmatprep.subr.mxu0 0.0
  %2402 = vmatpush1.msra.mxu0 0.0
  %2403 = vmatprep.subr.mxu0 0.0
  %2404 = vmatpush1.msra.mxu0 0.0
  %2405 = vmatprep.subr.mxu0 0.0
  %2406 = vmatpush1.msra.mxu0 0.0
  %2407 = vmatprep.subr.mxu0 0.0
  %2408 = vmatpush1.msra.mxu0 0.0
  %2409 = vmatprep.subr.mxu0 0.0
  %2410 = vmatpush1.msra.mxu0 0.0
  %2411 = vmatprep.subr.mxu0 0.0
  %2412 = vmatpush1.msra.mxu0 0.0
  %2413 = vmatprep.subr.mxu0 0.0
  %2414 = vmatpush1.msra.mxu0 0.0
  %2415 = vmatprep.subr.mxu0 0.0
  %2416 = vmatpush1.msra.mxu0 0.0
  %2417 = vmatprep.subr.mxu0 0.0
  %2418 = vmatpush1.msra.mxu0 0.0
  %2419 = vmatprep.mubr.f32.mxu0 0.0
  %2420 = vmatmul.mubr.f32.gmra.mrb[0].mxu0 %v2353
  %v2421 = vpop.f32.mrb[0].mxu0
  %v2422 = vadd.f32 %v2351, %v2421
  %v2423 = vpop.f32.mrb[0].mxu0
  %2424 = vdwg.mxu0
  %v2425 = vxor.u32 %v2422, 2147483648
  %v2426 = vmul.f32 %v2425, 1.442695
  %v2427 = vpow.pop %v2426
  %v2428 = vadd.f32 %v2427, 1.0
  %v2429 = vrcp.pop %v2428
  %v2430 = vmul.f32 1.0, %v2429
  %v2431 = vtanh.pop %v2422
  %v2432 = vmul.f32 %v2430, %v2083
  %2434 = vrot.lane.b32.xlu0 %v2431, 64
  %v2435 = vpop.permute.xlu0 %2434
  %v2437 = vmul.f32 %v2430, %v2435
  %2439 = vrot.lane.b32.xlu0 %v2437, 32
  %v2440 = vpop.permute.xlu0 %2439
  %v2442 = vadd.f32 %v2432, %v2440
  %v2443 = vtanh.pop %v2442
  %2445 = vrot.lane.b32.xlu0 %v2443, 64
  %v2446 = vpop.permute.xlu0 %2445
  %v2448 = vmul.f32 %v2430, %v2446
  %v2449 = vsel %vm2329, 1, 0
  %2450 = vset.pattern.permute.xlu0 0
  %2451 = vperm.xlu0 %2450, %v2449
  %v2452 = vpop.permute.xlu0 %2451
  %vm2453 = vcmp.eq.s32.totalorder %v2452, 1
  %v2454 = vsel %vm2453, %v2448, 0.0
  %v2455 = vsel %vm2453, %v2448, %v2082
  %v2456 = vsel %vm2453, %v2442, %v2083
  %s2457 = sadd.s32 %s74, 1
  %v2458 = vstv %s2457
  %vm2459 = vcmp.lt.s32.totalorder %v2458, %v59
  %v2460 = vld [vmem:[%s42] sm:$0x1]
  %v2461 = vld [vmem:[%s42 + $0x4] sm:$0x1]
  %v2462 = vld [vmem:[%s42 + $0x8] sm:$0x1]
  %v2463 = vld [vmem:[%s42 + $0xc] sm:$0x1]
  %v2464 = vunpack.c.l.bf16 %v2460
  %v2465 = vunpack.c.l.bf16 %v2461
  %v2466 = vunpack.c.l.bf16 %v2462
  %v2467 = vunpack.c.l.bf16 %v2463
  %2469 = vrot.lane.b32.xlu0 %v2211, 32
  %v2470 = vpop.permute.xlu0 %2469
  %v2475 = vrot.slane %v2464, 1
  %v2476 = vsel %vm90, %v2465, %v2475
  %v2477 = vrot.slane %v2466, 7
  %v2478 = vsel %vm93, %v2477, %v2476
  %v2479 = vrot.slane %v2467, 6
  %v2480 = vsel %vm96, %v2479, %v2478
  %v2482 = vsel %vm99, %v2470, 0
  %2484 = vmatprep.subr.mxu0 0.0
  %2485 = vmatpush1.msra.mxu0 %v64
  %2486 = vmatprep.subr.mxu0 0.0
  %2487 = vmatpush1.msra.mxu0 %v65
  %2488 = vmatprep.subr.mxu0 0.0
  %2489 = vmatpush1.msra.mxu0 %v66
  %2490 = vmatprep.subr.mxu0 0.0
  %2491 = vmatpush1.msra.mxu0 %v67
  %2492 = vmatprep.subr.mxu0 0.0
  %2493 = vmatpush1.msra.mxu0 0.0
  %2494 = vmatprep.subr.mxu0 0.0
  %2495 = vmatpush1.msra.mxu0 0.0
  %2496 = vmatprep.subr.mxu0 0.0
  %2497 = vmatpush1.msra.mxu0 0.0
  %2498 = vmatprep.subr.mxu0 0.0
  %2499 = vmatpush1.msra.mxu0 0.0
  %2500 = vmatprep.subr.mxu0 0.0
  %2501 = vmatpush1.msra.mxu0 0.0
  %2502 = vmatprep.subr.mxu0 0.0
  %2503 = vmatpush1.msra.mxu0 0.0
  %2504 = vmatprep.subr.mxu0 0.0
  %2505 = vmatpush1.msra.mxu0 0.0
  %2506 = vmatprep.subr.mxu0 0.0
  %2507 = vmatpush1.msra.mxu0 0.0
  %2508 = vmatprep.subr.mxu0 0.0
  %2509 = vmatpush1.msra.mxu0 0.0
  %2510 = vmatprep.subr.mxu0 0.0
  %2511 = vmatpush1.msra.mxu0 0.0
  %2512 = vmatprep.subr.mxu0 0.0
  %2513 = vmatpush1.msra.mxu0 0.0
  %2514 = vmatprep.subr.mxu0 0.0
  %2515 = vmatpush1.msra.mxu0 0.0
  %2516 = vmatprep.subr.mxu0 0.0
  %2517 = vmatpush1.msra.mxu0 0.0
  %2518 = vmatprep.subr.mxu0 0.0
  %2519 = vmatpush1.msra.mxu0 0.0
  %2520 = vmatprep.subr.mxu0 0.0
  %2521 = vmatpush1.msra.mxu0 0.0
  %2522 = vmatprep.subr.mxu0 0.0
  %2523 = vmatpush1.msra.mxu0 0.0
  %2524 = vmatprep.subr.mxu0 0.0
  %2525 = vmatpush1.msra.mxu0 0.0
  %2526 = vmatprep.subr.mxu0 0.0
  %2527 = vmatpush1.msra.mxu0 0.0
  %2528 = vmatprep.subr.mxu0 0.0
  %2529 = vmatpush1.msra.mxu0 0.0
  %2530 = vmatprep.subr.mxu0 0.0
  %2531 = vmatpush1.msra.mxu0 0.0
  %2532 = vmatprep.subr.mxu0 0.0
  %2533 = vmatpush1.msra.mxu0 0.0
  %2534 = vmatprep.subr.mxu0 0.0
  %2535 = vmatpush1.msra.mxu0 0.0
  %2536 = vmatprep.subr.mxu0 0.0
  %2537 = vmatpush1.msra.mxu0 0.0
  %2538 = vmatprep.subr.mxu0 0.0
  %2539 = vmatpush1.msra.mxu0 0.0
  %2540 = vmatprep.subr.mxu0 0.0
  %2541 = vmatpush1.msra.mxu0 0.0
  %2542 = vmatprep.subr.mxu0 0.0
  %2543 = vmatpush1.msra.mxu0 0.0
  %2544 = vmatprep.subr.mxu0 0.0
  %2545 = vmatpush1.msra.mxu0 0.0
  %2546 = vmatprep.subr.mxu0 0.0
  %2547 = vmatpush1.msra.mxu0 0.0
  %2548 = vmatprep.mubr.f32.mxu0 0.0
  %2549 = vmatmul.mubr.f32.gmra.mrb[0].mxu0 %v2482
  %v2550 = vpop.f32.mrb[0].mxu0
  %v2551 = vadd.f32 %v2480, %v2550
  %v2552 = vpop.f32.mrb[0].mxu0
  %2553 = vdwg.mxu0
  %v2554 = vxor.u32 %v2551, 2147483648
  %v2555 = vmul.f32 %v2554, 1.442695
  %v2556 = vpow.pop %v2555
  %v2557 = vadd.f32 %v2556, 1.0
  %v2558 = vrcp.pop %v2557
  %v2559 = vmul.f32 1.0, %v2558
  %v2560 = vtanh.pop %v2551
  %v2561 = vmul.f32 %v2559, %v2212
  %2563 = vrot.lane.b32.xlu0 %v2560, 64
  %v2564 = vpop.permute.xlu0 %2563
  %v2566 = vmul.f32 %v2559, %v2564
  %2568 = vrot.lane.b32.xlu0 %v2566, 32
  %v2569 = vpop.permute.xlu0 %2568
  %v2571 = vadd.f32 %v2561, %v2569
  %v2572 = vtanh.pop %v2571
  %2574 = vrot.lane.b32.xlu0 %v2572, 64
  %v2575 = vpop.permute.xlu0 %2574
  %v2577 = vmul.f32 %v2559, %v2575
  %v2578 = vsel %vm2459, 1, 0
  %2579 = vset.pattern.permute.xlu0 0
  %2580 = vperm.xlu0 %2579, %v2578
  %v2581 = vpop.permute.xlu0 %2580
  %vm2582 = vcmp.eq.s32.totalorder %v2581, 1
  %v2583 = vsel %vm2582, %v2577, 0.0
  %v2584 = vsel %vm2582, %v2577, %v2211
  %v2585 = vsel %vm2582, %v2571, %v2212
  %v2588 = vunpack.c.l.s4 1966171168
  %v2589 = vunpack.c.0.s8 %v2588
  %v2590 = vlaneseq
  %v2591 = vshrl.u32 %v2590, 7
  %v2592 = vsub.s32 %v2589, %v2591
  %v2593 = vrot.slane %v2454, %v2592
  %v2594 = vcombine.high %v2593, %v2593
  %v2596 = vunpack.c.l.s4 1966171168
  %v2597 = vunpack.c.0.s8 %v2596
  %v2598 = vlaneseq
  %v2599 = vshrl.u32 %v2598, 7
  %v2600 = vsub.s32 %v2597, %v2599
  %v2601 = vrot.slane %v2593, %v2600
  %v2603 = vunpack.c.l.s4 1966171168
  %v2604 = vunpack.c.0.s8 %v2603
  %v2605 = vlaneseq
  %v2606 = vshrl.u32 %v2605, 7
  %v2607 = vsub.s32 %v2604, %v2606
  %v2608 = vrot.slane %v2594, %v2607
  %v2609 = vcombine.high %v2601, %v2601
  %v2610 = vcombine.high %v2608, %v2608
  %v2611 = vlaneseq
  %v2612 = vshrl.u32 %v2611, 7
  %v2613 = vsub.s32 0, %v2612
  %v2614 = vrot.slane %v2601, %v2613
  %v2615 = vlaneseq
  %v2616 = vshrl.u32 %v2615, 7
  %v2617 = vsub.s32 0, %v2616
  %v2618 = vrot.slane %v2608, %v2617
  %v2619 = vlaneseq
  %v2620 = vshrl.u32 %v2619, 7
  %v2621 = vsub.s32 0, %v2620
  %v2622 = vrot.slane %v2609, %v2621
  %v2623 = vlaneseq
  %v2624 = vshrl.u32 %v2623, 7
  %v2625 = vsub.s32 0, %v2624
  %v2626 = vrot.slane %v2610, %v2625
  %2627 = vrot.lane.b32.xlu0 %v2614, 32
  %v2628 = vpop.permute.xlu0 %2627
  %2629 = vrot.lane.b32.xlu0 %v2618, 32
  %v2630 = vpop.permute.xlu0 %2629
  %2631 = vrot.lane.b32.xlu0 %v2622, 32
  %v2632 = vpop.permute.xlu0 %2631
  %2633 = vrot.lane.b32.xlu0 %v2626, 32
  %v2634 = vpop.permute.xlu0 %2633
  %2639 = vst.msk [vmem:[%s5 + $0x6] sm:$0x1] %vm400, %v2628
  %2640 = vst.msk [vmem:[%s5 + $0xe] sm:$0x1] %vm400, %v2630
  %2641 = vst.msk [vmem:[%s5 + $0x16] sm:$0x1] %vm400, %v2632
  %2642 = vst.msk [vmem:[%s5 + $0x1e] sm:$0x1] %vm400, %v2634
  %v2645 = vunpack.c.l.s4 1966171168
  %v2646 = vunpack.c.0.s8 %v2645
  %v2647 = vlaneseq
  %v2648 = vshrl.u32 %v2647, 7
  %v2649 = vsub.s32 %v2646, %v2648
  %v2650 = vrot.slane %v2583, %v2649
  %v2651 = vcombine.high %v2650, %v2650
  %v2653 = vunpack.c.l.s4 1966171168
  %v2654 = vunpack.c.0.s8 %v2653
  %v2655 = vlaneseq
  %v2656 = vshrl.u32 %v2655, 7
  %v2657 = vsub.s32 %v2654, %v2656
  %v2658 = vrot.slane %v2650, %v2657
  %v2660 = vunpack.c.l.s4 1966171168
  %v2661 = vunpack.c.0.s8 %v2660
  %v2662 = vlaneseq
  %v2663 = vshrl.u32 %v2662, 7
  %v2664 = vsub.s32 %v2661, %v2663
  %v2665 = vrot.slane %v2651, %v2664
  %v2666 = vcombine.high %v2658, %v2658
  %v2667 = vcombine.high %v2665, %v2665
  %v2668 = vlaneseq
  %v2669 = vshrl.u32 %v2668, 7
  %v2670 = vsub.s32 0, %v2669
  %v2671 = vrot.slane %v2658, %v2670
  %v2672 = vlaneseq
  %v2673 = vshrl.u32 %v2672, 7
  %v2674 = vsub.s32 0, %v2673
  %v2675 = vrot.slane %v2665, %v2674
  %v2676 = vlaneseq
  %v2677 = vshrl.u32 %v2676, 7
  %v2678 = vsub.s32 0, %v2677
  %v2679 = vrot.slane %v2666, %v2678
  %v2680 = vlaneseq
  %v2681 = vshrl.u32 %v2680, 7
  %v2682 = vsub.s32 0, %v2681
  %v2683 = vrot.slane %v2667, %v2682
  %2684 = vrot.lane.b32.xlu0 %v2671, 32
  %v2685 = vpop.permute.xlu0 %2684
  %2686 = vrot.lane.b32.xlu0 %v2675, 32
  %v2687 = vpop.permute.xlu0 %2686
  %2688 = vrot.lane.b32.xlu0 %v2679, 32
  %v2689 = vpop.permute.xlu0 %2688
  %2690 = vrot.lane.b32.xlu0 %v2683, 32
  %v2691 = vpop.permute.xlu0 %2690
  %2696 = vst.msk [vmem:[%s48 + $0x1] sm:$0x1] %vm400, %v2685
  %2697 = vst.msk [vmem:[%s48 + $0x9] sm:$0x1] %vm400, %v2687
  %2698 = vst.msk [vmem:[%s48 + $0x11] sm:$0x1] %vm400, %v2689
  %2699 = vst.msk [vmem:[%s48 + $0x19] sm:$0x1] %vm400, %v2691
  %s2700 = sadd.s32 %s72, 7
  %v2701 = vstv %s2700
  %vm2702 = vcmp.lt.s32.totalorder %v2701, %v59
  %v2703 = vld [vmem:[%s0] sm:$0x8]
  %v2704 = vld [vmem:[%s0 + $0x4] sm:$0x8]
  %v2705 = vld [vmem:[%s0 + $0x8] sm:$0x8]
  %v2706 = vld [vmem:[%s0 + $0xc] sm:$0x8]
  %v2707 = vunpack.c.l.bf16 %v2703
  %v2708 = vunpack.c.l.bf16 %v2704
  %v2709 = vunpack.c.l.bf16 %v2705
  %v2710 = vunpack.c.l.bf16 %v2706
  %2712 = vrot.lane.b32.xlu0 %v2455, 32
  %v2713 = vpop.permute.xlu0 %2712
  %v2718 = vrot.slane %v2707, 7
  %v2719 = vrot.slane %v2708, 6
  %v2720 = vsel %vm90, %v2719, %v2718
  %v2721 = vrot.slane %v2709, 5
  %v2722 = vsel %vm93, %v2721, %v2720
  %v2723 = vrot.slane %v2710, 4
  %v2724 = vsel %vm96, %v2723, %v2722
  %v2726 = vsel %vm99, %v2713, 0
  %2728 = vmatprep.subr.mxu0 0.0
  %2729 = vmatpush1.msra.mxu0 %v60
  %2730 = vmatprep.subr.mxu0 0.0
  %2731 = vmatpush1.msra.mxu0 %v61
  %2732 = vmatprep.subr.mxu0 0.0
  %2733 = vmatpush1.msra.mxu0 %v62
  %2734 = vmatprep.subr.mxu0 0.0
  %2735 = vmatpush1.msra.mxu0 %v63
  %2736 = vmatprep.subr.mxu0 0.0
  %2737 = vmatpush1.msra.mxu0 0.0
  %2738 = vmatprep.subr.mxu0 0.0
  %2739 = vmatpush1.msra.mxu0 0.0
  %2740 = vmatprep.subr.mxu0 0.0
  %2741 = vmatpush1.msra.mxu0 0.0
  %2742 = vmatprep.subr.mxu0 0.0
  %2743 = vmatpush1.msra.mxu0 0.0
  %2744 = vmatprep.subr.mxu0 0.0
  %2745 = vmatpush1.msra.mxu0 0.0
  %2746 = vmatprep.subr.mxu0 0.0
  %2747 = vmatpush1.msra.mxu0 0.0
  %2748 = vmatprep.subr.mxu0 0.0
  %2749 = vmatpush1.msra.mxu0 0.0
  %2750 = vmatprep.subr.mxu0 0.0
  %2751 = vmatpush1.msra.mxu0 0.0
  %2752 = vmatprep.subr.mxu0 0.0
  %2753 = vmatpush1.msra.mxu0 0.0
  %2754 = vmatprep.subr.mxu0 0.0
  %2755 = vmatpush1.msra.mxu0 0.0
  %2756 = vmatprep.subr.mxu0 0.0
  %2757 = vmatpush1.msra.mxu0 0.0
  %2758 = vmatprep.subr.mxu0 0.0
  %2759 = vmatpush1.msra.mxu0 0.0
  %2760 = vmatprep.subr.mxu0 0.0
  %2761 = vmatpush1.msra.mxu0 0.0
  %2762 = vmatprep.subr.mxu0 0.0
  %2763 = vmatpush1.msra.mxu0 0.0
  %2764 = vmatprep.subr.mxu0 0.0
  %2765 = vmatpush1.msra.mxu0 0.0
  %2766 = vmatprep.subr.mxu0 0.0
  %2767 = vmatpush1.msra.mxu0 0.0
  %2768 = vmatprep.subr.mxu0 0.0
  %2769 = vmatpush1.msra.mxu0 0.0
  %2770 = vmatprep.subr.mxu0 0.0
  %2771 = vmatpush1.msra.mxu0 0.0
  %2772 = vmatprep.subr.mxu0 0.0
  %2773 = vmatpush1.msra.mxu0 0.0
  %2774 = vmatprep.subr.mxu0 0.0
  %2775 = vmatpush1.msra.mxu0 0.0
  %2776 = vmatprep.subr.mxu0 0.0
  %2777 = vmatpush1.msra.mxu0 0.0
  %2778 = vmatprep.subr.mxu0 0.0
  %2779 = vmatpush1.msra.mxu0 0.0
  %2780 = vmatprep.subr.mxu0 0.0
  %2781 = vmatpush1.msra.mxu0 0.0
  %2782 = vmatprep.subr.mxu0 0.0
  %2783 = vmatpush1.msra.mxu0 0.0
  %2784 = vmatprep.subr.mxu0 0.0
  %2785 = vmatpush1.msra.mxu0 0.0
  %2786 = vmatprep.subr.mxu0 0.0
  %2787 = vmatpush1.msra.mxu0 0.0
  %2788 = vmatprep.subr.mxu0 0.0
  %2789 = vmatpush1.msra.mxu0 0.0
  %2790 = vmatprep.subr.mxu0 0.0
  %2791 = vmatpush1.msra.mxu0 0.0
  %2792 = vmatprep.mubr.f32.mxu0 0.0
  %2793 = vmatmul.mubr.f32.gmra.mrb[0].mxu0 %v2726
  %v2794 = vpop.f32.mrb[0].mxu0
  %v2795 = vadd.f32 %v2724, %v2794
  %v2796 = vpop.f32.mrb[0].mxu0
  %2797 = vdwg.mxu0
  %v2798 = vxor.u32 %v2795, 2147483648
  %v2799 = vmul.f32 %v2798, 1.442695
  %v2800 = vpow.pop %v2799
  %v2801 = vadd.f32 %v2800, 1.0
  %v2802 = vrcp.pop %v2801
  %v2803 = vmul.f32 1.0, %v2802
  %v2804 = vtanh.pop %v2795
  %v2805 = vmul.f32 %v2803, %v2456
  %2807 = vrot.lane.b32.xlu0 %v2804, 64
  %v2808 = vpop.permute.xlu0 %2807
  %v2810 = vmul.f32 %v2803, %v2808
  %2812 = vrot.lane.b32.xlu0 %v2810, 32
  %v2813 = vpop.permute.xlu0 %2812
  %v2815 = vadd.f32 %v2805, %v2813
  %v2816 = vtanh.pop %v2815
  %2818 = vrot.lane.b32.xlu0 %v2816, 64
  %v2819 = vpop.permute.xlu0 %2818
  %v2821 = vmul.f32 %v2803, %v2819
  %v2822 = vsel %vm2702, 1, 0
  %2823 = vset.pattern.permute.xlu0 0
  %2824 = vperm.xlu0 %2823, %v2822
  %v2825 = vpop.permute.xlu0 %2824
  %vm2826 = vcmp.eq.s32.totalorder %v2825, 1
  %v2827 = vsel %vm2826, %v2821, 0.0
  %v2828 = vsel %vm2826, %v2821, %v2455
  %v2829 = vsel %vm2826, %v2815, %v2456
  %v2830 = vstv %s74
  %vm2831 = vcmp.lt.s32.totalorder %v2830, %v59
  %v2832 = vld [vmem:[%s42] sm:$0x1]
  %v2833 = vld [vmem:[%s42 + $0x4] sm:$0x1]
  %v2834 = vld [vmem:[%s42 + $0x8] sm:$0x1]
  %v2835 = vld [vmem:[%s42 + $0xc] sm:$0x1]
  %v2836 = vunpack.c.l.bf16 %v2832
  %v2837 = vunpack.c.l.bf16 %v2833
  %v2838 = vunpack.c.l.bf16 %v2834
  %v2839 = vunpack.c.l.bf16 %v2835
  %2841 = vrot.lane.b32.xlu0 %v2584, 32
  %v2842 = vpop.permute.xlu0 %2841
  %v2847 = vrot.slane %v2837, 7
  %v2848 = vsel %vm90, %v2847, %v2836
  %v2849 = vrot.slane %v2838, 6
  %v2850 = vsel %vm93, %v2849, %v2848
  %v2851 = vrot.slane %v2839, 5
  %v2852 = vsel %vm96, %v2851, %v2850
  %v2854 = vsel %vm99, %v2842, 0
  %2856 = vmatprep.subr.mxu0 0.0
  %2857 = vmatpush1.msra.mxu0 %v64
  %2858 = vmatprep.subr.mxu0 0.0
  %2859 = vmatpush1.msra.mxu0 %v65
  %2860 = vmatprep.subr.mxu0 0.0
  %2861 = vmatpush1.msra.mxu0 %v66
  %2862 = vmatprep.subr.mxu0 0.0
  %2863 = vmatpush1.msra.mxu0 %v67
  %2864 = vmatprep.subr.mxu0 0.0
  %2865 = vmatpush1.msra.mxu0 0.0
  %2866 = vmatprep.subr.mxu0 0.0
  %2867 = vmatpush1.msra.mxu0 0.0
  %2868 = vmatprep.subr.mxu0 0.0
  %2869 = vmatpush1.msra.mxu0 0.0
  %2870 = vmatprep.subr.mxu0 0.0
  %2871 = vmatpush1.msra.mxu0 0.0
  %2872 = vmatprep.subr.mxu0 0.0
  %2873 = vmatpush1.msra.mxu0 0.0
  %2874 = vmatprep.subr.mxu0 0.0
  %2875 = vmatpush1.msra.mxu0 0.0
  %2876 = vmatprep.subr.mxu0 0.0
  %2877 = vmatpush1.msra.mxu0 0.0
  %2878 = vmatprep.subr.mxu0 0.0
  %2879 = vmatpush1.msra.mxu0 0.0
  %2880 = vmatprep.subr.mxu0 0.0
  %2881 = vmatpush1.msra.mxu0 0.0
  %2882 = vmatprep.subr.mxu0 0.0
  %2883 = vmatpush1.msra.mxu0 0.0
  %2884 = vmatprep.subr.mxu0 0.0
  %2885 = vmatpush1.msra.mxu0 0.0
  %2886 = vmatprep.subr.mxu0 0.0
  %2887 = vmatpush1.msra.mxu0 0.0
  %2888 = vmatprep.subr.mxu0 0.0
  %2889 = vmatpush1.msra.mxu0 0.0
  %2890 = vmatprep.subr.mxu0 0.0
  %2891 = vmatpush1.msra.mxu0 0.0
  %2892 = vmatprep.subr.mxu0 0.0
  %2893 = vmatpush1.msra.mxu0 0.0
  %2894 = vmatprep.subr.mxu0 0.0
  %2895 = vmatpush1.msra.mxu0 0.0
  %2896 = vmatprep.subr.mxu0 0.0
  %2897 = vmatpush1.msra.mxu0 0.0
  %2898 = vmatprep.subr.mxu0 0.0
  %2899 = vmatpush1.msra.mxu0 0.0
  %2900 = vmatprep.subr.mxu0 0.0
  %2901 = vmatpush1.msra.mxu0 0.0
  %2902 = vmatprep.subr.mxu0 0.0
  %2903 = vmatpush1.msra.mxu0 0.0
  %2904 = vmatprep.subr.mxu0 0.0
  %2905 = vmatpush1.msra.mxu0 0.0
  %2906 = vmatprep.subr.mxu0 0.0
  %2907 = vmatpush1.msra.mxu0 0.0
  %2908 = vmatprep.subr.mxu0 0.0
  %2909 = vmatpush1.msra.mxu0 0.0
  %2910 = vmatprep.subr.mxu0 0.0
  %2911 = vmatpush1.msra.mxu0 0.0
  %2912 = vmatprep.subr.mxu0 0.0
  %2913 = vmatpush1.msra.mxu0 0.0
  %2914 = vmatprep.subr.mxu0 0.0
  %2915 = vmatpush1.msra.mxu0 0.0
  %2916 = vmatprep.subr.mxu0 0.0
  %2917 = vmatpush1.msra.mxu0 0.0
  %2918 = vmatprep.subr.mxu0 0.0
  %2919 = vmatpush1.msra.mxu0 0.0
  %2920 = vmatprep.mubr.f32.mxu0 0.0
  %2921 = vmatmul.mubr.f32.gmra.mrb[0].mxu0 %v2854
  %v2922 = vpop.f32.mrb[0].mxu0
  %v2923 = vadd.f32 %v2852, %v2922
  %v2924 = vpop.f32.mrb[0].mxu0
  %2925 = vdwg.mxu0
  %v2926 = vxor.u32 %v2923, 2147483648
  %v2927 = vmul.f32 %v2926, 1.442695
  %v2928 = vpow.pop %v2927
  %v2929 = vadd.f32 %v2928, 1.0
  %v2930 = vrcp.pop %v2929
  %v2931 = vmul.f32 1.0, %v2930
  %v2932 = vtanh.pop %v2923
  %v2933 = vmul.f32 %v2931, %v2585
  %2935 = vrot.lane.b32.xlu0 %v2932, 64
  %v2936 = vpop.permute.xlu0 %2935
  %v2938 = vmul.f32 %v2931, %v2936
  %2940 = vrot.lane.b32.xlu0 %v2938, 32
  %v2941 = vpop.permute.xlu0 %2940
  %v2943 = vadd.f32 %v2933, %v2941
  %v2944 = vtanh.pop %v2943
  %2946 = vrot.lane.b32.xlu0 %v2944, 64
  %v2947 = vpop.permute.xlu0 %2946
  %v2949 = vmul.f32 %v2931, %v2947
  %v2950 = vsel %vm2831, 1, 0
  %2951 = vset.pattern.permute.xlu0 0
  %2952 = vperm.xlu0 %2951, %v2950
  %v2953 = vpop.permute.xlu0 %2952
  %vm2954 = vcmp.eq.s32.totalorder %v2953, 1
  %v2955 = vsel %vm2954, %v2949, 0.0
  %v2956 = vsel %vm2954, %v2949, %v2584
  %v2957 = vsel %vm2954, %v2943, %v2585
  %v2960 = vunpack.c.l.s4 1966171168
  %v2961 = vunpack.c.0.s8 %v2960
  %v2962 = vlaneseq
  %v2963 = vshrl.u32 %v2962, 7
  %v2964 = vsub.s32 %v2961, %v2963
  %v2965 = vrot.slane %v2827, %v2964
  %v2966 = vcombine.high %v2965, %v2965
  %v2968 = vunpack.c.l.s4 1966171168
  %v2969 = vunpack.c.0.s8 %v2968
  %v2970 = vlaneseq
  %v2971 = vshrl.u32 %v2970, 7
  %v2972 = vsub.s32 %v2969, %v2971
  %v2973 = vrot.slane %v2965, %v2972
  %v2975 = vunpack.c.l.s4 1966171168
  %v2976 = vunpack.c.0.s8 %v2975
  %v2977 = vlaneseq
  %v2978 = vshrl.u32 %v2977, 7
  %v2979 = vsub.s32 %v2976, %v2978
  %v2980 = vrot.slane %v2966, %v2979
  %v2981 = vcombine.high %v2973, %v2973
  %v2982 = vcombine.high %v2980, %v2980
  %v2983 = vlaneseq
  %v2984 = vshrl.u32 %v2983, 7
  %v2985 = vsub.s32 0, %v2984
  %v2986 = vrot.slane %v2973, %v2985
  %v2987 = vlaneseq
  %v2988 = vshrl.u32 %v2987, 7
  %v2989 = vsub.s32 0, %v2988
  %v2990 = vrot.slane %v2980, %v2989
  %v2991 = vlaneseq
  %v2992 = vshrl.u32 %v2991, 7
  %v2993 = vsub.s32 0, %v2992
  %v2994 = vrot.slane %v2981, %v2993
  %v2995 = vlaneseq
  %v2996 = vshrl.u32 %v2995, 7
  %v2997 = vsub.s32 0, %v2996
  %v2998 = vrot.slane %v2982, %v2997
  %2999 = vrot.lane.b32.xlu0 %v2986, 32
  %v3000 = vpop.permute.xlu0 %2999
  %3001 = vrot.lane.b32.xlu0 %v2990, 32
  %v3002 = vpop.permute.xlu0 %3001
  %3003 = vrot.lane.b32.xlu0 %v2994, 32
  %v3004 = vpop.permute.xlu0 %3003
  %3005 = vrot.lane.b32.xlu0 %v2998, 32
  %v3006 = vpop.permute.xlu0 %3005
  %3011 = vst.msk [vmem:[%s5 + $0x7] sm:$0x1] %vm400, %v3000
  %3012 = vst.msk [vmem:[%s5 + $0xf] sm:$0x1] %vm400, %v3002
  %3013 = vst.msk [vmem:[%s5 + $0x17] sm:$0x1] %vm400, %v3004
  %3014 = vst.msk [vmem:[%s5 + $0x1f] sm:$0x1] %vm400, %v3006
  %v3017 = vunpack.c.l.s4 1966171168
  %v3018 = vunpack.c.0.s8 %v3017
  %v3019 = vlaneseq
  %v3020 = vshrl.u32 %v3019, 7
  %v3021 = vsub.s32 %v3018, %v3020
  %v3022 = vrot.slane %v2955, %v3021
  %v3023 = vcombine.high %v3022, %v3022
  %v3025 = vunpack.c.l.s4 1966171168
  %v3026 = vunpack.c.0.s8 %v3025
  %v3027 = vlaneseq
  %v3028 = vshrl.u32 %v3027, 7
  %v3029 = vsub.s32 %v3026, %v3028
  %v3030 = vrot.slane %v3022, %v3029
  %v3032 = vunpack.c.l.s4 1966171168
  %v3033 = vunpack.c.0.s8 %v3032
  %v3034 = vlaneseq
  %v3035 = vshrl.u32 %v3034, 7
  %v3036 = vsub.s32 %v3033, %v3035
  %v3037 = vrot.slane %v3023, %v3036
  %v3038 = vcombine.high %v3030, %v3030
  %v3039 = vcombine.high %v3037, %v3037
  %v3040 = vlaneseq
  %v3041 = vshrl.u32 %v3040, 7
  %v3042 = vsub.s32 0, %v3041
  %v3043 = vrot.slane %v3030, %v3042
  %v3044 = vlaneseq
  %v3045 = vshrl.u32 %v3044, 7
  %v3046 = vsub.s32 0, %v3045
  %v3047 = vrot.slane %v3037, %v3046
  %v3048 = vlaneseq
  %v3049 = vshrl.u32 %v3048, 7
  %v3050 = vsub.s32 0, %v3049
  %v3051 = vrot.slane %v3038, %v3050
  %v3052 = vlaneseq
  %v3053 = vshrl.u32 %v3052, 7
  %v3054 = vsub.s32 0, %v3053
  %v3055 = vrot.slane %v3039, %v3054
  %3056 = vrot.lane.b32.xlu0 %v3043, 32
  %v3057 = vpop.permute.xlu0 %3056
  %3058 = vrot.lane.b32.xlu0 %v3047, 32
  %v3059 = vpop.permute.xlu0 %3058
  %3060 = vrot.lane.b32.xlu0 %v3051, 32
  %v3061 = vpop.permute.xlu0 %3060
  %3062 = vrot.lane.b32.xlu0 %v3055, 32
  %v3063 = vpop.permute.xlu0 %3062
  %3068 = vst.msk [vmem:[%s48] sm:$0x1] %vm400, %v3057
  %3069 = vst.msk [vmem:[%s48 + $0x8] sm:$0x1] %vm400, %v3059
  %3070 = vst.msk [vmem:[%s48 + $0x10] sm:$0x1] %vm400, %v3061
  %3071 = vst.msk [vmem:[%s48 + $0x18] sm:$0x1] %vm400, %v3063
  %3073 = vrot.lane.b32.xlu0 %v2828, 32
  %v3074 = vpop.permute.xlu0 %3073
  %vm3076 = vcmask 257024
  %3077 = vst.msk [vmem:[#allocation2] sm:$0xf] %vm3076, %v3074
  %3079 = vrot.lane.b32.xlu0 %v2829, 96
  %v3080 = vpop.permute.xlu0 %3079
  %3082 = vst.msk [vmem:[#allocation3] sm:$0xf] %vm3076, %v3080
  %3084 = vrot.lane.b32.xlu0 %v2956, 32
  %v3085 = vpop.permute.xlu0 %3084
  %3087 = vst.msk [vmem:[#allocation4] sm:$0xf] %vm3076, %v3085
  %3089 = vrot.lane.b32.xlu0 %v2957, 96
  %v3090 = vpop.permute.xlu0 %3089
  %3092 = vst.msk [vmem:[#allocation5] sm:$0xf] %vm3076, %v3090
  %s3093 = ssub.s32 0, 0
  %p3094 = scmp.lt.s32.totalorder %s3093, 0
  %s3095 = scalar_select %p3094, %s3093, 0
  %s3096 = smul.addr %s3095, 8
  %s3097 = scalar_lea.vmem %s6, %s3096
  // Predicated region
  $region26: #{sem_attn_forward.4} parent=0 // pred_check
    _
  $region27: #{sem_attn_forward.4} parent=0 // pred_check_branch
    %3099 = sbr.rel (0) target = $region29
  $region28: #{sem_attn_forward.4} parent=0 // pred_region
    _
  $region29: #{sem_attn_forward.4} parent=0 // pred_fallthru
    _
  // Predicated region
  $region30: #{sem_attn_forward.4} parent=0 // pred_check
    _
  $region31: #{sem_attn_forward.4} parent=0 // pred_check_branch
    %3101 = sbr.rel (0) target = $region33
  $region32: #{sem_attn_forward.4} parent=0 // pred_region
    %s3102 = ssub.s32 0, 0
  $region33: #{sem_attn_forward.4} parent=0 // pred_fallthru
    _
  // Predicated region
  $region34: #{sem_attn_forward.4} parent=0 // pred_check
    _
  $region35: #{sem_attn_forward.4} parent=0 // pred_check_branch
    %3104 = sbr.rel (0) target = $region37
  $region36: #{sem_attn_forward.4} parent=0 // pred_region
    _
  $region37: #{sem_attn_forward.4} parent=0 // pred_fallthru
    _
  // Predicated region
  $region38: #{sem_attn_forward.4} parent=0 // pred_check
    _
  $region39: #{sem_attn_forward.4} parent=0 // pred_check_branch
    %3106 = sbr.rel (0) target = $region41
  $region40: #{sem_attn_forward.4} parent=0 // pred_region
    %s3107 = ssub.s32 0, 0
    %p3108 = scmp.lt.s32.totalorder %s3107, 0
    %s3109 = scalar_select %p3108, %s3107, 0
    %s3110 = smul.addr %s3109, 8
    %s3111 = scalar_lea.vmem %s6, %s3110
  $region41: #{sem_attn_forward.4} parent=0 // pred_fallthru
    _

// kernel: sem_attn_forward.6
$region0: #{sem_attn_forward.6}
  #allocation0 [shape = 'u32[]', space=smem, size = 0x4, offset = 0x4, fixed_abs, tag = 'smem constant byte address 0x4 - core index']
  #allocation1 [shape = 'u32[144,128]{1,0:T(1,128)}', space=vmem, size = 0x12000, scoped, tag = 'internal scratch']
  #allocation2 [shape = 'f32[4,32]{1,0:T(4,128)}', space=vmem, size = 0x800, scoped, tag = 'scratch operand']
  #allocation3 [shape = 'f32[4,32]{1,0:T(4,128)}', space=vmem, size = 0x800, scoped, tag = 'scratch operand']
  #allocation4 [shape = 'f32[4,32]{1,0:T(4,128)}', space=vmem, size = 0x800, scoped, tag = 'scratch operand']
  #allocation5 [shape = 'f32[4,32]{1,0:T(4,128)}', space=vmem, size = 0x800, scoped, tag = 'scratch operand']
  %s0 = inlined_call_operand.vmem [shape: bf16[4,8,128], index: 0, kind: input, shape index: {}]
  %s1 = inlined_call_operand.vmem [shape: bf16[4,8,128], index: 1, kind: input, shape index: {}]
  %s2 = inlined_call_operand.vmem [shape: s32[4,1], index: 2, kind: input, shape index: {}]
  %s3 = inlined_call_operand.vmem [shape: f32[32,128], index: 3, kind: input, shape index: {}]
  %s4 = inlined_call_operand.vmem [shape: f32[32,128], index: 4, kind: input, shape index: {}]
  %s5 = inlined_call_operand.vmem [shape: f32[4,32], index: 5, kind: output, shape index: {0}]
  %s6 = inlined_call_operand.vmem [shape: f32[4,32], index: 6, kind: output, shape index: {1}]
  %7 = xla_tuple %s5, %s6
  %s8 = sld [smem:[#allocation0]]
  $region46: #{sem_attn_forward.6} parent=0
    _
  %s10 = ssub.s32 1, %s8
  %s11 = scalar_select 0, %s10, %s8
  // Predicated region
  $region2: #{sem_attn_forward.6} parent=0 // pred_check
    _
  $region3: #{sem_attn_forward.6} parent=0 // pred_check_branch
    %13 = sbr.rel (0) target = $region5
  $region4: #{sem_attn_forward.6} parent=0 // pred_region
    _
  $region5: #{sem_attn_forward.6} parent=0 // pred_fallthru
    _
  // Predicated region
  $region6: #{sem_attn_forward.6} parent=0 // pred_check
    _
  $region7: #{sem_attn_forward.6} parent=0 // pred_check_branch
    %15 = sbr.rel (0) target = $region9
  $region8: #{sem_attn_forward.6} parent=0 // pred_region
    %s16 = ssub.s32 0, 0
    %p17 = scmp.lt.s32.totalorder %s16, 0
    %s18 = scalar_select %p17, %s16, 0
    %s19 = smul.addr %s18, 4
    %s20 = scalar_lea.vmem %s1, %s19
    %s21 = ssub.s32 0, 0
  $region9: #{sem_attn_forward.6} parent=0 // pred_fallthru
    _
  // Predicated region
  $region10: #{sem_attn_forward.6} parent=0 // pred_check
    _
  $region11: #{sem_attn_forward.6} parent=0 // pred_check_branch
    %23 = sbr.rel (0) target = $region13
  $region12: #{sem_attn_forward.6} parent=0 // pred_region
    _
  $region13: #{sem_attn_forward.6} parent=0 // pred_fallthru
    _
  // Predicated region
  $region14: #{sem_attn_forward.6} parent=0 // pred_check
    _
  $region15: #{sem_attn_forward.6} parent=0 // pred_check_branch
    %25 = sbr.rel (0) target = $region17
  $region16: #{sem_attn_forward.6} parent=0 // pred_region
    _
  $region17: #{sem_attn_forward.6} parent=0 // pred_fallthru
    _
  // Predicated region
  $region18: #{sem_attn_forward.6} parent=0 // pred_check
    _
  $region19: #{sem_attn_forward.6} parent=0 // pred_check_branch
    %27 = sbr.rel (0) target = $region21
  $region20: #{sem_attn_forward.6} parent=0 // pred_region
    _
  $region21: #{sem_attn_forward.6} parent=0 // pred_fallthru
    _
  %s28 = ssub.s32 0, 0
  %p29 = scmp.lt.s32.totalorder %s28, 0
  %s30 = scalar_select %p29, %s28, 0
  %s31 = smul.addr %s30, 4
  %s32 = scalar_lea.vmem %s1, %s31
  %s33 = ssub.s32 0, 0
  %p34 = scmp.lt.s32.totalorder %s33, 0
  %s35 = scalar_select %p34, %s33, 0
  %s36 = smul.addr %s35, 4
  %s37 = scalar_lea.vmem %s1, %s36
  %s38 = ssub.s32 0, 0
  %p39 = scmp.eq.s32.totalorder 0, 0
  // Predicated region
  $region22: #{sem_attn_forward.6} parent=0 // pred_check
    %p40 = pneg %p39
  $region23: #{sem_attn_forward.6} parent=0 // pred_check_branch
    %42 = sbr.rel (%p40) target = $region25
  $region24: #{sem_attn_forward.6} parent=0 // pred_region
    %vm43 = vcmask 257024
    %44 = vst.msk [vmem:[#allocation2] sm:$0xf] %vm43, 0.0
    %45 = vst.msk [vmem:[#allocation3] sm:$0xf] %vm43, 0.0
    %46 = vst.msk [vmem:[#allocation4] sm:$0xf] %vm43, 0.0
    %47 = vst.msk [vmem:[#allocation5] sm:$0xf] %vm43, 0.0
    %48 = vst.msk [vmem:[%s5] sm:$0xf] %vm43, 0.0
    %49 = vst.msk [vmem:[%s6] sm:$0xf] %vm43, 0.0
  $region25: #{sem_attn_forward.6} parent=0 // pred_fallthru
    _
  %v50 = vld [vmem:[%s2] sm:$0xf]
  %v51 = vld [vmem:[%s3] sm:$0xff]
  %v52 = vld [vmem:[%s3 + $0x8] sm:$0xff]
  %v53 = vld [vmem:[%s3 + $0x10] sm:$0xff]
  %v54 = vld [vmem:[%s3 + $0x18] sm:$0xff]
  %v55 = vld [vmem:[%s4] sm:$0xff]
  %v56 = vld [vmem:[%s4 + $0x8] sm:$0xff]
  %v57 = vld [vmem:[%s4 + $0x10] sm:$0xff]
  %v58 = vld [vmem:[%s4 + $0x18] sm:$0xff]
  %v59 = vld [vmem:[#allocation2] sm:$0xf]
  %v60 = vld [vmem:[#allocation3] sm:$0xf]
  %v61 = vld [vmem:[#allocation4] sm:$0xf]
  %v62 = vld [vmem:[#allocation5] sm:$0xf]
  %s63 = smul.u32 0, 8
  %s64 = ssub.s32 0, 0
  %s65 = smul.u32 %s64, 8
  %v66 = vstv %s63
  %vm67 = vcmp.lt.s32.totalorder %v66, %v50
  %v68 = vld [vmem:[%s0] sm:$0x1]
  %v69 = vld [vmem:[%s0 + $0x4] sm:$0x1]
  %v70 = vld [vmem:[%s0 + $0x8] sm:$0x1]
  %v71 = vld [vmem:[%s0 + $0xc] sm:$0x1]
  %v72 = vunpack.c.l.bf16 %v68
  %v73 = vunpack.c.l.bf16 %v69
  %v74 = vunpack.c.l.bf16 %v70
  %v75 = vunpack.c.l.bf16 %v71
  %v80 = vrot.slane %v73, 7
  %vm81 = vcmask 1041409
  %v82 = vsel %vm81, %v80, %v72
  %v83 = vrot.slane %v74, 6
  %vm84 = vcmask 1042434
  %v85 = vsel %vm84, %v83, %v82
  %v86 = vrot.slane %v75, 5
  %vm87 = vcmask 1043459
  %v88 = vsel %vm87, %v86, %v85
  %vm90 = vcmask 261120
  %v92 = vsel %vm90, %v59, 0
  %94 = vmatprep.subr.mxu0 0.0
  %95 = vmatpush1.msra.mxu0 %v51
  %96 = vmatprep.subr.mxu0 0.0
  %97 = vmatpush1.msra.mxu0 %v52
  %98 = vmatprep.subr.mxu0 0.0
  %99 = vmatpush1.msra.mxu0 %v53
  %100 = vmatprep.subr.mxu0 0.0
  %101 = vmatpush1.msra.mxu0 %v54
  %102 = vmatprep.subr.mxu0 0.0
  %103 = vmatpush1.msra.mxu0 0.0
  %104 = vmatprep.subr.mxu0 0.0
  %105 = vmatpush1.msra.mxu0 0.0
  %106 = vmatprep.subr.mxu0 0.0
  %107 = vmatpush1.msra.mxu0 0.0
  %108 = vmatprep.subr.mxu0 0.0
  %109 = vmatpush1.msra.mxu0 0.0
  %110 = vmatprep.subr.mxu0 0.0
  %111 = vmatpush1.msra.mxu0 0.0
  %112 = vmatprep.subr.mxu0 0.0
  %113 = vmatpush1.msra.mxu0 0.0
  %114 = vmatprep.subr.mxu0 0.0
  %115 = vmatpush1.msra.mxu0 0.0
  %116 = vmatprep.subr.mxu0 0.0
  %117 = vmatpush1.msra.mxu0 0.0
  %118 = vmatprep.subr.mxu0 0.0
  %119 = vmatpush1.msra.mxu0 0.0
  %120 = vmatprep.subr.mxu0 0.0
  %121 = vmatpush1.msra.mxu0 0.0
  %122 = vmatprep.subr.mxu0 0.0
  %123 = vmatpush1.msra.mxu0 0.0
  %124 = vmatprep.subr.mxu0 0.0
  %125 = vmatpush1.msra.mxu0 0.0
  %126 = vmatprep.subr.mxu0 0.0
  %127 = vmatpush1.msra.mxu0 0.0
  %128 = vmatprep.subr.mxu0 0.0
  %129 = vmatpush1.msra.mxu0 0.0
  %130 = vmatprep.subr.mxu0 0.0
  %131 = vmatpush1.msra.mxu0 0.0
  %132 = vmatprep.subr.mxu0 0.0
  %133 = vmatpush1.msra.mxu0 0.0
  %134 = vmatprep.subr.mxu0 0.0
  %135 = vmatpush1.msra.mxu0 0.0
  %136 = vmatprep.subr.mxu0 0.0
  %137 = vmatpush1.msra.mxu0 0.0
  %138 = vmatprep.subr.mxu0 0.0
  %139 = vmatpush1.msra.mxu0 0.0
  %140 = vmatprep.subr.mxu0 0.0
  %141 = vmatpush1.msra.mxu0 0.0
  %142 = vmatprep.subr.mxu0 0.0
  %143 = vmatpush1.msra.mxu0 0.0
  %144 = vmatprep.subr.mxu0 0.0
  %145 = vmatpush1.msra.mxu0 0.0
  %146 = vmatprep.subr.mxu0 0.0
  %147 = vmatpush1.msra.mxu0 0.0
  %148 = vmatprep.subr.mxu0 0.0
  %149 = vmatpush1.msra.mxu0 0.0
  %150 = vmatprep.subr.mxu0 0.0
  %151 = vmatpush1.msra.mxu0 0.0
  %152 = vmatprep.subr.mxu0 0.0
  %153 = vmatpush1.msra.mxu0 0.0
  %154 = vmatprep.subr.mxu0 0.0
  %155 = vmatpush1.msra.mxu0 0.0
  %156 = vmatprep.subr.mxu0 0.0
  %157 = vmatpush1.msra.mxu0 0.0
  %158 = vmatprep.mubr.f32.mxu0 0.0
  %159 = vmatmul.mubr.f32.gmra.mrb[0].mxu0 %v92
  %v160 = vpop.f32.mrb[0].mxu0
  %v161 = vadd.f32 %v88, %v160
  %v162 = vpop.f32.mrb[0].mxu0
  %163 = vdwg.mxu0
  %v164 = vxor.u32 %v161, 2147483648
  %v165 = vmul.f32 %v164, 1.442695
  %v166 = vpow.pop %v165
  %v167 = vadd.f32 %v166, 1.0
  %v168 = vrcp.pop %v167
  %v169 = vmul.f32 1.0, %v168
  %v170 = vtanh.pop %v161
  %172 = vrot.lane.b32.xlu0 %v60, 32
  %v173 = vpop.permute.xlu0 %172
  %v175 = vmul.f32 %v169, %v173
  %177 = vrot.lane.b32.xlu0 %v170, 64
  %v178 = vpop.permute.xlu0 %177
  %v180 = vmul.f32 %v169, %v178
  %182 = vrot.lane.b32.xlu0 %v180, 32
  %v183 = vpop.permute.xlu0 %182
  %v185 = vadd.f32 %v175, %v183
  %v186 = vtanh.pop %v185
  %188 = vrot.lane.b32.xlu0 %v186, 64
  %v189 = vpop.permute.xlu0 %188
  %v191 = vmul.f32 %v169, %v189
  %v192 = vsel %vm67, 1, 0
  %193 = vset.pattern.permute.xlu0 0
  %194 = vperm.xlu0 %193, %v192
  %v195 = vpop.permute.xlu0 %194
  %vm196 = vcmp.eq.s32.totalorder %v195, 1
  %v197 = vsel %vm196, %v191, 0.0
  %198 = vrot.lane.b32.xlu0 %v59, 96
  %v199 = vpop.permute.xlu0 %198
  %v201 = vsel %vm196, %v191, %v199
  %v202 = vsel %vm196, %v185, %v173
  %s203 = sadd.s32 %s65, 7
  %v204 = vstv %s203
  %vm205 = vcmp.lt.s32.totalorder %v204, %v50
  %v206 = vld [vmem:[%s37] sm:$0x8]
  %v207 = vld [vmem:[%s37 + $0x4] sm:$0x8]
  %v208 = vld [vmem:[%s37 + $0x8] sm:$0x8]
  %v209 = vld [vmem:[%s37 + $0xc] sm:$0x8]
  %v210 = vunpack.c.l.bf16 %v206
  %v211 = vunpack.c.l.bf16 %v207
  %v212 = vunpack.c.l.bf16 %v208
  %v213 = vunpack.c.l.bf16 %v209
  %v218 = vrot.slane %v210, 7
  %v219 = vrot.slane %v211, 6
  %v220 = vsel %vm81, %v219, %v218
  %v221 = vrot.slane %v212, 5
  %v222 = vsel %vm84, %v221, %v220
  %v223 = vrot.slane %v213, 4
  %v224 = vsel %vm87, %v223, %v222
  %v227 = vsel %vm90, %v61, 0
  %229 = vmatprep.subr.mxu0 0.0
  %230 = vmatpush1.msra.mxu0 %v55
  %231 = vmatprep.subr.mxu0 0.0
  %232 = vmatpush1.msra.mxu0 %v56
  %233 = vmatprep.subr.mxu0 0.0
  %234 = vmatpush1.msra.mxu0 %v57
  %235 = vmatprep.subr.mxu0 0.0
  %236 = vmatpush1.msra.mxu0 %v58
  %237 = vmatprep.subr.mxu0 0.0
  %238 = vmatpush1.msra.mxu0 0.0
  %239 = vmatprep.subr.mxu0 0.0
  %240 = vmatpush1.msra.mxu0 0.0
  %241 = vmatprep.subr.mxu0 0.0
  %242 = vmatpush1.msra.mxu0 0.0
  %243 = vmatprep.subr.mxu0 0.0
  %244 = vmatpush1.msra.mxu0 0.0
  %245 = vmatprep.subr.mxu0 0.0
  %246 = vmatpush1.msra.mxu0 0.0
  %247 = vmatprep.subr.mxu0 0.0
  %248 = vmatpush1.msra.mxu0 0.0
  %249 = vmatprep.subr.mxu0 0.0
  %250 = vmatpush1.msra.mxu0 0.0
  %251 = vmatprep.subr.mxu0 0.0
  %252 = vmatpush1.msra.mxu0 0.0
  %253 = vmatprep.subr.mxu0 0.0
  %254 = vmatpush1.msra.mxu0 0.0
  %255 = vmatprep.subr.mxu0 0.0
  %256 = vmatpush1.msra.mxu0 0.0
  %257 = vmatprep.subr.mxu0 0.0
  %258 = vmatpush1.msra.mxu0 0.0
  %259 = vmatprep.subr.mxu0 0.0
  %260 = vmatpush1.msra.mxu0 0.0
  %261 = vmatprep.subr.mxu0 0.0
  %262 = vmatpush1.msra.mxu0 0.0
  %263 = vmatprep.subr.mxu0 0.0
  %264 = vmatpush1.msra.mxu0 0.0
  %265 = vmatprep.subr.mxu0 0.0
  %266 = vmatpush1.msra.mxu0 0.0
  %267 = vmatprep.subr.mxu0 0.0
  %268 = vmatpush1.msra.mxu0 0.0
  %269 = vmatprep.subr.mxu0 0.0
  %270 = vmatpush1.msra.mxu0 0.0
  %271 = vmatprep.subr.mxu0 0.0
  %272 = vmatpush1.msra.mxu0 0.0
  %273 = vmatprep.subr.mxu0 0.0
  %274 = vmatpush1.msra.mxu0 0.0
  %275 = vmatprep.subr.mxu0 0.0
  %276 = vmatpush1.msra.mxu0 0.0
  %277 = vmatprep.subr.mxu0 0.0
  %278 = vmatpush1.msra.mxu0 0.0
  %279 = vmatprep.subr.mxu0 0.0
  %280 = vmatpush1.msra.mxu0 0.0
  %281 = vmatprep.subr.mxu0 0.0
  %282 = vmatpush1.msra.mxu0 0.0
  %283 = vmatprep.subr.mxu0 0.0
  %284 = vmatpush1.msra.mxu0 0.0
  %285 = vmatprep.subr.mxu0 0.0
  %286 = vmatpush1.msra.mxu0 0.0
  %287 = vmatprep.subr.mxu0 0.0
  %288 = vmatpush1.msra.mxu0 0.0
  %289 = vmatprep.subr.mxu0 0.0
  %290 = vmatpush1.msra.mxu0 0.0
  %291 = vmatprep.subr.mxu0 0.0
  %292 = vmatpush1.msra.mxu0 0.0
  %293 = vmatprep.mubr.f32.mxu0 0.0
  %294 = vmatmul.mubr.f32.gmra.mrb[0].mxu0 %v227
  %v295 = vpop.f32.mrb[0].mxu0
  %v296 = vadd.f32 %v224, %v295
  %v297 = vpop.f32.mrb[0].mxu0
  %298 = vdwg.mxu0
  %v299 = vxor.u32 %v296, 2147483648
  %v300 = vmul.f32 %v299, 1.442695
  %v301 = vpow.pop %v300
  %v302 = vadd.f32 %v301, 1.0
  %v303 = vrcp.pop %v302
  %v304 = vmul.f32 1.0, %v303
  %v305 = vtanh.pop %v296
  %307 = vrot.lane.b32.xlu0 %v62, 32
  %v308 = vpop.permute.xlu0 %307
  %v310 = vmul.f32 %v304, %v308
  %312 = vrot.lane.b32.xlu0 %v305, 64
  %v313 = vpop.permute.xlu0 %312
  %v315 = vmul.f32 %v304, %v313
  %317 = vrot.lane.b32.xlu0 %v315, 32
  %v318 = vpop.permute.xlu0 %317
  %v320 = vadd.f32 %v310, %v318
  %v321 = vtanh.pop %v320
  %323 = vrot.lane.b32.xlu0 %v321, 64
  %v324 = vpop.permute.xlu0 %323
  %v326 = vmul.f32 %v304, %v324
  %v327 = vsel %vm205, 1, 0
  %328 = vset.pattern.permute.xlu0 0
  %329 = vperm.xlu0 %328, %v327
  %v330 = vpop.permute.xlu0 %329
  %vm331 = vcmp.eq.s32.totalorder %v330, 1
  %v332 = vsel %vm331, %v326, 0.0
  %333 = vrot.lane.b32.xlu0 %v61, 96
  %v334 = vpop.permute.xlu0 %333
  %v336 = vsel %vm331, %v326, %v334
  %v337 = vsel %vm331, %v320, %v308
  %v338 = vadd.f32 %v197, 0.0
  %v339 = vadd.f32 %v332, 0.0
  %s340 = sadd.s32 %s63, 1
  %v341 = vstv %s340
  %vm342 = vcmp.lt.s32.totalorder %v341, %v50
  %344 = vrot.lane.b32.xlu0 %v201, 32
  %v345 = vpop.permute.xlu0 %344
  %v346 = vrot.slane %v72, 1
  %v347 = vsel %vm81, %v73, %v346
  %v348 = vrot.slane %v74, 7
  %v349 = vsel %vm84, %v348, %v347
  %v350 = vrot.slane %v75, 6
  %v351 = vsel %vm87, %v350, %v349
  %v353 = vsel %vm90, %v345, 0
  %355 = vmatprep.subr.mxu0 0.0
  %356 = vmatpush1.msra.mxu0 %v51
  %357 = vmatprep.subr.mxu0 0.0
  %358 = vmatpush1.msra.mxu0 %v52
  %359 = vmatprep.subr.mxu0 0.0
  %360 = vmatpush1.msra.mxu0 %v53
  %361 = vmatprep.subr.mxu0 0.0
  %362 = vmatpush1.msra.mxu0 %v54
  %363 = vmatprep.subr.mxu0 0.0
  %364 = vmatpush1.msra.mxu0 0.0
  %365 = vmatprep.subr.mxu0 0.0
  %366 = vmatpush1.msra.mxu0 0.0
  %367 = vmatprep.subr.mxu0 0.0
  %368 = vmatpush1.msra.mxu0 0.0
  %369 = vmatprep.subr.mxu0 0.0
  %370 = vmatpush1.msra.mxu0 0.0
  %371 = vmatprep.subr.mxu0 0.0
  %372 = vmatpush1.msra.mxu0 0.0
  %373 = vmatprep.subr.mxu0 0.0
  %374 = vmatpush1.msra.mxu0 0.0
  %375 = vmatprep.subr.mxu0 0.0
  %376 = vmatpush1.msra.mxu0 0.0
  %377 = vmatprep.subr.mxu0 0.0
  %378 = vmatpush1.msra.mxu0 0.0
  %379 = vmatprep.subr.mxu0 0.0
  %380 = vmatpush1.msra.mxu0 0.0
  %381 = vmatprep.subr.mxu0 0.0
  %382 = vmatpush1.msra.mxu0 0.0
  %383 = vmatprep.subr.mxu0 0.0
  %384 = vmatpush1.msra.mxu0 0.0
  %385 = vmatprep.subr.mxu0 0.0
  %386 = vmatpush1.msra.mxu0 0.0
  %387 = vmatprep.subr.mxu0 0.0
  %388 = vmatpush1.msra.mxu0 0.0
  %389 = vmatprep.subr.mxu0 0.0
  %390 = vmatpush1.msra.mxu0 0.0
  %391 = vmatprep.subr.mxu0 0.0
  %392 = vmatpush1.msra.mxu0 0.0
  %393 = vmatprep.subr.mxu0 0.0
  %394 = vmatpush1.msra.mxu0 0.0
  %395 = vmatprep.subr.mxu0 0.0
  %396 = vmatpush1.msra.mxu0 0.0
  %397 = vmatprep.subr.mxu0 0.0
  %398 = vmatpush1.msra.mxu0 0.0
  %399 = vmatprep.subr.mxu0 0.0
  %400 = vmatpush1.msra.mxu0 0.0
  %401 = vmatprep.subr.mxu0 0.0
  %402 = vmatpush1.msra.mxu0 0.0
  %403 = vmatprep.subr.mxu0 0.0
  %404 = vmatpush1.msra.mxu0 0.0
  %405 = vmatprep.subr.mxu0 0.0
  %406 = vmatpush1.msra.mxu0 0.0
  %407 = vmatprep.subr.mxu0 0.0
  %408 = vmatpush1.msra.mxu0 0.0
  %409 = vmatprep.subr.mxu0 0.0
  %410 = vmatpush1.msra.mxu0 0.0
  %411 = vmatprep.subr.mxu0 0.0
  %412 = vmatpush1.msra.mxu0 0.0
  %413 = vmatprep.subr.mxu0 0.0
  %414 = vmatpush1.msra.mxu0 0.0
  %415 = vmatprep.subr.mxu0 0.0
  %416 = vmatpush1.msra.mxu0 0.0
  %417 = vmatprep.subr.mxu0 0.0
  %418 = vmatpush1.msra.mxu0 0.0
  %419 = vmatprep.mubr.f32.mxu0 0.0
  %420 = vmatmul.mubr.f32.gmra.mrb[0].mxu0 %v353
  %v421 = vpop.f32.mrb[0].mxu0
  %v422 = vadd.f32 %v351, %v421
  %v423 = vpop.f32.mrb[0].mxu0
  %424 = vdwg.mxu0
  %v425 = vxor.u32 %v422, 2147483648
  %v426 = vmul.f32 %v425, 1.442695
  %v427 = vpow.pop %v426
  %v428 = vadd.f32 %v427, 1.0
  %v429 = vrcp.pop %v428
  %v430 = vmul.f32 1.0, %v429
  %v431 = vtanh.pop %v422
  %v432 = vmul.f32 %v430, %v202
  %434 = vrot.lane.b32.xlu0 %v431, 64
  %v435 = vpop.permute.xlu0 %434
  %v437 = vmul.f32 %v430, %v435
  %439 = vrot.lane.b32.xlu0 %v437, 32
  %v440 = vpop.permute.xlu0 %439
  %v442 = vadd.f32 %v432, %v440
  %v443 = vtanh.pop %v442
  %445 = vrot.lane.b32.xlu0 %v443, 64
  %v446 = vpop.permute.xlu0 %445
  %v448 = vmul.f32 %v430, %v446
  %v449 = vsel %vm342, 1, 0
  %450 = vset.pattern.permute.xlu0 0
  %451 = vperm.xlu0 %450, %v449
  %v452 = vpop.permute.xlu0 %451
  %vm453 = vcmp.eq.s32.totalorder %v452, 1
  %v454 = vsel %vm453, %v448, 0.0
  %v455 = vsel %vm453, %v448, %v201
  %v456 = vsel %vm453, %v442, %v202
  %s457 = sadd.s32 %s65, 6
  %v458 = vstv %s457
  %vm459 = vcmp.lt.s32.totalorder %v458, %v50
  %461 = vrot.lane.b32.xlu0 %v336, 32
  %v462 = vpop.permute.xlu0 %461
  %v463 = vrot.slane %v210, 6
  %v464 = vrot.slane %v211, 5
  %v465 = vsel %vm81, %v464, %v463
  %v466 = vrot.slane %v212, 4
  %v467 = vsel %vm84, %v466, %v465
  %v468 = vrot.slane %v213, 3
  %v469 = vsel %vm87, %v468, %v467
  %v471 = vsel %vm90, %v462, 0
  %473 = vmatprep.subr.mxu0 0.0
  %474 = vmatpush1.msra.mxu0 %v55
  %475 = vmatprep.subr.mxu0 0.0
  %476 = vmatpush1.msra.mxu0 %v56
  %477 = vmatprep.subr.mxu0 0.0
  %478 = vmatpush1.msra.mxu0 %v57
  %479 = vmatprep.subr.mxu0 0.0
  %480 = vmatpush1.msra.mxu0 %v58
  %481 = vmatprep.subr.mxu0 0.0
  %482 = vmatpush1.msra.mxu0 0.0
  %483 = vmatprep.subr.mxu0 0.0
  %484 = vmatpush1.msra.mxu0 0.0
  %485 = vmatprep.subr.mxu0 0.0
  %486 = vmatpush1.msra.mxu0 0.0
  %487 = vmatprep.subr.mxu0 0.0
  %488 = vmatpush1.msra.mxu0 0.0
  %489 = vmatprep.subr.mxu0 0.0
  %490 = vmatpush1.msra.mxu0 0.0
  %491 = vmatprep.subr.mxu0 0.0
  %492 = vmatpush1.msra.mxu0 0.0
  %493 = vmatprep.subr.mxu0 0.0
  %494 = vmatpush1.msra.mxu0 0.0
  %495 = vmatprep.subr.mxu0 0.0
  %496 = vmatpush1.msra.mxu0 0.0
  %497 = vmatprep.subr.mxu0 0.0
  %498 = vmatpush1.msra.mxu0 0.0
  %499 = vmatprep.subr.mxu0 0.0
  %500 = vmatpush1.msra.mxu0 0.0
  %501 = vmatprep.subr.mxu0 0.0
  %502 = vmatpush1.msra.mxu0 0.0
  %503 = vmatprep.subr.mxu0 0.0
  %504 = vmatpush1.msra.mxu0 0.0
  %505 = vmatprep.subr.mxu0 0.0
  %506 = vmatpush1.msra.mxu0 0.0
  %507 = vmatprep.subr.mxu0 0.0
  %508 = vmatpush1.msra.mxu0 0.0
  %509 = vmatprep.subr.mxu0 0.0
  %510 = vmatpush1.msra.mxu0 0.0
  %511 = vmatprep.subr.mxu0 0.0
  %512 = vmatpush1.msra.mxu0 0.0
  %513 = vmatprep.subr.mxu0 0.0
  %514 = vmatpush1.msra.mxu0 0.0
  %515 = vmatprep.subr.mxu0 0.0
  %516 = vmatpush1.msra.mxu0 0.0
  %517 = vmatprep.subr.mxu0 0.0
  %518 = vmatpush1.msra.mxu0 0.0
  %519 = vmatprep.subr.mxu0 0.0
  %520 = vmatpush1.msra.mxu0 0.0
  %521 = vmatprep.subr.mxu0 0.0
  %522 = vmatpush1.msra.mxu0 0.0
  %523 = vmatprep.subr.mxu0 0.0
  %524 = vmatpush1.msra.mxu0 0.0
  %525 = vmatprep.subr.mxu0 0.0
  %526 = vmatpush1.msra.mxu0 0.0
  %527 = vmatprep.subr.mxu0 0.0
  %528 = vmatpush1.msra.mxu0 0.0
  %529 = vmatprep.subr.mxu0 0.0
  %530 = vmatpush1.msra.mxu0 0.0
  %531 = vmatprep.subr.mxu0 0.0
  %532 = vmatpush1.msra.mxu0 0.0
  %533 = vmatprep.subr.mxu0 0.0
  %534 = vmatpush1.msra.mxu0 0.0
  %535 = vmatprep.subr.mxu0 0.0
  %536 = vmatpush1.msra.mxu0 0.0
  %537 = vmatprep.mubr.f32.mxu0 0.0
  %538 = vmatmul.mubr.f32.gmra.mrb[0].mxu0 %v471
  %v539 = vpop.f32.mrb[0].mxu0
  %v540 = vadd.f32 %v469, %v539
  %v541 = vpop.f32.mrb[0].mxu0
  %542 = vdwg.mxu0
  %v543 = vxor.u32 %v540, 2147483648
  %v544 = vmul.f32 %v543, 1.442695
  %v545 = vpow.pop %v544
  %v546 = vadd.f32 %v545, 1.0
  %v547 = vrcp.pop %v546
  %v548 = vmul.f32 1.0, %v547
  %v549 = vtanh.pop %v540
  %v550 = vmul.f32 %v548, %v337
  %552 = vrot.lane.b32.xlu0 %v549, 64
  %v553 = vpop.permute.xlu0 %552
  %v555 = vmul.f32 %v548, %v553
  %557 = vrot.lane.b32.xlu0 %v555, 32
  %v558 = vpop.permute.xlu0 %557
  %v560 = vadd.f32 %v550, %v558
  %v561 = vtanh.pop %v560
  %563 = vrot.lane.b32.xlu0 %v561, 64
  %v564 = vpop.permute.xlu0 %563
  %v566 = vmul.f32 %v548, %v564
  %v567 = vsel %vm459, 1, 0
  %568 = vset.pattern.permute.xlu0 0
  %569 = vperm.xlu0 %568, %v567
  %v570 = vpop.permute.xlu0 %569
  %vm571 = vcmp.eq.s32.totalorder %v570, 1
  %v572 = vsel %vm571, %v566, 0.0
  %v573 = vsel %vm571, %v566, %v336
  %v574 = vsel %vm571, %v560, %v337
  %v575 = vadd.f32 %v338, %v454
  %v576 = vadd.f32 %v339, %v572
  %s577 = sadd.s32 %s63, 2
  %v578 = vstv %s577
  %vm579 = vcmp.lt.s32.totalorder %v578, %v50
  %v580 = vld [vmem:[%s0] sm:$0x2]
  %v581 = vld [vmem:[%s0 + $0x4] sm:$0x2]
  %v582 = vld [vmem:[%s0 + $0x8] sm:$0x2]
  %v583 = vld [vmem:[%s0 + $0xc] sm:$0x2]
  %v584 = vunpack.c.l.bf16 %v580
  %v585 = vunpack.c.l.bf16 %v581
  %v586 = vunpack.c.l.bf16 %v582
  %v587 = vunpack.c.l.bf16 %v583
  %589 = vrot.lane.b32.xlu0 %v455, 32
  %v590 = vpop.permute.xlu0 %589
  %v595 = vrot.slane %v584, 2
  %v596 = vrot.slane %v585, 1
  %v597 = vsel %vm81, %v596, %v595
  %v598 = vsel %vm84, %v586, %v597
  %v599 = vrot.slane %v587, 7
  %v600 = vsel %vm87, %v599, %v598
  %v602 = vsel %vm90, %v590, 0
  %604 = vmatprep.subr.mxu0 0.0
  %605 = vmatpush1.msra.mxu0 %v51
  %606 = vmatprep.subr.mxu0 0.0
  %607 = vmatpush1.msra.mxu0 %v52
  %608 = vmatprep.subr.mxu0 0.0
  %609 = vmatpush1.msra.mxu0 %v53
  %610 = vmatprep.subr.mxu0 0.0
  %611 = vmatpush1.msra.mxu0 %v54
  %612 = vmatprep.subr.mxu0 0.0
  %613 = vmatpush1.msra.mxu0 0.0
  %614 = vmatprep.subr.mxu0 0.0
  %615 = vmatpush1.msra.mxu0 0.0
  %616 = vmatprep.subr.mxu0 0.0
  %617 = vmatpush1.msra.mxu0 0.0
  %618 = vmatprep.subr.mxu0 0.0
  %619 = vmatpush1.msra.mxu0 0.0
  %620 = vmatprep.subr.mxu0 0.0
  %621 = vmatpush1.msra.mxu0 0.0
  %622 = vmatprep.subr.mxu0 0.0
  %623 = vmatpush1.msra.mxu0 0.0
  %624 = vmatprep.subr.mxu0 0.0
  %625 = vmatpush1.msra.mxu0 0.0
  %626 = vmatprep.subr.mxu0 0.0
  %627 = vmatpush1.msra.mxu0 0.0
  %628 = vmatprep.subr.mxu0 0.0
  %629 = vmatpush1.msra.mxu0 0.0
  %630 = vmatprep.subr.mxu0 0.0
  %631 = vmatpush1.msra.mxu0 0.0
  %632 = vmatprep.subr.mxu0 0.0
  %633 = vmatpush1.msra.mxu0 0.0
  %634 = vmatprep.subr.mxu0 0.0
  %635 = vmatpush1.msra.mxu0 0.0
  %636 = vmatprep.subr.mxu0 0.0
  %637 = vmatpush1.msra.mxu0 0.0
  %638 = vmatprep.subr.mxu0 0.0
  %639 = vmatpush1.msra.mxu0 0.0
  %640 = vmatprep.subr.mxu0 0.0
  %641 = vmatpush1.msra.mxu0 0.0
  %642 = vmatprep.subr.mxu0 0.0
  %643 = vmatpush1.msra.mxu0 0.0
  %644 = vmatprep.subr.mxu0 0.0
  %645 = vmatpush1.msra.mxu0 0.0
  %646 = vmatprep.subr.mxu0 0.0
  %647 = vmatpush1.msra.mxu0 0.0
  %648 = vmatprep.subr.mxu0 0.0
  %649 = vmatpush1.msra.mxu0 0.0
  %650 = vmatprep.subr.mxu0 0.0
  %651 = vmatpush1.msra.mxu0 0.0
  %652 = vmatprep.subr.mxu0 0.0
  %653 = vmatpush1.msra.mxu0 0.0
  %654 = vmatprep.subr.mxu0 0.0
  %655 = vmatpush1.msra.mxu0 0.0
  %656 = vmatprep.subr.mxu0 0.0
  %657 = vmatpush1.msra.mxu0 0.0
  %658 = vmatprep.subr.mxu0 0.0
  %659 = vmatpush1.msra.mxu0 0.0
  %660 = vmatprep.subr.mxu0 0.0
  %661 = vmatpush1.msra.mxu0 0.0
  %662 = vmatprep.subr.mxu0 0.0
  %663 = vmatpush1.msra.mxu0 0.0
  %664 = vmatprep.subr.mxu0 0.0
  %665 = vmatpush1.msra.mxu0 0.0
  %666 = vmatprep.subr.mxu0 0.0
  %667 = vmatpush1.msra.mxu0 0.0
  %668 = vmatprep.mubr.f32.mxu0 0.0
  %669 = vmatmul.mubr.f32.gmra.mrb[0].mxu0 %v602
  %v670 = vpop.f32.mrb[0].mxu0
  %v671 = vadd.f32 %v600, %v670
  %v672 = vpop.f32.mrb[0].mxu0
  %673 = vdwg.mxu0
  %v674 = vxor.u32 %v671, 2147483648
  %v675 = vmul.f32 %v674, 1.442695
  %v676 = vpow.pop %v675
  %v677 = vadd.f32 %v676, 1.0
  %v678 = vrcp.pop %v677
  %v679 = vmul.f32 1.0, %v678
  %v680 = vtanh.pop %v671
  %v681 = vmul.f32 %v679, %v456
  %683 = vrot.lane.b32.xlu0 %v680, 64
  %v684 = vpop.permute.xlu0 %683
  %v686 = vmul.f32 %v679, %v684
  %688 = vrot.lane.b32.xlu0 %v686, 32
  %v689 = vpop.permute.xlu0 %688
  %v691 = vadd.f32 %v681, %v689
  %v692 = vtanh.pop %v691
  %694 = vrot.lane.b32.xlu0 %v692, 64
  %v695 = vpop.permute.xlu0 %694
  %v697 = vmul.f32 %v679, %v695
  %v698 = vsel %vm579, 1, 0
  %699 = vset.pattern.permute.xlu0 0
  %700 = vperm.xlu0 %699, %v698
  %v701 = vpop.permute.xlu0 %700
  %vm702 = vcmp.eq.s32.totalorder %v701, 1
  %v703 = vsel %vm702, %v697, 0.0
  %v704 = vsel %vm702, %v697, %v455
  %v705 = vsel %vm702, %v691, %v456
  %s706 = sadd.s32 %s65, 5
  %v707 = vstv %s706
  %vm708 = vcmp.lt.s32.totalorder %v707, %v50
  %v709 = vld [vmem:[%s37] sm:$0x4]
  %v710 = vld [vmem:[%s37 + $0x4] sm:$0x4]
  %v711 = vld [vmem:[%s37 + $0x8] sm:$0x4]
  %v712 = vld [vmem:[%s37 + $0xc] sm:$0x4]
  %v713 = vunpack.c.l.bf16 %v709
  %v714 = vunpack.c.l.bf16 %v710
  %v715 = vunpack.c.l.bf16 %v711
  %v716 = vunpack.c.l.bf16 %v712
  %718 = vrot.lane.b32.xlu0 %v573, 32
  %v719 = vpop.permute.xlu0 %718
  %v724 = vrot.slane %v713, 5
  %v725 = vrot.slane %v714, 4
  %v726 = vsel %vm81, %v725, %v724
  %v727 = vrot.slane %v715, 3
  %v728 = vsel %vm84, %v727, %v726
  %v729 = vrot.slane %v716, 2
  %v730 = vsel %vm87, %v729, %v728
  %v732 = vsel %vm90, %v719, 0
  %734 = vmatprep.subr.mxu0 0.0
  %735 = vmatpush1.msra.mxu0 %v55
  %736 = vmatprep.subr.mxu0 0.0
  %737 = vmatpush1.msra.mxu0 %v56
  %738 = vmatprep.subr.mxu0 0.0
  %739 = vmatpush1.msra.mxu0 %v57
  %740 = vmatprep.subr.mxu0 0.0
  %741 = vmatpush1.msra.mxu0 %v58
  %742 = vmatprep.subr.mxu0 0.0
  %743 = vmatpush1.msra.mxu0 0.0
  %744 = vmatprep.subr.mxu0 0.0
  %745 = vmatpush1.msra.mxu0 0.0
  %746 = vmatprep.subr.mxu0 0.0
  %747 = vmatpush1.msra.mxu0 0.0
  %748 = vmatprep.subr.mxu0 0.0
  %749 = vmatpush1.msra.mxu0 0.0
  %750 = vmatprep.subr.mxu0 0.0
  %751 = vmatpush1.msra.mxu0 0.0
  %752 = vmatprep.subr.mxu0 0.0
  %753 = vmatpush1.msra.mxu0 0.0
  %754 = vmatprep.subr.mxu0 0.0
  %755 = vmatpush1.msra.mxu0 0.0
  %756 = vmatprep.subr.mxu0 0.0
  %757 = vmatpush1.msra.mxu0 0.0
  %758 = vmatprep.subr.mxu0 0.0
  %759 = vmatpush1.msra.mxu0 0.0
  %760 = vmatprep.subr.mxu0 0.0
  %761 = vmatpush1.msra.mxu0 0.0
  %762 = vmatprep.subr.mxu0 0.0
  %763 = vmatpush1.msra.mxu0 0.0
  %764 = vmatprep.subr.mxu0 0.0
  %765 = vmatpush1.msra.mxu0 0.0
  %766 = vmatprep.subr.mxu0 0.0
  %767 = vmatpush1.msra.mxu0 0.0
  %768 = vmatprep.subr.mxu0 0.0
  %769 = vmatpush1.msra.mxu0 0.0
  %770 = vmatprep.subr.mxu0 0.0
  %771 = vmatpush1.msra.mxu0 0.0
  %772 = vmatprep.subr.mxu0 0.0
  %773 = vmatpush1.msra.mxu0 0.0
  %774 = vmatprep.subr.mxu0 0.0
  %775 = vmatpush1.msra.mxu0 0.0
  %776 = vmatprep.subr.mxu0 0.0
  %777 = vmatpush1.msra.mxu0 0.0
  %778 = vmatprep.subr.mxu0 0.0
  %779 = vmatpush1.msra.mxu0 0.0
  %780 = vmatprep.subr.mxu0 0.0
  %781 = vmatpush1.msra.mxu0 0.0
  %782 = vmatprep.subr.mxu0 0.0
  %783 = vmatpush1.msra.mxu0 0.0
  %784 = vmatprep.subr.mxu0 0.0
  %785 = vmatpush1.msra.mxu0 0.0
  %786 = vmatprep.subr.mxu0 0.0
  %787 = vmatpush1.msra.mxu0 0.0
  %788 = vmatprep.subr.mxu0 0.0
  %789 = vmatpush1.msra.mxu0 0.0
  %790 = vmatprep.subr.mxu0 0.0
  %791 = vmatpush1.msra.mxu0 0.0
  %792 = vmatprep.subr.mxu0 0.0
  %793 = vmatpush1.msra.mxu0 0.0
  %794 = vmatprep.subr.mxu0 0.0
  %795 = vmatpush1.msra.mxu0 0.0
  %796 = vmatprep.subr.mxu0 0.0
  %797 = vmatpush1.msra.mxu0 0.0
  %798 = vmatprep.mubr.f32.mxu0 0.0
  %799 = vmatmul.mubr.f32.gmra.mrb[0].mxu0 %v732
  %v800 = vpop.f32.mrb[0].mxu0
  %v801 = vadd.f32 %v730, %v800
  %v802 = vpop.f32.mrb[0].mxu0
  %803 = vdwg.mxu0
  %v804 = vxor.u32 %v801, 2147483648
  %v805 = vmul.f32 %v804, 1.442695
  %v806 = vpow.pop %v805
  %v807 = vadd.f32 %v806, 1.0
  %v808 = vrcp.pop %v807
  %v809 = vmul.f32 1.0, %v808
  %v810 = vtanh.pop %v801
  %v811 = vmul.f32 %v809, %v574
  %813 = vrot.lane.b32.xlu0 %v810, 64
  %v814 = vpop.permute.xlu0 %813
  %v816 = vmul.f32 %v809, %v814
  %818 = vrot.lane.b32.xlu0 %v816, 32
  %v819 = vpop.permute.xlu0 %818
  %v821 = vadd.f32 %v811, %v819
  %v822 = vtanh.pop %v821
  %824 = vrot.lane.b32.xlu0 %v822, 64
  %v825 = vpop.permute.xlu0 %824
  %v827 = vmul.f32 %v809, %v825
  %v828 = vsel %vm708, 1, 0
  %829 = vset.pattern.permute.xlu0 0
  %830 = vperm.xlu0 %829, %v828
  %v831 = vpop.permute.xlu0 %830
  %vm832 = vcmp.eq.s32.totalorder %v831, 1
  %v833 = vsel %vm832, %v827, 0.0
  %v834 = vsel %vm832, %v827, %v573
  %v835 = vsel %vm832, %v821, %v574
  %v836 = vadd.f32 %v575, %v703
  %v837 = vadd.f32 %v576, %v833
  %s838 = sadd.s32 %s63, 3
  %v839 = vstv %s838
  %vm840 = vcmp.lt.s32.totalorder %v839, %v50
  %842 = vrot.lane.b32.xlu0 %v704, 32
  %v843 = vpop.permute.xlu0 %842
  %v844 = vrot.slane %v584, 3
  %v845 = vrot.slane %v585, 2
  %v846 = vsel %vm81, %v845, %v844
  %v847 = vrot.slane %v586, 1
  %v848 = vsel %vm84, %v847, %v846
  %v849 = vsel %vm87, %v587, %v848
  %v851 = vsel %vm90, %v843, 0
  %853 = vmatprep.subr.mxu0 0.0
  %854 = vmatpush1.msra.mxu0 %v51
  %855 = vmatprep.subr.mxu0 0.0
  %856 = vmatpush1.msra.mxu0 %v52
  %857 = vmatprep.subr.mxu0 0.0
  %858 = vmatpush1.msra.mxu0 %v53
  %859 = vmatprep.subr.mxu0 0.0
  %860 = vmatpush1.msra.mxu0 %v54
  %861 = vmatprep.subr.mxu0 0.0
  %862 = vmatpush1.msra.mxu0 0.0
  %863 = vmatprep.subr.mxu0 0.0
  %864 = vmatpush1.msra.mxu0 0.0
  %865 = vmatprep.subr.mxu0 0.0
  %866 = vmatpush1.msra.mxu0 0.0
  %867 = vmatprep.subr.mxu0 0.0
  %868 = vmatpush1.msra.mxu0 0.0
  %869 = vmatprep.subr.mxu0 0.0
  %870 = vmatpush1.msra.mxu0 0.0
  %871 = vmatprep.subr.mxu0 0.0
  %872 = vmatpush1.msra.mxu0 0.0
  %873 = vmatprep.subr.mxu0 0.0
  %874 = vmatpush1.msra.mxu0 0.0
  %875 = vmatprep.subr.mxu0 0.0
  %876 = vmatpush1.msra.mxu0 0.0
  %877 = vmatprep.subr.mxu0 0.0
  %878 = vmatpush1.msra.mxu0 0.0
  %879 = vmatprep.subr.mxu0 0.0
  %880 = vmatpush1.msra.mxu0 0.0
  %881 = vmatprep.subr.mxu0 0.0
  %882 = vmatpush1.msra.mxu0 0.0
  %883 = vmatprep.subr.mxu0 0.0
  %884 = vmatpush1.msra.mxu0 0.0
  %885 = vmatprep.subr.mxu0 0.0
  %886 = vmatpush1.msra.mxu0 0.0
  %887 = vmatprep.subr.mxu0 0.0
  %888 = vmatpush1.msra.mxu0 0.0
  %889 = vmatprep.subr.mxu0 0.0
  %890 = vmatpush1.msra.mxu0 0.0
  %891 = vmatprep.subr.mxu0 0.0
  %892 = vmatpush1.msra.mxu0 0.0
  %893 = vmatprep.subr.mxu0 0.0
  %894 = vmatpush1.msra.mxu0 0.0
  %895 = vmatprep.subr.mxu0 0.0
  %896 = vmatpush1.msra.mxu0 0.0
  %897 = vmatprep.subr.mxu0 0.0
  %898 = vmatpush1.msra.mxu0 0.0
  %899 = vmatprep.subr.mxu0 0.0
  %900 = vmatpush1.msra.mxu0 0.0
  %901 = vmatprep.subr.mxu0 0.0
  %902 = vmatpush1.msra.mxu0 0.0
  %903 = vmatprep.subr.mxu0 0.0
  %904 = vmatpush1.msra.mxu0 0.0
  %905 = vmatprep.subr.mxu0 0.0
  %906 = vmatpush1.msra.mxu0 0.0
  %907 = vmatprep.subr.mxu0 0.0
  %908 = vmatpush1.msra.mxu0 0.0
  %909 = vmatprep.subr.mxu0 0.0
  %910 = vmatpush1.msra.mxu0 0.0
  %911 = vmatprep.subr.mxu0 0.0
  %912 = vmatpush1.msra.mxu0 0.0
  %913 = vmatprep.subr.mxu0 0.0
  %914 = vmatpush1.msra.mxu0 0.0
  %915 = vmatprep.subr.mxu0 0.0
  %916 = vmatpush1.msra.mxu0 0.0
  %917 = vmatprep.mubr.f32.mxu0 0.0
  %918 = vmatmul.mubr.f32.gmra.mrb[0].mxu0 %v851
  %v919 = vpop.f32.mrb[0].mxu0
  %v920 = vadd.f32 %v849, %v919
  %v921 = vpop.f32.mrb[0].mxu0
  %922 = vdwg.mxu0
  %v923 = vxor.u32 %v920, 2147483648
  %v924 = vmul.f32 %v923, 1.442695
  %v925 = vpow.pop %v924
  %v926 = vadd.f32 %v925, 1.0
  %v927 = vrcp.pop %v926
  %v928 = vmul.f32 1.0, %v927
  %v929 = vtanh.pop %v920
  %v930 = vmul.f32 %v928, %v705
  %932 = vrot.lane.b32.xlu0 %v929, 64
  %v933 = vpop.permute.xlu0 %932
  %v935 = vmul.f32 %v928, %v933
  %937 = vrot.lane.b32.xlu0 %v935, 32
  %v938 = vpop.permute.xlu0 %937
  %v940 = vadd.f32 %v930, %v938
  %v941 = vtanh.pop %v940
  %943 = vrot.lane.b32.xlu0 %v941, 64
  %v944 = vpop.permute.xlu0 %943
  %v946 = vmul.f32 %v928, %v944
  %v947 = vsel %vm840, 1, 0
  %948 = vset.pattern.permute.xlu0 0
  %949 = vperm.xlu0 %948, %v947
  %v950 = vpop.permute.xlu0 %949
  %vm951 = vcmp.eq.s32.totalorder %v950, 1
  %v952 = vsel %vm951, %v946, 0.0
  %v953 = vsel %vm951, %v946, %v704
  %v954 = vsel %vm951, %v940, %v705
  %s955 = sadd.s32 %s65, 4
  %v956 = vstv %s955
  %vm957 = vcmp.lt.s32.totalorder %v956, %v50
  %959 = vrot.lane.b32.xlu0 %v834, 32
  %v960 = vpop.permute.xlu0 %959
  %v961 = vrot.slane %v713, 4
  %v962 = vrot.slane %v714, 3
  %v963 = vsel %vm81, %v962, %v961
  %v964 = vrot.slane %v715, 2
  %v965 = vsel %vm84, %v964, %v963
  %v966 = vrot.slane %v716, 1
  %v967 = vsel %vm87, %v966, %v965
  %v969 = vsel %vm90, %v960, 0
  %971 = vmatprep.subr.mxu0 0.0
  %972 = vmatpush1.msra.mxu0 %v55
  %973 = vmatprep.subr.mxu0 0.0
  %974 = vmatpush1.msra.mxu0 %v56
  %975 = vmatprep.subr.mxu0 0.0
  %976 = vmatpush1.msra.mxu0 %v57
  %977 = vmatprep.subr.mxu0 0.0
  %978 = vmatpush1.msra.mxu0 %v58
  %979 = vmatprep.subr.mxu0 0.0
  %980 = vmatpush1.msra.mxu0 0.0
  %981 = vmatprep.subr.mxu0 0.0
  %982 = vmatpush1.msra.mxu0 0.0
  %983 = vmatprep.subr.mxu0 0.0
  %984 = vmatpush1.msra.mxu0 0.0
  %985 = vmatprep.subr.mxu0 0.0
  %986 = vmatpush1.msra.mxu0 0.0
  %987 = vmatprep.subr.mxu0 0.0
  %988 = vmatpush1.msra.mxu0 0.0
  %989 = vmatprep.subr.mxu0 0.0
  %990 = vmatpush1.msra.mxu0 0.0
  %991 = vmatprep.subr.mxu0 0.0
  %992 = vmatpush1.msra.mxu0 0.0
  %993 = vmatprep.subr.mxu0 0.0
  %994 = vmatpush1.msra.mxu0 0.0
  %995 = vmatprep.subr.mxu0 0.0
  %996 = vmatpush1.msra.mxu0 0.0
  %997 = vmatprep.subr.mxu0 0.0
  %998 = vmatpush1.msra.mxu0 0.0
  %999 = vmatprep.subr.mxu0 0.0
  %1000 = vmatpush1.msra.mxu0 0.0
  %1001 = vmatprep.subr.mxu0 0.0
  %1002 = vmatpush1.msra.mxu0 0.0
  %1003 = vmatprep.subr.mxu0 0.0
  %1004 = vmatpush1.msra.mxu0 0.0
  %1005 = vmatprep.subr.mxu0 0.0
  %1006 = vmatpush1.msra.mxu0 0.0
  %1007 = vmatprep.subr.mxu0 0.0
  %1008 = vmatpush1.msra.mxu0 0.0
  %1009 = vmatprep.subr.mxu0 0.0
  %1010 = vmatpush1.msra.mxu0 0.0
  %1011 = vmatprep.subr.mxu0 0.0
  %1012 = vmatpush1.msra.mxu0 0.0
  %1013 = vmatprep.subr.mxu0 0.0
  %1014 = vmatpush1.msra.mxu0 0.0
  %1015 = vmatprep.subr.mxu0 0.0
  %1016 = vmatpush1.msra.mxu0 0.0
  %1017 = vmatprep.subr.mxu0 0.0
  %1018 = vmatpush1.msra.mxu0 0.0
  %1019 = vmatprep.subr.mxu0 0.0
  %1020 = vmatpush1.msra.mxu0 0.0
  %1021 = vmatprep.subr.mxu0 0.0
  %1022 = vmatpush1.msra.mxu0 0.0
  %1023 = vmatprep.subr.mxu0 0.0
  %1024 = vmatpush1.msra.mxu0 0.0
  %1025 = vmatprep.subr.mxu0 0.0
  %1026 = vmatpush1.msra.mxu0 0.0
  %1027 = vmatprep.subr.mxu0 0.0
  %1028 = vmatpush1.msra.mxu0 0.0
  %1029 = vmatprep.subr.mxu0 0.0
  %1030 = vmatpush1.msra.mxu0 0.0
  %1031 = vmatprep.subr.mxu0 0.0
  %1032 = vmatpush1.msra.mxu0 0.0
  %1033 = vmatprep.subr.mxu0 0.0
  %1034 = vmatpush1.msra.mxu0 0.0
  %1035 = vmatprep.mubr.f32.mxu0 0.0
  %1036 = vmatmul.mubr.f32.gmra.mrb[0].mxu0 %v969
  %v1037 = vpop.f32.mrb[0].mxu0
  %v1038 = vadd.f32 %v967, %v1037
  %v1039 = vpop.f32.mrb[0].mxu0
  %1040 = vdwg.mxu0
  %v1041 = vxor.u32 %v1038, 2147483648
  %v1042 = vmul.f32 %v1041, 1.442695
  %v1043 = vpow.pop %v1042
  %v1044 = vadd.f32 %v1043, 1.0
  %v1045 = vrcp.pop %v1044
  %v1046 = vmul.f32 1.0, %v1045
  %v1047 = vtanh.pop %v1038
  %v1048 = vmul.f32 %v1046, %v835
  %1050 = vrot.lane.b32.xlu0 %v1047, 64
  %v1051 = vpop.permute.xlu0 %1050
  %v1053 = vmul.f32 %v1046, %v1051
  %1055 = vrot.lane.b32.xlu0 %v1053, 32
  %v1056 = vpop.permute.xlu0 %1055
  %v1058 = vadd.f32 %v1048, %v1056
  %v1059 = vtanh.pop %v1058
  %1061 = vrot.lane.b32.xlu0 %v1059, 64
  %v1062 = vpop.permute.xlu0 %1061
  %v1064 = vmul.f32 %v1046, %v1062
  %v1065 = vsel %vm957, 1, 0
  %1066 = vset.pattern.permute.xlu0 0
  %1067 = vperm.xlu0 %1066, %v1065
  %v1068 = vpop.permute.xlu0 %1067
  %vm1069 = vcmp.eq.s32.totalorder %v1068, 1
  %v1070 = vsel %vm1069, %v1064, 0.0
  %v1071 = vsel %vm1069, %v1064, %v834
  %v1072 = vsel %vm1069, %v1058, %v835
  %v1073 = vadd.f32 %v836, %v952
  %v1074 = vadd.f32 %v837, %v1070
  %s1075 = sadd.s32 %s63, 4
  %v1076 = vstv %s1075
  %vm1077 = vcmp.lt.s32.totalorder %v1076, %v50
  %v1078 = vld [vmem:[%s0] sm:$0x4]
  %v1079 = vld [vmem:[%s0 + $0x4] sm:$0x4]
  %v1080 = vld [vmem:[%s0 + $0x8] sm:$0x4]
  %v1081 = vld [vmem:[%s0 + $0xc] sm:$0x4]
  %v1082 = vunpack.c.l.bf16 %v1078
  %v1083 = vunpack.c.l.bf16 %v1079
  %v1084 = vunpack.c.l.bf16 %v1080
  %v1085 = vunpack.c.l.bf16 %v1081
  %1087 = vrot.lane.b32.xlu0 %v953, 32
  %v1088 = vpop.permute.xlu0 %1087
  %v1093 = vrot.slane %v1082, 4
  %v1094 = vrot.slane %v1083, 3
  %v1095 = vsel %vm81, %v1094, %v1093
  %v1096 = vrot.slane %v1084, 2
  %v1097 = vsel %vm84, %v1096, %v1095
  %v1098 = vrot.slane %v1085, 1
  %v1099 = vsel %vm87, %v1098, %v1097
  %v1101 = vsel %vm90, %v1088, 0
  %1103 = vmatprep.subr.mxu0 0.0
  %1104 = vmatpush1.msra.mxu0 %v51
  %1105 = vmatprep.subr.mxu0 0.0
  %1106 = vmatpush1.msra.mxu0 %v52
  %1107 = vmatprep.subr.mxu0 0.0
  %1108 = vmatpush1.msra.mxu0 %v53
  %1109 = vmatprep.subr.mxu0 0.0
  %1110 = vmatpush1.msra.mxu0 %v54
  %1111 = vmatprep.subr.mxu0 0.0
  %1112 = vmatpush1.msra.mxu0 0.0
  %1113 = vmatprep.subr.mxu0 0.0
  %1114 = vmatpush1.msra.mxu0 0.0
  %1115 = vmatprep.subr.mxu0 0.0
  %1116 = vmatpush1.msra.mxu0 0.0
  %1117 = vmatprep.subr.mxu0 0.0
  %1118 = vmatpush1.msra.mxu0 0.0
  %1119 = vmatprep.subr.mxu0 0.0
  %1120 = vmatpush1.msra.mxu0 0.0
  %1121 = vmatprep.subr.mxu0 0.0
  %1122 = vmatpush1.msra.mxu0 0.0
  %1123 = vmatprep.subr.mxu0 0.0
  %1124 = vmatpush1.msra.mxu0 0.0
  %1125 = vmatprep.subr.mxu0 0.0
  %1126 = vmatpush1.msra.mxu0 0.0
  %1127 = vmatprep.subr.mxu0 0.0
  %1128 = vmatpush1.msra.mxu0 0.0
  %1129 = vmatprep.subr.mxu0 0.0
  %1130 = vmatpush1.msra.mxu0 0.0
  %1131 = vmatprep.subr.mxu0 0.0
  %1132 = vmatpush1.msra.mxu0 0.0
  %1133 = vmatprep.subr.mxu0 0.0
  %1134 = vmatpush1.msra.mxu0 0.0
  %1135 = vmatprep.subr.mxu0 0.0
  %1136 = vmatpush1.msra.mxu0 0.0
  %1137 = vmatprep.subr.mxu0 0.0
  %1138 = vmatpush1.msra.mxu0 0.0
  %1139 = vmatprep.subr.mxu0 0.0
  %1140 = vmatpush1.msra.mxu0 0.0
  %1141 = vmatprep.subr.mxu0 0.0
  %1142 = vmatpush1.msra.mxu0 0.0
  %1143 = vmatprep.subr.mxu0 0.0
  %1144 = vmatpush1.msra.mxu0 0.0
  %1145 = vmatprep.subr.mxu0 0.0
  %1146 = vmatpush1.msra.mxu0 0.0
  %1147 = vmatprep.subr.mxu0 0.0
  %1148 = vmatpush1.msra.mxu0 0.0
  %1149 = vmatprep.subr.mxu0 0.0
  %1150 = vmatpush1.msra.mxu0 0.0
  %1151 = vmatprep.subr.mxu0 0.0
  %1152 = vmatpush1.msra.mxu0 0.0
  %1153 = vmatprep.subr.mxu0 0.0
  %1154 = vmatpush1.msra.mxu0 0.0
  %1155 = vmatprep.subr.mxu0 0.0
  %1156 = vmatpush1.msra.mxu0 0.0
  %1157 = vmatprep.subr.mxu0 0.0
  %1158 = vmatpush1.msra.mxu0 0.0
  %1159 = vmatprep.subr.mxu0 0.0
  %1160 = vmatpush1.msra.mxu0 0.0
  %1161 = vmatprep.subr.mxu0 0.0
  %1162 = vmatpush1.msra.mxu0 0.0
  %1163 = vmatprep.subr.mxu0 0.0
  %1164 = vmatpush1.msra.mxu0 0.0
  %1165 = vmatprep.subr.mxu0 0.0
  %1166 = vmatpush1.msra.mxu0 0.0
  %1167 = vmatprep.mubr.f32.mxu0 0.0
  %1168 = vmatmul.mubr.f32.gmra.mrb[0].mxu0 %v1101
  %v1169 = vpop.f32.mrb[0].mxu0
  %v1170 = vadd.f32 %v1099, %v1169
  %v1171 = vpop.f32.mrb[0].mxu0
  %1172 = vdwg.mxu0
  %v1173 = vxor.u32 %v1170, 2147483648
  %v1174 = vmul.f32 %v1173, 1.442695
  %v1175 = vpow.pop %v1174
  %v1176 = vadd.f32 %v1175, 1.0
  %v1177 = vrcp.pop %v1176
  %v1178 = vmul.f32 1.0, %v1177
  %v1179 = vtanh.pop %v1170
  %v1180 = vmul.f32 %v1178, %v954
  %1182 = vrot.lane.b32.xlu0 %v1179, 64
  %v1183 = vpop.permute.xlu0 %1182
  %v1185 = vmul.f32 %v1178, %v1183
  %1187 = vrot.lane.b32.xlu0 %v1185, 32
  %v1188 = vpop.permute.xlu0 %1187
  %v1190 = vadd.f32 %v1180, %v1188
  %v1191 = vtanh.pop %v1190
  %1193 = vrot.lane.b32.xlu0 %v1191, 64
  %v1194 = vpop.permute.xlu0 %1193
  %v1196 = vmul.f32 %v1178, %v1194
  %v1197 = vsel %vm1077, 1, 0
  %1198 = vset.pattern.permute.xlu0 0
  %1199 = vperm.xlu0 %1198, %v1197
  %v1200 = vpop.permute.xlu0 %1199
  %vm1201 = vcmp.eq.s32.totalorder %v1200, 1
  %v1202 = vsel %vm1201, %v1196, 0.0
  %v1203 = vsel %vm1201, %v1196, %v953
  %v1204 = vsel %vm1201, %v1190, %v954
  %s1205 = sadd.s32 %s65, 3
  %v1206 = vstv %s1205
  %vm1207 = vcmp.lt.s32.totalorder %v1206, %v50
  %v1208 = vld [vmem:[%s37] sm:$0x2]
  %v1209 = vld [vmem:[%s37 + $0x4] sm:$0x2]
  %v1210 = vld [vmem:[%s37 + $0x8] sm:$0x2]
  %v1211 = vld [vmem:[%s37 + $0xc] sm:$0x2]
  %v1212 = vunpack.c.l.bf16 %v1208
  %v1213 = vunpack.c.l.bf16 %v1209
  %v1214 = vunpack.c.l.bf16 %v1210
  %v1215 = vunpack.c.l.bf16 %v1211
  %1217 = vrot.lane.b32.xlu0 %v1071, 32
  %v1218 = vpop.permute.xlu0 %1217
  %v1223 = vrot.slane %v1212, 3
  %v1224 = vrot.slane %v1213, 2
  %v1225 = vsel %vm81, %v1224, %v1223
  %v1226 = vrot.slane %v1214, 1
  %v1227 = vsel %vm84, %v1226, %v1225
  %v1228 = vsel %vm87, %v1215, %v1227
  %v1230 = vsel %vm90, %v1218, 0
  %1232 = vmatprep.subr.mxu0 0.0
  %1233 = vmatpush1.msra.mxu0 %v55
  %1234 = vmatprep.subr.mxu0 0.0
  %1235 = vmatpush1.msra.mxu0 %v56
  %1236 = vmatprep.subr.mxu0 0.0
  %1237 = vmatpush1.msra.mxu0 %v57
  %1238 = vmatprep.subr.mxu0 0.0
  %1239 = vmatpush1.msra.mxu0 %v58
  %1240 = vmatprep.subr.mxu0 0.0
  %1241 = vmatpush1.msra.mxu0 0.0
  %1242 = vmatprep.subr.mxu0 0.0
  %1243 = vmatpush1.msra.mxu0 0.0
  %1244 = vmatprep.subr.mxu0 0.0
  %1245 = vmatpush1.msra.mxu0 0.0
  %1246 = vmatprep.subr.mxu0 0.0
  %1247 = vmatpush1.msra.mxu0 0.0
  %1248 = vmatprep.subr.mxu0 0.0
  %1249 = vmatpush1.msra.mxu0 0.0
  %1250 = vmatprep.subr.mxu0 0.0
  %1251 = vmatpush1.msra.mxu0 0.0
  %1252 = vmatprep.subr.mxu0 0.0
  %1253 = vmatpush1.msra.mxu0 0.0
  %1254 = vmatprep.subr.mxu0 0.0
  %1255 = vmatpush1.msra.mxu0 0.0
  %1256 = vmatprep.subr.mxu0 0.0
  %1257 = vmatpush1.msra.mxu0 0.0
  %1258 = vmatprep.subr.mxu0 0.0
  %1259 = vmatpush1.msra.mxu0 0.0
  %1260 = vmatprep.subr.mxu0 0.0
  %1261 = vmatpush1.msra.mxu0 0.0
  %1262 = vmatprep.subr.mxu0 0.0
  %1263 = vmatpush1.msra.mxu0 0.0
  %1264 = vmatprep.subr.mxu0 0.0
  %1265 = vmatpush1.msra.mxu0 0.0
  %1266 = vmatprep.subr.mxu0 0.0
  %1267 = vmatpush1.msra.mxu0 0.0
  %1268 = vmatprep.subr.mxu0 0.0
  %1269 = vmatpush1.msra.mxu0 0.0
  %1270 = vmatprep.subr.mxu0 0.0
  %1271 = vmatpush1.msra.mxu0 0.0
  %1272 = vmatprep.subr.mxu0 0.0
  %1273 = vmatpush1.msra.mxu0 0.0
  %1274 = vmatprep.subr.mxu0 0.0
  %1275 = vmatpush1.msra.mxu0 0.0
  %1276 = vmatprep.subr.mxu0 0.0
  %1277 = vmatpush1.msra.mxu0 0.0
  %1278 = vmatprep.subr.mxu0 0.0
  %1279 = vmatpush1.msra.mxu0 0.0
  %1280 = vmatprep.subr.mxu0 0.0
  %1281 = vmatpush1.msra.mxu0 0.0
  %1282 = vmatprep.subr.mxu0 0.0
  %1283 = vmatpush1.msra.mxu0 0.0
  %1284 = vmatprep.subr.mxu0 0.0
  %1285 = vmatpush1.msra.mxu0 0.0
  %1286 = vmatprep.subr.mxu0 0.0
  %1287 = vmatpush1.msra.mxu0 0.0
  %1288 = vmatprep.subr.mxu0 0.0
  %1289 = vmatpush1.msra.mxu0 0.0
  %1290 = vmatprep.subr.mxu0 0.0
  %1291 = vmatpush1.msra.mxu0 0.0
  %1292 = vmatprep.subr.mxu0 0.0
  %1293 = vmatpush1.msra.mxu0 0.0
  %1294 = vmatprep.subr.mxu0 0.0
  %1295 = vmatpush1.msra.mxu0 0.0
  %1296 = vmatprep.mubr.f32.mxu0 0.0
  %1297 = vmatmul.mubr.f32.gmra.mrb[0].mxu0 %v1230
  %v1298 = vpop.f32.mrb[0].mxu0
  %v1299 = vadd.f32 %v1228, %v1298
  %v1300 = vpop.f32.mrb[0].mxu0
  %1301 = vdwg.mxu0
  %v1302 = vxor.u32 %v1299, 2147483648
  %v1303 = vmul.f32 %v1302, 1.442695
  %v1304 = vpow.pop %v1303
  %v1305 = vadd.f32 %v1304, 1.0
  %v1306 = vrcp.pop %v1305
  %v1307 = vmul.f32 1.0, %v1306
  %v1308 = vtanh.pop %v1299
  %v1309 = vmul.f32 %v1307, %v1072
  %1311 = vrot.lane.b32.xlu0 %v1308, 64
  %v1312 = vpop.permute.xlu0 %1311
  %v1314 = vmul.f32 %v1307, %v1312
  %1316 = vrot.lane.b32.xlu0 %v1314, 32
  %v1317 = vpop.permute.xlu0 %1316
  %v1319 = vadd.f32 %v1309, %v1317
  %v1320 = vtanh.pop %v1319
  %1322 = vrot.lane.b32.xlu0 %v1320, 64
  %v1323 = vpop.permute.xlu0 %1322
  %v1325 = vmul.f32 %v1307, %v1323
  %v1326 = vsel %vm1207, 1, 0
  %1327 = vset.pattern.permute.xlu0 0
  %1328 = vperm.xlu0 %1327, %v1326
  %v1329 = vpop.permute.xlu0 %1328
  %vm1330 = vcmp.eq.s32.totalorder %v1329, 1
  %v1331 = vsel %vm1330, %v1325, 0.0
  %v1332 = vsel %vm1330, %v1325, %v1071
  %v1333 = vsel %vm1330, %v1319, %v1072
  %v1334 = vadd.f32 %v1073, %v1202
  %v1335 = vadd.f32 %v1074, %v1331
  %s1336 = sadd.s32 %s63, 5
  %v1337 = vstv %s1336
  %vm1338 = vcmp.lt.s32.totalorder %v1337, %v50
  %1340 = vrot.lane.b32.xlu0 %v1203, 32
  %v1341 = vpop.permute.xlu0 %1340
  %v1342 = vrot.slane %v1082, 5
  %v1343 = vrot.slane %v1083, 4
  %v1344 = vsel %vm81, %v1343, %v1342
  %v1345 = vrot.slane %v1084, 3
  %v1346 = vsel %vm84, %v1345, %v1344
  %v1347 = vrot.slane %v1085, 2
  %v1348 = vsel %vm87, %v1347, %v1346
  %v1350 = vsel %vm90, %v1341, 0
  %1352 = vmatprep.subr.mxu0 0.0
  %1353 = vmatpush1.msra.mxu0 %v51
  %1354 = vmatprep.subr.mxu0 0.0
  %1355 = vmatpush1.msra.mxu0 %v52
  %1356 = vmatprep.subr.mxu0 0.0
  %1357 = vmatpush1.msra.mxu0 %v53
  %1358 = vmatprep.subr.mxu0 0.0
  %1359 = vmatpush1.msra.mxu0 %v54
  %1360 = vmatprep.subr.mxu0 0.0
  %1361 = vmatpush1.msra.mxu0 0.0
  %1362 = vmatprep.subr.mxu0 0.0
  %1363 = vmatpush1.msra.mxu0 0.0
  %1364 = vmatprep.subr.mxu0 0.0
  %1365 = vmatpush1.msra.mxu0 0.0
  %1366 = vmatprep.subr.mxu0 0.0
  %1367 = vmatpush1.msra.mxu0 0.0
  %1368 = vmatprep.subr.mxu0 0.0
  %1369 = vmatpush1.msra.mxu0 0.0
  %1370 = vmatprep.subr.mxu0 0.0
  %1371 = vmatpush1.msra.mxu0 0.0
  %1372 = vmatprep.subr.mxu0 0.0
  %1373 = vmatpush1.msra.mxu0 0.0
  %1374 = vmatprep.subr.mxu0 0.0
  %1375 = vmatpush1.msra.mxu0 0.0
  %1376 = vmatprep.subr.mxu0 0.0
  %1377 = vmatpush1.msra.mxu0 0.0
  %1378 = vmatprep.subr.mxu0 0.0
  %1379 = vmatpush1.msra.mxu0 0.0
  %1380 = vmatprep.subr.mxu0 0.0
  %1381 = vmatpush1.msra.mxu0 0.0
  %1382 = vmatprep.subr.mxu0 0.0
  %1383 = vmatpush1.msra.mxu0 0.0
  %1384 = vmatprep.subr.mxu0 0.0
  %1385 = vmatpush1.msra.mxu0 0.0
  %1386 = vmatprep.subr.mxu0 0.0
  %1387 = vmatpush1.msra.mxu0 0.0
  %1388 = vmatprep.subr.mxu0 0.0
  %1389 = vmatpush1.msra.mxu0 0.0
  %1390 = vmatprep.subr.mxu0 0.0
  %1391 = vmatpush1.msra.mxu0 0.0
  %1392 = vmatprep.subr.mxu0 0.0
  %1393 = vmatpush1.msra.mxu0 0.0
  %1394 = vmatprep.subr.mxu0 0.0
  %1395 = vmatpush1.msra.mxu0 0.0
  %1396 = vmatprep.subr.mxu0 0.0
  %1397 = vmatpush1.msra.mxu0 0.0
  %1398 = vmatprep.subr.mxu0 0.0
  %1399 = vmatpush1.msra.mxu0 0.0
  %1400 = vmatprep.subr.mxu0 0.0
  %1401 = vmatpush1.msra.mxu0 0.0
  %1402 = vmatprep.subr.mxu0 0.0
  %1403 = vmatpush1.msra.mxu0 0.0
  %1404 = vmatprep.subr.mxu0 0.0
  %1405 = vmatpush1.msra.mxu0 0.0
  %1406 = vmatprep.subr.mxu0 0.0
  %1407 = vmatpush1.msra.mxu0 0.0
  %1408 = vmatprep.subr.mxu0 0.0
  %1409 = vmatpush1.msra.mxu0 0.0
  %1410 = vmatprep.subr.mxu0 0.0
  %1411 = vmatpush1.msra.mxu0 0.0
  %1412 = vmatprep.subr.mxu0 0.0
  %1413 = vmatpush1.msra.mxu0 0.0
  %1414 = vmatprep.subr.mxu0 0.0
  %1415 = vmatpush1.msra.mxu0 0.0
  %1416 = vmatprep.mubr.f32.mxu0 0.0
  %1417 = vmatmul.mubr.f32.gmra.mrb[0].mxu0 %v1350
  %v1418 = vpop.f32.mrb[0].mxu0
  %v1419 = vadd.f32 %v1348, %v1418
  %v1420 = vpop.f32.mrb[0].mxu0
  %1421 = vdwg.mxu0
  %v1422 = vxor.u32 %v1419, 2147483648
  %v1423 = vmul.f32 %v1422, 1.442695
  %v1424 = vpow.pop %v1423
  %v1425 = vadd.f32 %v1424, 1.0
  %v1426 = vrcp.pop %v1425
  %v1427 = vmul.f32 1.0, %v1426
  %v1428 = vtanh.pop %v1419
  %v1429 = vmul.f32 %v1427, %v1204
  %1431 = vrot.lane.b32.xlu0 %v1428, 64
  %v1432 = vpop.permute.xlu0 %1431
  %v1434 = vmul.f32 %v1427, %v1432
  %1436 = vrot.lane.b32.xlu0 %v1434, 32
  %v1437 = vpop.permute.xlu0 %1436
  %v1439 = vadd.f32 %v1429, %v1437
  %v1440 = vtanh.pop %v1439
  %1442 = vrot.lane.b32.xlu0 %v1440, 64
  %v1443 = vpop.permute.xlu0 %1442
  %v1445 = vmul.f32 %v1427, %v1443
  %v1446 = vsel %vm1338, 1, 0
  %1447 = vset.pattern.permute.xlu0 0
  %1448 = vperm.xlu0 %1447, %v1446
  %v1449 = vpop.permute.xlu0 %1448
  %vm1450 = vcmp.eq.s32.totalorder %v1449, 1
  %v1451 = vsel %vm1450, %v1445, 0.0
  %v1452 = vsel %vm1450, %v1445, %v1203
  %v1453 = vsel %vm1450, %v1439, %v1204
  %s1454 = sadd.s32 %s65, 2
  %v1455 = vstv %s1454
  %vm1456 = vcmp.lt.s32.totalorder %v1455, %v50
  %1458 = vrot.lane.b32.xlu0 %v1332, 32
  %v1459 = vpop.permute.xlu0 %1458
  %v1460 = vrot.slane %v1212, 2
  %v1461 = vrot.slane %v1213, 1
  %v1462 = vsel %vm81, %v1461, %v1460
  %v1463 = vsel %vm84, %v1214, %v1462
  %v1464 = vrot.slane %v1215, 7
  %v1465 = vsel %vm87, %v1464, %v1463
  %v1467 = vsel %vm90, %v1459, 0
  %1469 = vmatprep.subr.mxu0 0.0
  %1470 = vmatpush1.msra.mxu0 %v55
  %1471 = vmatprep.subr.mxu0 0.0
  %1472 = vmatpush1.msra.mxu0 %v56
  %1473 = vmatprep.subr.mxu0 0.0
  %1474 = vmatpush1.msra.mxu0 %v57
  %1475 = vmatprep.subr.mxu0 0.0
  %1476 = vmatpush1.msra.mxu0 %v58
  %1477 = vmatprep.subr.mxu0 0.0
  %1478 = vmatpush1.msra.mxu0 0.0
  %1479 = vmatprep.subr.mxu0 0.0
  %1480 = vmatpush1.msra.mxu0 0.0
  %1481 = vmatprep.subr.mxu0 0.0
  %1482 = vmatpush1.msra.mxu0 0.0
  %1483 = vmatprep.subr.mxu0 0.0
  %1484 = vmatpush1.msra.mxu0 0.0
  %1485 = vmatprep.subr.mxu0 0.0
  %1486 = vmatpush1.msra.mxu0 0.0
  %1487 = vmatprep.subr.mxu0 0.0
  %1488 = vmatpush1.msra.mxu0 0.0
  %1489 = vmatprep.subr.mxu0 0.0
  %1490 = vmatpush1.msra.mxu0 0.0
  %1491 = vmatprep.subr.mxu0 0.0
  %1492 = vmatpush1.msra.mxu0 0.0
  %1493 = vmatprep.subr.mxu0 0.0
  %1494 = vmatpush1.msra.mxu0 0.0
  %1495 = vmatprep.subr.mxu0 0.0
  %1496 = vmatpush1.msra.mxu0 0.0
  %1497 = vmatprep.subr.mxu0 0.0
  %1498 = vmatpush1.msra.mxu0 0.0
  %1499 = vmatprep.subr.mxu0 0.0
  %1500 = vmatpush1.msra.mxu0 0.0
  %1501 = vmatprep.subr.mxu0 0.0
  %1502 = vmatpush1.msra.mxu0 0.0
  %1503 = vmatprep.subr.mxu0 0.0
  %1504 = vmatpush1.msra.mxu0 0.0
  %1505 = vmatprep.subr.mxu0 0.0
  %1506 = vmatpush1.msra.mxu0 0.0
  %1507 = vmatprep.subr.mxu0 0.0
  %1508 = vmatpush1.msra.mxu0 0.0
  %1509 = vmatprep.subr.mxu0 0.0
  %1510 = vmatpush1.msra.mxu0 0.0
  %1511 = vmatprep.subr.mxu0 0.0
  %1512 = vmatpush1.msra.mxu0 0.0
  %1513 = vmatprep.subr.mxu0 0.0
  %1514 = vmatpush1.msra.mxu0 0.0
  %1515 = vmatprep.subr.mxu0 0.0
  %1516 = vmatpush1.msra.mxu0 0.0
  %1517 = vmatprep.subr.mxu0 0.0
  %1518 = vmatpush1.msra.mxu0 0.0
  %1519 = vmatprep.subr.mxu0 0.0
  %1520 = vmatpush1.msra.mxu0 0.0
  %1521 = vmatprep.subr.mxu0 0.0
  %1522 = vmatpush1.msra.mxu0 0.0
  %1523 = vmatprep.subr.mxu0 0.0
  %1524 = vmatpush1.msra.mxu0 0.0
  %1525 = vmatprep.subr.mxu0 0.0
  %1526 = vmatpush1.msra.mxu0 0.0
  %1527 = vmatprep.subr.mxu0 0.0
  %1528 = vmatpush1.msra.mxu0 0.0
  %1529 = vmatprep.subr.mxu0 0.0
  %1530 = vmatpush1.msra.mxu0 0.0
  %1531 = vmatprep.subr.mxu0 0.0
  %1532 = vmatpush1.msra.mxu0 0.0
  %1533 = vmatprep.mubr.f32.mxu0 0.0
  %1534 = vmatmul.mubr.f32.gmra.mrb[0].mxu0 %v1467
  %v1535 = vpop.f32.mrb[0].mxu0
  %v1536 = vadd.f32 %v1465, %v1535
  %v1537 = vpop.f32.mrb[0].mxu0
  %1538 = vdwg.mxu0
  %v1539 = vxor.u32 %v1536, 2147483648
  %v1540 = vmul.f32 %v1539, 1.442695
  %v1541 = vpow.pop %v1540
  %v1542 = vadd.f32 %v1541, 1.0
  %v1543 = vrcp.pop %v1542
  %v1544 = vmul.f32 1.0, %v1543
  %v1545 = vtanh.pop %v1536
  %v1546 = vmul.f32 %v1544, %v1333
  %1548 = vrot.lane.b32.xlu0 %v1545, 64
  %v1549 = vpop.permute.xlu0 %1548
  %v1551 = vmul.f32 %v1544, %v1549
  %1553 = vrot.lane.b32.xlu0 %v1551, 32
  %v1554 = vpop.permute.xlu0 %1553
  %v1556 = vadd.f32 %v1546, %v1554
  %v1557 = vtanh.pop %v1556
  %1559 = vrot.lane.b32.xlu0 %v1557, 64
  %v1560 = vpop.permute.xlu0 %1559
  %v1562 = vmul.f32 %v1544, %v1560
  %v1563 = vsel %vm1456, 1, 0
  %1564 = vset.pattern.permute.xlu0 0
  %1565 = vperm.xlu0 %1564, %v1563
  %v1566 = vpop.permute.xlu0 %1565
  %vm1567 = vcmp.eq.s32.totalorder %v1566, 1
  %v1568 = vsel %vm1567, %v1562, 0.0
  %v1569 = vsel %vm1567, %v1562, %v1332
  %v1570 = vsel %vm1567, %v1556, %v1333
  %v1571 = vadd.f32 %v1334, %v1451
  %v1572 = vadd.f32 %v1335, %v1568
  %s1573 = sadd.s32 %s63, 6
  %v1574 = vstv %s1573
  %vm1575 = vcmp.lt.s32.totalorder %v1574, %v50
  %v1576 = vld [vmem:[%s0] sm:$0x8]
  %v1577 = vld [vmem:[%s0 + $0x4] sm:$0x8]
  %v1578 = vld [vmem:[%s0 + $0x8] sm:$0x8]
  %v1579 = vld [vmem:[%s0 + $0xc] sm:$0x8]
  %v1580 = vunpack.c.l.bf16 %v1576
  %v1581 = vunpack.c.l.bf16 %v1577
  %v1582 = vunpack.c.l.bf16 %v1578
  %v1583 = vunpack.c.l.bf16 %v1579
  %1585 = vrot.lane.b32.xlu0 %v1452, 32
  %v1586 = vpop.permute.xlu0 %1585
  %v1591 = vrot.slane %v1580, 6
  %v1592 = vrot.slane %v1581, 5
  %v1593 = vsel %vm81, %v1592, %v1591
  %v1594 = vrot.slane %v1582, 4
  %v1595 = vsel %vm84, %v1594, %v1593
  %v1596 = vrot.slane %v1583, 3
  %v1597 = vsel %vm87, %v1596, %v1595
  %v1599 = vsel %vm90, %v1586, 0
  %1601 = vmatprep.subr.mxu0 0.0
  %1602 = vmatpush1.msra.mxu0 %v51
  %1603 = vmatprep.subr.mxu0 0.0
  %1604 = vmatpush1.msra.mxu0 %v52
  %1605 = vmatprep.subr.mxu0 0.0
  %1606 = vmatpush1.msra.mxu0 %v53
  %1607 = vmatprep.subr.mxu0 0.0
  %1608 = vmatpush1.msra.mxu0 %v54
  %1609 = vmatprep.subr.mxu0 0.0
  %1610 = vmatpush1.msra.mxu0 0.0
  %1611 = vmatprep.subr.mxu0 0.0
  %1612 = vmatpush1.msra.mxu0 0.0
  %1613 = vmatprep.subr.mxu0 0.0
  %1614 = vmatpush1.msra.mxu0 0.0
  %1615 = vmatprep.subr.mxu0 0.0
  %1616 = vmatpush1.msra.mxu0 0.0
  %1617 = vmatprep.subr.mxu0 0.0
  %1618 = vmatpush1.msra.mxu0 0.0
  %1619 = vmatprep.subr.mxu0 0.0
  %1620 = vmatpush1.msra.mxu0 0.0
  %1621 = vmatprep.subr.mxu0 0.0
  %1622 = vmatpush1.msra.mxu0 0.0
  %1623 = vmatprep.subr.mxu0 0.0
  %1624 = vmatpush1.msra.mxu0 0.0
  %1625 = vmatprep.subr.mxu0 0.0
  %1626 = vmatpush1.msra.mxu0 0.0
  %1627 = vmatprep.subr.mxu0 0.0
  %1628 = vmatpush1.msra.mxu0 0.0
  %1629 = vmatprep.subr.mxu0 0.0
  %1630 = vmatpush1.msra.mxu0 0.0
  %1631 = vmatprep.subr.mxu0 0.0
  %1632 = vmatpush1.msra.mxu0 0.0
  %1633 = vmatprep.subr.mxu0 0.0
  %1634 = vmatpush1.msra.mxu0 0.0
  %1635 = vmatprep.subr.mxu0 0.0
  %1636 = vmatpush1.msra.mxu0 0.0
  %1637 = vmatprep.subr.mxu0 0.0
  %1638 = vmatpush1.msra.mxu0 0.0
  %1639 = vmatprep.subr.mxu0 0.0
  %1640 = vmatpush1.msra.mxu0 0.0
  %1641 = vmatprep.subr.mxu0 0.0
  %1642 = vmatpush1.msra.mxu0 0.0
  %1643 = vmatprep.subr.mxu0 0.0
  %1644 = vmatpush1.msra.mxu0 0.0
  %1645 = vmatprep.subr.mxu0 0.0
  %1646 = vmatpush1.msra.mxu0 0.0
  %1647 = vmatprep.subr.mxu0 0.0
  %1648 = vmatpush1.msra.mxu0 0.0
  %1649 = vmatprep.subr.mxu0 0.0
  %1650 = vmatpush1.msra.mxu0 0.0
  %1651 = vmatprep.subr.mxu0 0.0
  %1652 = vmatpush1.msra.mxu0 0.0
  %1653 = vmatprep.subr.mxu0 0.0
  %1654 = vmatpush1.msra.mxu0 0.0
  %1655 = vmatprep.subr.mxu0 0.0
  %1656 = vmatpush1.msra.mxu0 0.0
  %1657 = vmatprep.subr.mxu0 0.0
  %1658 = vmatpush1.msra.mxu0 0.0
  %1659 = vmatprep.subr.mxu0 0.0
  %1660 = vmatpush1.msra.mxu0 0.0
  %1661 = vmatprep.subr.mxu0 0.0
  %1662 = vmatpush1.msra.mxu0 0.0
  %1663 = vmatprep.subr.mxu0 0.0
  %1664 = vmatpush1.msra.mxu0 0.0
  %1665 = vmatprep.mubr.f32.mxu0 0.0
  %1666 = vmatmul.mubr.f32.gmra.mrb[0].mxu0 %v1599
  %v1667 = vpop.f32.mrb[0].mxu0
  %v1668 = vadd.f32 %v1597, %v1667
  %v1669 = vpop.f32.mrb[0].mxu0
  %1670 = vdwg.mxu0
  %v1671 = vxor.u32 %v1668, 2147483648
  %v1672 = vmul.f32 %v1671, 1.442695
  %v1673 = vpow.pop %v1672
  %v1674 = vadd.f32 %v1673, 1.0
  %v1675 = vrcp.pop %v1674
  %v1676 = vmul.f32 1.0, %v1675
  %v1677 = vtanh.pop %v1668
  %v1678 = vmul.f32 %v1676, %v1453
  %1680 = vrot.lane.b32.xlu0 %v1677, 64
  %v1681 = vpop.permute.xlu0 %1680
  %v1683 = vmul.f32 %v1676, %v1681
  %1685 = vrot.lane.b32.xlu0 %v1683, 32
  %v1686 = vpop.permute.xlu0 %1685
  %v1688 = vadd.f32 %v1678, %v1686
  %v1689 = vtanh.pop %v1688
  %1691 = vrot.lane.b32.xlu0 %v1689, 64
  %v1692 = vpop.permute.xlu0 %1691
  %v1694 = vmul.f32 %v1676, %v1692
  %v1695 = vsel %vm1575, 1, 0
  %1696 = vset.pattern.permute.xlu0 0
  %1697 = vperm.xlu0 %1696, %v1695
  %v1698 = vpop.permute.xlu0 %1697
  %vm1699 = vcmp.eq.s32.totalorder %v1698, 1
  %v1700 = vsel %vm1699, %v1694, 0.0
  %v1701 = vsel %vm1699, %v1694, %v1452
  %v1702 = vsel %vm1699, %v1688, %v1453
  %s1703 = sadd.s32 %s65, 1
  %v1704 = vstv %s1703
  %vm1705 = vcmp.lt.s32.totalorder %v1704, %v50
  %v1706 = vld [vmem:[%s37] sm:$0x1]
  %v1707 = vld [vmem:[%s37 + $0x4] sm:$0x1]
  %v1708 = vld [vmem:[%s37 + $0x8] sm:$0x1]
  %v1709 = vld [vmem:[%s37 + $0xc] sm:$0x1]
  %v1710 = vunpack.c.l.bf16 %v1706
  %v1711 = vunpack.c.l.bf16 %v1707
  %v1712 = vunpack.c.l.bf16 %v1708
  %v1713 = vunpack.c.l.bf16 %v1709
  %1715 = vrot.lane.b32.xlu0 %v1569, 32
  %v1716 = vpop.permute.xlu0 %1715
  %v1721 = vrot.slane %v1710, 1
  %v1722 = vsel %vm81, %v1711, %v1721
  %v1723 = vrot.slane %v1712, 7
  %v1724 = vsel %vm84, %v1723, %v1722
  %v1725 = vrot.slane %v1713, 6
  %v1726 = vsel %vm87, %v1725, %v1724
  %v1728 = vsel %vm90, %v1716, 0
  %1730 = vmatprep.subr.mxu0 0.0
  %1731 = vmatpush1.msra.mxu0 %v55
  %1732 = vmatprep.subr.mxu0 0.0
  %1733 = vmatpush1.msra.mxu0 %v56
  %1734 = vmatprep.subr.mxu0 0.0
  %1735 = vmatpush1.msra.mxu0 %v57
  %1736 = vmatprep.subr.mxu0 0.0
  %1737 = vmatpush1.msra.mxu0 %v58
  %1738 = vmatprep.subr.mxu0 0.0
  %1739 = vmatpush1.msra.mxu0 0.0
  %1740 = vmatprep.subr.mxu0 0.0
  %1741 = vmatpush1.msra.mxu0 0.0
  %1742 = vmatprep.subr.mxu0 0.0
  %1743 = vmatpush1.msra.mxu0 0.0
  %1744 = vmatprep.subr.mxu0 0.0
  %1745 = vmatpush1.msra.mxu0 0.0
  %1746 = vmatprep.subr.mxu0 0.0
  %1747 = vmatpush1.msra.mxu0 0.0
  %1748 = vmatprep.subr.mxu0 0.0
  %1749 = vmatpush1.msra.mxu0 0.0
  %1750 = vmatprep.subr.mxu0 0.0
  %1751 = vmatpush1.msra.mxu0 0.0
  %1752 = vmatprep.subr.mxu0 0.0
  %1753 = vmatpush1.msra.mxu0 0.0
  %1754 = vmatprep.subr.mxu0 0.0
  %1755 = vmatpush1.msra.mxu0 0.0
  %1756 = vmatprep.subr.mxu0 0.0
  %1757 = vmatpush1.msra.mxu0 0.0
  %1758 = vmatprep.subr.mxu0 0.0
  %1759 = vmatpush1.msra.mxu0 0.0
  %1760 = vmatprep.subr.mxu0 0.0
  %1761 = vmatpush1.msra.mxu0 0.0
  %1762 = vmatprep.subr.mxu0 0.0
  %1763 = vmatpush1.msra.mxu0 0.0
  %1764 = vmatprep.subr.mxu0 0.0
  %1765 = vmatpush1.msra.mxu0 0.0
  %1766 = vmatprep.subr.mxu0 0.0
  %1767 = vmatpush1.msra.mxu0 0.0
  %1768 = vmatprep.subr.mxu0 0.0
  %1769 = vmatpush1.msra.mxu0 0.0
  %1770 = vmatprep.subr.mxu0 0.0
  %1771 = vmatpush1.msra.mxu0 0.0
  %1772 = vmatprep.subr.mxu0 0.0
  %1773 = vmatpush1.msra.mxu0 0.0
  %1774 = vmatprep.subr.mxu0 0.0
  %1775 = vmatpush1.msra.mxu0 0.0
  %1776 = vmatprep.subr.mxu0 0.0
  %1777 = vmatpush1.msra.mxu0 0.0
  %1778 = vmatprep.subr.mxu0 0.0
  %1779 = vmatpush1.msra.mxu0 0.0
  %1780 = vmatprep.subr.mxu0 0.0
  %1781 = vmatpush1.msra.mxu0 0.0
  %1782 = vmatprep.subr.mxu0 0.0
  %1783 = vmatpush1.msra.mxu0 0.0
  %1784 = vmatprep.subr.mxu0 0.0
  %1785 = vmatpush1.msra.mxu0 0.0
  %1786 = vmatprep.subr.mxu0 0.0
  %1787 = vmatpush1.msra.mxu0 0.0
  %1788 = vmatprep.subr.mxu0 0.0
  %1789 = vmatpush1.msra.mxu0 0.0
  %1790 = vmatprep.subr.mxu0 0.0
  %1791 = vmatpush1.msra.mxu0 0.0
  %1792 = vmatprep.subr.mxu0 0.0
  %1793 = vmatpush1.msra.mxu0 0.0
  %1794 = vmatprep.mubr.f32.mxu0 0.0
  %1795 = vmatmul.mubr.f32.gmra.mrb[0].mxu0 %v1728
  %v1796 = vpop.f32.mrb[0].mxu0
  %v1797 = vadd.f32 %v1726, %v1796
  %v1798 = vpop.f32.mrb[0].mxu0
  %1799 = vdwg.mxu0
  %v1800 = vxor.u32 %v1797, 2147483648
  %v1801 = vmul.f32 %v1800, 1.442695
  %v1802 = vpow.pop %v1801
  %v1803 = vadd.f32 %v1802, 1.0
  %v1804 = vrcp.pop %v1803
  %v1805 = vmul.f32 1.0, %v1804
  %v1806 = vtanh.pop %v1797
  %v1807 = vmul.f32 %v1805, %v1570
  %1809 = vrot.lane.b32.xlu0 %v1806, 64
  %v1810 = vpop.permute.xlu0 %1809
  %v1812 = vmul.f32 %v1805, %v1810
  %1814 = vrot.lane.b32.xlu0 %v1812, 32
  %v1815 = vpop.permute.xlu0 %1814
  %v1817 = vadd.f32 %v1807, %v1815
  %v1818 = vtanh.pop %v1817
  %1820 = vrot.lane.b32.xlu0 %v1818, 64
  %v1821 = vpop.permute.xlu0 %1820
  %v1823 = vmul.f32 %v1805, %v1821
  %v1824 = vsel %vm1705, 1, 0
  %1825 = vset.pattern.permute.xlu0 0
  %1826 = vperm.xlu0 %1825, %v1824
  %v1827 = vpop.permute.xlu0 %1826
  %vm1828 = vcmp.eq.s32.totalorder %v1827, 1
  %v1829 = vsel %vm1828, %v1823, 0.0
  %v1830 = vsel %vm1828, %v1823, %v1569
  %v1831 = vsel %vm1828, %v1817, %v1570
  %v1832 = vadd.f32 %v1571, %v1700
  %v1833 = vadd.f32 %v1572, %v1829
  %s1834 = sadd.s32 %s63, 7
  %v1835 = vstv %s1834
  %vm1836 = vcmp.lt.s32.totalorder %v1835, %v50
  %1838 = vrot.lane.b32.xlu0 %v1701, 32
  %v1839 = vpop.permute.xlu0 %1838
  %v1840 = vrot.slane %v1580, 7
  %v1841 = vrot.slane %v1581, 6
  %v1842 = vsel %vm81, %v1841, %v1840
  %v1843 = vrot.slane %v1582, 5
  %v1844 = vsel %vm84, %v1843, %v1842
  %v1845 = vrot.slane %v1583, 4
  %v1846 = vsel %vm87, %v1845, %v1844
  %v1848 = vsel %vm90, %v1839, 0
  %1850 = vmatprep.subr.mxu0 0.0
  %1851 = vmatpush1.msra.mxu0 %v51
  %1852 = vmatprep.subr.mxu0 0.0
  %1853 = vmatpush1.msra.mxu0 %v52
  %1854 = vmatprep.subr.mxu0 0.0
  %1855 = vmatpush1.msra.mxu0 %v53
  %1856 = vmatprep.subr.mxu0 0.0
  %1857 = vmatpush1.msra.mxu0 %v54
  %1858 = vmatprep.subr.mxu0 0.0
  %1859 = vmatpush1.msra.mxu0 0.0
  %1860 = vmatprep.subr.mxu0 0.0
  %1861 = vmatpush1.msra.mxu0 0.0
  %1862 = vmatprep.subr.mxu0 0.0
  %1863 = vmatpush1.msra.mxu0 0.0
  %1864 = vmatprep.subr.mxu0 0.0
  %1865 = vmatpush1.msra.mxu0 0.0
  %1866 = vmatprep.subr.mxu0 0.0
  %1867 = vmatpush1.msra.mxu0 0.0
  %1868 = vmatprep.subr.mxu0 0.0
  %1869 = vmatpush1.msra.mxu0 0.0
  %1870 = vmatprep.subr.mxu0 0.0
  %1871 = vmatpush1.msra.mxu0 0.0
  %1872 = vmatprep.subr.mxu0 0.0
  %1873 = vmatpush1.msra.mxu0 0.0
  %1874 = vmatprep.subr.mxu0 0.0
  %1875 = vmatpush1.msra.mxu0 0.0
  %1876 = vmatprep.subr.mxu0 0.0
  %1877 = vmatpush1.msra.mxu0 0.0
  %1878 = vmatprep.subr.mxu0 0.0
  %1879 = vmatpush1.msra.mxu0 0.0
  %1880 = vmatprep.subr.mxu0 0.0
  %1881 = vmatpush1.msra.mxu0 0.0
  %1882 = vmatprep.subr.mxu0 0.0
  %1883 = vmatpush1.msra.mxu0 0.0
  %1884 = vmatprep.subr.mxu0 0.0
  %1885 = vmatpush1.msra.mxu0 0.0
  %1886 = vmatprep.subr.mxu0 0.0
  %1887 = vmatpush1.msra.mxu0 0.0
  %1888 = vmatprep.subr.mxu0 0.0
  %1889 = vmatpush1.msra.mxu0 0.0
  %1890 = vmatprep.subr.mxu0 0.0
  %1891 = vmatpush1.msra.mxu0 0.0
  %1892 = vmatprep.subr.mxu0 0.0
  %1893 = vmatpush1.msra.mxu0 0.0
  %1894 = vmatprep.subr.mxu0 0.0
  %1895 = vmatpush1.msra.mxu0 0.0
  %1896 = vmatprep.subr.mxu0 0.0
  %1897 = vmatpush1.msra.mxu0 0.0
  %1898 = vmatprep.subr.mxu0 0.0
  %1899 = vmatpush1.msra.mxu0 0.0
  %1900 = vmatprep.subr.mxu0 0.0
  %1901 = vmatpush1.msra.mxu0 0.0
  %1902 = vmatprep.subr.mxu0 0.0
  %1903 = vmatpush1.msra.mxu0 0.0
  %1904 = vmatprep.subr.mxu0 0.0
  %1905 = vmatpush1.msra.mxu0 0.0
  %1906 = vmatprep.subr.mxu0 0.0
  %1907 = vmatpush1.msra.mxu0 0.0
  %1908 = vmatprep.subr.mxu0 0.0
  %1909 = vmatpush1.msra.mxu0 0.0
  %1910 = vmatprep.subr.mxu0 0.0
  %1911 = vmatpush1.msra.mxu0 0.0
  %1912 = vmatprep.subr.mxu0 0.0
  %1913 = vmatpush1.msra.mxu0 0.0
  %1914 = vmatprep.mubr.f32.mxu0 0.0
  %1915 = vmatmul.mubr.f32.gmra.mrb[0].mxu0 %v1848
  %v1916 = vpop.f32.mrb[0].mxu0
  %v1917 = vadd.f32 %v1846, %v1916
  %v1918 = vpop.f32.mrb[0].mxu0
  %1919 = vdwg.mxu0
  %v1920 = vxor.u32 %v1917, 2147483648
  %v1921 = vmul.f32 %v1920, 1.442695
  %v1922 = vpow.pop %v1921
  %v1923 = vadd.f32 %v1922, 1.0
  %v1924 = vrcp.pop %v1923
  %v1925 = vmul.f32 1.0, %v1924
  %v1926 = vtanh.pop %v1917
  %v1927 = vmul.f32 %v1925, %v1702
  %1929 = vrot.lane.b32.xlu0 %v1926, 64
  %v1930 = vpop.permute.xlu0 %1929
  %v1932 = vmul.f32 %v1925, %v1930
  %1934 = vrot.lane.b32.xlu0 %v1932, 32
  %v1935 = vpop.permute.xlu0 %1934
  %v1937 = vadd.f32 %v1927, %v1935
  %v1938 = vtanh.pop %v1937
  %1940 = vrot.lane.b32.xlu0 %v1938, 64
  %v1941 = vpop.permute.xlu0 %1940
  %v1943 = vmul.f32 %v1925, %v1941
  %v1944 = vsel %vm1836, 1, 0
  %1945 = vset.pattern.permute.xlu0 0
  %1946 = vperm.xlu0 %1945, %v1944
  %v1947 = vpop.permute.xlu0 %1946
  %vm1948 = vcmp.eq.s32.totalorder %v1947, 1
  %v1949 = vsel %vm1948, %v1943, 0.0
  %v1950 = vsel %vm1948, %v1943, %v1701
  %v1951 = vsel %vm1948, %v1937, %v1702
  %v1952 = vstv %s65
  %vm1953 = vcmp.lt.s32.totalorder %v1952, %v50
  %1955 = vrot.lane.b32.xlu0 %v1830, 32
  %v1956 = vpop.permute.xlu0 %1955
  %v1957 = vrot.slane %v1711, 7
  %v1958 = vsel %vm81, %v1957, %v1710
  %v1959 = vrot.slane %v1712, 6
  %v1960 = vsel %vm84, %v1959, %v1958
  %v1961 = vrot.slane %v1713, 5
  %v1962 = vsel %vm87, %v1961, %v1960
  %v1964 = vsel %vm90, %v1956, 0
  %1966 = vmatprep.subr.mxu0 0.0
  %1967 = vmatpush1.msra.mxu0 %v55
  %1968 = vmatprep.subr.mxu0 0.0
  %1969 = vmatpush1.msra.mxu0 %v56
  %1970 = vmatprep.subr.mxu0 0.0
  %1971 = vmatpush1.msra.mxu0 %v57
  %1972 = vmatprep.subr.mxu0 0.0
  %1973 = vmatpush1.msra.mxu0 %v58
  %1974 = vmatprep.subr.mxu0 0.0
  %1975 = vmatpush1.msra.mxu0 0.0
  %1976 = vmatprep.subr.mxu0 0.0
  %1977 = vmatpush1.msra.mxu0 0.0
  %1978 = vmatprep.subr.mxu0 0.0
  %1979 = vmatpush1.msra.mxu0 0.0
  %1980 = vmatprep.subr.mxu0 0.0
  %1981 = vmatpush1.msra.mxu0 0.0
  %1982 = vmatprep.subr.mxu0 0.0
  %1983 = vmatpush1.msra.mxu0 0.0
  %1984 = vmatprep.subr.mxu0 0.0
  %1985 = vmatpush1.msra.mxu0 0.0
  %1986 = vmatprep.subr.mxu0 0.0
  %1987 = vmatpush1.msra.mxu0 0.0
  %1988 = vmatprep.subr.mxu0 0.0
  %1989 = vmatpush1.msra.mxu0 0.0
  %1990 = vmatprep.subr.mxu0 0.0
  %1991 = vmatpush1.msra.mxu0 0.0
  %1992 = vmatprep.subr.mxu0 0.0
  %1993 = vmatpush1.msra.mxu0 0.0
  %1994 = vmatprep.subr.mxu0 0.0
  %1995 = vmatpush1.msra.mxu0 0.0
  %1996 = vmatprep.subr.mxu0 0.0
  %1997 = vmatpush1.msra.mxu0 0.0
  %1998 = vmatprep.subr.mxu0 0.0
  %1999 = vmatpush1.msra.mxu0 0.0
  %2000 = vmatprep.subr.mxu0 0.0
  %2001 = vmatpush1.msra.mxu0 0.0
  %2002 = vmatprep.subr.mxu0 0.0
  %2003 = vmatpush1.msra.mxu0 0.0
  %2004 = vmatprep.subr.mxu0 0.0
  %2005 = vmatpush1.msra.mxu0 0.0
  %2006 = vmatprep.subr.mxu0 0.0
  %2007 = vmatpush1.msra.mxu0 0.0
  %2008 = vmatprep.subr.mxu0 0.0
  %2009 = vmatpush1.msra.mxu0 0.0
  %2010 = vmatprep.subr.mxu0 0.0
  %2011 = vmatpush1.msra.mxu0 0.0
  %2012 = vmatprep.subr.mxu0 0.0
  %2013 = vmatpush1.msra.mxu0 0.0
  %2014 = vmatprep.subr.mxu0 0.0
  %2015 = vmatpush1.msra.mxu0 0.0
  %2016 = vmatprep.subr.mxu0 0.0
  %2017 = vmatpush1.msra.mxu0 0.0
  %2018 = vmatprep.subr.mxu0 0.0
  %2019 = vmatpush1.msra.mxu0 0.0
  %2020 = vmatprep.subr.mxu0 0.0
  %2021 = vmatpush1.msra.mxu0 0.0
  %2022 = vmatprep.subr.mxu0 0.0
  %2023 = vmatpush1.msra.mxu0 0.0
  %2024 = vmatprep.subr.mxu0 0.0
  %2025 = vmatpush1.msra.mxu0 0.0
  %2026 = vmatprep.subr.mxu0 0.0
  %2027 = vmatpush1.msra.mxu0 0.0
  %2028 = vmatprep.subr.mxu0 0.0
  %2029 = vmatpush1.msra.mxu0 0.0
  %2030 = vmatprep.mubr.f32.mxu0 0.0
  %2031 = vmatmul.mubr.f32.gmra.mrb[0].mxu0 %v1964
  %v2032 = vpop.f32.mrb[0].mxu0
  %v2033 = vadd.f32 %v1962, %v2032
  %v2034 = vpop.f32.mrb[0].mxu0
  %2035 = vdwg.mxu0
  %v2036 = vxor.u32 %v2033, 2147483648
  %v2037 = vmul.f32 %v2036, 1.442695
  %v2038 = vpow.pop %v2037
  %v2039 = vadd.f32 %v2038, 1.0
  %v2040 = vrcp.pop %v2039
  %v2041 = vmul.f32 1.0, %v2040
  %v2042 = vtanh.pop %v2033
  %v2043 = vmul.f32 %v2041, %v1831
  %2045 = vrot.lane.b32.xlu0 %v2042, 64
  %v2046 = vpop.permute.xlu0 %2045
  %v2048 = vmul.f32 %v2041, %v2046
  %2050 = vrot.lane.b32.xlu0 %v2048, 32
  %v2051 = vpop.permute.xlu0 %2050
  %v2053 = vadd.f32 %v2043, %v2051
  %v2054 = vtanh.pop %v2053
  %2056 = vrot.lane.b32.xlu0 %v2054, 64
  %v2057 = vpop.permute.xlu0 %2056
  %v2059 = vmul.f32 %v2041, %v2057
  %v2060 = vsel %vm1953, 1, 0
  %2061 = vset.pattern.permute.xlu0 0
  %2062 = vperm.xlu0 %2061, %v2060
  %v2063 = vpop.permute.xlu0 %2062
  %vm2064 = vcmp.eq.s32.totalorder %v2063, 1
  %v2065 = vsel %vm2064, %v2059, 0.0
  %v2066 = vsel %vm2064, %v2059, %v1830
  %v2067 = vsel %vm2064, %v2053, %v1831
  %v2068 = vadd.f32 %v1832, %v1949
  %v2069 = vadd.f32 %v1833, %v2065
  %2071 = vrot.lane.b32.xlu0 %v1950, 32
  %v2072 = vpop.permute.xlu0 %2071
  %vm2074 = vcmask 257024
  %2075 = vst.msk [vmem:[#allocation2] sm:$0xf] %vm2074, %v2072
  %2077 = vrot.lane.b32.xlu0 %v1951, 96
  %v2078 = vpop.permute.xlu0 %2077
  %2080 = vst.msk [vmem:[#allocation3] sm:$0xf] %vm2074, %v2078
  %2082 = vrot.lane.b32.xlu0 %v2066, 32
  %v2083 = vpop.permute.xlu0 %2082
  %2085 = vst.msk [vmem:[#allocation4] sm:$0xf] %vm2074, %v2083
  %2087 = vrot.lane.b32.xlu0 %v2067, 96
  %v2088 = vpop.permute.xlu0 %2087
  %2090 = vst.msk [vmem:[#allocation5] sm:$0xf] %vm2074, %v2088
  %v2091 = vld [vmem:[%s5] sm:$0xf]
  %2093 = vrot.lane.b32.xlu0 %v2068, 32
  %v2094 = vpop.permute.xlu0 %2093
  %v2096 = vadd.f32 %v2091, %v2094
  %2097 = vst.msk [vmem:[%s5] sm:$0xf] %vm2074, %v2096
  %v2098 = vld [vmem:[%s6] sm:$0xf]
  %2100 = vrot.lane.b32.xlu0 %v2069, 32
  %v2101 = vpop.permute.xlu0 %2100
  %v2103 = vadd.f32 %v2098, %v2101
  %2104 = vst.msk [vmem:[%s6] sm:$0xf] %vm2074, %v2103
  // Predicated region
  $region26: #{sem_attn_forward.6} parent=0 // pred_check
    %p2105 = pneg %p39
  $region27: #{sem_attn_forward.6} parent=0 // pred_check_branch
    %2107 = sbr.rel (%p2105) target = $region29
  $region28: #{sem_attn_forward.6} parent=0 // pred_region
    %v2108 = vcvt.s32.f32 %v50
    %v2109 = vmax.f32 %v2108, 1.0
    %v2110 = vrcp.pop %v2109
    %v2111 = vmul.f32 1.0, %v2110
    %v2112 = vld [vmem:[%s5] sm:$0xf]
    %2114 = vset.pattern.permute.xlu0 0
    %2115 = vperm.xlu0 %2114, %v2111
    %v2116 = vpop.permute.xlu0 %2115
    %v2118 = vmul.f32 %v2112, %v2116
    %2119 = vst.msk [vmem:[%s5] sm:$0xf] %vm2074, %v2118
    %v2120 = vld [vmem:[%s6] sm:$0xf]
    %v2121 = vmul.f32 %v2120, %v2116
    %2122 = vst.msk [vmem:[%s6] sm:$0xf] %vm2074, %v2121
  $region29: #{sem_attn_forward.6} parent=0 // pred_fallthru
    _
  // Predicated region
  $region30: #{sem_attn_forward.6} parent=0 // pred_check
    _
  $region31: #{sem_attn_forward.6} parent=0 // pred_check_branch
    %2124 = sbr.rel (0) target = $region33
  $region32: #{sem_attn_forward.6} parent=0 // pred_region
    _
  $region33: #{sem_attn_forward.6} parent=0 // pred_fallthru
    _
  // Predicated region
  $region34: #{sem_attn_forward.6} parent=0 // pred_check
    _
  $region35: #{sem_attn_forward.6} parent=0 // pred_check_branch
    %2126 = sbr.rel (0) target = $region37
  $region36: #{sem_attn_forward.6} parent=0 // pred_region
    _
  $region37: #{sem_attn_forward.6} parent=0 // pred_fallthru
    _
  // Predicated region
  $region38: #{sem_attn_forward.6} parent=0 // pred_check
    _
  $region39: #{sem_attn_forward.6} parent=0 // pred_check_branch
    %2128 = sbr.rel (0) target = $region41
  $region40: #{sem_attn_forward.6} parent=0 // pred_region
    _
  $region41: #{sem_attn_forward.6} parent=0 // pred_fallthru
    _
  // Predicated region
  $region42: #{sem_attn_forward.6} parent=0 // pred_check
    _
  $region43: #{sem_attn_forward.6} parent=0 // pred_check_branch
    %2130 = sbr.rel (0) target = $region45
  $region44: #{sem_attn_forward.6} parent=0 // pred_region
    _
  $region45: #{sem_attn_forward.6} parent=0 // pred_fallthru
    _

</llo_original>
